<compile_context>
chip_gen: v6e
topology: v6e:2x2x1
jax: 0.10.0
libtpu: 0.0.40
codegen_flags: <defaults>
</compile_context>

<pallas_src>
import functools

import jax
import jax.numpy as jnp
from jax.experimental import pallas as pl
from jax.experimental.pallas import tpu as pltpu


def _cdiv(a, b):
    return -(-a // b)


def _round_up(a, b):
    return _cdiv(a, b) * b


def _focal_dice_kernel(x_ref, t_ref, inter_ref, denom_ref, focal_ref,
                       inter_acc, denom_acc, focal_acc, *opt_scratch,
                       gamma, rows_valid, block_rows, needs_mask,
                       one_hot_targets):
    split = pl.program_id(0)
    step = pl.program_id(1)
    last_step = pl.num_programs(1) - 1
    cls_ref = opt_scratch[0] if opt_scratch else None

    # Zero this split's resident accumulators on its first row tile; cache
    # the class iota once (generic argmax path only).
    @pl.when(step == 0)
    def _():
        inter_acc[...] = jnp.zeros_like(inter_acc)
        denom_acc[...] = jnp.zeros_like(denom_acc)
        focal_acc[...] = jnp.zeros_like(focal_acc)
        if cls_ref is not None:
            cls_ref[...] = jax.lax.broadcasted_iota(jnp.int32, cls_ref.shape, 1)

    x = x_ref[...].astype(jnp.float32)          # (tR, C) logits
    t = t_ref[...].astype(jnp.float32)          # (tR, C) targets
    tr, c = x.shape

    # ---- softmax over the class (lane) axis ----
    m = jnp.max(x, axis=-1, keepdims=True)
    e = jnp.exp(x - m)
    s = jnp.sum(e, axis=-1, keepdims=True)
    log_s = jnp.log(s)
    p = e * pl.reciprocal(s, approx=True)       # EUP vrcp; p only feeds dice

    # ---- valid-row mask for the ragged last tile (select-based: kills NaN) ----
    if needs_mask:
        row0 = (split * pl.num_programs(1) + step) * block_rows
        row_ids = row0 + jax.lax.broadcasted_iota(jnp.int32, (tr, 1), 0)
        valid = row_ids < rows_valid            # (tR, 1) bool
        pm = jnp.where(valid, p, 0.0)
        tm = jnp.where(valid, t, 0.0)
    else:
        valid = None
        pm, tm = p, t

    # ---- dice partial sums (into VMEM scratch) ----
    inter_acc[...] += jnp.sum(pm * tm, axis=0, keepdims=True)
    denom_acc[...] += jnp.sum(pm + tm, axis=0, keepdims=True)   # fused reduce

    # ---- focal-loss partial sum ----
    if one_hot_targets:
        # Fast path: targets are one-hot, so sum(t * (x - m)) == (x - m)[y].
        xy_minus_m = jnp.sum(t * (x - m), axis=-1, keepdims=True)
    else:
        cls = cls_ref[...]
        t_max = jnp.max(t, axis=-1, keepdims=True)
        # first argmax index along the class axis (torch.argmax semantics)
        y = jnp.min(jnp.where(t == t_max, cls, c), axis=-1, keepdims=True)
        sel = (cls == y).astype(jnp.float32)
        xy_minus_m = jnp.sum(sel * (x - m), axis=-1, keepdims=True)
    ce = log_s - xy_minus_m                                     # -log p[y], exact
    prob_y = jnp.exp(-ce)
    if float(gamma) == int(gamma) and gamma >= 0:
        focal_w = (1.0 - prob_y) ** int(gamma)   # integer_pow: cheap VALU muls
    else:
        focal_w = jnp.power(1.0 - prob_y, gamma)
    focal = ce * focal_w                                        # (tR, 1)
    if needs_mask:
        focal = jnp.where(valid, focal, 0.0)
    focal_acc[...] += jnp.sum(focal, axis=0, keepdims=True)

    # ---- finalize: single write of the partials at the last step ----
    @pl.when(step == last_step)
    def _():
        inter_ref[...] = inter_acc[...][None]
        denom_ref[...] = denom_acc[...][None]
        focal_ref[...] = focal_acc[...][None]


def focal_dice_loss(output, target, *, alpha, beta, gamma,
                    epsilon=1e-5, w=1.0,
                    block_rows=4096, target_block_bytes=1 << 20,
                    num_splits=1, one_hot_targets=False):
    """Pallas TPU implementation of FocalDiceLoss(alpha, beta, gamma).forward.

    num_splits: set 2 on v7x (2 TensorCores/chip) to shard the row stream;
                keep 1 on single-TC v5e/v6e.
    target_block_bytes: ~1 MiB is the all-generation sweet spot; ~2 MiB is
                fine on v6e/v7x if more VMEM headroom is available.
    one_hot_targets: enables the cheaper focal path (valid iff targets are
                one-hot; otherwise the torch argmax semantics are used).
    """
    assert output.shape == target.shape and output.ndim == 3
    B, N, C = output.shape
    R = B * N

    # Wrapper-side flatten only (free metadata): class axis stays last
    # (lane-dense) and the kernel tiles a single row axis.
    x = output.reshape(R, C)
    t = target.reshape(R, C)

    # Row-tile size: multiple of 8 sublanes, ~target_block_bytes per input
    # block in the *input* dtype (bf16 inputs get twice the rows).
    itemsize = jnp.dtype(output.dtype).itemsize
    bytes_per_row = max(C, 1) * itemsize
    tr = max(8, min(block_rows, target_block_bytes // bytes_per_row) // 8 * 8)
    tr = min(tr, _round_up(R, 8))

    # Split the block stream across TensorCores only when it divides evenly,
    # so no block is ever fully out of bounds (only the last block may be
    # partial, handled by the in-kernel mask).
    total_blocks = _cdiv(R, tr)
    requested = max(1, int(num_splits))
    splits = requested if (requested > 1 and total_blocks % requested == 0) else 1
    steps = total_blocks // splits
    needs_mask = total_blocks * tr != R

    def row_index_map(s, i):
        return (s * steps + i, 0)

    in_specs = [
        pl.BlockSpec((tr, C), row_index_map),
        pl.BlockSpec((tr, C), row_index_map),
    ]
    out_specs = (
        pl.BlockSpec((1, 1, C), lambda s, i: (s, 0, 0)),
        pl.BlockSpec((1, 1, C), lambda s, i: (s, 0, 0)),
        pl.BlockSpec((1, 1, 1), lambda s, i: (s, 0, 0)),
    )
    out_shape = (
        jax.ShapeDtypeStruct((splits, 1, C), jnp.float32),   # sum p*t per class
        jax.ShapeDtypeStruct((splits, 1, C), jnp.float32),   # sum p+t per class
        jax.ShapeDtypeStruct((splits, 1, 1), jnp.float32),   # sum focal loss
    )
    scratch_shapes = [
        pltpu.VMEM((1, C), jnp.float32),   # intersection accumulator
        pltpu.VMEM((1, C), jnp.float32),   # p+t denominator accumulator
        pltpu.VMEM((1, 1), jnp.float32),   # focal-loss accumulator
    ]
    if not one_hot_targets:
        scratch_shapes.append(pltpu.VMEM((tr, C), jnp.int32))   # cached class iota

    kernel = functools.partial(
        _focal_dice_kernel, gamma=float(gamma), rows_valid=R,
        block_rows=tr, needs_mask=needs_mask, one_hot_targets=one_hot_targets)

    inter_p, denom_p, focal_p = pl.pallas_call(
        kernel,
        out_shape=out_shape,
        grid=(splits, steps),
        in_specs=in_specs,
        out_specs=out_specs,
        scratch_shapes=scratch_shapes,
        compiler_params=pltpu.CompilerParams(
            dimension_semantics=("parallel", "arbitrary")),
    )(x, t)

    # Tiny O(C) finalize in plain JAX: combine per-core partials.
    intersection = jnp.sum(inter_p[:, 0, :], axis=0)          # (C,)
    denominator = jnp.sum(denom_p[:, 0, :], axis=0)           # (C,)
    denominator = jnp.maximum(denominator, epsilon)
    dice = 2.0 * intersection / denominator
    dice_loss = jnp.mean(w * (1.0 - dice))                    # DiceLoss(...).mean()
    focal_loss = jnp.sum(focal_p) / R                         # FocalLoss(...).mean()
    return alpha * focal_loss + beta * dice_loss


def _focal_dice_ref(output, target, *, alpha, beta, gamma, epsilon=1e-5, w=1.0):
    """Pure-JAX reference mirroring the PyTorch FocalDiceLoss module."""
    output = output.astype(jnp.float32)
    target = target.astype(jnp.float32)
    # FocalLoss
    logp = jax.nn.log_softmax(output, axis=2)
    y = jnp.argmax(target, axis=2)
    ce = -jnp.take_along_axis(logp, y[..., None], axis=2)[..., 0]
    probs = jnp.exp(-ce)
    fl = jnp.mean(ce * jnp.power(1.0 - probs, gamma))
    # DiceLoss
    p = jax.nn.softmax(output, axis=2)
    intersection = jnp.sum(p * target, axis=(0, 1))
    denominator = jnp.sum(p, axis=(0, 1)) + jnp.sum(target, axis=(0, 1))
    denominator = jnp.maximum(denominator, epsilon)
    dice = 2.0 * intersection / denominator
    dice_loss = jnp.mean(w * (1.0 - dice))
    return alpha * fl + beta * dice_loss


if __name__ == "__main__":
    key = jax.random.PRNGKey(0)
    k1, k2 = jax.random.split(key)

    # R = B*N = 2400 is NOT a multiple of the ~2048-row tile, so the
    # no-pad ragged-block masking path is exercised.
    B, N, C = 2, 1200, 128
    alpha, beta, gamma = 0.6, 0.4, 2.0

    output = jax.random.normal(k1, (B, N, C), dtype=jnp.float32)
    labels = jax.random.randint(k2, (B, N), 0, C)
    target = jax.nn.one_hot(labels, C, dtype=jnp.float32)

    ref = _focal_dice_ref(output, target, alpha=alpha, beta=beta, gamma=gamma)

    # Exercise both focal paths: one-hot fast path and the generic
    # argmax-compatible path (torch semantics).
    for one_hot in (True, False):
        loss = focal_dice_loss(output, target, alpha=alpha, beta=beta,
                               gamma=gamma, one_hot_targets=one_hot)
        loss = jax.block_until_ready(loss)
        assert loss.shape == ()
        assert jnp.allclose(loss, ref, atol=2e-4, rtol=2e-4), (
            f"one_hot={one_hot}: kernel {float(loss)} vs ref {float(ref)} "
            f"(abs diff {float(jnp.abs(loss - ref))})"
        )

    print("KERNEL_OK")
</pallas_src>

<mosaic_0001>
module attributes {stable_mosaic.version = 11 : i64} {
  func.func @_focal_dice_kernel(%arg0: i32, %arg1: i32, %arg2: memref<2048x128xf32, #tpu.memory_space<vmem>>, %arg3: memref<2048x128xf32, #tpu.memory_space<vmem>>, %arg4: memref<1x1x128xf32, #tpu.memory_space<vmem>>, %arg5: memref<1x1x128xf32, #tpu.memory_space<vmem>>, %arg6: memref<1x1x1xf32, #tpu.memory_space<vmem>>, %arg7: memref<1x128xf32, #tpu.memory_space<vmem>>, %arg8: memref<1x128xf32, #tpu.memory_space<vmem>>, %arg9: memref<1x1xf32, #tpu.memory_space<vmem>>) attributes {dimension_semantics = [#tpu.dimension_semantics<parallel>, #tpu.dimension_semantics<arbitrary>], iteration_bounds = array<i64: 1, 2>, scalar_prefetch = 0 : i64, scratch_operands = 3 : i64, tpu.core_type = #tpu.core_type<tc>, window_params = [{transform_indices = @transform_0, window_bounds = array<i64: 2048, 128>}, {transform_indices = @transform_1, window_bounds = array<i64: 2048, 128>}, {transform_indices = @transform_2, window_bounds = array<i64: 1, 1, 128>}, {transform_indices = @transform_3, window_bounds = array<i64: 1, 1, 128>}, {transform_indices = @transform_4, window_bounds = array<i64: 1, 1, 1>}]} {
    %c0_i32 = arith.constant 0 : i32
    %0 = arith.cmpi eq, %arg1, %c0_i32 : i32
    %1 = arith.extui %0 : i1 to i32
    %c0_i32_0 = arith.constant 0 : i32
    %2 = arith.cmpi ne, %1, %c0_i32_0 : i32
    scf.if %2 {
      %cst_27 = arith.constant 0.000000e+00 : f32
      %67 = vector.broadcast %cst_27 : f32 to vector<1x128xf32>
      %c0_28 = arith.constant 0 : index
      %c0_29 = arith.constant 0 : index
      %68 = vector.load %arg7[%c0_28, %c0_29] : memref<1x128xf32, #tpu.memory_space<vmem>>, vector<1x128xf32>
      tpu.vector_store %arg7[%c0_28, %c0_29], %67 {strides = array<i32>} : memref<1x128xf32, #tpu.memory_space<vmem>>, vector<1x128xf32>,
      %cst_30 = arith.constant 0.000000e+00 : f32
      %69 = vector.broadcast %cst_30 : f32 to vector<1x128xf32>
      %c0_31 = arith.constant 0 : index
      %c0_32 = arith.constant 0 : index
      %70 = vector.load %arg8[%c0_31, %c0_32] : memref<1x128xf32, #tpu.memory_space<vmem>>, vector<1x128xf32>
      tpu.vector_store %arg8[%c0_31, %c0_32], %69 {strides = array<i32>} : memref<1x128xf32, #tpu.memory_space<vmem>>, vector<1x128xf32>,
      %cst_33 = arith.constant 0.000000e+00 : f32
      %71 = vector.broadcast %cst_33 : f32 to vector<1x1xf32>
      %c0_34 = arith.constant 0 : index
      %c0_35 = arith.constant 0 : index
      %72 = vector.load %arg9[%c0_34, %c0_35] : memref<1x1xf32, #tpu.memory_space<vmem>>, vector<1x1xf32>
      tpu.vector_store %arg9[%c0_34, %c0_35], %71 {strides = array<i32>} : memref<1x1xf32, #tpu.memory_space<vmem>>, vector<1x1xf32>,
    } else {
    }
    %c0 = arith.constant 0 : index
    %c0_1 = arith.constant 0 : index
    %3 = vector.load %arg2[%c0, %c0_1] : memref<2048x128xf32, #tpu.memory_space<vmem>>, vector<2048x128xf32>
    %c0_2 = arith.constant 0 : index
    %c0_3 = arith.constant 0 : index
    %4 = vector.load %arg3[%c0_2, %c0_3] : memref<2048x128xf32, #tpu.memory_space<vmem>>, vector<2048x128xf32>
    %cst = arith.constant dense<0xFF800000> : vector<2048xf32>
    %5 = vector.multi_reduction <maximumf>, %3, %cst [1] : vector<2048x128xf32> to vector<2048xf32>
    %6 = vector.shape_cast %5 : vector<2048xf32> to vector<2048x1xf32>
    %7 = vector.broadcast %6 : vector<2048x1xf32> to vector<2048x128xf32>
    %8 = arith.subf %3, %7 : vector<2048x128xf32>
    %9 = math.exp %8 : vector<2048x128xf32>
    %cst_4 = arith.constant dense<0.000000e+00> : vector<2048xf32>
    %10 = vector.multi_reduction <add>, %9, %cst_4 [1] : vector<2048x128xf32> to vector<2048xf32>
    %11 = vector.shape_cast %10 : vector<2048xf32> to vector<2048x1xf32>
    %12 = math.log %11 : vector<2048x1xf32>
    %13 = tpu.reciprocal %11 {approx = true} : vector<2048x1xf32> -> vector<2048x1xf32>
    %14 = vector.broadcast %13 : vector<2048x1xf32> to vector<2048x128xf32>
    %15 = arith.mulf %9, %14 : vector<2048x128xf32>
    %c2_i32 = arith.constant 2 : i32
    %16 = arith.muli %arg0, %c2_i32 : i32
    %17 = arith.addi %16, %arg1 : i32
    %c2048_i32 = arith.constant 2048 : i32
    %18 = arith.muli %17, %c2048_i32 : i32
    %19 = tpu.iota {dimensions = array<i32: 0>} : vector<2048x1xi32>
    %20 = vector.broadcast %18 : i32 to vector<2048x1xi32>
    %21 = arith.addi %20, %19 : vector<2048x1xi32>
    %c2400_i32 = arith.constant 2400 : i32
    %22 = vector.broadcast %c2400_i32 : i32 to vector<2048x1xi32>
    %23 = arith.cmpi slt, %21, %22 : vector<2048x1xi32>
    %cst_5 = arith.constant 0.000000e+00 : f32
    %24 = vector.shape_cast %23 : vector<2048x1xi1> to vector<2048x1xi1>
    %25 = vector.broadcast %24 : vector<2048x1xi1> to vector<2048x128xi1>
    %26 = vector.broadcast %cst_5 : f32 to vector<2048x128xf32>
    %27 = arith.select %25, %15, %26 : vector<2048x128xi1>, vector<2048x128xf32>
    %cst_6 = arith.constant 0.000000e+00 : f32
    %28 = vector.shape_cast %23 : vector<2048x1xi1> to vector<2048x1xi1>
    %29 = vector.broadcast %28 : vector<2048x1xi1> to vector<2048x128xi1>
    %30 = vector.broadcast %cst_6 : f32 to vector<2048x128xf32>
    %31 = arith.select %29, %4, %30 : vector<2048x128xi1>, vector<2048x128xf32>
    %c0_7 = arith.constant 0 : index
    %c0_8 = arith.constant 0 : index
    %32 = vector.load %arg7[%c0_7, %c0_8] : memref<1x128xf32, #tpu.memory_space<vmem>>, vector<1x128xf32>
    %33 = arith.mulf %27, %31 : vector<2048x128xf32>
    %cst_9 = arith.constant dense<0.000000e+00> : vector<128xf32>
    %34 = vector.multi_reduction <add>, %33, %cst_9 [0] : vector<2048x128xf32> to vector<128xf32>
    %35 = vector.shape_cast %34 : vector<128xf32> to vector<1x128xf32>
    %36 = arith.addf %32, %35 : vector<1x128xf32>
    %c0_10 = arith.constant 0 : index
    %c0_11 = arith.constant 0 : index
    %37 = vector.load %arg7[%c0_10, %c0_11] : memref<1x128xf32, #tpu.memory_space<vmem>>, vector<1x128xf32>
    tpu.vector_store %arg7[%c0_10, %c0_11], %36 {strides = array<i32>} : memref<1x128xf32, #tpu.memory_space<vmem>>, vector<1x128xf32>,
    %c0_12 = arith.constant 0 : index
    %c0_13 = arith.constant 0 : index
    %38 = vector.load %arg8[%c0_12, %c0_13] : memref<1x128xf32, #tpu.memory_space<vmem>>, vector<1x128xf32>
    %39 = arith.addf %27, %31 : vector<2048x128xf32>
    %cst_14 = arith.constant dense<0.000000e+00> : vector<128xf32>
    %40 = vector.multi_reduction <add>, %39, %cst_14 [0] : vector<2048x128xf32> to vector<128xf32>
    %41 = vector.shape_cast %40 : vector<128xf32> to vector<1x128xf32>
    %42 = arith.addf %38, %41 : vector<1x128xf32>
    %c0_15 = arith.constant 0 : index
    %c0_16 = arith.constant 0 : index
    %43 = vector.load %arg8[%c0_15, %c0_16] : memref<1x128xf32, #tpu.memory_space<vmem>>, vector<1x128xf32>
    tpu.vector_store %arg8[%c0_15, %c0_16], %42 {strides = array<i32>} : memref<1x128xf32, #tpu.memory_space<vmem>>, vector<1x128xf32>,
    %44 = vector.broadcast %6 : vector<2048x1xf32> to vector<2048x128xf32>
    %45 = arith.subf %3, %44 : vector<2048x128xf32>
    %46 = arith.mulf %4, %45 : vector<2048x128xf32>
    %cst_17 = arith.constant dense<0.000000e+00> : vector<2048xf32>
    %47 = vector.multi_reduction <add>, %46, %cst_17 [1] : vector<2048x128xf32> to vector<2048xf32>
    %48 = vector.shape_cast %47 : vector<2048xf32> to vector<2048x1xf32>
    %49 = arith.subf %12, %48 : vector<2048x1xf32>
    %cst_18 = arith.constant 0.000000e+00 : f32
    %50 = vector.broadcast %cst_18 : f32 to vector<2048x1xf32>
    %51 = arith.subf %50, %49 : vector<2048x1xf32>
    %52 = math.exp %51 : vector<2048x1xf32>
    %cst_19 = arith.constant 1.000000e+00 : f32
    %53 = vector.broadcast %cst_19 : f32 to vector<2048x1xf32>
    %54 = arith.subf %53, %52 : vector<2048x1xf32>
    %55 = arith.mulf %54, %54 : vector<2048x1xf32>
    %56 = arith.mulf %49, %55 : vector<2048x1xf32>
    %cst_20 = arith.constant 0.000000e+00 : f32
    %57 = vector.broadcast %cst_20 : f32 to vector<2048x1xf32>
    %58 = arith.select %23, %56, %57 : vector<2048x1xi1>, vector<2048x1xf32>
    %c0_21 = arith.constant 0 : index
    %c0_22 = arith.constant 0 : index
    %59 = vector.load %arg9[%c0_21, %c0_22] : memref<1x1xf32, #tpu.memory_space<vmem>>, vector<1x1xf32>
    %cst_23 = arith.constant dense<0.000000e+00> : vector<1xf32>
    %60 = vector.multi_reduction <add>, %58, %cst_23 [0] : vector<2048x1xf32> to vector<1xf32>
    %61 = vector.shape_cast %60 : vector<1xf32> to vector<1x1xf32>
    %62 = arith.addf %59, %61 : vector<1x1xf32>
    %c0_24 = arith.constant 0 : index
    %c0_25 = arith.constant 0 : index
    %63 = vector.load %arg9[%c0_24, %c0_25] : memref<1x1xf32, #tpu.memory_space<vmem>>, vector<1x1xf32>
    tpu.vector_store %arg9[%c0_24, %c0_25], %62 {strides = array<i32>} : memref<1x1xf32, #tpu.memory_space<vmem>>, vector<1x1xf32>,
    %c1_i32 = arith.constant 1 : i32
    %64 = arith.cmpi eq, %arg1, %c1_i32 : i32
    %65 = arith.extui %64 : i1 to i32
    %c0_i32_26 = arith.constant 0 : i32
    %66 = arith.cmpi ne, %65, %c0_i32_26 : i32
    scf.if %66 {
      %c0_27 = arith.constant 0 : index
      %c0_28 = arith.constant 0 : index
      %67 = vector.load %arg7[%c0_27, %c0_28] : memref<1x128xf32, #tpu.memory_space<vmem>>, vector<1x128xf32>
      %68 = vector.shape_cast %67 : vector<1x128xf32> to vector<1x1x128xf32>
      %c0_29 = arith.constant 0 : index
      %c0_30 = arith.constant 0 : index
      %c0_31 = arith.constant 0 : index
      %69 = vector.load %arg4[%c0_29, %c0_30, %c0_31] : memref<1x1x128xf32, #tpu.memory_space<vmem>>, vector<1x1x128xf32>
      tpu.vector_store %arg4[%c0_29, %c0_30, %c0_31], %68 {strides = array<i32>} : memref<1x1x128xf32, #tpu.memory_space<vmem>>, vector<1x1x128xf32>,
      %c0_32 = arith.constant 0 : index
      %c0_33 = arith.constant 0 : index
      %70 = vector.load %arg8[%c0_32, %c0_33] : memref<1x128xf32, #tpu.memory_space<vmem>>, vector<1x128xf32>
      %71 = vector.shape_cast %70 : vector<1x128xf32> to vector<1x1x128xf32>
      %c0_34 = arith.constant 0 : index
      %c0_35 = arith.constant 0 : index
      %c0_36 = arith.constant 0 : index
      %72 = vector.load %arg5[%c0_34, %c0_35, %c0_36] : memref<1x1x128xf32, #tpu.memory_space<vmem>>, vector<1x1x128xf32>
      tpu.vector_store %arg5[%c0_34, %c0_35, %c0_36], %71 {strides = array<i32>} : memref<1x1x128xf32, #tpu.memory_space<vmem>>, vector<1x1x128xf32>,
      %c0_37 = arith.constant 0 : index
      %c0_38 = arith.constant 0 : index
      %73 = vector.load %arg9[%c0_37, %c0_38] : memref<1x1xf32, #tpu.memory_space<vmem>>, vector<1x1xf32>
      %74 = vector.shape_cast %73 : vector<1x1xf32> to vector<1x1x1xf32>
      %c0_39 = arith.constant 0 : index
      %c0_40 = arith.constant 0 : index
      %c0_41 = arith.constant 0 : index
      %75 = vector.load %arg6[%c0_39, %c0_40, %c0_41] : memref<1x1x1xf32, #tpu.memory_space<vmem>>, vector<1x1x1xf32>
      tpu.vector_store %arg6[%c0_39, %c0_40, %c0_41], %74 {strides = array<i32>} : memref<1x1x1xf32, #tpu.memory_space<vmem>>, vector<1x1x1xf32>,
    } else {
    }
    return
  }
  func.func @transform_0(%arg0: i32, %arg1: i32) -> (i32, i32) {
    %c2_i32 = arith.constant 2 : i32
    %0 = arith.muli %arg0, %c2_i32 : i32
    %1 = arith.addi %0, %arg1 : i32
    %c0_i32 = arith.constant 0 : i32
    %c0_i32_0 = arith.constant 0 : i32
    return %1, %c0_i32 : i32, i32
  }
  func.func @transform_1(%arg0: i32, %arg1: i32) -> (i32, i32) {
    %c2_i32 = arith.constant 2 : i32
    %0 = arith.muli %arg0, %c2_i32 : i32
    %1 = arith.addi %0, %arg1 : i32
    %c0_i32 = arith.constant 0 : i32
    %c0_i32_0 = arith.constant 0 : i32
    return %1, %c0_i32 : i32, i32
  }
  func.func @transform_2(%arg0: i32, %arg1: i32) -> (i32, i32, i32) {
    %c0_i32 = arith.constant 0 : i32
    %c0_i32_0 = arith.constant 0 : i32
    %c0_i32_1 = arith.constant 0 : i32
    return %arg0, %c0_i32, %c0_i32_0 : i32, i32, i32
  }
  func.func @transform_3(%arg0: i32, %arg1: i32) -> (i32, i32, i32) {
    %c0_i32 = arith.constant 0 : i32
    %c0_i32_0 = arith.constant 0 : i32
    %c0_i32_1 = arith.constant 0 : i32
    return %arg0, %c0_i32, %c0_i32_0 : i32, i32, i32
  }
  func.func @transform_4(%arg0: i32, %arg1: i32) -> (i32, i32, i32) {
    %c0_i32 = arith.constant 0 : i32
    %c0_i32_0 = arith.constant 0 : i32
    %c0_i32_1 = arith.constant 0 : i32
    return %arg0, %c0_i32, %c0_i32_0 : i32, i32, i32
  }
}

</mosaic_0001>

<llo_original>
// kernel: tpu_custom_call.1
$region0: #{tpu_custom_call.1}
  #allocation0 [shape = 'u32[]', space=smem, size = 0x4, offset = 0x4, fixed_abs, tag = 'smem constant byte address 0x4 - core index']
  #allocation1 [shape = 'u32[144,128]{1,0:T(1,128)}', space=vmem, size = 0x12000, scoped, tag = 'internal scratch']
  #allocation2 [shape = 'f32[1,128]{1,0:T(1,128)}', space=vmem, size = 0x200, scoped, tag = 'scratch operand']
  #allocation3 [shape = 'f32[1,128]{1,0:T(1,128)}', space=vmem, size = 0x200, scoped, tag = 'scratch operand']
  #allocation4 [shape = 'f32[1,1]{1,0:T(1,128)}', space=vmem, size = 0x200, scoped, tag = 'scratch operand']
  %s0 = inlined_call_operand.hbm [shape: f32[2400,128], index: 0, kind: input, shape index: {}]
  %s1 = inlined_call_operand.hbm [shape: f32[2400,128], index: 1, kind: input, shape index: {}]
  %s2 = inlined_call_operand.hbm [shape: f32[1,1,128], index: 2, kind: output, shape index: {0}]
  %s3 = inlined_call_operand.hbm [shape: f32[1,1,128], index: 3, kind: output, shape index: {1}]
  %s4 = inlined_call_operand.hbm [shape: f32[1,1,1], index: 4, kind: output, shape index: {2}]
  %5 = xla_tuple %s2, %s3, %s4
  %s6 = sld [smem:[#allocation0]]
  $region73: #{tpu_custom_call.1} parent=0
    _
  %s8 = ssub.s32 1, %s6
  %s9 = scalar_select 0, %s8, %s6
  $region1: #{tpu_custom_call.1} parent=0
    #allocation5 [shape = 'u8[2097152]{0}', space=vmem, size = 0x200000, scoped, tag = 'input window, operand 0']
    #allocation6 [shape = 's32[2]{0}', space=sflag, size = 0x8, scoped, tag = 'scoped memory for tpu_custom_call.1']
    #allocation7 [shape = 's32[2]{0}', space=sflag, size = 0x8, scoped, tag = 'scoped memory for tpu_custom_call.1']
    #allocation8 [shape = 'u8[2097152]{0}', space=vmem, size = 0x200000, scoped, tag = 'input window, operand 1']
    #allocation9 [shape = 's32[2]{0}', space=sflag, size = 0x8, scoped, tag = 'scoped memory for tpu_custom_call.1']
    #allocation10 [shape = 'u8[512]{0}', space=vmem, size = 0x400, scoped, tag = 'output window, operand 0, single buffered']
    #allocation11 [shape = 'u8[512]{0}', space=vmem, size = 0x400, scoped, tag = 'output window, operand 1, single buffered']
    #allocation12 [shape = 's32[1]{0}', space=sflag, size = 0x4, scoped, tag = 'scoped memory for tpu_custom_call.1']
    #allocation13 [shape = 'u8[512]{0}', space=vmem, size = 0x400, scoped, tag = 'output window, operand 2, single buffered']
    %10 = vsyncpa [#allocation6], 0
    %s11 = scalar_lea.sflag [#allocation6], 1
    %12 = vsyncpa %s11, 0
    %13 = vsyncpa [#allocation9], 0
    %s14 = scalar_lea.sflag [#allocation9], 1
    %15 = vsyncpa %s14, 0
    %16 = vsyncpa [#allocation7], 0
    %17 = vsyncpa [#allocation12], 0
    loop: start=0, step=1, limit=4
    $region2: #{tpu_custom_call.1} parent=1 // loop_pre_header
      _
    $region3: #{tpu_custom_call.1} parent=1 // loop_header
      %s19 = sphi 0, %s23
      %p20 = scmp.ge.s32.totalorder %s19, 4
      %s26 = sphi 0, %s38
      %s27 = sphi 0, %s34
      %s28 = sphi 0, %s26
      %s29 = sphi 0, %s27
      %s30 = sphi 0, %s28
      %s31 = sphi 0, %s29
      %s45 = sphi 0, %s47
      %s48 = sphi 0, %s45
      %s49 = sphi 0, %s48
      %s65 = sphi 0, %s49
      %s75 = sphi 0, %s77
      %s78 = sphi 0, %s75
      %s79 = sphi 0, %s78
      %s95 = sphi 0, %s79
      %s101 = sphi 0, %s103
      %s104 = sphi 0, %s101
      %s105 = sphi 0, %s104
      %s121 = sphi 0, %s105
      %s127 = sphi 0, %s129
      %s130 = sphi 0, %s127
      %s131 = sphi 0, %s130
      %s147 = sphi 0, %s131
      %s153 = sphi 0, %s155
      %s156 = sphi 0, %s153
      %s157 = sphi 0, %s156
      %s173 = sphi 0, %s157
    $region4: #{tpu_custom_call.1} parent=1 // loop_header_branch
      %22 = sbr.rel (%p20) target = $region8
    $region5: #{tpu_custom_call.1} parent=1 // loop_body
      %s24 = ssub.s32 %s19, 1
      %s25 = ssub.s32 %s19, 2
      %s32 = sadd.s32 1, %s27
      %p33 = scmp.ge.s32.totalorder %s32, 2
      %s34 = scalar_select %p33, 0, %s32
      %s35 = sadd.s32 1, %s26
      %s36 = scalar_select %p33, %s35, %s26
      %p37 = scmp.ge.s32.totalorder %s36, 1
      %s38 = scalar_select %p37, 0, %s36
      %s39 = smul.u32 %s26, 2
      %s40 = sadd.s32 %s39, %s27
      %s41 = smul.u32 %s38, 2
      %s42 = sadd.s32 %s41, %s34
      %s43 = ssub.s32 %s40, %s42
      %p44 = scmp.eq.s32.totalorder %s43, 0
      %s46 = sadd.s32 %s45, 1
      %s47 = scalar_select %p44, %s45, %s46
      %p50 = pneg %p44
      %p51 = scmp.eq.s32.totalorder %s19, 1
      %p52 = por %p50, %p51
      %p53 = scmp.ne.s32.totalorder %s45, %s48
      %p54 = scmp.eq.s32.totalorder %s19, 0
      %p55 = por %p53, %p54
      %p56 = scmp.ne.s32.totalorder %s45, %s48
      %p57 = scmp.eq.s32.totalorder %s24, 1
      %p58 = por %p56, %p57
      %p59 = scmp.ne.s32.totalorder %s48, %s49
      %p60 = scmp.eq.s32.totalorder %s24, 0
      %p61 = por %p59, %p60
      %p62 = scmp.ne.s32.totalorder %s48, %s49
      %p63 = scmp.eq.s32.totalorder %s25, 1
      %p64 = por %p62, %p63
      %p66 = scmp.ne.s32.totalorder %s49, %s65
      %p67 = scmp.eq.s32.totalorder %s25, 0
      %p68 = por %p66, %p67
      %s69 = smul.u32 %s26, 2
      %s70 = sadd.s32 %s69, %s27
      %s71 = smul.u32 %s38, 2
      %s72 = sadd.s32 %s71, %s34
      %s73 = ssub.s32 %s70, %s72
      %p74 = scmp.eq.s32.totalorder %s73, 0
      %s76 = sadd.s32 %s75, 1
      %s77 = scalar_select %p74, %s75, %s76
      %p80 = pneg %p74
      %p81 = scmp.eq.s32.totalorder %s19, 1
      %p82 = por %p80, %p81
      %p83 = scmp.ne.s32.totalorder %s75, %s78
      %p84 = scmp.eq.s32.totalorder %s19, 0
      %p85 = por %p83, %p84
      %p86 = scmp.ne.s32.totalorder %s75, %s78
      %p87 = scmp.eq.s32.totalorder %s24, 1
      %p88 = por %p86, %p87
      %p89 = scmp.ne.s32.totalorder %s78, %s79
      %p90 = scmp.eq.s32.totalorder %s24, 0
      %p91 = por %p89, %p90
      %p92 = scmp.ne.s32.totalorder %s78, %s79
      %p93 = scmp.eq.s32.totalorder %s25, 1
      %p94 = por %p92, %p93
      %p96 = scmp.ne.s32.totalorder %s79, %s95
      %p97 = scmp.eq.s32.totalorder %s25, 0
      %p98 = por %p96, %p97
      %s99 = ssub.s32 %s26, %s38
      %p100 = scmp.eq.s32.totalorder %s99, 0
      %s102 = sadd.s32 %s101, 1
      %s103 = scalar_select %p100, %s101, %s102
      %p106 = pneg %p100
      %p107 = scmp.eq.s32.totalorder %s19, 1
      %p108 = por %p106, %p107
      %p109 = scmp.ne.s32.totalorder %s101, %s104
      %p110 = scmp.eq.s32.totalorder %s19, 0
      %p111 = por %p109, %p110
      %p112 = scmp.ne.s32.totalorder %s101, %s104
      %p113 = scmp.eq.s32.totalorder %s24, 1
      %p114 = por %p112, %p113
      %p115 = scmp.ne.s32.totalorder %s104, %s105
      %p116 = scmp.eq.s32.totalorder %s24, 0
      %p117 = por %p115, %p116
      %p118 = scmp.ne.s32.totalorder %s104, %s105
      %p119 = scmp.eq.s32.totalorder %s25, 1
      %p120 = por %p118, %p119
      %p122 = scmp.ne.s32.totalorder %s105, %s121
      %p123 = scmp.eq.s32.totalorder %s25, 0
      %p124 = por %p122, %p123
      %s125 = ssub.s32 %s26, %s38
      %p126 = scmp.eq.s32.totalorder %s125, 0
      %s128 = sadd.s32 %s127, 1
      %s129 = scalar_select %p126, %s127, %s128
      %p132 = pneg %p126
      %p133 = scmp.eq.s32.totalorder %s19, 1
      %p134 = por %p132, %p133
      %p135 = scmp.ne.s32.totalorder %s127, %s130
      %p136 = scmp.eq.s32.totalorder %s19, 0
      %p137 = por %p135, %p136
      %p138 = scmp.ne.s32.totalorder %s127, %s130
      %p139 = scmp.eq.s32.totalorder %s24, 1
      %p140 = por %p138, %p139
      %p141 = scmp.ne.s32.totalorder %s130, %s131
      %p142 = scmp.eq.s32.totalorder %s24, 0
      %p143 = por %p141, %p142
      %p144 = scmp.ne.s32.totalorder %s130, %s131
      %p145 = scmp.eq.s32.totalorder %s25, 1
      %p146 = por %p144, %p145
      %p148 = scmp.ne.s32.totalorder %s131, %s147
      %p149 = scmp.eq.s32.totalorder %s25, 0
      %p150 = por %p148, %p149
      %s151 = ssub.s32 %s26, %s38
      %p152 = scmp.eq.s32.totalorder %s151, 0
      %s154 = sadd.s32 %s153, 1
      %s155 = scalar_select %p152, %s153, %s154
      %p158 = pneg %p152
      %p159 = scmp.eq.s32.totalorder %s19, 1
      %p160 = por %p158, %p159
      %p161 = scmp.ne.s32.totalorder %s153, %s156
      %p162 = scmp.eq.s32.totalorder %s19, 0
      %p163 = por %p161, %p162
      %p164 = scmp.ne.s32.totalorder %s153, %s156
      %p165 = scmp.eq.s32.totalorder %s24, 1
      %p166 = por %p164, %p165
      %p167 = scmp.ne.s32.totalorder %s156, %s157
      %p168 = scmp.eq.s32.totalorder %s24, 0
      %p169 = por %p167, %p168
      %p170 = scmp.ne.s32.totalorder %s156, %s157
      %p171 = scmp.eq.s32.totalorder %s25, 1
      %p172 = por %p170, %p171
      %p174 = scmp.ne.s32.totalorder %s157, %s173
      %p175 = scmp.eq.s32.totalorder %s25, 0
      %p176 = por %p174, %p175
      %p177 = scmp.le.s32.totalorder 1, %s19
      %p178 = scmp.lt.s32.totalorder %s19, 3
      %p179 = pnand %p177, %p178
      %p180 = pneg %p179
      // Predicated region
      $region9: #{tpu_custom_call.1} parent=5 // pred_check
        _
      $region10: #{tpu_custom_call.1} parent=5 // pred_check_branch
        %182 = sbr.rel (%p179) target = $region12
      $region11: #{tpu_custom_call.1} parent=5 // pred_region
        %s183 = ssub.s32 %s19, 1
      $region12: #{tpu_custom_call.1} parent=5 // pred_fallthru
        _
      %p184 = scmp.lt.s32.totalorder %s19, 2
      // Predicated region
      $region13: #{tpu_custom_call.1} parent=5 // pred_check
        %p185 = pneg %p184
      $region14: #{tpu_custom_call.1} parent=5 // pred_check_branch
        %187 = sbr.rel (%p185) target = $region16
      $region15: #{tpu_custom_call.1} parent=5 // pred_region
        // Predicated region
        $region17: #{tpu_custom_call.1} parent=15 // pred_check
          %p188 = pneg %p55
        $region18: #{tpu_custom_call.1} parent=15 // pred_check_branch
          %190 = sbr.rel (%p188) target = $region20
        $region19: #{tpu_custom_call.1} parent=15 // pred_region
          %s191 = sand.u32 %s45, 1
          %s192 = scalar_lea.sflag [#allocation6], %s191
          %s193 = sand.u32 %s45, 1
          %s194 = smul.addr %s193, 2048
          %s195 = scalar_lea.vmem [#allocation5], %s194
          %s196 = smul.u32 %s26, 2
          %s197 = sadd.s32 %s196, %s27
          %s198 = smul.u32 256, %s197
          %s199 = ssub.s32 300, %s198
          %p200 = scmp.lt.s32.totalorder %s199, 256
          %s201 = scalar_select %p200, %s199, 256
          %s202 = smul.u32 128, %s201
          %s204 = ssub.s32 32768, %s202
          %205 = vsyncadd %s192, %s204
          %p206 = scmp.ne.s32.totalorder 0, %s202
          %s207 = smul.addr %s198, 128
          %s208 = scalar_lea.hbm %s0, %s207
          %s209 = smul.u32 8, %s201
          %s210 = sshll.u32 %s195, 4
          %s211 = int_to_ptr.vmem [resolvable:$true] %s210
          %s212 = sshll.u32 %s209, 4
          %216 = dma.hbm_to_vmem [thread:$0]  (%p206), %s208, %s212, %s211, %s192, 128, 128, 8
        $region20: #{tpu_custom_call.1} parent=15 // pred_fallthru
          _
        // Predicated region
        $region21: #{tpu_custom_call.1} parent=15 // pred_check
          %p217 = pneg %p85
        $region22: #{tpu_custom_call.1} parent=15 // pred_check_branch
          %219 = sbr.rel (%p217) target = $region24
        $region23: #{tpu_custom_call.1} parent=15 // pred_region
          %s220 = sand.u32 %s75, 1
          %s221 = scalar_lea.sflag [#allocation9], %s220
          %s222 = sand.u32 %s75, 1
          %s223 = smul.addr %s222, 2048
          %s224 = scalar_lea.vmem [#allocation8], %s223
          %s225 = smul.u32 %s26, 2
          %s226 = sadd.s32 %s225, %s27
          %s227 = smul.u32 256, %s226
          %s228 = ssub.s32 300, %s227
          %p229 = scmp.lt.s32.totalorder %s228, 256
          %s230 = scalar_select %p229, %s228, 256
          %s231 = smul.u32 128, %s230
          %s233 = ssub.s32 32768, %s231
          %234 = vsyncadd %s221, %s233
          %p235 = scmp.ne.s32.totalorder 0, %s231
          %s236 = smul.addr %s227, 128
          %s237 = scalar_lea.hbm %s1, %s236
          %s238 = smul.u32 8, %s230
          %s239 = sshll.u32 %s224, 4
          %s240 = int_to_ptr.vmem [resolvable:$true] %s239
          %s241 = sshll.u32 %s238, 4
          %245 = dma.hbm_to_vmem [thread:$0]  (%p235), %s237, %s241, %s240, %s221, 128, 128, 8
        $region24: #{tpu_custom_call.1} parent=15 // pred_fallthru
          _
      $region16: #{tpu_custom_call.1} parent=5 // pred_fallthru
        _
      %p246 = scmp.le.s32.totalorder 1, %s19
      %p247 = scmp.lt.s32.totalorder %s19, 3
      %p248 = pnand %p246, %p247
      %p249 = pneg %p248
      // Predicated region
      $region25: #{tpu_custom_call.1} parent=5 // pred_check
        _
      $region26: #{tpu_custom_call.1} parent=5 // pred_check_branch
        %251 = sbr.rel (%p248) target = $region28
      $region27: #{tpu_custom_call.1} parent=5 // pred_region
        %s252 = ssub.s32 %s19, 1
        %s253 = sand.u32 %s48, 1
        %s254 = scalar_lea.sflag [#allocation6], %s253
        %s255 = sand.u32 %s48, 1
        %s256 = smul.addr %s255, 2048
        %s257 = scalar_lea.vmem [#allocation5], %s256
        // Predicated region
        $region29: #{tpu_custom_call.1} parent=27 // pred_check
          %p258 = pneg %p61
        $region30: #{tpu_custom_call.1} parent=27 // pred_check_branch
          %260 = sbr.rel (%p258) target = $region32
        $region31: #{tpu_custom_call.1} parent=27 // pred_region
          %261 = dma.done %s254, 32768
        $region32: #{tpu_custom_call.1} parent=27 // pred_fallthru
          _
        %s262 = sand.u32 %s78, 1
        %s263 = scalar_lea.sflag [#allocation9], %s262
        %s264 = sand.u32 %s78, 1
        %s265 = smul.addr %s264, 2048
        %s266 = scalar_lea.vmem [#allocation8], %s265
        // Predicated region
        $region33: #{tpu_custom_call.1} parent=27 // pred_check
          %p267 = pneg %p91
        $region34: #{tpu_custom_call.1} parent=27 // pred_check_branch
          %269 = sbr.rel (%p267) target = $region36
        $region35: #{tpu_custom_call.1} parent=27 // pred_region
          %270 = dma.done %s263, 32768
        $region36: #{tpu_custom_call.1} parent=27 // pred_fallthru
          _
        %s271 = sand.u32 %s48, 1
        %s272 = scalar_lea.sflag [#allocation6], %s271
        %s273 = sand.u32 %s48, 1
        %s274 = smul.addr %s273, 2048
        %s275 = scalar_lea.vmem [#allocation5], %s274
        %p276 = pneg %p61
        %p277 = pneg %p58
        %s278 = sand.u32 %s78, 1
        %s279 = scalar_lea.sflag [#allocation9], %s278
        %s280 = sand.u32 %s78, 1
        %s281 = smul.addr %s280, 2048
        %s282 = scalar_lea.vmem [#allocation8], %s281
        %p283 = pneg %p91
        %p284 = pneg %p88
        %p285 = pneg %p117
        %p286 = pneg %p114
        %p287 = pneg %p143
        %p288 = pneg %p140
        %p289 = pneg %p169
        %p290 = pneg %p166
        %s291 = smul.u32 %s28, 2
        %s292 = sadd.s32 %s291, %s29
        %s293 = smul.u32 256, %s292
        %s294 = ssub.s32 300, %s293
        %p295 = scmp.lt.s32.totalorder %s294, 256
        %s296 = scalar_select %p295, %s294, 256
        %s297 = smul.u32 128, %s296
        %s298 = smul.u32 %s28, 2
        %s299 = sadd.s32 %s298, %s29
        %s300 = smul.u32 256, %s299
        %s301 = ssub.s32 300, %s300
        %p302 = scmp.lt.s32.totalorder %s301, 256
        %s303 = scalar_select %p302, %s301, 256
        %s304 = smul.u32 128, %s303
        %p305 = scmp.eq.s32.totalorder %s29, 0
        // Predicated region
        $region37: #{tpu_custom_call.1} parent=27 // pred_check
          %p306 = pneg %p305
        $region38: #{tpu_custom_call.1} parent=27 // pred_check_branch
          %308 = sbr.rel (%p306) target = $region40
        $region39: #{tpu_custom_call.1} parent=27 // pred_region
          %309 = vst [vmem:[#allocation2] sm:$0x1] 0.0
          %310 = vst [vmem:[#allocation3] sm:$0x1] 0.0
          %vm311 = vcmask 0
          %312 = vst.msk [vmem:[#allocation4] sm:$0x1] %vm311, 0.0
        $region40: #{tpu_custom_call.1} parent=27 // pred_fallthru
          _
        %v313 = vld [vmem:[%s257] sm:$0xff]
        %v314 = vld [vmem:[%s257 + $0x8] sm:$0xff]
        %v315 = vld [vmem:[%s257 + $0x10] sm:$0xff]
        %v316 = vld [vmem:[%s257 + $0x18] sm:$0xff]
        %v317 = vld [vmem:[%s257 + $0x20] sm:$0xff]
        %v318 = vld [vmem:[%s257 + $0x28] sm:$0xff]
        %v319 = vld [vmem:[%s257 + $0x30] sm:$0xff]
        %v320 = vld [vmem:[%s257 + $0x38] sm:$0xff]
        %v321 = vld [vmem:[%s257 + $0x40] sm:$0xff]
        %v322 = vld [vmem:[%s257 + $0x48] sm:$0xff]
        %v323 = vld [vmem:[%s257 + $0x50] sm:$0xff]
        %v324 = vld [vmem:[%s257 + $0x58] sm:$0xff]
        %v325 = vld [vmem:[%s257 + $0x60] sm:$0xff]
        %v326 = vld [vmem:[%s257 + $0x68] sm:$0xff]
        %v327 = vld [vmem:[%s257 + $0x70] sm:$0xff]
        %v328 = vld [vmem:[%s257 + $0x78] sm:$0xff]
        %v329 = vld [vmem:[%s257 + $0x80] sm:$0xff]
        %v330 = vld [vmem:[%s257 + $0x88] sm:$0xff]
        %v331 = vld [vmem:[%s257 + $0x90] sm:$0xff]
        %v332 = vld [vmem:[%s257 + $0x98] sm:$0xff]
        %v333 = vld [vmem:[%s257 + $0xa0] sm:$0xff]
        %v334 = vld [vmem:[%s257 + $0xa8] sm:$0xff]
        %v335 = vld [vmem:[%s257 + $0xb0] sm:$0xff]
        %v336 = vld [vmem:[%s257 + $0xb8] sm:$0xff]
        %v337 = vld [vmem:[%s257 + $0xc0] sm:$0xff]
        %v338 = vld [vmem:[%s257 + $0xc8] sm:$0xff]
        %v339 = vld [vmem:[%s257 + $0xd0] sm:$0xff]
        %v340 = vld [vmem:[%s257 + $0xd8] sm:$0xff]
        %v341 = vld [vmem:[%s257 + $0xe0] sm:$0xff]
        %v342 = vld [vmem:[%s257 + $0xe8] sm:$0xff]
        %v343 = vld [vmem:[%s257 + $0xf0] sm:$0xff]
        %v344 = vld [vmem:[%s257 + $0xf8] sm:$0xff]
        %v345 = vld [vmem:[%s257 + $0x100] sm:$0xff]
        %v346 = vld [vmem:[%s257 + $0x108] sm:$0xff]
        %v347 = vld [vmem:[%s257 + $0x110] sm:$0xff]
        %v348 = vld [vmem:[%s257 + $0x118] sm:$0xff]
        %v349 = vld [vmem:[%s257 + $0x120] sm:$0xff]
        %v350 = vld [vmem:[%s257 + $0x128] sm:$0xff]
        %v351 = vld [vmem:[%s257 + $0x130] sm:$0xff]
        %v352 = vld [vmem:[%s257 + $0x138] sm:$0xff]
        %v353 = vld [vmem:[%s257 + $0x140] sm:$0xff]
        %v354 = vld [vmem:[%s257 + $0x148] sm:$0xff]
        %v355 = vld [vmem:[%s257 + $0x150] sm:$0xff]
        %v356 = vld [vmem:[%s257 + $0x158] sm:$0xff]
        %v357 = vld [vmem:[%s257 + $0x160] sm:$0xff]
        %v358 = vld [vmem:[%s257 + $0x168] sm:$0xff]
        %v359 = vld [vmem:[%s257 + $0x170] sm:$0xff]
        %v360 = vld [vmem:[%s257 + $0x178] sm:$0xff]
        %v361 = vld [vmem:[%s257 + $0x180] sm:$0xff]
        %v362 = vld [vmem:[%s257 + $0x188] sm:$0xff]
        %v363 = vld [vmem:[%s257 + $0x190] sm:$0xff]
        %v364 = vld [vmem:[%s257 + $0x198] sm:$0xff]
        %v365 = vld [vmem:[%s257 + $0x1a0] sm:$0xff]
        %v366 = vld [vmem:[%s257 + $0x1a8] sm:$0xff]
        %v367 = vld [vmem:[%s257 + $0x1b0] sm:$0xff]
        %v368 = vld [vmem:[%s257 + $0x1b8] sm:$0xff]
        %v369 = vld [vmem:[%s257 + $0x1c0] sm:$0xff]
        %v370 = vld [vmem:[%s257 + $0x1c8] sm:$0xff]
        %v371 = vld [vmem:[%s257 + $0x1d0] sm:$0xff]
        %v372 = vld [vmem:[%s257 + $0x1d8] sm:$0xff]
        %v373 = vld [vmem:[%s257 + $0x1e0] sm:$0xff]
        %v374 = vld [vmem:[%s257 + $0x1e8] sm:$0xff]
        %v375 = vld [vmem:[%s257 + $0x1f0] sm:$0xff]
        %v376 = vld [vmem:[%s257 + $0x1f8] sm:$0xff]
        %v377 = vld [vmem:[%s257 + $0x200] sm:$0xff]
        %v378 = vld [vmem:[%s257 + $0x208] sm:$0xff]
        %v379 = vld [vmem:[%s257 + $0x210] sm:$0xff]
        %v380 = vld [vmem:[%s257 + $0x218] sm:$0xff]
        %v381 = vld [vmem:[%s257 + $0x220] sm:$0xff]
        %v382 = vld [vmem:[%s257 + $0x228] sm:$0xff]
        %v383 = vld [vmem:[%s257 + $0x230] sm:$0xff]
        %v384 = vld [vmem:[%s257 + $0x238] sm:$0xff]
        %v385 = vld [vmem:[%s257 + $0x240] sm:$0xff]
        %v386 = vld [vmem:[%s257 + $0x248] sm:$0xff]
        %v387 = vld [vmem:[%s257 + $0x250] sm:$0xff]
        %v388 = vld [vmem:[%s257 + $0x258] sm:$0xff]
        %v389 = vld [vmem:[%s257 + $0x260] sm:$0xff]
        %v390 = vld [vmem:[%s257 + $0x268] sm:$0xff]
        %v391 = vld [vmem:[%s257 + $0x270] sm:$0xff]
        %v392 = vld [vmem:[%s257 + $0x278] sm:$0xff]
        %v393 = vld [vmem:[%s257 + $0x280] sm:$0xff]
        %v394 = vld [vmem:[%s257 + $0x288] sm:$0xff]
        %v395 = vld [vmem:[%s257 + $0x290] sm:$0xff]
        %v396 = vld [vmem:[%s257 + $0x298] sm:$0xff]
        %v397 = vld [vmem:[%s257 + $0x2a0] sm:$0xff]
        %v398 = vld [vmem:[%s257 + $0x2a8] sm:$0xff]
        %v399 = vld [vmem:[%s257 + $0x2b0] sm:$0xff]
        %v400 = vld [vmem:[%s257 + $0x2b8] sm:$0xff]
        %v401 = vld [vmem:[%s257 + $0x2c0] sm:$0xff]
        %v402 = vld [vmem:[%s257 + $0x2c8] sm:$0xff]
        %v403 = vld [vmem:[%s257 + $0x2d0] sm:$0xff]
        %v404 = vld [vmem:[%s257 + $0x2d8] sm:$0xff]
        %v405 = vld [vmem:[%s257 + $0x2e0] sm:$0xff]
        %v406 = vld [vmem:[%s257 + $0x2e8] sm:$0xff]
        %v407 = vld [vmem:[%s257 + $0x2f0] sm:$0xff]
        %v408 = vld [vmem:[%s257 + $0x2f8] sm:$0xff]
        %v409 = vld [vmem:[%s257 + $0x300] sm:$0xff]
        %v410 = vld [vmem:[%s257 + $0x308] sm:$0xff]
        %v411 = vld [vmem:[%s257 + $0x310] sm:$0xff]
        %v412 = vld [vmem:[%s257 + $0x318] sm:$0xff]
        %v413 = vld [vmem:[%s257 + $0x320] sm:$0xff]
        %v414 = vld [vmem:[%s257 + $0x328] sm:$0xff]
        %v415 = vld [vmem:[%s257 + $0x330] sm:$0xff]
        %v416 = vld [vmem:[%s257 + $0x338] sm:$0xff]
        %v417 = vld [vmem:[%s257 + $0x340] sm:$0xff]
        %v418 = vld [vmem:[%s257 + $0x348] sm:$0xff]
        %v419 = vld [vmem:[%s257 + $0x350] sm:$0xff]
        %v420 = vld [vmem:[%s257 + $0x358] sm:$0xff]
        %v421 = vld [vmem:[%s257 + $0x360] sm:$0xff]
        %v422 = vld [vmem:[%s257 + $0x368] sm:$0xff]
        %v423 = vld [vmem:[%s257 + $0x370] sm:$0xff]
        %v424 = vld [vmem:[%s257 + $0x378] sm:$0xff]
        %v425 = vld [vmem:[%s257 + $0x380] sm:$0xff]
        %v426 = vld [vmem:[%s257 + $0x388] sm:$0xff]
        %v427 = vld [vmem:[%s257 + $0x390] sm:$0xff]
        %v428 = vld [vmem:[%s257 + $0x398] sm:$0xff]
        %v429 = vld [vmem:[%s257 + $0x3a0] sm:$0xff]
        %v430 = vld [vmem:[%s257 + $0x3a8] sm:$0xff]
        %v431 = vld [vmem:[%s257 + $0x3b0] sm:$0xff]
        %v432 = vld [vmem:[%s257 + $0x3b8] sm:$0xff]
        %v433 = vld [vmem:[%s257 + $0x3c0] sm:$0xff]
        %v434 = vld [vmem:[%s257 + $0x3c8] sm:$0xff]
        %v435 = vld [vmem:[%s257 + $0x3d0] sm:$0xff]
        %v436 = vld [vmem:[%s257 + $0x3d8] sm:$0xff]
        %v437 = vld [vmem:[%s257 + $0x3e0] sm:$0xff]
        %v438 = vld [vmem:[%s257 + $0x3e8] sm:$0xff]
        %v439 = vld [vmem:[%s257 + $0x3f0] sm:$0xff]
        %v440 = vld [vmem:[%s257 + $0x3f8] sm:$0xff]
        %v441 = vld [vmem:[%s257 + $0x400] sm:$0xff]
        %v442 = vld [vmem:[%s257 + $0x408] sm:$0xff]
        %v443 = vld [vmem:[%s257 + $0x410] sm:$0xff]
        %v444 = vld [vmem:[%s257 + $0x418] sm:$0xff]
        %v445 = vld [vmem:[%s257 + $0x420] sm:$0xff]
        %v446 = vld [vmem:[%s257 + $0x428] sm:$0xff]
        %v447 = vld [vmem:[%s257 + $0x430] sm:$0xff]
        %v448 = vld [vmem:[%s257 + $0x438] sm:$0xff]
        %v449 = vld [vmem:[%s257 + $0x440] sm:$0xff]
        %v450 = vld [vmem:[%s257 + $0x448] sm:$0xff]
        %v451 = vld [vmem:[%s257 + $0x450] sm:$0xff]
        %v452 = vld [vmem:[%s257 + $0x458] sm:$0xff]
        %v453 = vld [vmem:[%s257 + $0x460] sm:$0xff]
        %v454 = vld [vmem:[%s257 + $0x468] sm:$0xff]
        %v455 = vld [vmem:[%s257 + $0x470] sm:$0xff]
        %v456 = vld [vmem:[%s257 + $0x478] sm:$0xff]
        %v457 = vld [vmem:[%s257 + $0x480] sm:$0xff]
        %v458 = vld [vmem:[%s257 + $0x488] sm:$0xff]
        %v459 = vld [vmem:[%s257 + $0x490] sm:$0xff]
        %v460 = vld [vmem:[%s257 + $0x498] sm:$0xff]
        %v461 = vld [vmem:[%s257 + $0x4a0] sm:$0xff]
        %v462 = vld [vmem:[%s257 + $0x4a8] sm:$0xff]
        %v463 = vld [vmem:[%s257 + $0x4b0] sm:$0xff]
        %v464 = vld [vmem:[%s257 + $0x4b8] sm:$0xff]
        %v465 = vld [vmem:[%s257 + $0x4c0] sm:$0xff]
        %v466 = vld [vmem:[%s257 + $0x4c8] sm:$0xff]
        %v467 = vld [vmem:[%s257 + $0x4d0] sm:$0xff]
        %v468 = vld [vmem:[%s257 + $0x4d8] sm:$0xff]
        %v469 = vld [vmem:[%s257 + $0x4e0] sm:$0xff]
        %v470 = vld [vmem:[%s257 + $0x4e8] sm:$0xff]
        %v471 = vld [vmem:[%s257 + $0x4f0] sm:$0xff]
        %v472 = vld [vmem:[%s257 + $0x4f8] sm:$0xff]
        %v473 = vld [vmem:[%s257 + $0x500] sm:$0xff]
        %v474 = vld [vmem:[%s257 + $0x508] sm:$0xff]
        %v475 = vld [vmem:[%s257 + $0x510] sm:$0xff]
        %v476 = vld [vmem:[%s257 + $0x518] sm:$0xff]
        %v477 = vld [vmem:[%s257 + $0x520] sm:$0xff]
        %v478 = vld [vmem:[%s257 + $0x528] sm:$0xff]
        %v479 = vld [vmem:[%s257 + $0x530] sm:$0xff]
        %v480 = vld [vmem:[%s257 + $0x538] sm:$0xff]
        %v481 = vld [vmem:[%s257 + $0x540] sm:$0xff]
        %v482 = vld [vmem:[%s257 + $0x548] sm:$0xff]
        %v483 = vld [vmem:[%s257 + $0x550] sm:$0xff]
        %v484 = vld [vmem:[%s257 + $0x558] sm:$0xff]
        %v485 = vld [vmem:[%s257 + $0x560] sm:$0xff]
        %v486 = vld [vmem:[%s257 + $0x568] sm:$0xff]
        %v487 = vld [vmem:[%s257 + $0x570] sm:$0xff]
        %v488 = vld [vmem:[%s257 + $0x578] sm:$0xff]
        %v489 = vld [vmem:[%s257 + $0x580] sm:$0xff]
        %v490 = vld [vmem:[%s257 + $0x588] sm:$0xff]
        %v491 = vld [vmem:[%s257 + $0x590] sm:$0xff]
        %v492 = vld [vmem:[%s257 + $0x598] sm:$0xff]
        %v493 = vld [vmem:[%s257 + $0x5a0] sm:$0xff]
        %v494 = vld [vmem:[%s257 + $0x5a8] sm:$0xff]
        %v495 = vld [vmem:[%s257 + $0x5b0] sm:$0xff]
        %v496 = vld [vmem:[%s257 + $0x5b8] sm:$0xff]
        %v497 = vld [vmem:[%s257 + $0x5c0] sm:$0xff]
        %v498 = vld [vmem:[%s257 + $0x5c8] sm:$0xff]
        %v499 = vld [vmem:[%s257 + $0x5d0] sm:$0xff]
        %v500 = vld [vmem:[%s257 + $0x5d8] sm:$0xff]
        %v501 = vld [vmem:[%s257 + $0x5e0] sm:$0xff]
        %v502 = vld [vmem:[%s257 + $0x5e8] sm:$0xff]
        %v503 = vld [vmem:[%s257 + $0x5f0] sm:$0xff]
        %v504 = vld [vmem:[%s257 + $0x5f8] sm:$0xff]
        %v505 = vld [vmem:[%s257 + $0x600] sm:$0xff]
        %v506 = vld [vmem:[%s257 + $0x608] sm:$0xff]
        %v507 = vld [vmem:[%s257 + $0x610] sm:$0xff]
        %v508 = vld [vmem:[%s257 + $0x618] sm:$0xff]
        %v509 = vld [vmem:[%s257 + $0x620] sm:$0xff]
        %v510 = vld [vmem:[%s257 + $0x628] sm:$0xff]
        %v511 = vld [vmem:[%s257 + $0x630] sm:$0xff]
        %v512 = vld [vmem:[%s257 + $0x638] sm:$0xff]
        %v513 = vld [vmem:[%s257 + $0x640] sm:$0xff]
        %v514 = vld [vmem:[%s257 + $0x648] sm:$0xff]
        %v515 = vld [vmem:[%s257 + $0x650] sm:$0xff]
        %v516 = vld [vmem:[%s257 + $0x658] sm:$0xff]
        %v517 = vld [vmem:[%s257 + $0x660] sm:$0xff]
        %v518 = vld [vmem:[%s257 + $0x668] sm:$0xff]
        %v519 = vld [vmem:[%s257 + $0x670] sm:$0xff]
        %v520 = vld [vmem:[%s257 + $0x678] sm:$0xff]
        %v521 = vld [vmem:[%s257 + $0x680] sm:$0xff]
        %v522 = vld [vmem:[%s257 + $0x688] sm:$0xff]
        %v523 = vld [vmem:[%s257 + $0x690] sm:$0xff]
        %v524 = vld [vmem:[%s257 + $0x698] sm:$0xff]
        %v525 = vld [vmem:[%s257 + $0x6a0] sm:$0xff]
        %v526 = vld [vmem:[%s257 + $0x6a8] sm:$0xff]
        %v527 = vld [vmem:[%s257 + $0x6b0] sm:$0xff]
        %v528 = vld [vmem:[%s257 + $0x6b8] sm:$0xff]
        %v529 = vld [vmem:[%s257 + $0x6c0] sm:$0xff]
        %v530 = vld [vmem:[%s257 + $0x6c8] sm:$0xff]
        %v531 = vld [vmem:[%s257 + $0x6d0] sm:$0xff]
        %v532 = vld [vmem:[%s257 + $0x6d8] sm:$0xff]
        %v533 = vld [vmem:[%s257 + $0x6e0] sm:$0xff]
        %v534 = vld [vmem:[%s257 + $0x6e8] sm:$0xff]
        %v535 = vld [vmem:[%s257 + $0x6f0] sm:$0xff]
        %v536 = vld [vmem:[%s257 + $0x6f8] sm:$0xff]
        %v537 = vld [vmem:[%s257 + $0x700] sm:$0xff]
        %v538 = vld [vmem:[%s257 + $0x708] sm:$0xff]
        %v539 = vld [vmem:[%s257 + $0x710] sm:$0xff]
        %v540 = vld [vmem:[%s257 + $0x718] sm:$0xff]
        %v541 = vld [vmem:[%s257 + $0x720] sm:$0xff]
        %v542 = vld [vmem:[%s257 + $0x728] sm:$0xff]
        %v543 = vld [vmem:[%s257 + $0x730] sm:$0xff]
        %v544 = vld [vmem:[%s257 + $0x738] sm:$0xff]
        %v545 = vld [vmem:[%s257 + $0x740] sm:$0xff]
        %v546 = vld [vmem:[%s257 + $0x748] sm:$0xff]
        %v547 = vld [vmem:[%s257 + $0x750] sm:$0xff]
        %v548 = vld [vmem:[%s257 + $0x758] sm:$0xff]
        %v549 = vld [vmem:[%s257 + $0x760] sm:$0xff]
        %v550 = vld [vmem:[%s257 + $0x768] sm:$0xff]
        %v551 = vld [vmem:[%s257 + $0x770] sm:$0xff]
        %v552 = vld [vmem:[%s257 + $0x778] sm:$0xff]
        %v553 = vld [vmem:[%s257 + $0x780] sm:$0xff]
        %v554 = vld [vmem:[%s257 + $0x788] sm:$0xff]
        %v555 = vld [vmem:[%s257 + $0x790] sm:$0xff]
        %v556 = vld [vmem:[%s257 + $0x798] sm:$0xff]
        %v557 = vld [vmem:[%s257 + $0x7a0] sm:$0xff]
        %v558 = vld [vmem:[%s257 + $0x7a8] sm:$0xff]
        %v559 = vld [vmem:[%s257 + $0x7b0] sm:$0xff]
        %v560 = vld [vmem:[%s257 + $0x7b8] sm:$0xff]
        %v561 = vld [vmem:[%s257 + $0x7c0] sm:$0xff]
        %v562 = vld [vmem:[%s257 + $0x7c8] sm:$0xff]
        %v563 = vld [vmem:[%s257 + $0x7d0] sm:$0xff]
        %v564 = vld [vmem:[%s257 + $0x7d8] sm:$0xff]
        %v565 = vld [vmem:[%s257 + $0x7e0] sm:$0xff]
        %v566 = vld [vmem:[%s257 + $0x7e8] sm:$0xff]
        %v567 = vld [vmem:[%s257 + $0x7f0] sm:$0xff]
        %v568 = vld [vmem:[%s257 + $0x7f8] sm:$0xff]
        %v569 = vld [vmem:[%s266] sm:$0xff]
        %v570 = vld [vmem:[%s266 + $0x8] sm:$0xff]
        %v571 = vld [vmem:[%s266 + $0x10] sm:$0xff]
        %v572 = vld [vmem:[%s266 + $0x18] sm:$0xff]
        %v573 = vld [vmem:[%s266 + $0x20] sm:$0xff]
        %v574 = vld [vmem:[%s266 + $0x28] sm:$0xff]
        %v575 = vld [vmem:[%s266 + $0x30] sm:$0xff]
        %v576 = vld [vmem:[%s266 + $0x38] sm:$0xff]
        %v577 = vld [vmem:[%s266 + $0x40] sm:$0xff]
        %v578 = vld [vmem:[%s266 + $0x48] sm:$0xff]
        %v579 = vld [vmem:[%s266 + $0x50] sm:$0xff]
        %v580 = vld [vmem:[%s266 + $0x58] sm:$0xff]
        %v581 = vld [vmem:[%s266 + $0x60] sm:$0xff]
        %v582 = vld [vmem:[%s266 + $0x68] sm:$0xff]
        %v583 = vld [vmem:[%s266 + $0x70] sm:$0xff]
        %v584 = vld [vmem:[%s266 + $0x78] sm:$0xff]
        %v585 = vld [vmem:[%s266 + $0x80] sm:$0xff]
        %v586 = vld [vmem:[%s266 + $0x88] sm:$0xff]
        %v587 = vld [vmem:[%s266 + $0x90] sm:$0xff]
        %v588 = vld [vmem:[%s266 + $0x98] sm:$0xff]
        %v589 = vld [vmem:[%s266 + $0xa0] sm:$0xff]
        %v590 = vld [vmem:[%s266 + $0xa8] sm:$0xff]
        %v591 = vld [vmem:[%s266 + $0xb0] sm:$0xff]
        %v592 = vld [vmem:[%s266 + $0xb8] sm:$0xff]
        %v593 = vld [vmem:[%s266 + $0xc0] sm:$0xff]
        %v594 = vld [vmem:[%s266 + $0xc8] sm:$0xff]
        %v595 = vld [vmem:[%s266 + $0xd0] sm:$0xff]
        %v596 = vld [vmem:[%s266 + $0xd8] sm:$0xff]
        %v597 = vld [vmem:[%s266 + $0xe0] sm:$0xff]
        %v598 = vld [vmem:[%s266 + $0xe8] sm:$0xff]
        %v599 = vld [vmem:[%s266 + $0xf0] sm:$0xff]
        %v600 = vld [vmem:[%s266 + $0xf8] sm:$0xff]
        %v601 = vld [vmem:[%s266 + $0x100] sm:$0xff]
        %v602 = vld [vmem:[%s266 + $0x108] sm:$0xff]
        %v603 = vld [vmem:[%s266 + $0x110] sm:$0xff]
        %v604 = vld [vmem:[%s266 + $0x118] sm:$0xff]
        %v605 = vld [vmem:[%s266 + $0x120] sm:$0xff]
        %v606 = vld [vmem:[%s266 + $0x128] sm:$0xff]
        %v607 = vld [vmem:[%s266 + $0x130] sm:$0xff]
        %v608 = vld [vmem:[%s266 + $0x138] sm:$0xff]
        %v609 = vld [vmem:[%s266 + $0x140] sm:$0xff]
        %v610 = vld [vmem:[%s266 + $0x148] sm:$0xff]
        %v611 = vld [vmem:[%s266 + $0x150] sm:$0xff]
        %v612 = vld [vmem:[%s266 + $0x158] sm:$0xff]
        %v613 = vld [vmem:[%s266 + $0x160] sm:$0xff]
        %v614 = vld [vmem:[%s266 + $0x168] sm:$0xff]
        %v615 = vld [vmem:[%s266 + $0x170] sm:$0xff]
        %v616 = vld [vmem:[%s266 + $0x178] sm:$0xff]
        %v617 = vld [vmem:[%s266 + $0x180] sm:$0xff]
        %v618 = vld [vmem:[%s266 + $0x188] sm:$0xff]
        %v619 = vld [vmem:[%s266 + $0x190] sm:$0xff]
        %v620 = vld [vmem:[%s266 + $0x198] sm:$0xff]
        %v621 = vld [vmem:[%s266 + $0x1a0] sm:$0xff]
        %v622 = vld [vmem:[%s266 + $0x1a8] sm:$0xff]
        %v623 = vld [vmem:[%s266 + $0x1b0] sm:$0xff]
        %v624 = vld [vmem:[%s266 + $0x1b8] sm:$0xff]
        %v625 = vld [vmem:[%s266 + $0x1c0] sm:$0xff]
        %v626 = vld [vmem:[%s266 + $0x1c8] sm:$0xff]
        %v627 = vld [vmem:[%s266 + $0x1d0] sm:$0xff]
        %v628 = vld [vmem:[%s266 + $0x1d8] sm:$0xff]
        %v629 = vld [vmem:[%s266 + $0x1e0] sm:$0xff]
        %v630 = vld [vmem:[%s266 + $0x1e8] sm:$0xff]
        %v631 = vld [vmem:[%s266 + $0x1f0] sm:$0xff]
        %v632 = vld [vmem:[%s266 + $0x1f8] sm:$0xff]
        %v633 = vld [vmem:[%s266 + $0x200] sm:$0xff]
        %v634 = vld [vmem:[%s266 + $0x208] sm:$0xff]
        %v635 = vld [vmem:[%s266 + $0x210] sm:$0xff]
        %v636 = vld [vmem:[%s266 + $0x218] sm:$0xff]
        %v637 = vld [vmem:[%s266 + $0x220] sm:$0xff]
        %v638 = vld [vmem:[%s266 + $0x228] sm:$0xff]
        %v639 = vld [vmem:[%s266 + $0x230] sm:$0xff]
        %v640 = vld [vmem:[%s266 + $0x238] sm:$0xff]
        %v641 = vld [vmem:[%s266 + $0x240] sm:$0xff]
        %v642 = vld [vmem:[%s266 + $0x248] sm:$0xff]
        %v643 = vld [vmem:[%s266 + $0x250] sm:$0xff]
        %v644 = vld [vmem:[%s266 + $0x258] sm:$0xff]
        %v645 = vld [vmem:[%s266 + $0x260] sm:$0xff]
        %v646 = vld [vmem:[%s266 + $0x268] sm:$0xff]
        %v647 = vld [vmem:[%s266 + $0x270] sm:$0xff]
        %v648 = vld [vmem:[%s266 + $0x278] sm:$0xff]
        %v649 = vld [vmem:[%s266 + $0x280] sm:$0xff]
        %v650 = vld [vmem:[%s266 + $0x288] sm:$0xff]
        %v651 = vld [vmem:[%s266 + $0x290] sm:$0xff]
        %v652 = vld [vmem:[%s266 + $0x298] sm:$0xff]
        %v653 = vld [vmem:[%s266 + $0x2a0] sm:$0xff]
        %v654 = vld [vmem:[%s266 + $0x2a8] sm:$0xff]
        %v655 = vld [vmem:[%s266 + $0x2b0] sm:$0xff]
        %v656 = vld [vmem:[%s266 + $0x2b8] sm:$0xff]
        %v657 = vld [vmem:[%s266 + $0x2c0] sm:$0xff]
        %v658 = vld [vmem:[%s266 + $0x2c8] sm:$0xff]
        %v659 = vld [vmem:[%s266 + $0x2d0] sm:$0xff]
        %v660 = vld [vmem:[%s266 + $0x2d8] sm:$0xff]
        %v661 = vld [vmem:[%s266 + $0x2e0] sm:$0xff]
        %v662 = vld [vmem:[%s266 + $0x2e8] sm:$0xff]
        %v663 = vld [vmem:[%s266 + $0x2f0] sm:$0xff]
        %v664 = vld [vmem:[%s266 + $0x2f8] sm:$0xff]
        %v665 = vld [vmem:[%s266 + $0x300] sm:$0xff]
        %v666 = vld [vmem:[%s266 + $0x308] sm:$0xff]
        %v667 = vld [vmem:[%s266 + $0x310] sm:$0xff]
        %v668 = vld [vmem:[%s266 + $0x318] sm:$0xff]
        %v669 = vld [vmem:[%s266 + $0x320] sm:$0xff]
        %v670 = vld [vmem:[%s266 + $0x328] sm:$0xff]
        %v671 = vld [vmem:[%s266 + $0x330] sm:$0xff]
        %v672 = vld [vmem:[%s266 + $0x338] sm:$0xff]
        %v673 = vld [vmem:[%s266 + $0x340] sm:$0xff]
        %v674 = vld [vmem:[%s266 + $0x348] sm:$0xff]
        %v675 = vld [vmem:[%s266 + $0x350] sm:$0xff]
        %v676 = vld [vmem:[%s266 + $0x358] sm:$0xff]
        %v677 = vld [vmem:[%s266 + $0x360] sm:$0xff]
        %v678 = vld [vmem:[%s266 + $0x368] sm:$0xff]
        %v679 = vld [vmem:[%s266 + $0x370] sm:$0xff]
        %v680 = vld [vmem:[%s266 + $0x378] sm:$0xff]
        %v681 = vld [vmem:[%s266 + $0x380] sm:$0xff]
        %v682 = vld [vmem:[%s266 + $0x388] sm:$0xff]
        %v683 = vld [vmem:[%s266 + $0x390] sm:$0xff]
        %v684 = vld [vmem:[%s266 + $0x398] sm:$0xff]
        %v685 = vld [vmem:[%s266 + $0x3a0] sm:$0xff]
        %v686 = vld [vmem:[%s266 + $0x3a8] sm:$0xff]
        %v687 = vld [vmem:[%s266 + $0x3b0] sm:$0xff]
        %v688 = vld [vmem:[%s266 + $0x3b8] sm:$0xff]
        %v689 = vld [vmem:[%s266 + $0x3c0] sm:$0xff]
        %v690 = vld [vmem:[%s266 + $0x3c8] sm:$0xff]
        %v691 = vld [vmem:[%s266 + $0x3d0] sm:$0xff]
        %v692 = vld [vmem:[%s266 + $0x3d8] sm:$0xff]
        %v693 = vld [vmem:[%s266 + $0x3e0] sm:$0xff]
        %v694 = vld [vmem:[%s266 + $0x3e8] sm:$0xff]
        %v695 = vld [vmem:[%s266 + $0x3f0] sm:$0xff]
        %v696 = vld [vmem:[%s266 + $0x3f8] sm:$0xff]
        %v697 = vld [vmem:[%s266 + $0x400] sm:$0xff]
        %v698 = vld [vmem:[%s266 + $0x408] sm:$0xff]
        %v699 = vld [vmem:[%s266 + $0x410] sm:$0xff]
        %v700 = vld [vmem:[%s266 + $0x418] sm:$0xff]
        %v701 = vld [vmem:[%s266 + $0x420] sm:$0xff]
        %v702 = vld [vmem:[%s266 + $0x428] sm:$0xff]
        %v703 = vld [vmem:[%s266 + $0x430] sm:$0xff]
        %v704 = vld [vmem:[%s266 + $0x438] sm:$0xff]
        %v705 = vld [vmem:[%s266 + $0x440] sm:$0xff]
        %v706 = vld [vmem:[%s266 + $0x448] sm:$0xff]
        %v707 = vld [vmem:[%s266 + $0x450] sm:$0xff]
        %v708 = vld [vmem:[%s266 + $0x458] sm:$0xff]
        %v709 = vld [vmem:[%s266 + $0x460] sm:$0xff]
        %v710 = vld [vmem:[%s266 + $0x468] sm:$0xff]
        %v711 = vld [vmem:[%s266 + $0x470] sm:$0xff]
        %v712 = vld [vmem:[%s266 + $0x478] sm:$0xff]
        %v713 = vld [vmem:[%s266 + $0x480] sm:$0xff]
        %v714 = vld [vmem:[%s266 + $0x488] sm:$0xff]
        %v715 = vld [vmem:[%s266 + $0x490] sm:$0xff]
        %v716 = vld [vmem:[%s266 + $0x498] sm:$0xff]
        %v717 = vld [vmem:[%s266 + $0x4a0] sm:$0xff]
        %v718 = vld [vmem:[%s266 + $0x4a8] sm:$0xff]
        %v719 = vld [vmem:[%s266 + $0x4b0] sm:$0xff]
        %v720 = vld [vmem:[%s266 + $0x4b8] sm:$0xff]
        %v721 = vld [vmem:[%s266 + $0x4c0] sm:$0xff]
        %v722 = vld [vmem:[%s266 + $0x4c8] sm:$0xff]
        %v723 = vld [vmem:[%s266 + $0x4d0] sm:$0xff]
        %v724 = vld [vmem:[%s266 + $0x4d8] sm:$0xff]
        %v725 = vld [vmem:[%s266 + $0x4e0] sm:$0xff]
        %v726 = vld [vmem:[%s266 + $0x4e8] sm:$0xff]
        %v727 = vld [vmem:[%s266 + $0x4f0] sm:$0xff]
        %v728 = vld [vmem:[%s266 + $0x4f8] sm:$0xff]
        %v729 = vld [vmem:[%s266 + $0x500] sm:$0xff]
        %v730 = vld [vmem:[%s266 + $0x508] sm:$0xff]
        %v731 = vld [vmem:[%s266 + $0x510] sm:$0xff]
        %v732 = vld [vmem:[%s266 + $0x518] sm:$0xff]
        %v733 = vld [vmem:[%s266 + $0x520] sm:$0xff]
        %v734 = vld [vmem:[%s266 + $0x528] sm:$0xff]
        %v735 = vld [vmem:[%s266 + $0x530] sm:$0xff]
        %v736 = vld [vmem:[%s266 + $0x538] sm:$0xff]
        %v737 = vld [vmem:[%s266 + $0x540] sm:$0xff]
        %v738 = vld [vmem:[%s266 + $0x548] sm:$0xff]
        %v739 = vld [vmem:[%s266 + $0x550] sm:$0xff]
        %v740 = vld [vmem:[%s266 + $0x558] sm:$0xff]
        %v741 = vld [vmem:[%s266 + $0x560] sm:$0xff]
        %v742 = vld [vmem:[%s266 + $0x568] sm:$0xff]
        %v743 = vld [vmem:[%s266 + $0x570] sm:$0xff]
        %v744 = vld [vmem:[%s266 + $0x578] sm:$0xff]
        %v745 = vld [vmem:[%s266 + $0x580] sm:$0xff]
        %v746 = vld [vmem:[%s266 + $0x588] sm:$0xff]
        %v747 = vld [vmem:[%s266 + $0x590] sm:$0xff]
        %v748 = vld [vmem:[%s266 + $0x598] sm:$0xff]
        %v749 = vld [vmem:[%s266 + $0x5a0] sm:$0xff]
        %v750 = vld [vmem:[%s266 + $0x5a8] sm:$0xff]
        %v751 = vld [vmem:[%s266 + $0x5b0] sm:$0xff]
        %v752 = vld [vmem:[%s266 + $0x5b8] sm:$0xff]
        %v753 = vld [vmem:[%s266 + $0x5c0] sm:$0xff]
        %v754 = vld [vmem:[%s266 + $0x5c8] sm:$0xff]
        %v755 = vld [vmem:[%s266 + $0x5d0] sm:$0xff]
        %v756 = vld [vmem:[%s266 + $0x5d8] sm:$0xff]
        %v757 = vld [vmem:[%s266 + $0x5e0] sm:$0xff]
        %v758 = vld [vmem:[%s266 + $0x5e8] sm:$0xff]
        %v759 = vld [vmem:[%s266 + $0x5f0] sm:$0xff]
        %v760 = vld [vmem:[%s266 + $0x5f8] sm:$0xff]
        %v761 = vld [vmem:[%s266 + $0x600] sm:$0xff]
        %v762 = vld [vmem:[%s266 + $0x608] sm:$0xff]
        %v763 = vld [vmem:[%s266 + $0x610] sm:$0xff]
        %v764 = vld [vmem:[%s266 + $0x618] sm:$0xff]
        %v765 = vld [vmem:[%s266 + $0x620] sm:$0xff]
        %v766 = vld [vmem:[%s266 + $0x628] sm:$0xff]
        %v767 = vld [vmem:[%s266 + $0x630] sm:$0xff]
        %v768 = vld [vmem:[%s266 + $0x638] sm:$0xff]
        %v769 = vld [vmem:[%s266 + $0x640] sm:$0xff]
        %v770 = vld [vmem:[%s266 + $0x648] sm:$0xff]
        %v771 = vld [vmem:[%s266 + $0x650] sm:$0xff]
        %v772 = vld [vmem:[%s266 + $0x658] sm:$0xff]
        %v773 = vld [vmem:[%s266 + $0x660] sm:$0xff]
        %v774 = vld [vmem:[%s266 + $0x668] sm:$0xff]
        %v775 = vld [vmem:[%s266 + $0x670] sm:$0xff]
        %v776 = vld [vmem:[%s266 + $0x678] sm:$0xff]
        %v777 = vld [vmem:[%s266 + $0x680] sm:$0xff]
        %v778 = vld [vmem:[%s266 + $0x688] sm:$0xff]
        %v779 = vld [vmem:[%s266 + $0x690] sm:$0xff]
        %v780 = vld [vmem:[%s266 + $0x698] sm:$0xff]
        %v781 = vld [vmem:[%s266 + $0x6a0] sm:$0xff]
        %v782 = vld [vmem:[%s266 + $0x6a8] sm:$0xff]
        %v783 = vld [vmem:[%s266 + $0x6b0] sm:$0xff]
        %v784 = vld [vmem:[%s266 + $0x6b8] sm:$0xff]
        %v785 = vld [vmem:[%s266 + $0x6c0] sm:$0xff]
        %v786 = vld [vmem:[%s266 + $0x6c8] sm:$0xff]
        %v787 = vld [vmem:[%s266 + $0x6d0] sm:$0xff]
        %v788 = vld [vmem:[%s266 + $0x6d8] sm:$0xff]
        %v789 = vld [vmem:[%s266 + $0x6e0] sm:$0xff]
        %v790 = vld [vmem:[%s266 + $0x6e8] sm:$0xff]
        %v791 = vld [vmem:[%s266 + $0x6f0] sm:$0xff]
        %v792 = vld [vmem:[%s266 + $0x6f8] sm:$0xff]
        %v793 = vld [vmem:[%s266 + $0x700] sm:$0xff]
        %v794 = vld [vmem:[%s266 + $0x708] sm:$0xff]
        %v795 = vld [vmem:[%s266 + $0x710] sm:$0xff]
        %v796 = vld [vmem:[%s266 + $0x718] sm:$0xff]
        %v797 = vld [vmem:[%s266 + $0x720] sm:$0xff]
        %v798 = vld [vmem:[%s266 + $0x728] sm:$0xff]
        %v799 = vld [vmem:[%s266 + $0x730] sm:$0xff]
        %v800 = vld [vmem:[%s266 + $0x738] sm:$0xff]
        %v801 = vld [vmem:[%s266 + $0x740] sm:$0xff]
        %v802 = vld [vmem:[%s266 + $0x748] sm:$0xff]
        %v803 = vld [vmem:[%s266 + $0x750] sm:$0xff]
        %v804 = vld [vmem:[%s266 + $0x758] sm:$0xff]
        %v805 = vld [vmem:[%s266 + $0x760] sm:$0xff]
        %v806 = vld [vmem:[%s266 + $0x768] sm:$0xff]
        %v807 = vld [vmem:[%s266 + $0x770] sm:$0xff]
        %v808 = vld [vmem:[%s266 + $0x778] sm:$0xff]
        %v809 = vld [vmem:[%s266 + $0x780] sm:$0xff]
        %v810 = vld [vmem:[%s266 + $0x788] sm:$0xff]
        %v811 = vld [vmem:[%s266 + $0x790] sm:$0xff]
        %v812 = vld [vmem:[%s266 + $0x798] sm:$0xff]
        %v813 = vld [vmem:[%s266 + $0x7a0] sm:$0xff]
        %v814 = vld [vmem:[%s266 + $0x7a8] sm:$0xff]
        %v815 = vld [vmem:[%s266 + $0x7b0] sm:$0xff]
        %v816 = vld [vmem:[%s266 + $0x7b8] sm:$0xff]
        %v817 = vld [vmem:[%s266 + $0x7c0] sm:$0xff]
        %v818 = vld [vmem:[%s266 + $0x7c8] sm:$0xff]
        %v819 = vld [vmem:[%s266 + $0x7d0] sm:$0xff]
        %v820 = vld [vmem:[%s266 + $0x7d8] sm:$0xff]
        %v821 = vld [vmem:[%s266 + $0x7e0] sm:$0xff]
        %v822 = vld [vmem:[%s266 + $0x7e8] sm:$0xff]
        %v823 = vld [vmem:[%s266 + $0x7f0] sm:$0xff]
        %v824 = vld [vmem:[%s266 + $0x7f8] sm:$0xff]
        %825 = vmax.xlane.f32.xlu0 %v313
        %v826 = vpop.xlane.xlu0 %825
        %827 = vmax.xlane.f32.xlu0 %v314
        %v828 = vpop.xlane.xlu0 %827
        %829 = vmax.xlane.f32.xlu0 %v315
        %v830 = vpop.xlane.xlu0 %829
        %831 = vmax.xlane.f32.xlu0 %v316
        %v832 = vpop.xlane.xlu0 %831
        %833 = vmax.xlane.f32.xlu0 %v317
        %v834 = vpop.xlane.xlu0 %833
        %835 = vmax.xlane.f32.xlu0 %v318
        %v836 = vpop.xlane.xlu0 %835
        %837 = vmax.xlane.f32.xlu0 %v319
        %v838 = vpop.xlane.xlu0 %837
        %839 = vmax.xlane.f32.xlu0 %v320
        %v840 = vpop.xlane.xlu0 %839
        %841 = vmax.xlane.f32.xlu0 %v321
        %v842 = vpop.xlane.xlu0 %841
        %843 = vmax.xlane.f32.xlu0 %v322
        %v844 = vpop.xlane.xlu0 %843
        %845 = vmax.xlane.f32.xlu0 %v323
        %v846 = vpop.xlane.xlu0 %845
        %847 = vmax.xlane.f32.xlu0 %v324
        %v848 = vpop.xlane.xlu0 %847
        %849 = vmax.xlane.f32.xlu0 %v325
        %v850 = vpop.xlane.xlu0 %849
        %851 = vmax.xlane.f32.xlu0 %v326
        %v852 = vpop.xlane.xlu0 %851
        %853 = vmax.xlane.f32.xlu0 %v327
        %v854 = vpop.xlane.xlu0 %853
        %855 = vmax.xlane.f32.xlu0 %v328
        %v856 = vpop.xlane.xlu0 %855
        %857 = vmax.xlane.f32.xlu0 %v329
        %v858 = vpop.xlane.xlu0 %857
        %859 = vmax.xlane.f32.xlu0 %v330
        %v860 = vpop.xlane.xlu0 %859
        %861 = vmax.xlane.f32.xlu0 %v331
        %v862 = vpop.xlane.xlu0 %861
        %863 = vmax.xlane.f32.xlu0 %v332
        %v864 = vpop.xlane.xlu0 %863
        %865 = vmax.xlane.f32.xlu0 %v333
        %v866 = vpop.xlane.xlu0 %865
        %867 = vmax.xlane.f32.xlu0 %v334
        %v868 = vpop.xlane.xlu0 %867
        %869 = vmax.xlane.f32.xlu0 %v335
        %v870 = vpop.xlane.xlu0 %869
        %871 = vmax.xlane.f32.xlu0 %v336
        %v872 = vpop.xlane.xlu0 %871
        %873 = vmax.xlane.f32.xlu0 %v337
        %v874 = vpop.xlane.xlu0 %873
        %875 = vmax.xlane.f32.xlu0 %v338
        %v876 = vpop.xlane.xlu0 %875
        %877 = vmax.xlane.f32.xlu0 %v339
        %v878 = vpop.xlane.xlu0 %877
        %879 = vmax.xlane.f32.xlu0 %v340
        %v880 = vpop.xlane.xlu0 %879
        %881 = vmax.xlane.f32.xlu0 %v341
        %v882 = vpop.xlane.xlu0 %881
        %883 = vmax.xlane.f32.xlu0 %v342
        %v884 = vpop.xlane.xlu0 %883
        %885 = vmax.xlane.f32.xlu0 %v343
        %v886 = vpop.xlane.xlu0 %885
        %887 = vmax.xlane.f32.xlu0 %v344
        %v888 = vpop.xlane.xlu0 %887
        %889 = vmax.xlane.f32.xlu0 %v345
        %v890 = vpop.xlane.xlu0 %889
        %891 = vmax.xlane.f32.xlu0 %v346
        %v892 = vpop.xlane.xlu0 %891
        %893 = vmax.xlane.f32.xlu0 %v347
        %v894 = vpop.xlane.xlu0 %893
        %895 = vmax.xlane.f32.xlu0 %v348
        %v896 = vpop.xlane.xlu0 %895
        %897 = vmax.xlane.f32.xlu0 %v349
        %v898 = vpop.xlane.xlu0 %897
        %899 = vmax.xlane.f32.xlu0 %v350
        %v900 = vpop.xlane.xlu0 %899
        %901 = vmax.xlane.f32.xlu0 %v351
        %v902 = vpop.xlane.xlu0 %901
        %903 = vmax.xlane.f32.xlu0 %v352
        %v904 = vpop.xlane.xlu0 %903
        %905 = vmax.xlane.f32.xlu0 %v353
        %v906 = vpop.xlane.xlu0 %905
        %907 = vmax.xlane.f32.xlu0 %v354
        %v908 = vpop.xlane.xlu0 %907
        %909 = vmax.xlane.f32.xlu0 %v355
        %v910 = vpop.xlane.xlu0 %909
        %911 = vmax.xlane.f32.xlu0 %v356
        %v912 = vpop.xlane.xlu0 %911
        %913 = vmax.xlane.f32.xlu0 %v357
        %v914 = vpop.xlane.xlu0 %913
        %915 = vmax.xlane.f32.xlu0 %v358
        %v916 = vpop.xlane.xlu0 %915
        %917 = vmax.xlane.f32.xlu0 %v359
        %v918 = vpop.xlane.xlu0 %917
        %919 = vmax.xlane.f32.xlu0 %v360
        %v920 = vpop.xlane.xlu0 %919
        %921 = vmax.xlane.f32.xlu0 %v361
        %v922 = vpop.xlane.xlu0 %921
        %923 = vmax.xlane.f32.xlu0 %v362
        %v924 = vpop.xlane.xlu0 %923
        %925 = vmax.xlane.f32.xlu0 %v363
        %v926 = vpop.xlane.xlu0 %925
        %927 = vmax.xlane.f32.xlu0 %v364
        %v928 = vpop.xlane.xlu0 %927
        %929 = vmax.xlane.f32.xlu0 %v365
        %v930 = vpop.xlane.xlu0 %929
        %931 = vmax.xlane.f32.xlu0 %v366
        %v932 = vpop.xlane.xlu0 %931
        %933 = vmax.xlane.f32.xlu0 %v367
        %v934 = vpop.xlane.xlu0 %933
        %935 = vmax.xlane.f32.xlu0 %v368
        %v936 = vpop.xlane.xlu0 %935
        %937 = vmax.xlane.f32.xlu0 %v369
        %v938 = vpop.xlane.xlu0 %937
        %939 = vmax.xlane.f32.xlu0 %v370
        %v940 = vpop.xlane.xlu0 %939
        %941 = vmax.xlane.f32.xlu0 %v371
        %v942 = vpop.xlane.xlu0 %941
        %943 = vmax.xlane.f32.xlu0 %v372
        %v944 = vpop.xlane.xlu0 %943
        %945 = vmax.xlane.f32.xlu0 %v373
        %v946 = vpop.xlane.xlu0 %945
        %947 = vmax.xlane.f32.xlu0 %v374
        %v948 = vpop.xlane.xlu0 %947
        %949 = vmax.xlane.f32.xlu0 %v375
        %v950 = vpop.xlane.xlu0 %949
        %951 = vmax.xlane.f32.xlu0 %v376
        %v952 = vpop.xlane.xlu0 %951
        %953 = vmax.xlane.f32.xlu0 %v377
        %v954 = vpop.xlane.xlu0 %953
        %955 = vmax.xlane.f32.xlu0 %v378
        %v956 = vpop.xlane.xlu0 %955
        %957 = vmax.xlane.f32.xlu0 %v379
        %v958 = vpop.xlane.xlu0 %957
        %959 = vmax.xlane.f32.xlu0 %v380
        %v960 = vpop.xlane.xlu0 %959
        %961 = vmax.xlane.f32.xlu0 %v381
        %v962 = vpop.xlane.xlu0 %961
        %963 = vmax.xlane.f32.xlu0 %v382
        %v964 = vpop.xlane.xlu0 %963
        %965 = vmax.xlane.f32.xlu0 %v383
        %v966 = vpop.xlane.xlu0 %965
        %967 = vmax.xlane.f32.xlu0 %v384
        %v968 = vpop.xlane.xlu0 %967
        %969 = vmax.xlane.f32.xlu0 %v385
        %v970 = vpop.xlane.xlu0 %969
        %971 = vmax.xlane.f32.xlu0 %v386
        %v972 = vpop.xlane.xlu0 %971
        %973 = vmax.xlane.f32.xlu0 %v387
        %v974 = vpop.xlane.xlu0 %973
        %975 = vmax.xlane.f32.xlu0 %v388
        %v976 = vpop.xlane.xlu0 %975
        %977 = vmax.xlane.f32.xlu0 %v389
        %v978 = vpop.xlane.xlu0 %977
        %979 = vmax.xlane.f32.xlu0 %v390
        %v980 = vpop.xlane.xlu0 %979
        %981 = vmax.xlane.f32.xlu0 %v391
        %v982 = vpop.xlane.xlu0 %981
        %983 = vmax.xlane.f32.xlu0 %v392
        %v984 = vpop.xlane.xlu0 %983
        %985 = vmax.xlane.f32.xlu0 %v393
        %v986 = vpop.xlane.xlu0 %985
        %987 = vmax.xlane.f32.xlu0 %v394
        %v988 = vpop.xlane.xlu0 %987
        %989 = vmax.xlane.f32.xlu0 %v395
        %v990 = vpop.xlane.xlu0 %989
        %991 = vmax.xlane.f32.xlu0 %v396
        %v992 = vpop.xlane.xlu0 %991
        %993 = vmax.xlane.f32.xlu0 %v397
        %v994 = vpop.xlane.xlu0 %993
        %995 = vmax.xlane.f32.xlu0 %v398
        %v996 = vpop.xlane.xlu0 %995
        %997 = vmax.xlane.f32.xlu0 %v399
        %v998 = vpop.xlane.xlu0 %997
        %999 = vmax.xlane.f32.xlu0 %v400
        %v1000 = vpop.xlane.xlu0 %999
        %1001 = vmax.xlane.f32.xlu0 %v401
        %v1002 = vpop.xlane.xlu0 %1001
        %1003 = vmax.xlane.f32.xlu0 %v402
        %v1004 = vpop.xlane.xlu0 %1003
        %1005 = vmax.xlane.f32.xlu0 %v403
        %v1006 = vpop.xlane.xlu0 %1005
        %1007 = vmax.xlane.f32.xlu0 %v404
        %v1008 = vpop.xlane.xlu0 %1007
        %1009 = vmax.xlane.f32.xlu0 %v405
        %v1010 = vpop.xlane.xlu0 %1009
        %1011 = vmax.xlane.f32.xlu0 %v406
        %v1012 = vpop.xlane.xlu0 %1011
        %1013 = vmax.xlane.f32.xlu0 %v407
        %v1014 = vpop.xlane.xlu0 %1013
        %1015 = vmax.xlane.f32.xlu0 %v408
        %v1016 = vpop.xlane.xlu0 %1015
        %1017 = vmax.xlane.f32.xlu0 %v409
        %v1018 = vpop.xlane.xlu0 %1017
        %1019 = vmax.xlane.f32.xlu0 %v410
        %v1020 = vpop.xlane.xlu0 %1019
        %1021 = vmax.xlane.f32.xlu0 %v411
        %v1022 = vpop.xlane.xlu0 %1021
        %1023 = vmax.xlane.f32.xlu0 %v412
        %v1024 = vpop.xlane.xlu0 %1023
        %1025 = vmax.xlane.f32.xlu0 %v413
        %v1026 = vpop.xlane.xlu0 %1025
        %1027 = vmax.xlane.f32.xlu0 %v414
        %v1028 = vpop.xlane.xlu0 %1027
        %1029 = vmax.xlane.f32.xlu0 %v415
        %v1030 = vpop.xlane.xlu0 %1029
        %1031 = vmax.xlane.f32.xlu0 %v416
        %v1032 = vpop.xlane.xlu0 %1031
        %1033 = vmax.xlane.f32.xlu0 %v417
        %v1034 = vpop.xlane.xlu0 %1033
        %1035 = vmax.xlane.f32.xlu0 %v418
        %v1036 = vpop.xlane.xlu0 %1035
        %1037 = vmax.xlane.f32.xlu0 %v419
        %v1038 = vpop.xlane.xlu0 %1037
        %1039 = vmax.xlane.f32.xlu0 %v420
        %v1040 = vpop.xlane.xlu0 %1039
        %1041 = vmax.xlane.f32.xlu0 %v421
        %v1042 = vpop.xlane.xlu0 %1041
        %1043 = vmax.xlane.f32.xlu0 %v422
        %v1044 = vpop.xlane.xlu0 %1043
        %1045 = vmax.xlane.f32.xlu0 %v423
        %v1046 = vpop.xlane.xlu0 %1045
        %1047 = vmax.xlane.f32.xlu0 %v424
        %v1048 = vpop.xlane.xlu0 %1047
        %1049 = vmax.xlane.f32.xlu0 %v425
        %v1050 = vpop.xlane.xlu0 %1049
        %1051 = vmax.xlane.f32.xlu0 %v426
        %v1052 = vpop.xlane.xlu0 %1051
        %1053 = vmax.xlane.f32.xlu0 %v427
        %v1054 = vpop.xlane.xlu0 %1053
        %1055 = vmax.xlane.f32.xlu0 %v428
        %v1056 = vpop.xlane.xlu0 %1055
        %1057 = vmax.xlane.f32.xlu0 %v429
        %v1058 = vpop.xlane.xlu0 %1057
        %1059 = vmax.xlane.f32.xlu0 %v430
        %v1060 = vpop.xlane.xlu0 %1059
        %1061 = vmax.xlane.f32.xlu0 %v431
        %v1062 = vpop.xlane.xlu0 %1061
        %1063 = vmax.xlane.f32.xlu0 %v432
        %v1064 = vpop.xlane.xlu0 %1063
        %1065 = vmax.xlane.f32.xlu0 %v433
        %v1066 = vpop.xlane.xlu0 %1065
        %1067 = vmax.xlane.f32.xlu0 %v434
        %v1068 = vpop.xlane.xlu0 %1067
        %1069 = vmax.xlane.f32.xlu0 %v435
        %v1070 = vpop.xlane.xlu0 %1069
        %1071 = vmax.xlane.f32.xlu0 %v436
        %v1072 = vpop.xlane.xlu0 %1071
        %1073 = vmax.xlane.f32.xlu0 %v437
        %v1074 = vpop.xlane.xlu0 %1073
        %1075 = vmax.xlane.f32.xlu0 %v438
        %v1076 = vpop.xlane.xlu0 %1075
        %1077 = vmax.xlane.f32.xlu0 %v439
        %v1078 = vpop.xlane.xlu0 %1077
        %1079 = vmax.xlane.f32.xlu0 %v440
        %v1080 = vpop.xlane.xlu0 %1079
        %1081 = vmax.xlane.f32.xlu0 %v441
        %v1082 = vpop.xlane.xlu0 %1081
        %1083 = vmax.xlane.f32.xlu0 %v442
        %v1084 = vpop.xlane.xlu0 %1083
        %1085 = vmax.xlane.f32.xlu0 %v443
        %v1086 = vpop.xlane.xlu0 %1085
        %1087 = vmax.xlane.f32.xlu0 %v444
        %v1088 = vpop.xlane.xlu0 %1087
        %1089 = vmax.xlane.f32.xlu0 %v445
        %v1090 = vpop.xlane.xlu0 %1089
        %1091 = vmax.xlane.f32.xlu0 %v446
        %v1092 = vpop.xlane.xlu0 %1091
        %1093 = vmax.xlane.f32.xlu0 %v447
        %v1094 = vpop.xlane.xlu0 %1093
        %1095 = vmax.xlane.f32.xlu0 %v448
        %v1096 = vpop.xlane.xlu0 %1095
        %1097 = vmax.xlane.f32.xlu0 %v449
        %v1098 = vpop.xlane.xlu0 %1097
        %1099 = vmax.xlane.f32.xlu0 %v450
        %v1100 = vpop.xlane.xlu0 %1099
        %1101 = vmax.xlane.f32.xlu0 %v451
        %v1102 = vpop.xlane.xlu0 %1101
        %1103 = vmax.xlane.f32.xlu0 %v452
        %v1104 = vpop.xlane.xlu0 %1103
        %1105 = vmax.xlane.f32.xlu0 %v453
        %v1106 = vpop.xlane.xlu0 %1105
        %1107 = vmax.xlane.f32.xlu0 %v454
        %v1108 = vpop.xlane.xlu0 %1107
        %1109 = vmax.xlane.f32.xlu0 %v455
        %v1110 = vpop.xlane.xlu0 %1109
        %1111 = vmax.xlane.f32.xlu0 %v456
        %v1112 = vpop.xlane.xlu0 %1111
        %1113 = vmax.xlane.f32.xlu0 %v457
        %v1114 = vpop.xlane.xlu0 %1113
        %1115 = vmax.xlane.f32.xlu0 %v458
        %v1116 = vpop.xlane.xlu0 %1115
        %1117 = vmax.xlane.f32.xlu0 %v459
        %v1118 = vpop.xlane.xlu0 %1117
        %1119 = vmax.xlane.f32.xlu0 %v460
        %v1120 = vpop.xlane.xlu0 %1119
        %1121 = vmax.xlane.f32.xlu0 %v461
        %v1122 = vpop.xlane.xlu0 %1121
        %1123 = vmax.xlane.f32.xlu0 %v462
        %v1124 = vpop.xlane.xlu0 %1123
        %1125 = vmax.xlane.f32.xlu0 %v463
        %v1126 = vpop.xlane.xlu0 %1125
        %1127 = vmax.xlane.f32.xlu0 %v464
        %v1128 = vpop.xlane.xlu0 %1127
        %1129 = vmax.xlane.f32.xlu0 %v465
        %v1130 = vpop.xlane.xlu0 %1129
        %1131 = vmax.xlane.f32.xlu0 %v466
        %v1132 = vpop.xlane.xlu0 %1131
        %1133 = vmax.xlane.f32.xlu0 %v467
        %v1134 = vpop.xlane.xlu0 %1133
        %1135 = vmax.xlane.f32.xlu0 %v468
        %v1136 = vpop.xlane.xlu0 %1135
        %1137 = vmax.xlane.f32.xlu0 %v469
        %v1138 = vpop.xlane.xlu0 %1137
        %1139 = vmax.xlane.f32.xlu0 %v470
        %v1140 = vpop.xlane.xlu0 %1139
        %1141 = vmax.xlane.f32.xlu0 %v471
        %v1142 = vpop.xlane.xlu0 %1141
        %1143 = vmax.xlane.f32.xlu0 %v472
        %v1144 = vpop.xlane.xlu0 %1143
        %1145 = vmax.xlane.f32.xlu0 %v473
        %v1146 = vpop.xlane.xlu0 %1145
        %1147 = vmax.xlane.f32.xlu0 %v474
        %v1148 = vpop.xlane.xlu0 %1147
        %1149 = vmax.xlane.f32.xlu0 %v475
        %v1150 = vpop.xlane.xlu0 %1149
        %1151 = vmax.xlane.f32.xlu0 %v476
        %v1152 = vpop.xlane.xlu0 %1151
        %1153 = vmax.xlane.f32.xlu0 %v477
        %v1154 = vpop.xlane.xlu0 %1153
        %1155 = vmax.xlane.f32.xlu0 %v478
        %v1156 = vpop.xlane.xlu0 %1155
        %1157 = vmax.xlane.f32.xlu0 %v479
        %v1158 = vpop.xlane.xlu0 %1157
        %1159 = vmax.xlane.f32.xlu0 %v480
        %v1160 = vpop.xlane.xlu0 %1159
        %1161 = vmax.xlane.f32.xlu0 %v481
        %v1162 = vpop.xlane.xlu0 %1161
        %1163 = vmax.xlane.f32.xlu0 %v482
        %v1164 = vpop.xlane.xlu0 %1163
        %1165 = vmax.xlane.f32.xlu0 %v483
        %v1166 = vpop.xlane.xlu0 %1165
        %1167 = vmax.xlane.f32.xlu0 %v484
        %v1168 = vpop.xlane.xlu0 %1167
        %1169 = vmax.xlane.f32.xlu0 %v485
        %v1170 = vpop.xlane.xlu0 %1169
        %1171 = vmax.xlane.f32.xlu0 %v486
        %v1172 = vpop.xlane.xlu0 %1171
        %1173 = vmax.xlane.f32.xlu0 %v487
        %v1174 = vpop.xlane.xlu0 %1173
        %1175 = vmax.xlane.f32.xlu0 %v488
        %v1176 = vpop.xlane.xlu0 %1175
        %1177 = vmax.xlane.f32.xlu0 %v489
        %v1178 = vpop.xlane.xlu0 %1177
        %1179 = vmax.xlane.f32.xlu0 %v490
        %v1180 = vpop.xlane.xlu0 %1179
        %1181 = vmax.xlane.f32.xlu0 %v491
        %v1182 = vpop.xlane.xlu0 %1181
        %1183 = vmax.xlane.f32.xlu0 %v492
        %v1184 = vpop.xlane.xlu0 %1183
        %1185 = vmax.xlane.f32.xlu0 %v493
        %v1186 = vpop.xlane.xlu0 %1185
        %1187 = vmax.xlane.f32.xlu0 %v494
        %v1188 = vpop.xlane.xlu0 %1187
        %1189 = vmax.xlane.f32.xlu0 %v495
        %v1190 = vpop.xlane.xlu0 %1189
        %1191 = vmax.xlane.f32.xlu0 %v496
        %v1192 = vpop.xlane.xlu0 %1191
        %1193 = vmax.xlane.f32.xlu0 %v497
        %v1194 = vpop.xlane.xlu0 %1193
        %1195 = vmax.xlane.f32.xlu0 %v498
        %v1196 = vpop.xlane.xlu0 %1195
        %1197 = vmax.xlane.f32.xlu0 %v499
        %v1198 = vpop.xlane.xlu0 %1197
        %1199 = vmax.xlane.f32.xlu0 %v500
        %v1200 = vpop.xlane.xlu0 %1199
        %1201 = vmax.xlane.f32.xlu0 %v501
        %v1202 = vpop.xlane.xlu0 %1201
        %1203 = vmax.xlane.f32.xlu0 %v502
        %v1204 = vpop.xlane.xlu0 %1203
        %1205 = vmax.xlane.f32.xlu0 %v503
        %v1206 = vpop.xlane.xlu0 %1205
        %1207 = vmax.xlane.f32.xlu0 %v504
        %v1208 = vpop.xlane.xlu0 %1207
        %1209 = vmax.xlane.f32.xlu0 %v505
        %v1210 = vpop.xlane.xlu0 %1209
        %1211 = vmax.xlane.f32.xlu0 %v506
        %v1212 = vpop.xlane.xlu0 %1211
        %1213 = vmax.xlane.f32.xlu0 %v507
        %v1214 = vpop.xlane.xlu0 %1213
        %1215 = vmax.xlane.f32.xlu0 %v508
        %v1216 = vpop.xlane.xlu0 %1215
        %1217 = vmax.xlane.f32.xlu0 %v509
        %v1218 = vpop.xlane.xlu0 %1217
        %1219 = vmax.xlane.f32.xlu0 %v510
        %v1220 = vpop.xlane.xlu0 %1219
        %1221 = vmax.xlane.f32.xlu0 %v511
        %v1222 = vpop.xlane.xlu0 %1221
        %1223 = vmax.xlane.f32.xlu0 %v512
        %v1224 = vpop.xlane.xlu0 %1223
        %1225 = vmax.xlane.f32.xlu0 %v513
        %v1226 = vpop.xlane.xlu0 %1225
        %1227 = vmax.xlane.f32.xlu0 %v514
        %v1228 = vpop.xlane.xlu0 %1227
        %1229 = vmax.xlane.f32.xlu0 %v515
        %v1230 = vpop.xlane.xlu0 %1229
        %1231 = vmax.xlane.f32.xlu0 %v516
        %v1232 = vpop.xlane.xlu0 %1231
        %1233 = vmax.xlane.f32.xlu0 %v517
        %v1234 = vpop.xlane.xlu0 %1233
        %1235 = vmax.xlane.f32.xlu0 %v518
        %v1236 = vpop.xlane.xlu0 %1235
        %1237 = vmax.xlane.f32.xlu0 %v519
        %v1238 = vpop.xlane.xlu0 %1237
        %1239 = vmax.xlane.f32.xlu0 %v520
        %v1240 = vpop.xlane.xlu0 %1239
        %1241 = vmax.xlane.f32.xlu0 %v521
        %v1242 = vpop.xlane.xlu0 %1241
        %1243 = vmax.xlane.f32.xlu0 %v522
        %v1244 = vpop.xlane.xlu0 %1243
        %1245 = vmax.xlane.f32.xlu0 %v523
        %v1246 = vpop.xlane.xlu0 %1245
        %1247 = vmax.xlane.f32.xlu0 %v524
        %v1248 = vpop.xlane.xlu0 %1247
        %1249 = vmax.xlane.f32.xlu0 %v525
        %v1250 = vpop.xlane.xlu0 %1249
        %1251 = vmax.xlane.f32.xlu0 %v526
        %v1252 = vpop.xlane.xlu0 %1251
        %1253 = vmax.xlane.f32.xlu0 %v527
        %v1254 = vpop.xlane.xlu0 %1253
        %1255 = vmax.xlane.f32.xlu0 %v528
        %v1256 = vpop.xlane.xlu0 %1255
        %1257 = vmax.xlane.f32.xlu0 %v529
        %v1258 = vpop.xlane.xlu0 %1257
        %1259 = vmax.xlane.f32.xlu0 %v530
        %v1260 = vpop.xlane.xlu0 %1259
        %1261 = vmax.xlane.f32.xlu0 %v531
        %v1262 = vpop.xlane.xlu0 %1261
        %1263 = vmax.xlane.f32.xlu0 %v532
        %v1264 = vpop.xlane.xlu0 %1263
        %1265 = vmax.xlane.f32.xlu0 %v533
        %v1266 = vpop.xlane.xlu0 %1265
        %1267 = vmax.xlane.f32.xlu0 %v534
        %v1268 = vpop.xlane.xlu0 %1267
        %1269 = vmax.xlane.f32.xlu0 %v535
        %v1270 = vpop.xlane.xlu0 %1269
        %1271 = vmax.xlane.f32.xlu0 %v536
        %v1272 = vpop.xlane.xlu0 %1271
        %1273 = vmax.xlane.f32.xlu0 %v537
        %v1274 = vpop.xlane.xlu0 %1273
        %1275 = vmax.xlane.f32.xlu0 %v538
        %v1276 = vpop.xlane.xlu0 %1275
        %1277 = vmax.xlane.f32.xlu0 %v539
        %v1278 = vpop.xlane.xlu0 %1277
        %1279 = vmax.xlane.f32.xlu0 %v540
        %v1280 = vpop.xlane.xlu0 %1279
        %1281 = vmax.xlane.f32.xlu0 %v541
        %v1282 = vpop.xlane.xlu0 %1281
        %1283 = vmax.xlane.f32.xlu0 %v542
        %v1284 = vpop.xlane.xlu0 %1283
        %1285 = vmax.xlane.f32.xlu0 %v543
        %v1286 = vpop.xlane.xlu0 %1285
        %1287 = vmax.xlane.f32.xlu0 %v544
        %v1288 = vpop.xlane.xlu0 %1287
        %1289 = vmax.xlane.f32.xlu0 %v545
        %v1290 = vpop.xlane.xlu0 %1289
        %1291 = vmax.xlane.f32.xlu0 %v546
        %v1292 = vpop.xlane.xlu0 %1291
        %1293 = vmax.xlane.f32.xlu0 %v547
        %v1294 = vpop.xlane.xlu0 %1293
        %1295 = vmax.xlane.f32.xlu0 %v548
        %v1296 = vpop.xlane.xlu0 %1295
        %1297 = vmax.xlane.f32.xlu0 %v549
        %v1298 = vpop.xlane.xlu0 %1297
        %1299 = vmax.xlane.f32.xlu0 %v550
        %v1300 = vpop.xlane.xlu0 %1299
        %1301 = vmax.xlane.f32.xlu0 %v551
        %v1302 = vpop.xlane.xlu0 %1301
        %1303 = vmax.xlane.f32.xlu0 %v552
        %v1304 = vpop.xlane.xlu0 %1303
        %1305 = vmax.xlane.f32.xlu0 %v553
        %v1306 = vpop.xlane.xlu0 %1305
        %1307 = vmax.xlane.f32.xlu0 %v554
        %v1308 = vpop.xlane.xlu0 %1307
        %1309 = vmax.xlane.f32.xlu0 %v555
        %v1310 = vpop.xlane.xlu0 %1309
        %1311 = vmax.xlane.f32.xlu0 %v556
        %v1312 = vpop.xlane.xlu0 %1311
        %1313 = vmax.xlane.f32.xlu0 %v557
        %v1314 = vpop.xlane.xlu0 %1313
        %1315 = vmax.xlane.f32.xlu0 %v558
        %v1316 = vpop.xlane.xlu0 %1315
        %1317 = vmax.xlane.f32.xlu0 %v559
        %v1318 = vpop.xlane.xlu0 %1317
        %1319 = vmax.xlane.f32.xlu0 %v560
        %v1320 = vpop.xlane.xlu0 %1319
        %1321 = vmax.xlane.f32.xlu0 %v561
        %v1322 = vpop.xlane.xlu0 %1321
        %1323 = vmax.xlane.f32.xlu0 %v562
        %v1324 = vpop.xlane.xlu0 %1323
        %1325 = vmax.xlane.f32.xlu0 %v563
        %v1326 = vpop.xlane.xlu0 %1325
        %1327 = vmax.xlane.f32.xlu0 %v564
        %v1328 = vpop.xlane.xlu0 %1327
        %1329 = vmax.xlane.f32.xlu0 %v565
        %v1330 = vpop.xlane.xlu0 %1329
        %1331 = vmax.xlane.f32.xlu0 %v566
        %v1332 = vpop.xlane.xlu0 %1331
        %1333 = vmax.xlane.f32.xlu0 %v567
        %v1334 = vpop.xlane.xlu0 %1333
        %1335 = vmax.xlane.f32.xlu0 %v568
        %v1336 = vpop.xlane.xlu0 %1335
        %v1337 = vsub.f32 %v313, %v826
        %v1338 = vsub.f32 %v314, %v828
        %v1339 = vsub.f32 %v315, %v830
        %v1340 = vsub.f32 %v316, %v832
        %v1341 = vsub.f32 %v317, %v834
        %v1342 = vsub.f32 %v318, %v836
        %v1343 = vsub.f32 %v319, %v838
        %v1344 = vsub.f32 %v320, %v840
        %v1345 = vsub.f32 %v321, %v842
        %v1346 = vsub.f32 %v322, %v844
        %v1347 = vsub.f32 %v323, %v846
        %v1348 = vsub.f32 %v324, %v848
        %v1349 = vsub.f32 %v325, %v850
        %v1350 = vsub.f32 %v326, %v852
        %v1351 = vsub.f32 %v327, %v854
        %v1352 = vsub.f32 %v328, %v856
        %v1353 = vsub.f32 %v329, %v858
        %v1354 = vsub.f32 %v330, %v860
        %v1355 = vsub.f32 %v331, %v862
        %v1356 = vsub.f32 %v332, %v864
        %v1357 = vsub.f32 %v333, %v866
        %v1358 = vsub.f32 %v334, %v868
        %v1359 = vsub.f32 %v335, %v870
        %v1360 = vsub.f32 %v336, %v872
        %v1361 = vsub.f32 %v337, %v874
        %v1362 = vsub.f32 %v338, %v876
        %v1363 = vsub.f32 %v339, %v878
        %v1364 = vsub.f32 %v340, %v880
        %v1365 = vsub.f32 %v341, %v882
        %v1366 = vsub.f32 %v342, %v884
        %v1367 = vsub.f32 %v343, %v886
        %v1368 = vsub.f32 %v344, %v888
        %v1369 = vsub.f32 %v345, %v890
        %v1370 = vsub.f32 %v346, %v892
        %v1371 = vsub.f32 %v347, %v894
        %v1372 = vsub.f32 %v348, %v896
        %v1373 = vsub.f32 %v349, %v898
        %v1374 = vsub.f32 %v350, %v900
        %v1375 = vsub.f32 %v351, %v902
        %v1376 = vsub.f32 %v352, %v904
        %v1377 = vsub.f32 %v353, %v906
        %v1378 = vsub.f32 %v354, %v908
        %v1379 = vsub.f32 %v355, %v910
        %v1380 = vsub.f32 %v356, %v912
        %v1381 = vsub.f32 %v357, %v914
        %v1382 = vsub.f32 %v358, %v916
        %v1383 = vsub.f32 %v359, %v918
        %v1384 = vsub.f32 %v360, %v920
        %v1385 = vsub.f32 %v361, %v922
        %v1386 = vsub.f32 %v362, %v924
        %v1387 = vsub.f32 %v363, %v926
        %v1388 = vsub.f32 %v364, %v928
        %v1389 = vsub.f32 %v365, %v930
        %v1390 = vsub.f32 %v366, %v932
        %v1391 = vsub.f32 %v367, %v934
        %v1392 = vsub.f32 %v368, %v936
        %v1393 = vsub.f32 %v369, %v938
        %v1394 = vsub.f32 %v370, %v940
        %v1395 = vsub.f32 %v371, %v942
        %v1396 = vsub.f32 %v372, %v944
        %v1397 = vsub.f32 %v373, %v946
        %v1398 = vsub.f32 %v374, %v948
        %v1399 = vsub.f32 %v375, %v950
        %v1400 = vsub.f32 %v376, %v952
        %v1401 = vsub.f32 %v377, %v954
        %v1402 = vsub.f32 %v378, %v956
        %v1403 = vsub.f32 %v379, %v958
        %v1404 = vsub.f32 %v380, %v960
        %v1405 = vsub.f32 %v381, %v962
        %v1406 = vsub.f32 %v382, %v964
        %v1407 = vsub.f32 %v383, %v966
        %v1408 = vsub.f32 %v384, %v968
        %v1409 = vsub.f32 %v385, %v970
        %v1410 = vsub.f32 %v386, %v972
        %v1411 = vsub.f32 %v387, %v974
        %v1412 = vsub.f32 %v388, %v976
        %v1413 = vsub.f32 %v389, %v978
        %v1414 = vsub.f32 %v390, %v980
        %v1415 = vsub.f32 %v391, %v982
        %v1416 = vsub.f32 %v392, %v984
        %v1417 = vsub.f32 %v393, %v986
        %v1418 = vsub.f32 %v394, %v988
        %v1419 = vsub.f32 %v395, %v990
        %v1420 = vsub.f32 %v396, %v992
        %v1421 = vsub.f32 %v397, %v994
        %v1422 = vsub.f32 %v398, %v996
        %v1423 = vsub.f32 %v399, %v998
        %v1424 = vsub.f32 %v400, %v1000
        %v1425 = vsub.f32 %v401, %v1002
        %v1426 = vsub.f32 %v402, %v1004
        %v1427 = vsub.f32 %v403, %v1006
        %v1428 = vsub.f32 %v404, %v1008
        %v1429 = vsub.f32 %v405, %v1010
        %v1430 = vsub.f32 %v406, %v1012
        %v1431 = vsub.f32 %v407, %v1014
        %v1432 = vsub.f32 %v408, %v1016
        %v1433 = vsub.f32 %v409, %v1018
        %v1434 = vsub.f32 %v410, %v1020
        %v1435 = vsub.f32 %v411, %v1022
        %v1436 = vsub.f32 %v412, %v1024
        %v1437 = vsub.f32 %v413, %v1026
        %v1438 = vsub.f32 %v414, %v1028
        %v1439 = vsub.f32 %v415, %v1030
        %v1440 = vsub.f32 %v416, %v1032
        %v1441 = vsub.f32 %v417, %v1034
        %v1442 = vsub.f32 %v418, %v1036
        %v1443 = vsub.f32 %v419, %v1038
        %v1444 = vsub.f32 %v420, %v1040
        %v1445 = vsub.f32 %v421, %v1042
        %v1446 = vsub.f32 %v422, %v1044
        %v1447 = vsub.f32 %v423, %v1046
        %v1448 = vsub.f32 %v424, %v1048
        %v1449 = vsub.f32 %v425, %v1050
        %v1450 = vsub.f32 %v426, %v1052
        %v1451 = vsub.f32 %v427, %v1054
        %v1452 = vsub.f32 %v428, %v1056
        %v1453 = vsub.f32 %v429, %v1058
        %v1454 = vsub.f32 %v430, %v1060
        %v1455 = vsub.f32 %v431, %v1062
        %v1456 = vsub.f32 %v432, %v1064
        %v1457 = vsub.f32 %v433, %v1066
        %v1458 = vsub.f32 %v434, %v1068
        %v1459 = vsub.f32 %v435, %v1070
        %v1460 = vsub.f32 %v436, %v1072
        %v1461 = vsub.f32 %v437, %v1074
        %v1462 = vsub.f32 %v438, %v1076
        %v1463 = vsub.f32 %v439, %v1078
        %v1464 = vsub.f32 %v440, %v1080
        %v1465 = vsub.f32 %v441, %v1082
        %v1466 = vsub.f32 %v442, %v1084
        %v1467 = vsub.f32 %v443, %v1086
        %v1468 = vsub.f32 %v444, %v1088
        %v1469 = vsub.f32 %v445, %v1090
        %v1470 = vsub.f32 %v446, %v1092
        %v1471 = vsub.f32 %v447, %v1094
        %v1472 = vsub.f32 %v448, %v1096
        %v1473 = vsub.f32 %v449, %v1098
        %v1474 = vsub.f32 %v450, %v1100
        %v1475 = vsub.f32 %v451, %v1102
        %v1476 = vsub.f32 %v452, %v1104
        %v1477 = vsub.f32 %v453, %v1106
        %v1478 = vsub.f32 %v454, %v1108
        %v1479 = vsub.f32 %v455, %v1110
        %v1480 = vsub.f32 %v456, %v1112
        %v1481 = vsub.f32 %v457, %v1114
        %v1482 = vsub.f32 %v458, %v1116
        %v1483 = vsub.f32 %v459, %v1118
        %v1484 = vsub.f32 %v460, %v1120
        %v1485 = vsub.f32 %v461, %v1122
        %v1486 = vsub.f32 %v462, %v1124
        %v1487 = vsub.f32 %v463, %v1126
        %v1488 = vsub.f32 %v464, %v1128
        %v1489 = vsub.f32 %v465, %v1130
        %v1490 = vsub.f32 %v466, %v1132
        %v1491 = vsub.f32 %v467, %v1134
        %v1492 = vsub.f32 %v468, %v1136
        %v1493 = vsub.f32 %v469, %v1138
        %v1494 = vsub.f32 %v470, %v1140
        %v1495 = vsub.f32 %v471, %v1142
        %v1496 = vsub.f32 %v472, %v1144
        %v1497 = vsub.f32 %v473, %v1146
        %v1498 = vsub.f32 %v474, %v1148
        %v1499 = vsub.f32 %v475, %v1150
        %v1500 = vsub.f32 %v476, %v1152
        %v1501 = vsub.f32 %v477, %v1154
        %v1502 = vsub.f32 %v478, %v1156
        %v1503 = vsub.f32 %v479, %v1158
        %v1504 = vsub.f32 %v480, %v1160
        %v1505 = vsub.f32 %v481, %v1162
        %v1506 = vsub.f32 %v482, %v1164
        %v1507 = vsub.f32 %v483, %v1166
        %v1508 = vsub.f32 %v484, %v1168
        %v1509 = vsub.f32 %v485, %v1170
        %v1510 = vsub.f32 %v486, %v1172
        %v1511 = vsub.f32 %v487, %v1174
        %v1512 = vsub.f32 %v488, %v1176
        %v1513 = vsub.f32 %v489, %v1178
        %v1514 = vsub.f32 %v490, %v1180
        %v1515 = vsub.f32 %v491, %v1182
        %v1516 = vsub.f32 %v492, %v1184
        %v1517 = vsub.f32 %v493, %v1186
        %v1518 = vsub.f32 %v494, %v1188
        %v1519 = vsub.f32 %v495, %v1190
        %v1520 = vsub.f32 %v496, %v1192
        %v1521 = vsub.f32 %v497, %v1194
        %v1522 = vsub.f32 %v498, %v1196
        %v1523 = vsub.f32 %v499, %v1198
        %v1524 = vsub.f32 %v500, %v1200
        %v1525 = vsub.f32 %v501, %v1202
        %v1526 = vsub.f32 %v502, %v1204
        %v1527 = vsub.f32 %v503, %v1206
        %v1528 = vsub.f32 %v504, %v1208
        %v1529 = vsub.f32 %v505, %v1210
        %v1530 = vsub.f32 %v506, %v1212
        %v1531 = vsub.f32 %v507, %v1214
        %v1532 = vsub.f32 %v508, %v1216
        %v1533 = vsub.f32 %v509, %v1218
        %v1534 = vsub.f32 %v510, %v1220
        %v1535 = vsub.f32 %v511, %v1222
        %v1536 = vsub.f32 %v512, %v1224
        %v1537 = vsub.f32 %v513, %v1226
        %v1538 = vsub.f32 %v514, %v1228
        %v1539 = vsub.f32 %v515, %v1230
        %v1540 = vsub.f32 %v516, %v1232
        %v1541 = vsub.f32 %v517, %v1234
        %v1542 = vsub.f32 %v518, %v1236
        %v1543 = vsub.f32 %v519, %v1238
        %v1544 = vsub.f32 %v520, %v1240
        %v1545 = vsub.f32 %v521, %v1242
        %v1546 = vsub.f32 %v522, %v1244
        %v1547 = vsub.f32 %v523, %v1246
        %v1548 = vsub.f32 %v524, %v1248
        %v1549 = vsub.f32 %v525, %v1250
        %v1550 = vsub.f32 %v526, %v1252
        %v1551 = vsub.f32 %v527, %v1254
        %v1552 = vsub.f32 %v528, %v1256
        %v1553 = vsub.f32 %v529, %v1258
        %v1554 = vsub.f32 %v530, %v1260
        %v1555 = vsub.f32 %v531, %v1262
        %v1556 = vsub.f32 %v532, %v1264
        %v1557 = vsub.f32 %v533, %v1266
        %v1558 = vsub.f32 %v534, %v1268
        %v1559 = vsub.f32 %v535, %v1270
        %v1560 = vsub.f32 %v536, %v1272
        %v1561 = vsub.f32 %v537, %v1274
        %v1562 = vsub.f32 %v538, %v1276
        %v1563 = vsub.f32 %v539, %v1278
        %v1564 = vsub.f32 %v540, %v1280
        %v1565 = vsub.f32 %v541, %v1282
        %v1566 = vsub.f32 %v542, %v1284
        %v1567 = vsub.f32 %v543, %v1286
        %v1568 = vsub.f32 %v544, %v1288
        %v1569 = vsub.f32 %v545, %v1290
        %v1570 = vsub.f32 %v546, %v1292
        %v1571 = vsub.f32 %v547, %v1294
        %v1572 = vsub.f32 %v548, %v1296
        %v1573 = vsub.f32 %v549, %v1298
        %v1574 = vsub.f32 %v550, %v1300
        %v1575 = vsub.f32 %v551, %v1302
        %v1576 = vsub.f32 %v552, %v1304
        %v1577 = vsub.f32 %v553, %v1306
        %v1578 = vsub.f32 %v554, %v1308
        %v1579 = vsub.f32 %v555, %v1310
        %v1580 = vsub.f32 %v556, %v1312
        %v1581 = vsub.f32 %v557, %v1314
        %v1582 = vsub.f32 %v558, %v1316
        %v1583 = vsub.f32 %v559, %v1318
        %v1584 = vsub.f32 %v560, %v1320
        %v1585 = vsub.f32 %v561, %v1322
        %v1586 = vsub.f32 %v562, %v1324
        %v1587 = vsub.f32 %v563, %v1326
        %v1588 = vsub.f32 %v564, %v1328
        %v1589 = vsub.f32 %v565, %v1330
        %v1590 = vsub.f32 %v566, %v1332
        %v1591 = vsub.f32 %v567, %v1334
        %v1592 = vsub.f32 %v568, %v1336
        %v1593 = vmul.f32 %v1337, 1.442695
        %v1594 = vpow.pop %v1593
        %v1595 = vmul.f32 %v1338, 1.442695
        %v1596 = vpow.pop %v1595
        %v1597 = vmul.f32 %v1339, 1.442695
        %v1598 = vpow.pop %v1597
        %v1599 = vmul.f32 %v1340, 1.442695
        %v1600 = vpow.pop %v1599
        %v1601 = vmul.f32 %v1341, 1.442695
        %v1602 = vpow.pop %v1601
        %v1603 = vmul.f32 %v1342, 1.442695
        %v1604 = vpow.pop %v1603
        %v1605 = vmul.f32 %v1343, 1.442695
        %v1606 = vpow.pop %v1605
        %v1607 = vmul.f32 %v1344, 1.442695
        %v1608 = vpow.pop %v1607
        %v1609 = vmul.f32 %v1345, 1.442695
        %v1610 = vpow.pop %v1609
        %v1611 = vmul.f32 %v1346, 1.442695
        %v1612 = vpow.pop %v1611
        %v1613 = vmul.f32 %v1347, 1.442695
        %v1614 = vpow.pop %v1613
        %v1615 = vmul.f32 %v1348, 1.442695
        %v1616 = vpow.pop %v1615
        %v1617 = vmul.f32 %v1349, 1.442695
        %v1618 = vpow.pop %v1617
        %v1619 = vmul.f32 %v1350, 1.442695
        %v1620 = vpow.pop %v1619
        %v1621 = vmul.f32 %v1351, 1.442695
        %v1622 = vpow.pop %v1621
        %v1623 = vmul.f32 %v1352, 1.442695
        %v1624 = vpow.pop %v1623
        %v1625 = vmul.f32 %v1353, 1.442695
        %v1626 = vpow.pop %v1625
        %v1627 = vmul.f32 %v1354, 1.442695
        %v1628 = vpow.pop %v1627
        %v1629 = vmul.f32 %v1355, 1.442695
        %v1630 = vpow.pop %v1629
        %v1631 = vmul.f32 %v1356, 1.442695
        %v1632 = vpow.pop %v1631
        %v1633 = vmul.f32 %v1357, 1.442695
        %v1634 = vpow.pop %v1633
        %v1635 = vmul.f32 %v1358, 1.442695
        %v1636 = vpow.pop %v1635
        %v1637 = vmul.f32 %v1359, 1.442695
        %v1638 = vpow.pop %v1637
        %v1639 = vmul.f32 %v1360, 1.442695
        %v1640 = vpow.pop %v1639
        %v1641 = vmul.f32 %v1361, 1.442695
        %v1642 = vpow.pop %v1641
        %v1643 = vmul.f32 %v1362, 1.442695
        %v1644 = vpow.pop %v1643
        %v1645 = vmul.f32 %v1363, 1.442695
        %v1646 = vpow.pop %v1645
        %v1647 = vmul.f32 %v1364, 1.442695
        %v1648 = vpow.pop %v1647
        %v1649 = vmul.f32 %v1365, 1.442695
        %v1650 = vpow.pop %v1649
        %v1651 = vmul.f32 %v1366, 1.442695
        %v1652 = vpow.pop %v1651
        %v1653 = vmul.f32 %v1367, 1.442695
        %v1654 = vpow.pop %v1653
        %v1655 = vmul.f32 %v1368, 1.442695
        %v1656 = vpow.pop %v1655
        %v1657 = vmul.f32 %v1369, 1.442695
        %v1658 = vpow.pop %v1657
        %v1659 = vmul.f32 %v1370, 1.442695
        %v1660 = vpow.pop %v1659
        %v1661 = vmul.f32 %v1371, 1.442695
        %v1662 = vpow.pop %v1661
        %v1663 = vmul.f32 %v1372, 1.442695
        %v1664 = vpow.pop %v1663
        %v1665 = vmul.f32 %v1373, 1.442695
        %v1666 = vpow.pop %v1665
        %v1667 = vmul.f32 %v1374, 1.442695
        %v1668 = vpow.pop %v1667
        %v1669 = vmul.f32 %v1375, 1.442695
        %v1670 = vpow.pop %v1669
        %v1671 = vmul.f32 %v1376, 1.442695
        %v1672 = vpow.pop %v1671
        %v1673 = vmul.f32 %v1377, 1.442695
        %v1674 = vpow.pop %v1673
        %v1675 = vmul.f32 %v1378, 1.442695
        %v1676 = vpow.pop %v1675
        %v1677 = vmul.f32 %v1379, 1.442695
        %v1678 = vpow.pop %v1677
        %v1679 = vmul.f32 %v1380, 1.442695
        %v1680 = vpow.pop %v1679
        %v1681 = vmul.f32 %v1381, 1.442695
        %v1682 = vpow.pop %v1681
        %v1683 = vmul.f32 %v1382, 1.442695
        %v1684 = vpow.pop %v1683
        %v1685 = vmul.f32 %v1383, 1.442695
        %v1686 = vpow.pop %v1685
        %v1687 = vmul.f32 %v1384, 1.442695
        %v1688 = vpow.pop %v1687
        %v1689 = vmul.f32 %v1385, 1.442695
        %v1690 = vpow.pop %v1689
        %v1691 = vmul.f32 %v1386, 1.442695
        %v1692 = vpow.pop %v1691
        %v1693 = vmul.f32 %v1387, 1.442695
        %v1694 = vpow.pop %v1693
        %v1695 = vmul.f32 %v1388, 1.442695
        %v1696 = vpow.pop %v1695
        %v1697 = vmul.f32 %v1389, 1.442695
        %v1698 = vpow.pop %v1697
        %v1699 = vmul.f32 %v1390, 1.442695
        %v1700 = vpow.pop %v1699
        %v1701 = vmul.f32 %v1391, 1.442695
        %v1702 = vpow.pop %v1701
        %v1703 = vmul.f32 %v1392, 1.442695
        %v1704 = vpow.pop %v1703
        %v1705 = vmul.f32 %v1393, 1.442695
        %v1706 = vpow.pop %v1705
        %v1707 = vmul.f32 %v1394, 1.442695
        %v1708 = vpow.pop %v1707
        %v1709 = vmul.f32 %v1395, 1.442695
        %v1710 = vpow.pop %v1709
        %v1711 = vmul.f32 %v1396, 1.442695
        %v1712 = vpow.pop %v1711
        %v1713 = vmul.f32 %v1397, 1.442695
        %v1714 = vpow.pop %v1713
        %v1715 = vmul.f32 %v1398, 1.442695
        %v1716 = vpow.pop %v1715
        %v1717 = vmul.f32 %v1399, 1.442695
        %v1718 = vpow.pop %v1717
        %v1719 = vmul.f32 %v1400, 1.442695
        %v1720 = vpow.pop %v1719
        %v1721 = vmul.f32 %v1401, 1.442695
        %v1722 = vpow.pop %v1721
        %v1723 = vmul.f32 %v1402, 1.442695
        %v1724 = vpow.pop %v1723
        %v1725 = vmul.f32 %v1403, 1.442695
        %v1726 = vpow.pop %v1725
        %v1727 = vmul.f32 %v1404, 1.442695
        %v1728 = vpow.pop %v1727
        %v1729 = vmul.f32 %v1405, 1.442695
        %v1730 = vpow.pop %v1729
        %v1731 = vmul.f32 %v1406, 1.442695
        %v1732 = vpow.pop %v1731
        %v1733 = vmul.f32 %v1407, 1.442695
        %v1734 = vpow.pop %v1733
        %v1735 = vmul.f32 %v1408, 1.442695
        %v1736 = vpow.pop %v1735
        %v1737 = vmul.f32 %v1409, 1.442695
        %v1738 = vpow.pop %v1737
        %v1739 = vmul.f32 %v1410, 1.442695
        %v1740 = vpow.pop %v1739
        %v1741 = vmul.f32 %v1411, 1.442695
        %v1742 = vpow.pop %v1741
        %v1743 = vmul.f32 %v1412, 1.442695
        %v1744 = vpow.pop %v1743
        %v1745 = vmul.f32 %v1413, 1.442695
        %v1746 = vpow.pop %v1745
        %v1747 = vmul.f32 %v1414, 1.442695
        %v1748 = vpow.pop %v1747
        %v1749 = vmul.f32 %v1415, 1.442695
        %v1750 = vpow.pop %v1749
        %v1751 = vmul.f32 %v1416, 1.442695
        %v1752 = vpow.pop %v1751
        %v1753 = vmul.f32 %v1417, 1.442695
        %v1754 = vpow.pop %v1753
        %v1755 = vmul.f32 %v1418, 1.442695
        %v1756 = vpow.pop %v1755
        %v1757 = vmul.f32 %v1419, 1.442695
        %v1758 = vpow.pop %v1757
        %v1759 = vmul.f32 %v1420, 1.442695
        %v1760 = vpow.pop %v1759
        %v1761 = vmul.f32 %v1421, 1.442695
        %v1762 = vpow.pop %v1761
        %v1763 = vmul.f32 %v1422, 1.442695
        %v1764 = vpow.pop %v1763
        %v1765 = vmul.f32 %v1423, 1.442695
        %v1766 = vpow.pop %v1765
        %v1767 = vmul.f32 %v1424, 1.442695
        %v1768 = vpow.pop %v1767
        %v1769 = vmul.f32 %v1425, 1.442695
        %v1770 = vpow.pop %v1769
        %v1771 = vmul.f32 %v1426, 1.442695
        %v1772 = vpow.pop %v1771
        %v1773 = vmul.f32 %v1427, 1.442695
        %v1774 = vpow.pop %v1773
        %v1775 = vmul.f32 %v1428, 1.442695
        %v1776 = vpow.pop %v1775
        %v1777 = vmul.f32 %v1429, 1.442695
        %v1778 = vpow.pop %v1777
        %v1779 = vmul.f32 %v1430, 1.442695
        %v1780 = vpow.pop %v1779
        %v1781 = vmul.f32 %v1431, 1.442695
        %v1782 = vpow.pop %v1781
        %v1783 = vmul.f32 %v1432, 1.442695
        %v1784 = vpow.pop %v1783
        %v1785 = vmul.f32 %v1433, 1.442695
        %v1786 = vpow.pop %v1785
        %v1787 = vmul.f32 %v1434, 1.442695
        %v1788 = vpow.pop %v1787
        %v1789 = vmul.f32 %v1435, 1.442695
        %v1790 = vpow.pop %v1789
        %v1791 = vmul.f32 %v1436, 1.442695
        %v1792 = vpow.pop %v1791
        %v1793 = vmul.f32 %v1437, 1.442695
        %v1794 = vpow.pop %v1793
        %v1795 = vmul.f32 %v1438, 1.442695
        %v1796 = vpow.pop %v1795
        %v1797 = vmul.f32 %v1439, 1.442695
        %v1798 = vpow.pop %v1797
        %v1799 = vmul.f32 %v1440, 1.442695
        %v1800 = vpow.pop %v1799
        %v1801 = vmul.f32 %v1441, 1.442695
        %v1802 = vpow.pop %v1801
        %v1803 = vmul.f32 %v1442, 1.442695
        %v1804 = vpow.pop %v1803
        %v1805 = vmul.f32 %v1443, 1.442695
        %v1806 = vpow.pop %v1805
        %v1807 = vmul.f32 %v1444, 1.442695
        %v1808 = vpow.pop %v1807
        %v1809 = vmul.f32 %v1445, 1.442695
        %v1810 = vpow.pop %v1809
        %v1811 = vmul.f32 %v1446, 1.442695
        %v1812 = vpow.pop %v1811
        %v1813 = vmul.f32 %v1447, 1.442695
        %v1814 = vpow.pop %v1813
        %v1815 = vmul.f32 %v1448, 1.442695
        %v1816 = vpow.pop %v1815
        %v1817 = vmul.f32 %v1449, 1.442695
        %v1818 = vpow.pop %v1817
        %v1819 = vmul.f32 %v1450, 1.442695
        %v1820 = vpow.pop %v1819
        %v1821 = vmul.f32 %v1451, 1.442695
        %v1822 = vpow.pop %v1821
        %v1823 = vmul.f32 %v1452, 1.442695
        %v1824 = vpow.pop %v1823
        %v1825 = vmul.f32 %v1453, 1.442695
        %v1826 = vpow.pop %v1825
        %v1827 = vmul.f32 %v1454, 1.442695
        %v1828 = vpow.pop %v1827
        %v1829 = vmul.f32 %v1455, 1.442695
        %v1830 = vpow.pop %v1829
        %v1831 = vmul.f32 %v1456, 1.442695
        %v1832 = vpow.pop %v1831
        %v1833 = vmul.f32 %v1457, 1.442695
        %v1834 = vpow.pop %v1833
        %v1835 = vmul.f32 %v1458, 1.442695
        %v1836 = vpow.pop %v1835
        %v1837 = vmul.f32 %v1459, 1.442695
        %v1838 = vpow.pop %v1837
        %v1839 = vmul.f32 %v1460, 1.442695
        %v1840 = vpow.pop %v1839
        %v1841 = vmul.f32 %v1461, 1.442695
        %v1842 = vpow.pop %v1841
        %v1843 = vmul.f32 %v1462, 1.442695
        %v1844 = vpow.pop %v1843
        %v1845 = vmul.f32 %v1463, 1.442695
        %v1846 = vpow.pop %v1845
        %v1847 = vmul.f32 %v1464, 1.442695
        %v1848 = vpow.pop %v1847
        %v1849 = vmul.f32 %v1465, 1.442695
        %v1850 = vpow.pop %v1849
        %v1851 = vmul.f32 %v1466, 1.442695
        %v1852 = vpow.pop %v1851
        %v1853 = vmul.f32 %v1467, 1.442695
        %v1854 = vpow.pop %v1853
        %v1855 = vmul.f32 %v1468, 1.442695
        %v1856 = vpow.pop %v1855
        %v1857 = vmul.f32 %v1469, 1.442695
        %v1858 = vpow.pop %v1857
        %v1859 = vmul.f32 %v1470, 1.442695
        %v1860 = vpow.pop %v1859
        %v1861 = vmul.f32 %v1471, 1.442695
        %v1862 = vpow.pop %v1861
        %v1863 = vmul.f32 %v1472, 1.442695
        %v1864 = vpow.pop %v1863
        %v1865 = vmul.f32 %v1473, 1.442695
        %v1866 = vpow.pop %v1865
        %v1867 = vmul.f32 %v1474, 1.442695
        %v1868 = vpow.pop %v1867
        %v1869 = vmul.f32 %v1475, 1.442695
        %v1870 = vpow.pop %v1869
        %v1871 = vmul.f32 %v1476, 1.442695
        %v1872 = vpow.pop %v1871
        %v1873 = vmul.f32 %v1477, 1.442695
        %v1874 = vpow.pop %v1873
        %v1875 = vmul.f32 %v1478, 1.442695
        %v1876 = vpow.pop %v1875
        %v1877 = vmul.f32 %v1479, 1.442695
        %v1878 = vpow.pop %v1877
        %v1879 = vmul.f32 %v1480, 1.442695
        %v1880 = vpow.pop %v1879
        %v1881 = vmul.f32 %v1481, 1.442695
        %v1882 = vpow.pop %v1881
        %v1883 = vmul.f32 %v1482, 1.442695
        %v1884 = vpow.pop %v1883
        %v1885 = vmul.f32 %v1483, 1.442695
        %v1886 = vpow.pop %v1885
        %v1887 = vmul.f32 %v1484, 1.442695
        %v1888 = vpow.pop %v1887
        %v1889 = vmul.f32 %v1485, 1.442695
        %v1890 = vpow.pop %v1889
        %v1891 = vmul.f32 %v1486, 1.442695
        %v1892 = vpow.pop %v1891
        %v1893 = vmul.f32 %v1487, 1.442695
        %v1894 = vpow.pop %v1893
        %v1895 = vmul.f32 %v1488, 1.442695
        %v1896 = vpow.pop %v1895
        %v1897 = vmul.f32 %v1489, 1.442695
        %v1898 = vpow.pop %v1897
        %v1899 = vmul.f32 %v1490, 1.442695
        %v1900 = vpow.pop %v1899
        %v1901 = vmul.f32 %v1491, 1.442695
        %v1902 = vpow.pop %v1901
        %v1903 = vmul.f32 %v1492, 1.442695
        %v1904 = vpow.pop %v1903
        %v1905 = vmul.f32 %v1493, 1.442695
        %v1906 = vpow.pop %v1905
        %v1907 = vmul.f32 %v1494, 1.442695
        %v1908 = vpow.pop %v1907
        %v1909 = vmul.f32 %v1495, 1.442695
        %v1910 = vpow.pop %v1909
        %v1911 = vmul.f32 %v1496, 1.442695
        %v1912 = vpow.pop %v1911
        %v1913 = vmul.f32 %v1497, 1.442695
        %v1914 = vpow.pop %v1913
        %v1915 = vmul.f32 %v1498, 1.442695
        %v1916 = vpow.pop %v1915
        %v1917 = vmul.f32 %v1499, 1.442695
        %v1918 = vpow.pop %v1917
        %v1919 = vmul.f32 %v1500, 1.442695
        %v1920 = vpow.pop %v1919
        %v1921 = vmul.f32 %v1501, 1.442695
        %v1922 = vpow.pop %v1921
        %v1923 = vmul.f32 %v1502, 1.442695
        %v1924 = vpow.pop %v1923
        %v1925 = vmul.f32 %v1503, 1.442695
        %v1926 = vpow.pop %v1925
        %v1927 = vmul.f32 %v1504, 1.442695
        %v1928 = vpow.pop %v1927
        %v1929 = vmul.f32 %v1505, 1.442695
        %v1930 = vpow.pop %v1929
        %v1931 = vmul.f32 %v1506, 1.442695
        %v1932 = vpow.pop %v1931
        %v1933 = vmul.f32 %v1507, 1.442695
        %v1934 = vpow.pop %v1933
        %v1935 = vmul.f32 %v1508, 1.442695
        %v1936 = vpow.pop %v1935
        %v1937 = vmul.f32 %v1509, 1.442695
        %v1938 = vpow.pop %v1937
        %v1939 = vmul.f32 %v1510, 1.442695
        %v1940 = vpow.pop %v1939
        %v1941 = vmul.f32 %v1511, 1.442695
        %v1942 = vpow.pop %v1941
        %v1943 = vmul.f32 %v1512, 1.442695
        %v1944 = vpow.pop %v1943
        %v1945 = vmul.f32 %v1513, 1.442695
        %v1946 = vpow.pop %v1945
        %v1947 = vmul.f32 %v1514, 1.442695
        %v1948 = vpow.pop %v1947
        %v1949 = vmul.f32 %v1515, 1.442695
        %v1950 = vpow.pop %v1949
        %v1951 = vmul.f32 %v1516, 1.442695
        %v1952 = vpow.pop %v1951
        %v1953 = vmul.f32 %v1517, 1.442695
        %v1954 = vpow.pop %v1953
        %v1955 = vmul.f32 %v1518, 1.442695
        %v1956 = vpow.pop %v1955
        %v1957 = vmul.f32 %v1519, 1.442695
        %v1958 = vpow.pop %v1957
        %v1959 = vmul.f32 %v1520, 1.442695
        %v1960 = vpow.pop %v1959
        %v1961 = vmul.f32 %v1521, 1.442695
        %v1962 = vpow.pop %v1961
        %v1963 = vmul.f32 %v1522, 1.442695
        %v1964 = vpow.pop %v1963
        %v1965 = vmul.f32 %v1523, 1.442695
        %v1966 = vpow.pop %v1965
        %v1967 = vmul.f32 %v1524, 1.442695
        %v1968 = vpow.pop %v1967
        %v1969 = vmul.f32 %v1525, 1.442695
        %v1970 = vpow.pop %v1969
        %v1971 = vmul.f32 %v1526, 1.442695
        %v1972 = vpow.pop %v1971
        %v1973 = vmul.f32 %v1527, 1.442695
        %v1974 = vpow.pop %v1973
        %v1975 = vmul.f32 %v1528, 1.442695
        %v1976 = vpow.pop %v1975
        %v1977 = vmul.f32 %v1529, 1.442695
        %v1978 = vpow.pop %v1977
        %v1979 = vmul.f32 %v1530, 1.442695
        %v1980 = vpow.pop %v1979
        %v1981 = vmul.f32 %v1531, 1.442695
        %v1982 = vpow.pop %v1981
        %v1983 = vmul.f32 %v1532, 1.442695
        %v1984 = vpow.pop %v1983
        %v1985 = vmul.f32 %v1533, 1.442695
        %v1986 = vpow.pop %v1985
        %v1987 = vmul.f32 %v1534, 1.442695
        %v1988 = vpow.pop %v1987
        %v1989 = vmul.f32 %v1535, 1.442695
        %v1990 = vpow.pop %v1989
        %v1991 = vmul.f32 %v1536, 1.442695
        %v1992 = vpow.pop %v1991
        %v1993 = vmul.f32 %v1537, 1.442695
        %v1994 = vpow.pop %v1993
        %v1995 = vmul.f32 %v1538, 1.442695
        %v1996 = vpow.pop %v1995
        %v1997 = vmul.f32 %v1539, 1.442695
        %v1998 = vpow.pop %v1997
        %v1999 = vmul.f32 %v1540, 1.442695
        %v2000 = vpow.pop %v1999
        %v2001 = vmul.f32 %v1541, 1.442695
        %v2002 = vpow.pop %v2001
        %v2003 = vmul.f32 %v1542, 1.442695
        %v2004 = vpow.pop %v2003
        %v2005 = vmul.f32 %v1543, 1.442695
        %v2006 = vpow.pop %v2005
        %v2007 = vmul.f32 %v1544, 1.442695
        %v2008 = vpow.pop %v2007
        %v2009 = vmul.f32 %v1545, 1.442695
        %v2010 = vpow.pop %v2009
        %v2011 = vmul.f32 %v1546, 1.442695
        %v2012 = vpow.pop %v2011
        %v2013 = vmul.f32 %v1547, 1.442695
        %v2014 = vpow.pop %v2013
        %v2015 = vmul.f32 %v1548, 1.442695
        %v2016 = vpow.pop %v2015
        %v2017 = vmul.f32 %v1549, 1.442695
        %v2018 = vpow.pop %v2017
        %v2019 = vmul.f32 %v1550, 1.442695
        %v2020 = vpow.pop %v2019
        %v2021 = vmul.f32 %v1551, 1.442695
        %v2022 = vpow.pop %v2021
        %v2023 = vmul.f32 %v1552, 1.442695
        %v2024 = vpow.pop %v2023
        %v2025 = vmul.f32 %v1553, 1.442695
        %v2026 = vpow.pop %v2025
        %v2027 = vmul.f32 %v1554, 1.442695
        %v2028 = vpow.pop %v2027
        %v2029 = vmul.f32 %v1555, 1.442695
        %v2030 = vpow.pop %v2029
        %v2031 = vmul.f32 %v1556, 1.442695
        %v2032 = vpow.pop %v2031
        %v2033 = vmul.f32 %v1557, 1.442695
        %v2034 = vpow.pop %v2033
        %v2035 = vmul.f32 %v1558, 1.442695
        %v2036 = vpow.pop %v2035
        %v2037 = vmul.f32 %v1559, 1.442695
        %v2038 = vpow.pop %v2037
        %v2039 = vmul.f32 %v1560, 1.442695
        %v2040 = vpow.pop %v2039
        %v2041 = vmul.f32 %v1561, 1.442695
        %v2042 = vpow.pop %v2041
        %v2043 = vmul.f32 %v1562, 1.442695
        %v2044 = vpow.pop %v2043
        %v2045 = vmul.f32 %v1563, 1.442695
        %v2046 = vpow.pop %v2045
        %v2047 = vmul.f32 %v1564, 1.442695
        %v2048 = vpow.pop %v2047
        %v2049 = vmul.f32 %v1565, 1.442695
        %v2050 = vpow.pop %v2049
        %v2051 = vmul.f32 %v1566, 1.442695
        %v2052 = vpow.pop %v2051
        %v2053 = vmul.f32 %v1567, 1.442695
        %v2054 = vpow.pop %v2053
        %v2055 = vmul.f32 %v1568, 1.442695
        %v2056 = vpow.pop %v2055
        %v2057 = vmul.f32 %v1569, 1.442695
        %v2058 = vpow.pop %v2057
        %v2059 = vmul.f32 %v1570, 1.442695
        %v2060 = vpow.pop %v2059
        %v2061 = vmul.f32 %v1571, 1.442695
        %v2062 = vpow.pop %v2061
        %v2063 = vmul.f32 %v1572, 1.442695
        %v2064 = vpow.pop %v2063
        %v2065 = vmul.f32 %v1573, 1.442695
        %v2066 = vpow.pop %v2065
        %v2067 = vmul.f32 %v1574, 1.442695
        %v2068 = vpow.pop %v2067
        %v2069 = vmul.f32 %v1575, 1.442695
        %v2070 = vpow.pop %v2069
        %v2071 = vmul.f32 %v1576, 1.442695
        %v2072 = vpow.pop %v2071
        %v2073 = vmul.f32 %v1577, 1.442695
        %v2074 = vpow.pop %v2073
        %v2075 = vmul.f32 %v1578, 1.442695
        %v2076 = vpow.pop %v2075
        %v2077 = vmul.f32 %v1579, 1.442695
        %v2078 = vpow.pop %v2077
        %v2079 = vmul.f32 %v1580, 1.442695
        %v2080 = vpow.pop %v2079
        %v2081 = vmul.f32 %v1581, 1.442695
        %v2082 = vpow.pop %v2081
        %v2083 = vmul.f32 %v1582, 1.442695
        %v2084 = vpow.pop %v2083
        %v2085 = vmul.f32 %v1583, 1.442695
        %v2086 = vpow.pop %v2085
        %v2087 = vmul.f32 %v1584, 1.442695
        %v2088 = vpow.pop %v2087
        %v2089 = vmul.f32 %v1585, 1.442695
        %v2090 = vpow.pop %v2089
        %v2091 = vmul.f32 %v1586, 1.442695
        %v2092 = vpow.pop %v2091
        %v2093 = vmul.f32 %v1587, 1.442695
        %v2094 = vpow.pop %v2093
        %v2095 = vmul.f32 %v1588, 1.442695
        %v2096 = vpow.pop %v2095
        %v2097 = vmul.f32 %v1589, 1.442695
        %v2098 = vpow.pop %v2097
        %v2099 = vmul.f32 %v1590, 1.442695
        %v2100 = vpow.pop %v2099
        %v2101 = vmul.f32 %v1591, 1.442695
        %v2102 = vpow.pop %v2101
        %v2103 = vmul.f32 %v1592, 1.442695
        %v2104 = vpow.pop %v2103
        %2105 = vadd.xlane.f32.xlu0 %v1594
        %v2106 = vpop.xlane.xlu0 %2105
        %2107 = vadd.xlane.f32.xlu0 %v1596
        %v2108 = vpop.xlane.xlu0 %2107
        %2109 = vadd.xlane.f32.xlu0 %v1598
        %v2110 = vpop.xlane.xlu0 %2109
        %2111 = vadd.xlane.f32.xlu0 %v1600
        %v2112 = vpop.xlane.xlu0 %2111
        %2113 = vadd.xlane.f32.xlu0 %v1602
        %v2114 = vpop.xlane.xlu0 %2113
        %2115 = vadd.xlane.f32.xlu0 %v1604
        %v2116 = vpop.xlane.xlu0 %2115
        %2117 = vadd.xlane.f32.xlu0 %v1606
        %v2118 = vpop.xlane.xlu0 %2117
        %2119 = vadd.xlane.f32.xlu0 %v1608
        %v2120 = vpop.xlane.xlu0 %2119
        %2121 = vadd.xlane.f32.xlu0 %v1610
        %v2122 = vpop.xlane.xlu0 %2121
        %2123 = vadd.xlane.f32.xlu0 %v1612
        %v2124 = vpop.xlane.xlu0 %2123
        %2125 = vadd.xlane.f32.xlu0 %v1614
        %v2126 = vpop.xlane.xlu0 %2125
        %2127 = vadd.xlane.f32.xlu0 %v1616
        %v2128 = vpop.xlane.xlu0 %2127
        %2129 = vadd.xlane.f32.xlu0 %v1618
        %v2130 = vpop.xlane.xlu0 %2129
        %2131 = vadd.xlane.f32.xlu0 %v1620
        %v2132 = vpop.xlane.xlu0 %2131
        %2133 = vadd.xlane.f32.xlu0 %v1622
        %v2134 = vpop.xlane.xlu0 %2133
        %2135 = vadd.xlane.f32.xlu0 %v1624
        %v2136 = vpop.xlane.xlu0 %2135
        %2137 = vadd.xlane.f32.xlu0 %v1626
        %v2138 = vpop.xlane.xlu0 %2137
        %2139 = vadd.xlane.f32.xlu0 %v1628
        %v2140 = vpop.xlane.xlu0 %2139
        %2141 = vadd.xlane.f32.xlu0 %v1630
        %v2142 = vpop.xlane.xlu0 %2141
        %2143 = vadd.xlane.f32.xlu0 %v1632
        %v2144 = vpop.xlane.xlu0 %2143
        %2145 = vadd.xlane.f32.xlu0 %v1634
        %v2146 = vpop.xlane.xlu0 %2145
        %2147 = vadd.xlane.f32.xlu0 %v1636
        %v2148 = vpop.xlane.xlu0 %2147
        %2149 = vadd.xlane.f32.xlu0 %v1638
        %v2150 = vpop.xlane.xlu0 %2149
        %2151 = vadd.xlane.f32.xlu0 %v1640
        %v2152 = vpop.xlane.xlu0 %2151
        %2153 = vadd.xlane.f32.xlu0 %v1642
        %v2154 = vpop.xlane.xlu0 %2153
        %2155 = vadd.xlane.f32.xlu0 %v1644
        %v2156 = vpop.xlane.xlu0 %2155
        %2157 = vadd.xlane.f32.xlu0 %v1646
        %v2158 = vpop.xlane.xlu0 %2157
        %2159 = vadd.xlane.f32.xlu0 %v1648
        %v2160 = vpop.xlane.xlu0 %2159
        %2161 = vadd.xlane.f32.xlu0 %v1650
        %v2162 = vpop.xlane.xlu0 %2161
        %2163 = vadd.xlane.f32.xlu0 %v1652
        %v2164 = vpop.xlane.xlu0 %2163
        %2165 = vadd.xlane.f32.xlu0 %v1654
        %v2166 = vpop.xlane.xlu0 %2165
        %2167 = vadd.xlane.f32.xlu0 %v1656
        %v2168 = vpop.xlane.xlu0 %2167
        %2169 = vadd.xlane.f32.xlu0 %v1658
        %v2170 = vpop.xlane.xlu0 %2169
        %2171 = vadd.xlane.f32.xlu0 %v1660
        %v2172 = vpop.xlane.xlu0 %2171
        %2173 = vadd.xlane.f32.xlu0 %v1662
        %v2174 = vpop.xlane.xlu0 %2173
        %2175 = vadd.xlane.f32.xlu0 %v1664
        %v2176 = vpop.xlane.xlu0 %2175
        %2177 = vadd.xlane.f32.xlu0 %v1666
        %v2178 = vpop.xlane.xlu0 %2177
        %2179 = vadd.xlane.f32.xlu0 %v1668
        %v2180 = vpop.xlane.xlu0 %2179
        %2181 = vadd.xlane.f32.xlu0 %v1670
        %v2182 = vpop.xlane.xlu0 %2181
        %2183 = vadd.xlane.f32.xlu0 %v1672
        %v2184 = vpop.xlane.xlu0 %2183
        %2185 = vadd.xlane.f32.xlu0 %v1674
        %v2186 = vpop.xlane.xlu0 %2185
        %2187 = vadd.xlane.f32.xlu0 %v1676
        %v2188 = vpop.xlane.xlu0 %2187
        %2189 = vadd.xlane.f32.xlu0 %v1678
        %v2190 = vpop.xlane.xlu0 %2189
        %2191 = vadd.xlane.f32.xlu0 %v1680
        %v2192 = vpop.xlane.xlu0 %2191
        %2193 = vadd.xlane.f32.xlu0 %v1682
        %v2194 = vpop.xlane.xlu0 %2193
        %2195 = vadd.xlane.f32.xlu0 %v1684
        %v2196 = vpop.xlane.xlu0 %2195
        %2197 = vadd.xlane.f32.xlu0 %v1686
        %v2198 = vpop.xlane.xlu0 %2197
        %2199 = vadd.xlane.f32.xlu0 %v1688
        %v2200 = vpop.xlane.xlu0 %2199
        %2201 = vadd.xlane.f32.xlu0 %v1690
        %v2202 = vpop.xlane.xlu0 %2201
        %2203 = vadd.xlane.f32.xlu0 %v1692
        %v2204 = vpop.xlane.xlu0 %2203
        %2205 = vadd.xlane.f32.xlu0 %v1694
        %v2206 = vpop.xlane.xlu0 %2205
        %2207 = vadd.xlane.f32.xlu0 %v1696
        %v2208 = vpop.xlane.xlu0 %2207
        %2209 = vadd.xlane.f32.xlu0 %v1698
        %v2210 = vpop.xlane.xlu0 %2209
        %2211 = vadd.xlane.f32.xlu0 %v1700
        %v2212 = vpop.xlane.xlu0 %2211
        %2213 = vadd.xlane.f32.xlu0 %v1702
        %v2214 = vpop.xlane.xlu0 %2213
        %2215 = vadd.xlane.f32.xlu0 %v1704
        %v2216 = vpop.xlane.xlu0 %2215
        %2217 = vadd.xlane.f32.xlu0 %v1706
        %v2218 = vpop.xlane.xlu0 %2217
        %2219 = vadd.xlane.f32.xlu0 %v1708
        %v2220 = vpop.xlane.xlu0 %2219
        %2221 = vadd.xlane.f32.xlu0 %v1710
        %v2222 = vpop.xlane.xlu0 %2221
        %2223 = vadd.xlane.f32.xlu0 %v1712
        %v2224 = vpop.xlane.xlu0 %2223
        %2225 = vadd.xlane.f32.xlu0 %v1714
        %v2226 = vpop.xlane.xlu0 %2225
        %2227 = vadd.xlane.f32.xlu0 %v1716
        %v2228 = vpop.xlane.xlu0 %2227
        %2229 = vadd.xlane.f32.xlu0 %v1718
        %v2230 = vpop.xlane.xlu0 %2229
        %2231 = vadd.xlane.f32.xlu0 %v1720
        %v2232 = vpop.xlane.xlu0 %2231
        %2233 = vadd.xlane.f32.xlu0 %v1722
        %v2234 = vpop.xlane.xlu0 %2233
        %2235 = vadd.xlane.f32.xlu0 %v1724
        %v2236 = vpop.xlane.xlu0 %2235
        %2237 = vadd.xlane.f32.xlu0 %v1726
        %v2238 = vpop.xlane.xlu0 %2237
        %2239 = vadd.xlane.f32.xlu0 %v1728
        %v2240 = vpop.xlane.xlu0 %2239
        %2241 = vadd.xlane.f32.xlu0 %v1730
        %v2242 = vpop.xlane.xlu0 %2241
        %2243 = vadd.xlane.f32.xlu0 %v1732
        %v2244 = vpop.xlane.xlu0 %2243
        %2245 = vadd.xlane.f32.xlu0 %v1734
        %v2246 = vpop.xlane.xlu0 %2245
        %2247 = vadd.xlane.f32.xlu0 %v1736
        %v2248 = vpop.xlane.xlu0 %2247
        %2249 = vadd.xlane.f32.xlu0 %v1738
        %v2250 = vpop.xlane.xlu0 %2249
        %2251 = vadd.xlane.f32.xlu0 %v1740
        %v2252 = vpop.xlane.xlu0 %2251
        %2253 = vadd.xlane.f32.xlu0 %v1742
        %v2254 = vpop.xlane.xlu0 %2253
        %2255 = vadd.xlane.f32.xlu0 %v1744
        %v2256 = vpop.xlane.xlu0 %2255
        %2257 = vadd.xlane.f32.xlu0 %v1746
        %v2258 = vpop.xlane.xlu0 %2257
        %2259 = vadd.xlane.f32.xlu0 %v1748
        %v2260 = vpop.xlane.xlu0 %2259
        %2261 = vadd.xlane.f32.xlu0 %v1750
        %v2262 = vpop.xlane.xlu0 %2261
        %2263 = vadd.xlane.f32.xlu0 %v1752
        %v2264 = vpop.xlane.xlu0 %2263
        %2265 = vadd.xlane.f32.xlu0 %v1754
        %v2266 = vpop.xlane.xlu0 %2265
        %2267 = vadd.xlane.f32.xlu0 %v1756
        %v2268 = vpop.xlane.xlu0 %2267
        %2269 = vadd.xlane.f32.xlu0 %v1758
        %v2270 = vpop.xlane.xlu0 %2269
        %2271 = vadd.xlane.f32.xlu0 %v1760
        %v2272 = vpop.xlane.xlu0 %2271
        %2273 = vadd.xlane.f32.xlu0 %v1762
        %v2274 = vpop.xlane.xlu0 %2273
        %2275 = vadd.xlane.f32.xlu0 %v1764
        %v2276 = vpop.xlane.xlu0 %2275
        %2277 = vadd.xlane.f32.xlu0 %v1766
        %v2278 = vpop.xlane.xlu0 %2277
        %2279 = vadd.xlane.f32.xlu0 %v1768
        %v2280 = vpop.xlane.xlu0 %2279
        %2281 = vadd.xlane.f32.xlu0 %v1770
        %v2282 = vpop.xlane.xlu0 %2281
        %2283 = vadd.xlane.f32.xlu0 %v1772
        %v2284 = vpop.xlane.xlu0 %2283
        %2285 = vadd.xlane.f32.xlu0 %v1774
        %v2286 = vpop.xlane.xlu0 %2285
        %2287 = vadd.xlane.f32.xlu0 %v1776
        %v2288 = vpop.xlane.xlu0 %2287
        %2289 = vadd.xlane.f32.xlu0 %v1778
        %v2290 = vpop.xlane.xlu0 %2289
        %2291 = vadd.xlane.f32.xlu0 %v1780
        %v2292 = vpop.xlane.xlu0 %2291
        %2293 = vadd.xlane.f32.xlu0 %v1782
        %v2294 = vpop.xlane.xlu0 %2293
        %2295 = vadd.xlane.f32.xlu0 %v1784
        %v2296 = vpop.xlane.xlu0 %2295
        %2297 = vadd.xlane.f32.xlu0 %v1786
        %v2298 = vpop.xlane.xlu0 %2297
        %2299 = vadd.xlane.f32.xlu0 %v1788
        %v2300 = vpop.xlane.xlu0 %2299
        %2301 = vadd.xlane.f32.xlu0 %v1790
        %v2302 = vpop.xlane.xlu0 %2301
        %2303 = vadd.xlane.f32.xlu0 %v1792
        %v2304 = vpop.xlane.xlu0 %2303
        %2305 = vadd.xlane.f32.xlu0 %v1794
        %v2306 = vpop.xlane.xlu0 %2305
        %2307 = vadd.xlane.f32.xlu0 %v1796
        %v2308 = vpop.xlane.xlu0 %2307
        %2309 = vadd.xlane.f32.xlu0 %v1798
        %v2310 = vpop.xlane.xlu0 %2309
        %2311 = vadd.xlane.f32.xlu0 %v1800
        %v2312 = vpop.xlane.xlu0 %2311
        %2313 = vadd.xlane.f32.xlu0 %v1802
        %v2314 = vpop.xlane.xlu0 %2313
        %2315 = vadd.xlane.f32.xlu0 %v1804
        %v2316 = vpop.xlane.xlu0 %2315
        %2317 = vadd.xlane.f32.xlu0 %v1806
        %v2318 = vpop.xlane.xlu0 %2317
        %2319 = vadd.xlane.f32.xlu0 %v1808
        %v2320 = vpop.xlane.xlu0 %2319
        %2321 = vadd.xlane.f32.xlu0 %v1810
        %v2322 = vpop.xlane.xlu0 %2321
        %2323 = vadd.xlane.f32.xlu0 %v1812
        %v2324 = vpop.xlane.xlu0 %2323
        %2325 = vadd.xlane.f32.xlu0 %v1814
        %v2326 = vpop.xlane.xlu0 %2325
        %2327 = vadd.xlane.f32.xlu0 %v1816
        %v2328 = vpop.xlane.xlu0 %2327
        %2329 = vadd.xlane.f32.xlu0 %v1818
        %v2330 = vpop.xlane.xlu0 %2329
        %2331 = vadd.xlane.f32.xlu0 %v1820
        %v2332 = vpop.xlane.xlu0 %2331
        %2333 = vadd.xlane.f32.xlu0 %v1822
        %v2334 = vpop.xlane.xlu0 %2333
        %2335 = vadd.xlane.f32.xlu0 %v1824
        %v2336 = vpop.xlane.xlu0 %2335
        %2337 = vadd.xlane.f32.xlu0 %v1826
        %v2338 = vpop.xlane.xlu0 %2337
        %2339 = vadd.xlane.f32.xlu0 %v1828
        %v2340 = vpop.xlane.xlu0 %2339
        %2341 = vadd.xlane.f32.xlu0 %v1830
        %v2342 = vpop.xlane.xlu0 %2341
        %2343 = vadd.xlane.f32.xlu0 %v1832
        %v2344 = vpop.xlane.xlu0 %2343
        %2345 = vadd.xlane.f32.xlu0 %v1834
        %v2346 = vpop.xlane.xlu0 %2345
        %2347 = vadd.xlane.f32.xlu0 %v1836
        %v2348 = vpop.xlane.xlu0 %2347
        %2349 = vadd.xlane.f32.xlu0 %v1838
        %v2350 = vpop.xlane.xlu0 %2349
        %2351 = vadd.xlane.f32.xlu0 %v1840
        %v2352 = vpop.xlane.xlu0 %2351
        %2353 = vadd.xlane.f32.xlu0 %v1842
        %v2354 = vpop.xlane.xlu0 %2353
        %2355 = vadd.xlane.f32.xlu0 %v1844
        %v2356 = vpop.xlane.xlu0 %2355
        %2357 = vadd.xlane.f32.xlu0 %v1846
        %v2358 = vpop.xlane.xlu0 %2357
        %2359 = vadd.xlane.f32.xlu0 %v1848
        %v2360 = vpop.xlane.xlu0 %2359
        %2361 = vadd.xlane.f32.xlu0 %v1850
        %v2362 = vpop.xlane.xlu0 %2361
        %2363 = vadd.xlane.f32.xlu0 %v1852
        %v2364 = vpop.xlane.xlu0 %2363
        %2365 = vadd.xlane.f32.xlu0 %v1854
        %v2366 = vpop.xlane.xlu0 %2365
        %2367 = vadd.xlane.f32.xlu0 %v1856
        %v2368 = vpop.xlane.xlu0 %2367
        %2369 = vadd.xlane.f32.xlu0 %v1858
        %v2370 = vpop.xlane.xlu0 %2369
        %2371 = vadd.xlane.f32.xlu0 %v1860
        %v2372 = vpop.xlane.xlu0 %2371
        %2373 = vadd.xlane.f32.xlu0 %v1862
        %v2374 = vpop.xlane.xlu0 %2373
        %2375 = vadd.xlane.f32.xlu0 %v1864
        %v2376 = vpop.xlane.xlu0 %2375
        %2377 = vadd.xlane.f32.xlu0 %v1866
        %v2378 = vpop.xlane.xlu0 %2377
        %2379 = vadd.xlane.f32.xlu0 %v1868
        %v2380 = vpop.xlane.xlu0 %2379
        %2381 = vadd.xlane.f32.xlu0 %v1870
        %v2382 = vpop.xlane.xlu0 %2381
        %2383 = vadd.xlane.f32.xlu0 %v1872
        %v2384 = vpop.xlane.xlu0 %2383
        %2385 = vadd.xlane.f32.xlu0 %v1874
        %v2386 = vpop.xlane.xlu0 %2385
        %2387 = vadd.xlane.f32.xlu0 %v1876
        %v2388 = vpop.xlane.xlu0 %2387
        %2389 = vadd.xlane.f32.xlu0 %v1878
        %v2390 = vpop.xlane.xlu0 %2389
        %2391 = vadd.xlane.f32.xlu0 %v1880
        %v2392 = vpop.xlane.xlu0 %2391
        %2393 = vadd.xlane.f32.xlu0 %v1882
        %v2394 = vpop.xlane.xlu0 %2393
        %2395 = vadd.xlane.f32.xlu0 %v1884
        %v2396 = vpop.xlane.xlu0 %2395
        %2397 = vadd.xlane.f32.xlu0 %v1886
        %v2398 = vpop.xlane.xlu0 %2397
        %2399 = vadd.xlane.f32.xlu0 %v1888
        %v2400 = vpop.xlane.xlu0 %2399
        %2401 = vadd.xlane.f32.xlu0 %v1890
        %v2402 = vpop.xlane.xlu0 %2401
        %2403 = vadd.xlane.f32.xlu0 %v1892
        %v2404 = vpop.xlane.xlu0 %2403
        %2405 = vadd.xlane.f32.xlu0 %v1894
        %v2406 = vpop.xlane.xlu0 %2405
        %2407 = vadd.xlane.f32.xlu0 %v1896
        %v2408 = vpop.xlane.xlu0 %2407
        %2409 = vadd.xlane.f32.xlu0 %v1898
        %v2410 = vpop.xlane.xlu0 %2409
        %2411 = vadd.xlane.f32.xlu0 %v1900
        %v2412 = vpop.xlane.xlu0 %2411
        %2413 = vadd.xlane.f32.xlu0 %v1902
        %v2414 = vpop.xlane.xlu0 %2413
        %2415 = vadd.xlane.f32.xlu0 %v1904
        %v2416 = vpop.xlane.xlu0 %2415
        %2417 = vadd.xlane.f32.xlu0 %v1906
        %v2418 = vpop.xlane.xlu0 %2417
        %2419 = vadd.xlane.f32.xlu0 %v1908
        %v2420 = vpop.xlane.xlu0 %2419
        %2421 = vadd.xlane.f32.xlu0 %v1910
        %v2422 = vpop.xlane.xlu0 %2421
        %2423 = vadd.xlane.f32.xlu0 %v1912
        %v2424 = vpop.xlane.xlu0 %2423
        %2425 = vadd.xlane.f32.xlu0 %v1914
        %v2426 = vpop.xlane.xlu0 %2425
        %2427 = vadd.xlane.f32.xlu0 %v1916
        %v2428 = vpop.xlane.xlu0 %2427
        %2429 = vadd.xlane.f32.xlu0 %v1918
        %v2430 = vpop.xlane.xlu0 %2429
        %2431 = vadd.xlane.f32.xlu0 %v1920
        %v2432 = vpop.xlane.xlu0 %2431
        %2433 = vadd.xlane.f32.xlu0 %v1922
        %v2434 = vpop.xlane.xlu0 %2433
        %2435 = vadd.xlane.f32.xlu0 %v1924
        %v2436 = vpop.xlane.xlu0 %2435
        %2437 = vadd.xlane.f32.xlu0 %v1926
        %v2438 = vpop.xlane.xlu0 %2437
        %2439 = vadd.xlane.f32.xlu0 %v1928
        %v2440 = vpop.xlane.xlu0 %2439
        %2441 = vadd.xlane.f32.xlu0 %v1930
        %v2442 = vpop.xlane.xlu0 %2441
        %2443 = vadd.xlane.f32.xlu0 %v1932
        %v2444 = vpop.xlane.xlu0 %2443
        %2445 = vadd.xlane.f32.xlu0 %v1934
        %v2446 = vpop.xlane.xlu0 %2445
        %2447 = vadd.xlane.f32.xlu0 %v1936
        %v2448 = vpop.xlane.xlu0 %2447
        %2449 = vadd.xlane.f32.xlu0 %v1938
        %v2450 = vpop.xlane.xlu0 %2449
        %2451 = vadd.xlane.f32.xlu0 %v1940
        %v2452 = vpop.xlane.xlu0 %2451
        %2453 = vadd.xlane.f32.xlu0 %v1942
        %v2454 = vpop.xlane.xlu0 %2453
        %2455 = vadd.xlane.f32.xlu0 %v1944
        %v2456 = vpop.xlane.xlu0 %2455
        %2457 = vadd.xlane.f32.xlu0 %v1946
        %v2458 = vpop.xlane.xlu0 %2457
        %2459 = vadd.xlane.f32.xlu0 %v1948
        %v2460 = vpop.xlane.xlu0 %2459
        %2461 = vadd.xlane.f32.xlu0 %v1950
        %v2462 = vpop.xlane.xlu0 %2461
        %2463 = vadd.xlane.f32.xlu0 %v1952
        %v2464 = vpop.xlane.xlu0 %2463
        %2465 = vadd.xlane.f32.xlu0 %v1954
        %v2466 = vpop.xlane.xlu0 %2465
        %2467 = vadd.xlane.f32.xlu0 %v1956
        %v2468 = vpop.xlane.xlu0 %2467
        %2469 = vadd.xlane.f32.xlu0 %v1958
        %v2470 = vpop.xlane.xlu0 %2469
        %2471 = vadd.xlane.f32.xlu0 %v1960
        %v2472 = vpop.xlane.xlu0 %2471
        %2473 = vadd.xlane.f32.xlu0 %v1962
        %v2474 = vpop.xlane.xlu0 %2473
        %2475 = vadd.xlane.f32.xlu0 %v1964
        %v2476 = vpop.xlane.xlu0 %2475
        %2477 = vadd.xlane.f32.xlu0 %v1966
        %v2478 = vpop.xlane.xlu0 %2477
        %2479 = vadd.xlane.f32.xlu0 %v1968
        %v2480 = vpop.xlane.xlu0 %2479
        %2481 = vadd.xlane.f32.xlu0 %v1970
        %v2482 = vpop.xlane.xlu0 %2481
        %2483 = vadd.xlane.f32.xlu0 %v1972
        %v2484 = vpop.xlane.xlu0 %2483
        %2485 = vadd.xlane.f32.xlu0 %v1974
        %v2486 = vpop.xlane.xlu0 %2485
        %2487 = vadd.xlane.f32.xlu0 %v1976
        %v2488 = vpop.xlane.xlu0 %2487
        %2489 = vadd.xlane.f32.xlu0 %v1978
        %v2490 = vpop.xlane.xlu0 %2489
        %2491 = vadd.xlane.f32.xlu0 %v1980
        %v2492 = vpop.xlane.xlu0 %2491
        %2493 = vadd.xlane.f32.xlu0 %v1982
        %v2494 = vpop.xlane.xlu0 %2493
        %2495 = vadd.xlane.f32.xlu0 %v1984
        %v2496 = vpop.xlane.xlu0 %2495
        %2497 = vadd.xlane.f32.xlu0 %v1986
        %v2498 = vpop.xlane.xlu0 %2497
        %2499 = vadd.xlane.f32.xlu0 %v1988
        %v2500 = vpop.xlane.xlu0 %2499
        %2501 = vadd.xlane.f32.xlu0 %v1990
        %v2502 = vpop.xlane.xlu0 %2501
        %2503 = vadd.xlane.f32.xlu0 %v1992
        %v2504 = vpop.xlane.xlu0 %2503
        %2505 = vadd.xlane.f32.xlu0 %v1994
        %v2506 = vpop.xlane.xlu0 %2505
        %2507 = vadd.xlane.f32.xlu0 %v1996
        %v2508 = vpop.xlane.xlu0 %2507
        %2509 = vadd.xlane.f32.xlu0 %v1998
        %v2510 = vpop.xlane.xlu0 %2509
        %2511 = vadd.xlane.f32.xlu0 %v2000
        %v2512 = vpop.xlane.xlu0 %2511
        %2513 = vadd.xlane.f32.xlu0 %v2002
        %v2514 = vpop.xlane.xlu0 %2513
        %2515 = vadd.xlane.f32.xlu0 %v2004
        %v2516 = vpop.xlane.xlu0 %2515
        %2517 = vadd.xlane.f32.xlu0 %v2006
        %v2518 = vpop.xlane.xlu0 %2517
        %2519 = vadd.xlane.f32.xlu0 %v2008
        %v2520 = vpop.xlane.xlu0 %2519
        %2521 = vadd.xlane.f32.xlu0 %v2010
        %v2522 = vpop.xlane.xlu0 %2521
        %2523 = vadd.xlane.f32.xlu0 %v2012
        %v2524 = vpop.xlane.xlu0 %2523
        %2525 = vadd.xlane.f32.xlu0 %v2014
        %v2526 = vpop.xlane.xlu0 %2525
        %2527 = vadd.xlane.f32.xlu0 %v2016
        %v2528 = vpop.xlane.xlu0 %2527
        %2529 = vadd.xlane.f32.xlu0 %v2018
        %v2530 = vpop.xlane.xlu0 %2529
        %2531 = vadd.xlane.f32.xlu0 %v2020
        %v2532 = vpop.xlane.xlu0 %2531
        %2533 = vadd.xlane.f32.xlu0 %v2022
        %v2534 = vpop.xlane.xlu0 %2533
        %2535 = vadd.xlane.f32.xlu0 %v2024
        %v2536 = vpop.xlane.xlu0 %2535
        %2537 = vadd.xlane.f32.xlu0 %v2026
        %v2538 = vpop.xlane.xlu0 %2537
        %2539 = vadd.xlane.f32.xlu0 %v2028
        %v2540 = vpop.xlane.xlu0 %2539
        %2541 = vadd.xlane.f32.xlu0 %v2030
        %v2542 = vpop.xlane.xlu0 %2541
        %2543 = vadd.xlane.f32.xlu0 %v2032
        %v2544 = vpop.xlane.xlu0 %2543
        %2545 = vadd.xlane.f32.xlu0 %v2034
        %v2546 = vpop.xlane.xlu0 %2545
        %2547 = vadd.xlane.f32.xlu0 %v2036
        %v2548 = vpop.xlane.xlu0 %2547
        %2549 = vadd.xlane.f32.xlu0 %v2038
        %v2550 = vpop.xlane.xlu0 %2549
        %2551 = vadd.xlane.f32.xlu0 %v2040
        %v2552 = vpop.xlane.xlu0 %2551
        %2553 = vadd.xlane.f32.xlu0 %v2042
        %v2554 = vpop.xlane.xlu0 %2553
        %2555 = vadd.xlane.f32.xlu0 %v2044
        %v2556 = vpop.xlane.xlu0 %2555
        %2557 = vadd.xlane.f32.xlu0 %v2046
        %v2558 = vpop.xlane.xlu0 %2557
        %2559 = vadd.xlane.f32.xlu0 %v2048
        %v2560 = vpop.xlane.xlu0 %2559
        %2561 = vadd.xlane.f32.xlu0 %v2050
        %v2562 = vpop.xlane.xlu0 %2561
        %2563 = vadd.xlane.f32.xlu0 %v2052
        %v2564 = vpop.xlane.xlu0 %2563
        %2565 = vadd.xlane.f32.xlu0 %v2054
        %v2566 = vpop.xlane.xlu0 %2565
        %2567 = vadd.xlane.f32.xlu0 %v2056
        %v2568 = vpop.xlane.xlu0 %2567
        %2569 = vadd.xlane.f32.xlu0 %v2058
        %v2570 = vpop.xlane.xlu0 %2569
        %2571 = vadd.xlane.f32.xlu0 %v2060
        %v2572 = vpop.xlane.xlu0 %2571
        %2573 = vadd.xlane.f32.xlu0 %v2062
        %v2574 = vpop.xlane.xlu0 %2573
        %2575 = vadd.xlane.f32.xlu0 %v2064
        %v2576 = vpop.xlane.xlu0 %2575
        %2577 = vadd.xlane.f32.xlu0 %v2066
        %v2578 = vpop.xlane.xlu0 %2577
        %2579 = vadd.xlane.f32.xlu0 %v2068
        %v2580 = vpop.xlane.xlu0 %2579
        %2581 = vadd.xlane.f32.xlu0 %v2070
        %v2582 = vpop.xlane.xlu0 %2581
        %2583 = vadd.xlane.f32.xlu0 %v2072
        %v2584 = vpop.xlane.xlu0 %2583
        %2585 = vadd.xlane.f32.xlu0 %v2074
        %v2586 = vpop.xlane.xlu0 %2585
        %2587 = vadd.xlane.f32.xlu0 %v2076
        %v2588 = vpop.xlane.xlu0 %2587
        %2589 = vadd.xlane.f32.xlu0 %v2078
        %v2590 = vpop.xlane.xlu0 %2589
        %2591 = vadd.xlane.f32.xlu0 %v2080
        %v2592 = vpop.xlane.xlu0 %2591
        %2593 = vadd.xlane.f32.xlu0 %v2082
        %v2594 = vpop.xlane.xlu0 %2593
        %2595 = vadd.xlane.f32.xlu0 %v2084
        %v2596 = vpop.xlane.xlu0 %2595
        %2597 = vadd.xlane.f32.xlu0 %v2086
        %v2598 = vpop.xlane.xlu0 %2597
        %2599 = vadd.xlane.f32.xlu0 %v2088
        %v2600 = vpop.xlane.xlu0 %2599
        %2601 = vadd.xlane.f32.xlu0 %v2090
        %v2602 = vpop.xlane.xlu0 %2601
        %2603 = vadd.xlane.f32.xlu0 %v2092
        %v2604 = vpop.xlane.xlu0 %2603
        %2605 = vadd.xlane.f32.xlu0 %v2094
        %v2606 = vpop.xlane.xlu0 %2605
        %2607 = vadd.xlane.f32.xlu0 %v2096
        %v2608 = vpop.xlane.xlu0 %2607
        %2609 = vadd.xlane.f32.xlu0 %v2098
        %v2610 = vpop.xlane.xlu0 %2609
        %2611 = vadd.xlane.f32.xlu0 %v2100
        %v2612 = vpop.xlane.xlu0 %2611
        %2613 = vadd.xlane.f32.xlu0 %v2102
        %v2614 = vpop.xlane.xlu0 %2613
        %2615 = vadd.xlane.f32.xlu0 %v2104
        %v2616 = vpop.xlane.xlu0 %2615
        %v2617 = vlog2.pop %v2106
        %v2618 = vmul.f32 %v2617, 0.6931472
        %v2619 = vlog2.pop %v2108
        %v2620 = vmul.f32 %v2619, 0.6931472
        %v2621 = vlog2.pop %v2110
        %v2622 = vmul.f32 %v2621, 0.6931472
        %v2623 = vlog2.pop %v2112
        %v2624 = vmul.f32 %v2623, 0.6931472
        %v2625 = vlog2.pop %v2114
        %v2626 = vmul.f32 %v2625, 0.6931472
        %v2627 = vlog2.pop %v2116
        %v2628 = vmul.f32 %v2627, 0.6931472
        %v2629 = vlog2.pop %v2118
        %v2630 = vmul.f32 %v2629, 0.6931472
        %v2631 = vlog2.pop %v2120
        %v2632 = vmul.f32 %v2631, 0.6931472
        %v2633 = vlog2.pop %v2122
        %v2634 = vmul.f32 %v2633, 0.6931472
        %v2635 = vlog2.pop %v2124
        %v2636 = vmul.f32 %v2635, 0.6931472
        %v2637 = vlog2.pop %v2126
        %v2638 = vmul.f32 %v2637, 0.6931472
        %v2639 = vlog2.pop %v2128
        %v2640 = vmul.f32 %v2639, 0.6931472
        %v2641 = vlog2.pop %v2130
        %v2642 = vmul.f32 %v2641, 0.6931472
        %v2643 = vlog2.pop %v2132
        %v2644 = vmul.f32 %v2643, 0.6931472
        %v2645 = vlog2.pop %v2134
        %v2646 = vmul.f32 %v2645, 0.6931472
        %v2647 = vlog2.pop %v2136
        %v2648 = vmul.f32 %v2647, 0.6931472
        %v2649 = vlog2.pop %v2138
        %v2650 = vmul.f32 %v2649, 0.6931472
        %v2651 = vlog2.pop %v2140
        %v2652 = vmul.f32 %v2651, 0.6931472
        %v2653 = vlog2.pop %v2142
        %v2654 = vmul.f32 %v2653, 0.6931472
        %v2655 = vlog2.pop %v2144
        %v2656 = vmul.f32 %v2655, 0.6931472
        %v2657 = vlog2.pop %v2146
        %v2658 = vmul.f32 %v2657, 0.6931472
        %v2659 = vlog2.pop %v2148
        %v2660 = vmul.f32 %v2659, 0.6931472
        %v2661 = vlog2.pop %v2150
        %v2662 = vmul.f32 %v2661, 0.6931472
        %v2663 = vlog2.pop %v2152
        %v2664 = vmul.f32 %v2663, 0.6931472
        %v2665 = vlog2.pop %v2154
        %v2666 = vmul.f32 %v2665, 0.6931472
        %v2667 = vlog2.pop %v2156
        %v2668 = vmul.f32 %v2667, 0.6931472
        %v2669 = vlog2.pop %v2158
        %v2670 = vmul.f32 %v2669, 0.6931472
        %v2671 = vlog2.pop %v2160
        %v2672 = vmul.f32 %v2671, 0.6931472
        %v2673 = vlog2.pop %v2162
        %v2674 = vmul.f32 %v2673, 0.6931472
        %v2675 = vlog2.pop %v2164
        %v2676 = vmul.f32 %v2675, 0.6931472
        %v2677 = vlog2.pop %v2166
        %v2678 = vmul.f32 %v2677, 0.6931472
        %v2679 = vlog2.pop %v2168
        %v2680 = vmul.f32 %v2679, 0.6931472
        %v2681 = vlog2.pop %v2170
        %v2682 = vmul.f32 %v2681, 0.6931472
        %v2683 = vlog2.pop %v2172
        %v2684 = vmul.f32 %v2683, 0.6931472
        %v2685 = vlog2.pop %v2174
        %v2686 = vmul.f32 %v2685, 0.6931472
        %v2687 = vlog2.pop %v2176
        %v2688 = vmul.f32 %v2687, 0.6931472
        %v2689 = vlog2.pop %v2178
        %v2690 = vmul.f32 %v2689, 0.6931472
        %v2691 = vlog2.pop %v2180
        %v2692 = vmul.f32 %v2691, 0.6931472
        %v2693 = vlog2.pop %v2182
        %v2694 = vmul.f32 %v2693, 0.6931472
        %v2695 = vlog2.pop %v2184
        %v2696 = vmul.f32 %v2695, 0.6931472
        %v2697 = vlog2.pop %v2186
        %v2698 = vmul.f32 %v2697, 0.6931472
        %v2699 = vlog2.pop %v2188
        %v2700 = vmul.f32 %v2699, 0.6931472
        %v2701 = vlog2.pop %v2190
        %v2702 = vmul.f32 %v2701, 0.6931472
        %v2703 = vlog2.pop %v2192
        %v2704 = vmul.f32 %v2703, 0.6931472
        %v2705 = vlog2.pop %v2194
        %v2706 = vmul.f32 %v2705, 0.6931472
        %v2707 = vlog2.pop %v2196
        %v2708 = vmul.f32 %v2707, 0.6931472
        %v2709 = vlog2.pop %v2198
        %v2710 = vmul.f32 %v2709, 0.6931472
        %v2711 = vlog2.pop %v2200
        %v2712 = vmul.f32 %v2711, 0.6931472
        %v2713 = vlog2.pop %v2202
        %v2714 = vmul.f32 %v2713, 0.6931472
        %v2715 = vlog2.pop %v2204
        %v2716 = vmul.f32 %v2715, 0.6931472
        %v2717 = vlog2.pop %v2206
        %v2718 = vmul.f32 %v2717, 0.6931472
        %v2719 = vlog2.pop %v2208
        %v2720 = vmul.f32 %v2719, 0.6931472
        %v2721 = vlog2.pop %v2210
        %v2722 = vmul.f32 %v2721, 0.6931472
        %v2723 = vlog2.pop %v2212
        %v2724 = vmul.f32 %v2723, 0.6931472
        %v2725 = vlog2.pop %v2214
        %v2726 = vmul.f32 %v2725, 0.6931472
        %v2727 = vlog2.pop %v2216
        %v2728 = vmul.f32 %v2727, 0.6931472
        %v2729 = vlog2.pop %v2218
        %v2730 = vmul.f32 %v2729, 0.6931472
        %v2731 = vlog2.pop %v2220
        %v2732 = vmul.f32 %v2731, 0.6931472
        %v2733 = vlog2.pop %v2222
        %v2734 = vmul.f32 %v2733, 0.6931472
        %v2735 = vlog2.pop %v2224
        %v2736 = vmul.f32 %v2735, 0.6931472
        %v2737 = vlog2.pop %v2226
        %v2738 = vmul.f32 %v2737, 0.6931472
        %v2739 = vlog2.pop %v2228
        %v2740 = vmul.f32 %v2739, 0.6931472
        %v2741 = vlog2.pop %v2230
        %v2742 = vmul.f32 %v2741, 0.6931472
        %v2743 = vlog2.pop %v2232
        %v2744 = vmul.f32 %v2743, 0.6931472
        %v2745 = vlog2.pop %v2234
        %v2746 = vmul.f32 %v2745, 0.6931472
        %v2747 = vlog2.pop %v2236
        %v2748 = vmul.f32 %v2747, 0.6931472
        %v2749 = vlog2.pop %v2238
        %v2750 = vmul.f32 %v2749, 0.6931472
        %v2751 = vlog2.pop %v2240
        %v2752 = vmul.f32 %v2751, 0.6931472
        %v2753 = vlog2.pop %v2242
        %v2754 = vmul.f32 %v2753, 0.6931472
        %v2755 = vlog2.pop %v2244
        %v2756 = vmul.f32 %v2755, 0.6931472
        %v2757 = vlog2.pop %v2246
        %v2758 = vmul.f32 %v2757, 0.6931472
        %v2759 = vlog2.pop %v2248
        %v2760 = vmul.f32 %v2759, 0.6931472
        %v2761 = vlog2.pop %v2250
        %v2762 = vmul.f32 %v2761, 0.6931472
        %v2763 = vlog2.pop %v2252
        %v2764 = vmul.f32 %v2763, 0.6931472
        %v2765 = vlog2.pop %v2254
        %v2766 = vmul.f32 %v2765, 0.6931472
        %v2767 = vlog2.pop %v2256
        %v2768 = vmul.f32 %v2767, 0.6931472
        %v2769 = vlog2.pop %v2258
        %v2770 = vmul.f32 %v2769, 0.6931472
        %v2771 = vlog2.pop %v2260
        %v2772 = vmul.f32 %v2771, 0.6931472
        %v2773 = vlog2.pop %v2262
        %v2774 = vmul.f32 %v2773, 0.6931472
        %v2775 = vlog2.pop %v2264
        %v2776 = vmul.f32 %v2775, 0.6931472
        %v2777 = vlog2.pop %v2266
        %v2778 = vmul.f32 %v2777, 0.6931472
        %v2779 = vlog2.pop %v2268
        %v2780 = vmul.f32 %v2779, 0.6931472
        %v2781 = vlog2.pop %v2270
        %v2782 = vmul.f32 %v2781, 0.6931472
        %v2783 = vlog2.pop %v2272
        %v2784 = vmul.f32 %v2783, 0.6931472
        %v2785 = vlog2.pop %v2274
        %v2786 = vmul.f32 %v2785, 0.6931472
        %v2787 = vlog2.pop %v2276
        %v2788 = vmul.f32 %v2787, 0.6931472
        %v2789 = vlog2.pop %v2278
        %v2790 = vmul.f32 %v2789, 0.6931472
        %v2791 = vlog2.pop %v2280
        %v2792 = vmul.f32 %v2791, 0.6931472
        %v2793 = vlog2.pop %v2282
        %v2794 = vmul.f32 %v2793, 0.6931472
        %v2795 = vlog2.pop %v2284
        %v2796 = vmul.f32 %v2795, 0.6931472
        %v2797 = vlog2.pop %v2286
        %v2798 = vmul.f32 %v2797, 0.6931472
        %v2799 = vlog2.pop %v2288
        %v2800 = vmul.f32 %v2799, 0.6931472
        %v2801 = vlog2.pop %v2290
        %v2802 = vmul.f32 %v2801, 0.6931472
        %v2803 = vlog2.pop %v2292
        %v2804 = vmul.f32 %v2803, 0.6931472
        %v2805 = vlog2.pop %v2294
        %v2806 = vmul.f32 %v2805, 0.6931472
        %v2807 = vlog2.pop %v2296
        %v2808 = vmul.f32 %v2807, 0.6931472
        %v2809 = vlog2.pop %v2298
        %v2810 = vmul.f32 %v2809, 0.6931472
        %v2811 = vlog2.pop %v2300
        %v2812 = vmul.f32 %v2811, 0.6931472
        %v2813 = vlog2.pop %v2302
        %v2814 = vmul.f32 %v2813, 0.6931472
        %v2815 = vlog2.pop %v2304
        %v2816 = vmul.f32 %v2815, 0.6931472
        %v2817 = vlog2.pop %v2306
        %v2818 = vmul.f32 %v2817, 0.6931472
        %v2819 = vlog2.pop %v2308
        %v2820 = vmul.f32 %v2819, 0.6931472
        %v2821 = vlog2.pop %v2310
        %v2822 = vmul.f32 %v2821, 0.6931472
        %v2823 = vlog2.pop %v2312
        %v2824 = vmul.f32 %v2823, 0.6931472
        %v2825 = vlog2.pop %v2314
        %v2826 = vmul.f32 %v2825, 0.6931472
        %v2827 = vlog2.pop %v2316
        %v2828 = vmul.f32 %v2827, 0.6931472
        %v2829 = vlog2.pop %v2318
        %v2830 = vmul.f32 %v2829, 0.6931472
        %v2831 = vlog2.pop %v2320
        %v2832 = vmul.f32 %v2831, 0.6931472
        %v2833 = vlog2.pop %v2322
        %v2834 = vmul.f32 %v2833, 0.6931472
        %v2835 = vlog2.pop %v2324
        %v2836 = vmul.f32 %v2835, 0.6931472
        %v2837 = vlog2.pop %v2326
        %v2838 = vmul.f32 %v2837, 0.6931472
        %v2839 = vlog2.pop %v2328
        %v2840 = vmul.f32 %v2839, 0.6931472
        %v2841 = vlog2.pop %v2330
        %v2842 = vmul.f32 %v2841, 0.6931472
        %v2843 = vlog2.pop %v2332
        %v2844 = vmul.f32 %v2843, 0.6931472
        %v2845 = vlog2.pop %v2334
        %v2846 = vmul.f32 %v2845, 0.6931472
        %v2847 = vlog2.pop %v2336
        %v2848 = vmul.f32 %v2847, 0.6931472
        %v2849 = vlog2.pop %v2338
        %v2850 = vmul.f32 %v2849, 0.6931472
        %v2851 = vlog2.pop %v2340
        %v2852 = vmul.f32 %v2851, 0.6931472
        %v2853 = vlog2.pop %v2342
        %v2854 = vmul.f32 %v2853, 0.6931472
        %v2855 = vlog2.pop %v2344
        %v2856 = vmul.f32 %v2855, 0.6931472
        %v2857 = vlog2.pop %v2346
        %v2858 = vmul.f32 %v2857, 0.6931472
        %v2859 = vlog2.pop %v2348
        %v2860 = vmul.f32 %v2859, 0.6931472
        %v2861 = vlog2.pop %v2350
        %v2862 = vmul.f32 %v2861, 0.6931472
        %v2863 = vlog2.pop %v2352
        %v2864 = vmul.f32 %v2863, 0.6931472
        %v2865 = vlog2.pop %v2354
        %v2866 = vmul.f32 %v2865, 0.6931472
        %v2867 = vlog2.pop %v2356
        %v2868 = vmul.f32 %v2867, 0.6931472
        %v2869 = vlog2.pop %v2358
        %v2870 = vmul.f32 %v2869, 0.6931472
        %v2871 = vlog2.pop %v2360
        %v2872 = vmul.f32 %v2871, 0.6931472
        %v2873 = vlog2.pop %v2362
        %v2874 = vmul.f32 %v2873, 0.6931472
        %v2875 = vlog2.pop %v2364
        %v2876 = vmul.f32 %v2875, 0.6931472
        %v2877 = vlog2.pop %v2366
        %v2878 = vmul.f32 %v2877, 0.6931472
        %v2879 = vlog2.pop %v2368
        %v2880 = vmul.f32 %v2879, 0.6931472
        %v2881 = vlog2.pop %v2370
        %v2882 = vmul.f32 %v2881, 0.6931472
        %v2883 = vlog2.pop %v2372
        %v2884 = vmul.f32 %v2883, 0.6931472
        %v2885 = vlog2.pop %v2374
        %v2886 = vmul.f32 %v2885, 0.6931472
        %v2887 = vlog2.pop %v2376
        %v2888 = vmul.f32 %v2887, 0.6931472
        %v2889 = vlog2.pop %v2378
        %v2890 = vmul.f32 %v2889, 0.6931472
        %v2891 = vlog2.pop %v2380
        %v2892 = vmul.f32 %v2891, 0.6931472
        %v2893 = vlog2.pop %v2382
        %v2894 = vmul.f32 %v2893, 0.6931472
        %v2895 = vlog2.pop %v2384
        %v2896 = vmul.f32 %v2895, 0.6931472
        %v2897 = vlog2.pop %v2386
        %v2898 = vmul.f32 %v2897, 0.6931472
        %v2899 = vlog2.pop %v2388
        %v2900 = vmul.f32 %v2899, 0.6931472
        %v2901 = vlog2.pop %v2390
        %v2902 = vmul.f32 %v2901, 0.6931472
        %v2903 = vlog2.pop %v2392
        %v2904 = vmul.f32 %v2903, 0.6931472
        %v2905 = vlog2.pop %v2394
        %v2906 = vmul.f32 %v2905, 0.6931472
        %v2907 = vlog2.pop %v2396
        %v2908 = vmul.f32 %v2907, 0.6931472
        %v2909 = vlog2.pop %v2398
        %v2910 = vmul.f32 %v2909, 0.6931472
        %v2911 = vlog2.pop %v2400
        %v2912 = vmul.f32 %v2911, 0.6931472
        %v2913 = vlog2.pop %v2402
        %v2914 = vmul.f32 %v2913, 0.6931472
        %v2915 = vlog2.pop %v2404
        %v2916 = vmul.f32 %v2915, 0.6931472
        %v2917 = vlog2.pop %v2406
        %v2918 = vmul.f32 %v2917, 0.6931472
        %v2919 = vlog2.pop %v2408
        %v2920 = vmul.f32 %v2919, 0.6931472
        %v2921 = vlog2.pop %v2410
        %v2922 = vmul.f32 %v2921, 0.6931472
        %v2923 = vlog2.pop %v2412
        %v2924 = vmul.f32 %v2923, 0.6931472
        %v2925 = vlog2.pop %v2414
        %v2926 = vmul.f32 %v2925, 0.6931472
        %v2927 = vlog2.pop %v2416
        %v2928 = vmul.f32 %v2927, 0.6931472
        %v2929 = vlog2.pop %v2418
        %v2930 = vmul.f32 %v2929, 0.6931472
        %v2931 = vlog2.pop %v2420
        %v2932 = vmul.f32 %v2931, 0.6931472
        %v2933 = vlog2.pop %v2422
        %v2934 = vmul.f32 %v2933, 0.6931472
        %v2935 = vlog2.pop %v2424
        %v2936 = vmul.f32 %v2935, 0.6931472
        %v2937 = vlog2.pop %v2426
        %v2938 = vmul.f32 %v2937, 0.6931472
        %v2939 = vlog2.pop %v2428
        %v2940 = vmul.f32 %v2939, 0.6931472
        %v2941 = vlog2.pop %v2430
        %v2942 = vmul.f32 %v2941, 0.6931472
        %v2943 = vlog2.pop %v2432
        %v2944 = vmul.f32 %v2943, 0.6931472
        %v2945 = vlog2.pop %v2434
        %v2946 = vmul.f32 %v2945, 0.6931472
        %v2947 = vlog2.pop %v2436
        %v2948 = vmul.f32 %v2947, 0.6931472
        %v2949 = vlog2.pop %v2438
        %v2950 = vmul.f32 %v2949, 0.6931472
        %v2951 = vlog2.pop %v2440
        %v2952 = vmul.f32 %v2951, 0.6931472
        %v2953 = vlog2.pop %v2442
        %v2954 = vmul.f32 %v2953, 0.6931472
        %v2955 = vlog2.pop %v2444
        %v2956 = vmul.f32 %v2955, 0.6931472
        %v2957 = vlog2.pop %v2446
        %v2958 = vmul.f32 %v2957, 0.6931472
        %v2959 = vlog2.pop %v2448
        %v2960 = vmul.f32 %v2959, 0.6931472
        %v2961 = vlog2.pop %v2450
        %v2962 = vmul.f32 %v2961, 0.6931472
        %v2963 = vlog2.pop %v2452
        %v2964 = vmul.f32 %v2963, 0.6931472
        %v2965 = vlog2.pop %v2454
        %v2966 = vmul.f32 %v2965, 0.6931472
        %v2967 = vlog2.pop %v2456
        %v2968 = vmul.f32 %v2967, 0.6931472
        %v2969 = vlog2.pop %v2458
        %v2970 = vmul.f32 %v2969, 0.6931472
        %v2971 = vlog2.pop %v2460
        %v2972 = vmul.f32 %v2971, 0.6931472
        %v2973 = vlog2.pop %v2462
        %v2974 = vmul.f32 %v2973, 0.6931472
        %v2975 = vlog2.pop %v2464
        %v2976 = vmul.f32 %v2975, 0.6931472
        %v2977 = vlog2.pop %v2466
        %v2978 = vmul.f32 %v2977, 0.6931472
        %v2979 = vlog2.pop %v2468
        %v2980 = vmul.f32 %v2979, 0.6931472
        %v2981 = vlog2.pop %v2470
        %v2982 = vmul.f32 %v2981, 0.6931472
        %v2983 = vlog2.pop %v2472
        %v2984 = vmul.f32 %v2983, 0.6931472
        %v2985 = vlog2.pop %v2474
        %v2986 = vmul.f32 %v2985, 0.6931472
        %v2987 = vlog2.pop %v2476
        %v2988 = vmul.f32 %v2987, 0.6931472
        %v2989 = vlog2.pop %v2478
        %v2990 = vmul.f32 %v2989, 0.6931472
        %v2991 = vlog2.pop %v2480
        %v2992 = vmul.f32 %v2991, 0.6931472
        %v2993 = vlog2.pop %v2482
        %v2994 = vmul.f32 %v2993, 0.6931472
        %v2995 = vlog2.pop %v2484
        %v2996 = vmul.f32 %v2995, 0.6931472
        %v2997 = vlog2.pop %v2486
        %v2998 = vmul.f32 %v2997, 0.6931472
        %v2999 = vlog2.pop %v2488
        %v3000 = vmul.f32 %v2999, 0.6931472
        %v3001 = vlog2.pop %v2490
        %v3002 = vmul.f32 %v3001, 0.6931472
        %v3003 = vlog2.pop %v2492
        %v3004 = vmul.f32 %v3003, 0.6931472
        %v3005 = vlog2.pop %v2494
        %v3006 = vmul.f32 %v3005, 0.6931472
        %v3007 = vlog2.pop %v2496
        %v3008 = vmul.f32 %v3007, 0.6931472
        %v3009 = vlog2.pop %v2498
        %v3010 = vmul.f32 %v3009, 0.6931472
        %v3011 = vlog2.pop %v2500
        %v3012 = vmul.f32 %v3011, 0.6931472
        %v3013 = vlog2.pop %v2502
        %v3014 = vmul.f32 %v3013, 0.6931472
        %v3015 = vlog2.pop %v2504
        %v3016 = vmul.f32 %v3015, 0.6931472
        %v3017 = vlog2.pop %v2506
        %v3018 = vmul.f32 %v3017, 0.6931472
        %v3019 = vlog2.pop %v2508
        %v3020 = vmul.f32 %v3019, 0.6931472
        %v3021 = vlog2.pop %v2510
        %v3022 = vmul.f32 %v3021, 0.6931472
        %v3023 = vlog2.pop %v2512
        %v3024 = vmul.f32 %v3023, 0.6931472
        %v3025 = vlog2.pop %v2514
        %v3026 = vmul.f32 %v3025, 0.6931472
        %v3027 = vlog2.pop %v2516
        %v3028 = vmul.f32 %v3027, 0.6931472
        %v3029 = vlog2.pop %v2518
        %v3030 = vmul.f32 %v3029, 0.6931472
        %v3031 = vlog2.pop %v2520
        %v3032 = vmul.f32 %v3031, 0.6931472
        %v3033 = vlog2.pop %v2522
        %v3034 = vmul.f32 %v3033, 0.6931472
        %v3035 = vlog2.pop %v2524
        %v3036 = vmul.f32 %v3035, 0.6931472
        %v3037 = vlog2.pop %v2526
        %v3038 = vmul.f32 %v3037, 0.6931472
        %v3039 = vlog2.pop %v2528
        %v3040 = vmul.f32 %v3039, 0.6931472
        %v3041 = vlog2.pop %v2530
        %v3042 = vmul.f32 %v3041, 0.6931472
        %v3043 = vlog2.pop %v2532
        %v3044 = vmul.f32 %v3043, 0.6931472
        %v3045 = vlog2.pop %v2534
        %v3046 = vmul.f32 %v3045, 0.6931472
        %v3047 = vlog2.pop %v2536
        %v3048 = vmul.f32 %v3047, 0.6931472
        %v3049 = vlog2.pop %v2538
        %v3050 = vmul.f32 %v3049, 0.6931472
        %v3051 = vlog2.pop %v2540
        %v3052 = vmul.f32 %v3051, 0.6931472
        %v3053 = vlog2.pop %v2542
        %v3054 = vmul.f32 %v3053, 0.6931472
        %v3055 = vlog2.pop %v2544
        %v3056 = vmul.f32 %v3055, 0.6931472
        %v3057 = vlog2.pop %v2546
        %v3058 = vmul.f32 %v3057, 0.6931472
        %v3059 = vlog2.pop %v2548
        %v3060 = vmul.f32 %v3059, 0.6931472
        %v3061 = vlog2.pop %v2550
        %v3062 = vmul.f32 %v3061, 0.6931472
        %v3063 = vlog2.pop %v2552
        %v3064 = vmul.f32 %v3063, 0.6931472
        %v3065 = vlog2.pop %v2554
        %v3066 = vmul.f32 %v3065, 0.6931472
        %v3067 = vlog2.pop %v2556
        %v3068 = vmul.f32 %v3067, 0.6931472
        %v3069 = vlog2.pop %v2558
        %v3070 = vmul.f32 %v3069, 0.6931472
        %v3071 = vlog2.pop %v2560
        %v3072 = vmul.f32 %v3071, 0.6931472
        %v3073 = vlog2.pop %v2562
        %v3074 = vmul.f32 %v3073, 0.6931472
        %v3075 = vlog2.pop %v2564
        %v3076 = vmul.f32 %v3075, 0.6931472
        %v3077 = vlog2.pop %v2566
        %v3078 = vmul.f32 %v3077, 0.6931472
        %v3079 = vlog2.pop %v2568
        %v3080 = vmul.f32 %v3079, 0.6931472
        %v3081 = vlog2.pop %v2570
        %v3082 = vmul.f32 %v3081, 0.6931472
        %v3083 = vlog2.pop %v2572
        %v3084 = vmul.f32 %v3083, 0.6931472
        %v3085 = vlog2.pop %v2574
        %v3086 = vmul.f32 %v3085, 0.6931472
        %v3087 = vlog2.pop %v2576
        %v3088 = vmul.f32 %v3087, 0.6931472
        %v3089 = vlog2.pop %v2578
        %v3090 = vmul.f32 %v3089, 0.6931472
        %v3091 = vlog2.pop %v2580
        %v3092 = vmul.f32 %v3091, 0.6931472
        %v3093 = vlog2.pop %v2582
        %v3094 = vmul.f32 %v3093, 0.6931472
        %v3095 = vlog2.pop %v2584
        %v3096 = vmul.f32 %v3095, 0.6931472
        %v3097 = vlog2.pop %v2586
        %v3098 = vmul.f32 %v3097, 0.6931472
        %v3099 = vlog2.pop %v2588
        %v3100 = vmul.f32 %v3099, 0.6931472
        %v3101 = vlog2.pop %v2590
        %v3102 = vmul.f32 %v3101, 0.6931472
        %v3103 = vlog2.pop %v2592
        %v3104 = vmul.f32 %v3103, 0.6931472
        %v3105 = vlog2.pop %v2594
        %v3106 = vmul.f32 %v3105, 0.6931472
        %v3107 = vlog2.pop %v2596
        %v3108 = vmul.f32 %v3107, 0.6931472
        %v3109 = vlog2.pop %v2598
        %v3110 = vmul.f32 %v3109, 0.6931472
        %v3111 = vlog2.pop %v2600
        %v3112 = vmul.f32 %v3111, 0.6931472
        %v3113 = vlog2.pop %v2602
        %v3114 = vmul.f32 %v3113, 0.6931472
        %v3115 = vlog2.pop %v2604
        %v3116 = vmul.f32 %v3115, 0.6931472
        %v3117 = vlog2.pop %v2606
        %v3118 = vmul.f32 %v3117, 0.6931472
        %v3119 = vlog2.pop %v2608
        %v3120 = vmul.f32 %v3119, 0.6931472
        %v3121 = vlog2.pop %v2610
        %v3122 = vmul.f32 %v3121, 0.6931472
        %v3123 = vlog2.pop %v2612
        %v3124 = vmul.f32 %v3123, 0.6931472
        %v3125 = vlog2.pop %v2614
        %v3126 = vmul.f32 %v3125, 0.6931472
        %v3127 = vlog2.pop %v2616
        %v3128 = vmul.f32 %v3127, 0.6931472
        %v3129 = vrcp.pop %v2106
        %v3130 = vrcp.pop %v2108
        %v3131 = vrcp.pop %v2110
        %v3132 = vrcp.pop %v2112
        %v3133 = vrcp.pop %v2114
        %v3134 = vrcp.pop %v2116
        %v3135 = vrcp.pop %v2118
        %v3136 = vrcp.pop %v2120
        %v3137 = vrcp.pop %v2122
        %v3138 = vrcp.pop %v2124
        %v3139 = vrcp.pop %v2126
        %v3140 = vrcp.pop %v2128
        %v3141 = vrcp.pop %v2130
        %v3142 = vrcp.pop %v2132
        %v3143 = vrcp.pop %v2134
        %v3144 = vrcp.pop %v2136
        %v3145 = vrcp.pop %v2138
        %v3146 = vrcp.pop %v2140
        %v3147 = vrcp.pop %v2142
        %v3148 = vrcp.pop %v2144
        %v3149 = vrcp.pop %v2146
        %v3150 = vrcp.pop %v2148
        %v3151 = vrcp.pop %v2150
        %v3152 = vrcp.pop %v2152
        %v3153 = vrcp.pop %v2154
        %v3154 = vrcp.pop %v2156
        %v3155 = vrcp.pop %v2158
        %v3156 = vrcp.pop %v2160
        %v3157 = vrcp.pop %v2162
        %v3158 = vrcp.pop %v2164
        %v3159 = vrcp.pop %v2166
        %v3160 = vrcp.pop %v2168
        %v3161 = vrcp.pop %v2170
        %v3162 = vrcp.pop %v2172
        %v3163 = vrcp.pop %v2174
        %v3164 = vrcp.pop %v2176
        %v3165 = vrcp.pop %v2178
        %v3166 = vrcp.pop %v2180
        %v3167 = vrcp.pop %v2182
        %v3168 = vrcp.pop %v2184
        %v3169 = vrcp.pop %v2186
        %v3170 = vrcp.pop %v2188
        %v3171 = vrcp.pop %v2190
        %v3172 = vrcp.pop %v2192
        %v3173 = vrcp.pop %v2194
        %v3174 = vrcp.pop %v2196
        %v3175 = vrcp.pop %v2198
        %v3176 = vrcp.pop %v2200
        %v3177 = vrcp.pop %v2202
        %v3178 = vrcp.pop %v2204
        %v3179 = vrcp.pop %v2206
        %v3180 = vrcp.pop %v2208
        %v3181 = vrcp.pop %v2210
        %v3182 = vrcp.pop %v2212
        %v3183 = vrcp.pop %v2214
        %v3184 = vrcp.pop %v2216
        %v3185 = vrcp.pop %v2218
        %v3186 = vrcp.pop %v2220
        %v3187 = vrcp.pop %v2222
        %v3188 = vrcp.pop %v2224
        %v3189 = vrcp.pop %v2226
        %v3190 = vrcp.pop %v2228
        %v3191 = vrcp.pop %v2230
        %v3192 = vrcp.pop %v2232
        %v3193 = vrcp.pop %v2234
        %v3194 = vrcp.pop %v2236
        %v3195 = vrcp.pop %v2238
        %v3196 = vrcp.pop %v2240
        %v3197 = vrcp.pop %v2242
        %v3198 = vrcp.pop %v2244
        %v3199 = vrcp.pop %v2246
        %v3200 = vrcp.pop %v2248
        %v3201 = vrcp.pop %v2250
        %v3202 = vrcp.pop %v2252
        %v3203 = vrcp.pop %v2254
        %v3204 = vrcp.pop %v2256
        %v3205 = vrcp.pop %v2258
        %v3206 = vrcp.pop %v2260
        %v3207 = vrcp.pop %v2262
        %v3208 = vrcp.pop %v2264
        %v3209 = vrcp.pop %v2266
        %v3210 = vrcp.pop %v2268
        %v3211 = vrcp.pop %v2270
        %v3212 = vrcp.pop %v2272
        %v3213 = vrcp.pop %v2274
        %v3214 = vrcp.pop %v2276
        %v3215 = vrcp.pop %v2278
        %v3216 = vrcp.pop %v2280
        %v3217 = vrcp.pop %v2282
        %v3218 = vrcp.pop %v2284
        %v3219 = vrcp.pop %v2286
        %v3220 = vrcp.pop %v2288
        %v3221 = vrcp.pop %v2290
        %v3222 = vrcp.pop %v2292
        %v3223 = vrcp.pop %v2294
        %v3224 = vrcp.pop %v2296
        %v3225 = vrcp.pop %v2298
        %v3226 = vrcp.pop %v2300
        %v3227 = vrcp.pop %v2302
        %v3228 = vrcp.pop %v2304
        %v3229 = vrcp.pop %v2306
        %v3230 = vrcp.pop %v2308
        %v3231 = vrcp.pop %v2310
        %v3232 = vrcp.pop %v2312
        %v3233 = vrcp.pop %v2314
        %v3234 = vrcp.pop %v2316
        %v3235 = vrcp.pop %v2318
        %v3236 = vrcp.pop %v2320
        %v3237 = vrcp.pop %v2322
        %v3238 = vrcp.pop %v2324
        %v3239 = vrcp.pop %v2326
        %v3240 = vrcp.pop %v2328
        %v3241 = vrcp.pop %v2330
        %v3242 = vrcp.pop %v2332
        %v3243 = vrcp.pop %v2334
        %v3244 = vrcp.pop %v2336
        %v3245 = vrcp.pop %v2338
        %v3246 = vrcp.pop %v2340
        %v3247 = vrcp.pop %v2342
        %v3248 = vrcp.pop %v2344
        %v3249 = vrcp.pop %v2346
        %v3250 = vrcp.pop %v2348
        %v3251 = vrcp.pop %v2350
        %v3252 = vrcp.pop %v2352
        %v3253 = vrcp.pop %v2354
        %v3254 = vrcp.pop %v2356
        %v3255 = vrcp.pop %v2358
        %v3256 = vrcp.pop %v2360
        %v3257 = vrcp.pop %v2362
        %v3258 = vrcp.pop %v2364
        %v3259 = vrcp.pop %v2366
        %v3260 = vrcp.pop %v2368
        %v3261 = vrcp.pop %v2370
        %v3262 = vrcp.pop %v2372
        %v3263 = vrcp.pop %v2374
        %v3264 = vrcp.pop %v2376
        %v3265 = vrcp.pop %v2378
        %v3266 = vrcp.pop %v2380
        %v3267 = vrcp.pop %v2382
        %v3268 = vrcp.pop %v2384
        %v3269 = vrcp.pop %v2386
        %v3270 = vrcp.pop %v2388
        %v3271 = vrcp.pop %v2390
        %v3272 = vrcp.pop %v2392
        %v3273 = vrcp.pop %v2394
        %v3274 = vrcp.pop %v2396
        %v3275 = vrcp.pop %v2398
        %v3276 = vrcp.pop %v2400
        %v3277 = vrcp.pop %v2402
        %v3278 = vrcp.pop %v2404
        %v3279 = vrcp.pop %v2406
        %v3280 = vrcp.pop %v2408
        %v3281 = vrcp.pop %v2410
        %v3282 = vrcp.pop %v2412
        %v3283 = vrcp.pop %v2414
        %v3284 = vrcp.pop %v2416
        %v3285 = vrcp.pop %v2418
        %v3286 = vrcp.pop %v2420
        %v3287 = vrcp.pop %v2422
        %v3288 = vrcp.pop %v2424
        %v3289 = vrcp.pop %v2426
        %v3290 = vrcp.pop %v2428
        %v3291 = vrcp.pop %v2430
        %v3292 = vrcp.pop %v2432
        %v3293 = vrcp.pop %v2434
        %v3294 = vrcp.pop %v2436
        %v3295 = vrcp.pop %v2438
        %v3296 = vrcp.pop %v2440
        %v3297 = vrcp.pop %v2442
        %v3298 = vrcp.pop %v2444
        %v3299 = vrcp.pop %v2446
        %v3300 = vrcp.pop %v2448
        %v3301 = vrcp.pop %v2450
        %v3302 = vrcp.pop %v2452
        %v3303 = vrcp.pop %v2454
        %v3304 = vrcp.pop %v2456
        %v3305 = vrcp.pop %v2458
        %v3306 = vrcp.pop %v2460
        %v3307 = vrcp.pop %v2462
        %v3308 = vrcp.pop %v2464
        %v3309 = vrcp.pop %v2466
        %v3310 = vrcp.pop %v2468
        %v3311 = vrcp.pop %v2470
        %v3312 = vrcp.pop %v2472
        %v3313 = vrcp.pop %v2474
        %v3314 = vrcp.pop %v2476
        %v3315 = vrcp.pop %v2478
        %v3316 = vrcp.pop %v2480
        %v3317 = vrcp.pop %v2482
        %v3318 = vrcp.pop %v2484
        %v3319 = vrcp.pop %v2486
        %v3320 = vrcp.pop %v2488
        %v3321 = vrcp.pop %v2490
        %v3322 = vrcp.pop %v2492
        %v3323 = vrcp.pop %v2494
        %v3324 = vrcp.pop %v2496
        %v3325 = vrcp.pop %v2498
        %v3326 = vrcp.pop %v2500
        %v3327 = vrcp.pop %v2502
        %v3328 = vrcp.pop %v2504
        %v3329 = vrcp.pop %v2506
        %v3330 = vrcp.pop %v2508
        %v3331 = vrcp.pop %v2510
        %v3332 = vrcp.pop %v2512
        %v3333 = vrcp.pop %v2514
        %v3334 = vrcp.pop %v2516
        %v3335 = vrcp.pop %v2518
        %v3336 = vrcp.pop %v2520
        %v3337 = vrcp.pop %v2522
        %v3338 = vrcp.pop %v2524
        %v3339 = vrcp.pop %v2526
        %v3340 = vrcp.pop %v2528
        %v3341 = vrcp.pop %v2530
        %v3342 = vrcp.pop %v2532
        %v3343 = vrcp.pop %v2534
        %v3344 = vrcp.pop %v2536
        %v3345 = vrcp.pop %v2538
        %v3346 = vrcp.pop %v2540
        %v3347 = vrcp.pop %v2542
        %v3348 = vrcp.pop %v2544
        %v3349 = vrcp.pop %v2546
        %v3350 = vrcp.pop %v2548
        %v3351 = vrcp.pop %v2550
        %v3352 = vrcp.pop %v2552
        %v3353 = vrcp.pop %v2554
        %v3354 = vrcp.pop %v2556
        %v3355 = vrcp.pop %v2558
        %v3356 = vrcp.pop %v2560
        %v3357 = vrcp.pop %v2562
        %v3358 = vrcp.pop %v2564
        %v3359 = vrcp.pop %v2566
        %v3360 = vrcp.pop %v2568
        %v3361 = vrcp.pop %v2570
        %v3362 = vrcp.pop %v2572
        %v3363 = vrcp.pop %v2574
        %v3364 = vrcp.pop %v2576
        %v3365 = vrcp.pop %v2578
        %v3366 = vrcp.pop %v2580
        %v3367 = vrcp.pop %v2582
        %v3368 = vrcp.pop %v2584
        %v3369 = vrcp.pop %v2586
        %v3370 = vrcp.pop %v2588
        %v3371 = vrcp.pop %v2590
        %v3372 = vrcp.pop %v2592
        %v3373 = vrcp.pop %v2594
        %v3374 = vrcp.pop %v2596
        %v3375 = vrcp.pop %v2598
        %v3376 = vrcp.pop %v2600
        %v3377 = vrcp.pop %v2602
        %v3378 = vrcp.pop %v2604
        %v3379 = vrcp.pop %v2606
        %v3380 = vrcp.pop %v2608
        %v3381 = vrcp.pop %v2610
        %v3382 = vrcp.pop %v2612
        %v3383 = vrcp.pop %v2614
        %v3384 = vrcp.pop %v2616
        %v3385 = vmul.f32 %v1594, %v3129
        %v3386 = vmul.f32 %v1596, %v3130
        %v3387 = vmul.f32 %v1598, %v3131
        %v3388 = vmul.f32 %v1600, %v3132
        %v3389 = vmul.f32 %v1602, %v3133
        %v3390 = vmul.f32 %v1604, %v3134
        %v3391 = vmul.f32 %v1606, %v3135
        %v3392 = vmul.f32 %v1608, %v3136
        %v3393 = vmul.f32 %v1610, %v3137
        %v3394 = vmul.f32 %v1612, %v3138
        %v3395 = vmul.f32 %v1614, %v3139
        %v3396 = vmul.f32 %v1616, %v3140
        %v3397 = vmul.f32 %v1618, %v3141
        %v3398 = vmul.f32 %v1620, %v3142
        %v3399 = vmul.f32 %v1622, %v3143
        %v3400 = vmul.f32 %v1624, %v3144
        %v3401 = vmul.f32 %v1626, %v3145
        %v3402 = vmul.f32 %v1628, %v3146
        %v3403 = vmul.f32 %v1630, %v3147
        %v3404 = vmul.f32 %v1632, %v3148
        %v3405 = vmul.f32 %v1634, %v3149
        %v3406 = vmul.f32 %v1636, %v3150
        %v3407 = vmul.f32 %v1638, %v3151
        %v3408 = vmul.f32 %v1640, %v3152
        %v3409 = vmul.f32 %v1642, %v3153
        %v3410 = vmul.f32 %v1644, %v3154
        %v3411 = vmul.f32 %v1646, %v3155
        %v3412 = vmul.f32 %v1648, %v3156
        %v3413 = vmul.f32 %v1650, %v3157
        %v3414 = vmul.f32 %v1652, %v3158
        %v3415 = vmul.f32 %v1654, %v3159
        %v3416 = vmul.f32 %v1656, %v3160
        %v3417 = vmul.f32 %v1658, %v3161
        %v3418 = vmul.f32 %v1660, %v3162
        %v3419 = vmul.f32 %v1662, %v3163
        %v3420 = vmul.f32 %v1664, %v3164
        %v3421 = vmul.f32 %v1666, %v3165
        %v3422 = vmul.f32 %v1668, %v3166
        %v3423 = vmul.f32 %v1670, %v3167
        %v3424 = vmul.f32 %v1672, %v3168
        %v3425 = vmul.f32 %v1674, %v3169
        %v3426 = vmul.f32 %v1676, %v3170
        %v3427 = vmul.f32 %v1678, %v3171
        %v3428 = vmul.f32 %v1680, %v3172
        %v3429 = vmul.f32 %v1682, %v3173
        %v3430 = vmul.f32 %v1684, %v3174
        %v3431 = vmul.f32 %v1686, %v3175
        %v3432 = vmul.f32 %v1688, %v3176
        %v3433 = vmul.f32 %v1690, %v3177
        %v3434 = vmul.f32 %v1692, %v3178
        %v3435 = vmul.f32 %v1694, %v3179
        %v3436 = vmul.f32 %v1696, %v3180
        %v3437 = vmul.f32 %v1698, %v3181
        %v3438 = vmul.f32 %v1700, %v3182
        %v3439 = vmul.f32 %v1702, %v3183
        %v3440 = vmul.f32 %v1704, %v3184
        %v3441 = vmul.f32 %v1706, %v3185
        %v3442 = vmul.f32 %v1708, %v3186
        %v3443 = vmul.f32 %v1710, %v3187
        %v3444 = vmul.f32 %v1712, %v3188
        %v3445 = vmul.f32 %v1714, %v3189
        %v3446 = vmul.f32 %v1716, %v3190
        %v3447 = vmul.f32 %v1718, %v3191
        %v3448 = vmul.f32 %v1720, %v3192
        %v3449 = vmul.f32 %v1722, %v3193
        %v3450 = vmul.f32 %v1724, %v3194
        %v3451 = vmul.f32 %v1726, %v3195
        %v3452 = vmul.f32 %v1728, %v3196
        %v3453 = vmul.f32 %v1730, %v3197
        %v3454 = vmul.f32 %v1732, %v3198
        %v3455 = vmul.f32 %v1734, %v3199
        %v3456 = vmul.f32 %v1736, %v3200
        %v3457 = vmul.f32 %v1738, %v3201
        %v3458 = vmul.f32 %v1740, %v3202
        %v3459 = vmul.f32 %v1742, %v3203
        %v3460 = vmul.f32 %v1744, %v3204
        %v3461 = vmul.f32 %v1746, %v3205
        %v3462 = vmul.f32 %v1748, %v3206
        %v3463 = vmul.f32 %v1750, %v3207
        %v3464 = vmul.f32 %v1752, %v3208
        %v3465 = vmul.f32 %v1754, %v3209
        %v3466 = vmul.f32 %v1756, %v3210
        %v3467 = vmul.f32 %v1758, %v3211
        %v3468 = vmul.f32 %v1760, %v3212
        %v3469 = vmul.f32 %v1762, %v3213
        %v3470 = vmul.f32 %v1764, %v3214
        %v3471 = vmul.f32 %v1766, %v3215
        %v3472 = vmul.f32 %v1768, %v3216
        %v3473 = vmul.f32 %v1770, %v3217
        %v3474 = vmul.f32 %v1772, %v3218
        %v3475 = vmul.f32 %v1774, %v3219
        %v3476 = vmul.f32 %v1776, %v3220
        %v3477 = vmul.f32 %v1778, %v3221
        %v3478 = vmul.f32 %v1780, %v3222
        %v3479 = vmul.f32 %v1782, %v3223
        %v3480 = vmul.f32 %v1784, %v3224
        %v3481 = vmul.f32 %v1786, %v3225
        %v3482 = vmul.f32 %v1788, %v3226
        %v3483 = vmul.f32 %v1790, %v3227
        %v3484 = vmul.f32 %v1792, %v3228
        %v3485 = vmul.f32 %v1794, %v3229
        %v3486 = vmul.f32 %v1796, %v3230
        %v3487 = vmul.f32 %v1798, %v3231
        %v3488 = vmul.f32 %v1800, %v3232
        %v3489 = vmul.f32 %v1802, %v3233
        %v3490 = vmul.f32 %v1804, %v3234
        %v3491 = vmul.f32 %v1806, %v3235
        %v3492 = vmul.f32 %v1808, %v3236
        %v3493 = vmul.f32 %v1810, %v3237
        %v3494 = vmul.f32 %v1812, %v3238
        %v3495 = vmul.f32 %v1814, %v3239
        %v3496 = vmul.f32 %v1816, %v3240
        %v3497 = vmul.f32 %v1818, %v3241
        %v3498 = vmul.f32 %v1820, %v3242
        %v3499 = vmul.f32 %v1822, %v3243
        %v3500 = vmul.f32 %v1824, %v3244
        %v3501 = vmul.f32 %v1826, %v3245
        %v3502 = vmul.f32 %v1828, %v3246
        %v3503 = vmul.f32 %v1830, %v3247
        %v3504 = vmul.f32 %v1832, %v3248
        %v3505 = vmul.f32 %v1834, %v3249
        %v3506 = vmul.f32 %v1836, %v3250
        %v3507 = vmul.f32 %v1838, %v3251
        %v3508 = vmul.f32 %v1840, %v3252
        %v3509 = vmul.f32 %v1842, %v3253
        %v3510 = vmul.f32 %v1844, %v3254
        %v3511 = vmul.f32 %v1846, %v3255
        %v3512 = vmul.f32 %v1848, %v3256
        %v3513 = vmul.f32 %v1850, %v3257
        %v3514 = vmul.f32 %v1852, %v3258
        %v3515 = vmul.f32 %v1854, %v3259
        %v3516 = vmul.f32 %v1856, %v3260
        %v3517 = vmul.f32 %v1858, %v3261
        %v3518 = vmul.f32 %v1860, %v3262
        %v3519 = vmul.f32 %v1862, %v3263
        %v3520 = vmul.f32 %v1864, %v3264
        %v3521 = vmul.f32 %v1866, %v3265
        %v3522 = vmul.f32 %v1868, %v3266
        %v3523 = vmul.f32 %v1870, %v3267
        %v3524 = vmul.f32 %v1872, %v3268
        %v3525 = vmul.f32 %v1874, %v3269
        %v3526 = vmul.f32 %v1876, %v3270
        %v3527 = vmul.f32 %v1878, %v3271
        %v3528 = vmul.f32 %v1880, %v3272
        %v3529 = vmul.f32 %v1882, %v3273
        %v3530 = vmul.f32 %v1884, %v3274
        %v3531 = vmul.f32 %v1886, %v3275
        %v3532 = vmul.f32 %v1888, %v3276
        %v3533 = vmul.f32 %v1890, %v3277
        %v3534 = vmul.f32 %v1892, %v3278
        %v3535 = vmul.f32 %v1894, %v3279
        %v3536 = vmul.f32 %v1896, %v3280
        %v3537 = vmul.f32 %v1898, %v3281
        %v3538 = vmul.f32 %v1900, %v3282
        %v3539 = vmul.f32 %v1902, %v3283
        %v3540 = vmul.f32 %v1904, %v3284
        %v3541 = vmul.f32 %v1906, %v3285
        %v3542 = vmul.f32 %v1908, %v3286
        %v3543 = vmul.f32 %v1910, %v3287
        %v3544 = vmul.f32 %v1912, %v3288
        %v3545 = vmul.f32 %v1914, %v3289
        %v3546 = vmul.f32 %v1916, %v3290
        %v3547 = vmul.f32 %v1918, %v3291
        %v3548 = vmul.f32 %v1920, %v3292
        %v3549 = vmul.f32 %v1922, %v3293
        %v3550 = vmul.f32 %v1924, %v3294
        %v3551 = vmul.f32 %v1926, %v3295
        %v3552 = vmul.f32 %v1928, %v3296
        %v3553 = vmul.f32 %v1930, %v3297
        %v3554 = vmul.f32 %v1932, %v3298
        %v3555 = vmul.f32 %v1934, %v3299
        %v3556 = vmul.f32 %v1936, %v3300
        %v3557 = vmul.f32 %v1938, %v3301
        %v3558 = vmul.f32 %v1940, %v3302
        %v3559 = vmul.f32 %v1942, %v3303
        %v3560 = vmul.f32 %v1944, %v3304
        %v3561 = vmul.f32 %v1946, %v3305
        %v3562 = vmul.f32 %v1948, %v3306
        %v3563 = vmul.f32 %v1950, %v3307
        %v3564 = vmul.f32 %v1952, %v3308
        %v3565 = vmul.f32 %v1954, %v3309
        %v3566 = vmul.f32 %v1956, %v3310
        %v3567 = vmul.f32 %v1958, %v3311
        %v3568 = vmul.f32 %v1960, %v3312
        %v3569 = vmul.f32 %v1962, %v3313
        %v3570 = vmul.f32 %v1964, %v3314
        %v3571 = vmul.f32 %v1966, %v3315
        %v3572 = vmul.f32 %v1968, %v3316
        %v3573 = vmul.f32 %v1970, %v3317
        %v3574 = vmul.f32 %v1972, %v3318
        %v3575 = vmul.f32 %v1974, %v3319
        %v3576 = vmul.f32 %v1976, %v3320
        %v3577 = vmul.f32 %v1978, %v3321
        %v3578 = vmul.f32 %v1980, %v3322
        %v3579 = vmul.f32 %v1982, %v3323
        %v3580 = vmul.f32 %v1984, %v3324
        %v3581 = vmul.f32 %v1986, %v3325
        %v3582 = vmul.f32 %v1988, %v3326
        %v3583 = vmul.f32 %v1990, %v3327
        %v3584 = vmul.f32 %v1992, %v3328
        %v3585 = vmul.f32 %v1994, %v3329
        %v3586 = vmul.f32 %v1996, %v3330
        %v3587 = vmul.f32 %v1998, %v3331
        %v3588 = vmul.f32 %v2000, %v3332
        %v3589 = vmul.f32 %v2002, %v3333
        %v3590 = vmul.f32 %v2004, %v3334
        %v3591 = vmul.f32 %v2006, %v3335
        %v3592 = vmul.f32 %v2008, %v3336
        %v3593 = vmul.f32 %v2010, %v3337
        %v3594 = vmul.f32 %v2012, %v3338
        %v3595 = vmul.f32 %v2014, %v3339
        %v3596 = vmul.f32 %v2016, %v3340
        %v3597 = vmul.f32 %v2018, %v3341
        %v3598 = vmul.f32 %v2020, %v3342
        %v3599 = vmul.f32 %v2022, %v3343
        %v3600 = vmul.f32 %v2024, %v3344
        %v3601 = vmul.f32 %v2026, %v3345
        %v3602 = vmul.f32 %v2028, %v3346
        %v3603 = vmul.f32 %v2030, %v3347
        %v3604 = vmul.f32 %v2032, %v3348
        %v3605 = vmul.f32 %v2034, %v3349
        %v3606 = vmul.f32 %v2036, %v3350
        %v3607 = vmul.f32 %v2038, %v3351
        %v3608 = vmul.f32 %v2040, %v3352
        %v3609 = vmul.f32 %v2042, %v3353
        %v3610 = vmul.f32 %v2044, %v3354
        %v3611 = vmul.f32 %v2046, %v3355
        %v3612 = vmul.f32 %v2048, %v3356
        %v3613 = vmul.f32 %v2050, %v3357
        %v3614 = vmul.f32 %v2052, %v3358
        %v3615 = vmul.f32 %v2054, %v3359
        %v3616 = vmul.f32 %v2056, %v3360
        %v3617 = vmul.f32 %v2058, %v3361
        %v3618 = vmul.f32 %v2060, %v3362
        %v3619 = vmul.f32 %v2062, %v3363
        %v3620 = vmul.f32 %v2064, %v3364
        %v3621 = vmul.f32 %v2066, %v3365
        %v3622 = vmul.f32 %v2068, %v3366
        %v3623 = vmul.f32 %v2070, %v3367
        %v3624 = vmul.f32 %v2072, %v3368
        %v3625 = vmul.f32 %v2074, %v3369
        %v3626 = vmul.f32 %v2076, %v3370
        %v3627 = vmul.f32 %v2078, %v3371
        %v3628 = vmul.f32 %v2080, %v3372
        %v3629 = vmul.f32 %v2082, %v3373
        %v3630 = vmul.f32 %v2084, %v3374
        %v3631 = vmul.f32 %v2086, %v3375
        %v3632 = vmul.f32 %v2088, %v3376
        %v3633 = vmul.f32 %v2090, %v3377
        %v3634 = vmul.f32 %v2092, %v3378
        %v3635 = vmul.f32 %v2094, %v3379
        %v3636 = vmul.f32 %v2096, %v3380
        %v3637 = vmul.f32 %v2098, %v3381
        %v3638 = vmul.f32 %v2100, %v3382
        %v3639 = vmul.f32 %v2102, %v3383
        %v3640 = vmul.f32 %v2104, %v3384
        %s3641 = smul.u32 %s28, 2
        %s3642 = sadd.s32 %s3641, %s29
        %s3643 = smul.u32 %s3642, 2048
        %v3644 = vlaneseq
        %v3645 = vshrl.u32 %v3644, 7
        %v3646 = vadd.s32 %v3645, 8
        %v3647 = vadd.s32 %v3645, 16
        %v3648 = vadd.s32 %v3645, 24
        %v3649 = vadd.s32 %v3645, 32
        %v3650 = vadd.s32 %v3645, 40
        %v3651 = vadd.s32 %v3645, 48
        %v3652 = vadd.s32 %v3645, 56
        %v3653 = vadd.s32 %v3645, 64
        %v3654 = vadd.s32 %v3645, 72
        %v3655 = vadd.s32 %v3645, 80
        %v3656 = vadd.s32 %v3645, 88
        %v3657 = vadd.s32 %v3645, 96
        %v3658 = vadd.s32 %v3645, 104
        %v3659 = vadd.s32 %v3645, 112
        %v3660 = vadd.s32 %v3645, 120
        %v3661 = vadd.s32 %v3645, 128
        %v3662 = vadd.s32 %v3645, 136
        %v3663 = vadd.s32 %v3645, 144
        %v3664 = vadd.s32 %v3645, 152
        %v3665 = vadd.s32 %v3645, 160
        %v3666 = vadd.s32 %v3645, 168
        %v3667 = vadd.s32 %v3645, 176
        %v3668 = vadd.s32 %v3645, 184
        %v3669 = vadd.s32 %v3645, 192
        %v3670 = vadd.s32 %v3645, 200
        %v3671 = vadd.s32 %v3645, 208
        %v3672 = vadd.s32 %v3645, 216
        %v3673 = vadd.s32 %v3645, 224
        %v3674 = vadd.s32 %v3645, 232
        %v3675 = vadd.s32 %v3645, 240
        %v3676 = vadd.s32 %v3645, 248
        %v3677 = vadd.s32 %v3645, 256
        %v3678 = vadd.s32 %v3645, 264
        %v3679 = vadd.s32 %v3645, 272
        %v3680 = vadd.s32 %v3645, 280
        %v3681 = vadd.s32 %v3645, 288
        %v3682 = vadd.s32 %v3645, 296
        %v3683 = vadd.s32 %v3645, 304
        %v3684 = vadd.s32 %v3645, 312
        %v3685 = vadd.s32 %v3645, 320
        %v3686 = vadd.s32 %v3645, 328
        %v3687 = vadd.s32 %v3645, 336
        %v3688 = vadd.s32 %v3645, 344
        %v3689 = vadd.s32 %v3645, 352
        %v3690 = vadd.s32 %v3645, 360
        %v3691 = vadd.s32 %v3645, 368
        %v3692 = vadd.s32 %v3645, 376
        %v3693 = vadd.s32 %v3645, 384
        %v3694 = vadd.s32 %v3645, 392
        %v3695 = vadd.s32 %v3645, 400
        %v3696 = vadd.s32 %v3645, 408
        %v3697 = vadd.s32 %v3645, 416
        %v3698 = vadd.s32 %v3645, 424
        %v3699 = vadd.s32 %v3645, 432
        %v3700 = vadd.s32 %v3645, 440
        %v3701 = vadd.s32 %v3645, 448
        %v3702 = vadd.s32 %v3645, 456
        %v3703 = vadd.s32 %v3645, 464
        %v3704 = vadd.s32 %v3645, 472
        %v3705 = vadd.s32 %v3645, 480
        %v3706 = vadd.s32 %v3645, 488
        %v3707 = vadd.s32 %v3645, 496
        %v3708 = vadd.s32 %v3645, 504
        %v3709 = vadd.s32 %v3645, 512
        %v3710 = vadd.s32 %v3645, 520
        %v3711 = vadd.s32 %v3645, 528
        %v3712 = vadd.s32 %v3645, 536
        %v3713 = vadd.s32 %v3645, 544
        %v3714 = vadd.s32 %v3645, 552
        %v3715 = vadd.s32 %v3645, 560
        %v3716 = vadd.s32 %v3645, 568
        %v3717 = vadd.s32 %v3645, 576
        %v3718 = vadd.s32 %v3645, 584
        %v3719 = vadd.s32 %v3645, 592
        %v3720 = vadd.s32 %v3645, 600
        %v3721 = vadd.s32 %v3645, 608
        %v3722 = vadd.s32 %v3645, 616
        %v3723 = vadd.s32 %v3645, 624
        %v3724 = vadd.s32 %v3645, 632
        %v3725 = vadd.s32 %v3645, 640
        %v3726 = vadd.s32 %v3645, 648
        %v3727 = vadd.s32 %v3645, 656
        %v3728 = vadd.s32 %v3645, 664
        %v3729 = vadd.s32 %v3645, 672
        %v3730 = vadd.s32 %v3645, 680
        %v3731 = vadd.s32 %v3645, 688
        %v3732 = vadd.s32 %v3645, 696
        %v3733 = vadd.s32 %v3645, 704
        %v3734 = vadd.s32 %v3645, 712
        %v3735 = vadd.s32 %v3645, 720
        %v3736 = vadd.s32 %v3645, 728
        %v3737 = vadd.s32 %v3645, 736
        %v3738 = vadd.s32 %v3645, 744
        %v3739 = vadd.s32 %v3645, 752
        %v3740 = vadd.s32 %v3645, 760
        %v3741 = vadd.s32 %v3645, 768
        %v3742 = vadd.s32 %v3645, 776
        %v3743 = vadd.s32 %v3645, 784
        %v3744 = vadd.s32 %v3645, 792
        %v3745 = vadd.s32 %v3645, 800
        %v3746 = vadd.s32 %v3645, 808
        %v3747 = vadd.s32 %v3645, 816
        %v3748 = vadd.s32 %v3645, 824
        %v3749 = vadd.s32 %v3645, 832
        %v3750 = vadd.s32 %v3645, 840
        %v3751 = vadd.s32 %v3645, 848
        %v3752 = vadd.s32 %v3645, 856
        %v3753 = vadd.s32 %v3645, 864
        %v3754 = vadd.s32 %v3645, 872
        %v3755 = vadd.s32 %v3645, 880
        %v3756 = vadd.s32 %v3645, 888
        %v3757 = vadd.s32 %v3645, 896
        %v3758 = vadd.s32 %v3645, 904
        %v3759 = vadd.s32 %v3645, 912
        %v3760 = vadd.s32 %v3645, 920
        %v3761 = vadd.s32 %v3645, 928
        %v3762 = vadd.s32 %v3645, 936
        %v3763 = vadd.s32 %v3645, 944
        %v3764 = vadd.s32 %v3645, 952
        %v3765 = vadd.s32 %v3645, 960
        %v3766 = vadd.s32 %v3645, 968
        %v3767 = vadd.s32 %v3645, 976
        %v3768 = vadd.s32 %v3645, 984
        %v3769 = vadd.s32 %v3645, 992
        %v3770 = vadd.s32 %v3645, 1000
        %v3771 = vadd.s32 %v3645, 1008
        %v3772 = vadd.s32 %v3645, 1016
        %v3773 = vadd.s32 %v3645, 1024
        %v3774 = vadd.s32 %v3645, 1032
        %v3775 = vadd.s32 %v3645, 1040
        %v3776 = vadd.s32 %v3645, 1048
        %v3777 = vadd.s32 %v3645, 1056
        %v3778 = vadd.s32 %v3645, 1064
        %v3779 = vadd.s32 %v3645, 1072
        %v3780 = vadd.s32 %v3645, 1080
        %v3781 = vadd.s32 %v3645, 1088
        %v3782 = vadd.s32 %v3645, 1096
        %v3783 = vadd.s32 %v3645, 1104
        %v3784 = vadd.s32 %v3645, 1112
        %v3785 = vadd.s32 %v3645, 1120
        %v3786 = vadd.s32 %v3645, 1128
        %v3787 = vadd.s32 %v3645, 1136
        %v3788 = vadd.s32 %v3645, 1144
        %v3789 = vadd.s32 %v3645, 1152
        %v3790 = vadd.s32 %v3645, 1160
        %v3791 = vadd.s32 %v3645, 1168
        %v3792 = vadd.s32 %v3645, 1176
        %v3793 = vadd.s32 %v3645, 1184
        %v3794 = vadd.s32 %v3645, 1192
        %v3795 = vadd.s32 %v3645, 1200
        %v3796 = vadd.s32 %v3645, 1208
        %v3797 = vadd.s32 %v3645, 1216
        %v3798 = vadd.s32 %v3645, 1224
        %v3799 = vadd.s32 %v3645, 1232
        %v3800 = vadd.s32 %v3645, 1240
        %v3801 = vadd.s32 %v3645, 1248
        %v3802 = vadd.s32 %v3645, 1256
        %v3803 = vadd.s32 %v3645, 1264
        %v3804 = vadd.s32 %v3645, 1272
        %v3805 = vadd.s32 %v3645, 1280
        %v3806 = vadd.s32 %v3645, 1288
        %v3807 = vadd.s32 %v3645, 1296
        %v3808 = vadd.s32 %v3645, 1304
        %v3809 = vadd.s32 %v3645, 1312
        %v3810 = vadd.s32 %v3645, 1320
        %v3811 = vadd.s32 %v3645, 1328
        %v3812 = vadd.s32 %v3645, 1336
        %v3813 = vadd.s32 %v3645, 1344
        %v3814 = vadd.s32 %v3645, 1352
        %v3815 = vadd.s32 %v3645, 1360
        %v3816 = vadd.s32 %v3645, 1368
        %v3817 = vadd.s32 %v3645, 1376
        %v3818 = vadd.s32 %v3645, 1384
        %v3819 = vadd.s32 %v3645, 1392
        %v3820 = vadd.s32 %v3645, 1400
        %v3821 = vadd.s32 %v3645, 1408
        %v3822 = vadd.s32 %v3645, 1416
        %v3823 = vadd.s32 %v3645, 1424
        %v3824 = vadd.s32 %v3645, 1432
        %v3825 = vadd.s32 %v3645, 1440
        %v3826 = vadd.s32 %v3645, 1448
        %v3827 = vadd.s32 %v3645, 1456
        %v3828 = vadd.s32 %v3645, 1464
        %v3829 = vadd.s32 %v3645, 1472
        %v3830 = vadd.s32 %v3645, 1480
        %v3831 = vadd.s32 %v3645, 1488
        %v3832 = vadd.s32 %v3645, 1496
        %v3833 = vadd.s32 %v3645, 1504
        %v3834 = vadd.s32 %v3645, 1512
        %v3835 = vadd.s32 %v3645, 1520
        %v3836 = vadd.s32 %v3645, 1528
        %v3837 = vadd.s32 %v3645, 1536
        %v3838 = vadd.s32 %v3645, 1544
        %v3839 = vadd.s32 %v3645, 1552
        %v3840 = vadd.s32 %v3645, 1560
        %v3841 = vadd.s32 %v3645, 1568
        %v3842 = vadd.s32 %v3645, 1576
        %v3843 = vadd.s32 %v3645, 1584
        %v3844 = vadd.s32 %v3645, 1592
        %v3845 = vadd.s32 %v3645, 1600
        %v3846 = vadd.s32 %v3645, 1608
        %v3847 = vadd.s32 %v3645, 1616
        %v3848 = vadd.s32 %v3645, 1624
        %v3849 = vadd.s32 %v3645, 1632
        %v3850 = vadd.s32 %v3645, 1640
        %v3851 = vadd.s32 %v3645, 1648
        %v3852 = vadd.s32 %v3645, 1656
        %v3853 = vadd.s32 %v3645, 1664
        %v3854 = vadd.s32 %v3645, 1672
        %v3855 = vadd.s32 %v3645, 1680
        %v3856 = vadd.s32 %v3645, 1688
        %v3857 = vadd.s32 %v3645, 1696
        %v3858 = vadd.s32 %v3645, 1704
        %v3859 = vadd.s32 %v3645, 1712
        %v3860 = vadd.s32 %v3645, 1720
        %v3861 = vadd.s32 %v3645, 1728
        %v3862 = vadd.s32 %v3645, 1736
        %v3863 = vadd.s32 %v3645, 1744
        %v3864 = vadd.s32 %v3645, 1752
        %v3865 = vadd.s32 %v3645, 1760
        %v3866 = vadd.s32 %v3645, 1768
        %v3867 = vadd.s32 %v3645, 1776
        %v3868 = vadd.s32 %v3645, 1784
        %v3869 = vadd.s32 %v3645, 1792
        %v3870 = vadd.s32 %v3645, 1800
        %v3871 = vadd.s32 %v3645, 1808
        %v3872 = vadd.s32 %v3645, 1816
        %v3873 = vadd.s32 %v3645, 1824
        %v3874 = vadd.s32 %v3645, 1832
        %v3875 = vadd.s32 %v3645, 1840
        %v3876 = vadd.s32 %v3645, 1848
        %v3877 = vadd.s32 %v3645, 1856
        %v3878 = vadd.s32 %v3645, 1864
        %v3879 = vadd.s32 %v3645, 1872
        %v3880 = vadd.s32 %v3645, 1880
        %v3881 = vadd.s32 %v3645, 1888
        %v3882 = vadd.s32 %v3645, 1896
        %v3883 = vadd.s32 %v3645, 1904
        %v3884 = vadd.s32 %v3645, 1912
        %v3885 = vadd.s32 %v3645, 1920
        %v3886 = vadd.s32 %v3645, 1928
        %v3887 = vadd.s32 %v3645, 1936
        %v3888 = vadd.s32 %v3645, 1944
        %v3889 = vadd.s32 %v3645, 1952
        %v3890 = vadd.s32 %v3645, 1960
        %v3891 = vadd.s32 %v3645, 1968
        %v3892 = vadd.s32 %v3645, 1976
        %v3893 = vadd.s32 %v3645, 1984
        %v3894 = vadd.s32 %v3645, 1992
        %v3895 = vadd.s32 %v3645, 2000
        %v3896 = vadd.s32 %v3645, 2008
        %v3897 = vadd.s32 %v3645, 2016
        %v3898 = vadd.s32 %v3645, 2024
        %v3899 = vadd.s32 %v3645, 2032
        %v3900 = vadd.s32 %v3645, 2040
        %v3901 = vstv %s3643
        %v3902 = vadd.s32 %v3901, %v3645
        %v3903 = vadd.s32 %v3901, %v3646
        %v3904 = vadd.s32 %v3901, %v3647
        %v3905 = vadd.s32 %v3901, %v3648
        %v3906 = vadd.s32 %v3901, %v3649
        %v3907 = vadd.s32 %v3901, %v3650
        %v3908 = vadd.s32 %v3901, %v3651
        %v3909 = vadd.s32 %v3901, %v3652
        %v3910 = vadd.s32 %v3901, %v3653
        %v3911 = vadd.s32 %v3901, %v3654
        %v3912 = vadd.s32 %v3901, %v3655
        %v3913 = vadd.s32 %v3901, %v3656
        %v3914 = vadd.s32 %v3901, %v3657
        %v3915 = vadd.s32 %v3901, %v3658
        %v3916 = vadd.s32 %v3901, %v3659
        %v3917 = vadd.s32 %v3901, %v3660
        %v3918 = vadd.s32 %v3901, %v3661
        %v3919 = vadd.s32 %v3901, %v3662
        %v3920 = vadd.s32 %v3901, %v3663
        %v3921 = vadd.s32 %v3901, %v3664
        %v3922 = vadd.s32 %v3901, %v3665
        %v3923 = vadd.s32 %v3901, %v3666
        %v3924 = vadd.s32 %v3901, %v3667
        %v3925 = vadd.s32 %v3901, %v3668
        %v3926 = vadd.s32 %v3901, %v3669
        %v3927 = vadd.s32 %v3901, %v3670
        %v3928 = vadd.s32 %v3901, %v3671
        %v3929 = vadd.s32 %v3901, %v3672
        %v3930 = vadd.s32 %v3901, %v3673
        %v3931 = vadd.s32 %v3901, %v3674
        %v3932 = vadd.s32 %v3901, %v3675
        %v3933 = vadd.s32 %v3901, %v3676
        %v3934 = vadd.s32 %v3901, %v3677
        %v3935 = vadd.s32 %v3901, %v3678
        %v3936 = vadd.s32 %v3901, %v3679
        %v3937 = vadd.s32 %v3901, %v3680
        %v3938 = vadd.s32 %v3901, %v3681
        %v3939 = vadd.s32 %v3901, %v3682
        %v3940 = vadd.s32 %v3901, %v3683
        %v3941 = vadd.s32 %v3901, %v3684
        %v3942 = vadd.s32 %v3901, %v3685
        %v3943 = vadd.s32 %v3901, %v3686
        %v3944 = vadd.s32 %v3901, %v3687
        %v3945 = vadd.s32 %v3901, %v3688
        %v3946 = vadd.s32 %v3901, %v3689
        %v3947 = vadd.s32 %v3901, %v3690
        %v3948 = vadd.s32 %v3901, %v3691
        %v3949 = vadd.s32 %v3901, %v3692
        %v3950 = vadd.s32 %v3901, %v3693
        %v3951 = vadd.s32 %v3901, %v3694
        %v3952 = vadd.s32 %v3901, %v3695
        %v3953 = vadd.s32 %v3901, %v3696
        %v3954 = vadd.s32 %v3901, %v3697
        %v3955 = vadd.s32 %v3901, %v3698
        %v3956 = vadd.s32 %v3901, %v3699
        %v3957 = vadd.s32 %v3901, %v3700
        %v3958 = vadd.s32 %v3901, %v3701
        %v3959 = vadd.s32 %v3901, %v3702
        %v3960 = vadd.s32 %v3901, %v3703
        %v3961 = vadd.s32 %v3901, %v3704
        %v3962 = vadd.s32 %v3901, %v3705
        %v3963 = vadd.s32 %v3901, %v3706
        %v3964 = vadd.s32 %v3901, %v3707
        %v3965 = vadd.s32 %v3901, %v3708
        %v3966 = vadd.s32 %v3901, %v3709
        %v3967 = vadd.s32 %v3901, %v3710
        %v3968 = vadd.s32 %v3901, %v3711
        %v3969 = vadd.s32 %v3901, %v3712
        %v3970 = vadd.s32 %v3901, %v3713
        %v3971 = vadd.s32 %v3901, %v3714
        %v3972 = vadd.s32 %v3901, %v3715
        %v3973 = vadd.s32 %v3901, %v3716
        %v3974 = vadd.s32 %v3901, %v3717
        %v3975 = vadd.s32 %v3901, %v3718
        %v3976 = vadd.s32 %v3901, %v3719
        %v3977 = vadd.s32 %v3901, %v3720
        %v3978 = vadd.s32 %v3901, %v3721
        %v3979 = vadd.s32 %v3901, %v3722
        %v3980 = vadd.s32 %v3901, %v3723
        %v3981 = vadd.s32 %v3901, %v3724
        %v3982 = vadd.s32 %v3901, %v3725
        %v3983 = vadd.s32 %v3901, %v3726
        %v3984 = vadd.s32 %v3901, %v3727
        %v3985 = vadd.s32 %v3901, %v3728
        %v3986 = vadd.s32 %v3901, %v3729
        %v3987 = vadd.s32 %v3901, %v3730
        %v3988 = vadd.s32 %v3901, %v3731
        %v3989 = vadd.s32 %v3901, %v3732
        %v3990 = vadd.s32 %v3901, %v3733
        %v3991 = vadd.s32 %v3901, %v3734
        %v3992 = vadd.s32 %v3901, %v3735
        %v3993 = vadd.s32 %v3901, %v3736
        %v3994 = vadd.s32 %v3901, %v3737
        %v3995 = vadd.s32 %v3901, %v3738
        %v3996 = vadd.s32 %v3901, %v3739
        %v3997 = vadd.s32 %v3901, %v3740
        %v3998 = vadd.s32 %v3901, %v3741
        %v3999 = vadd.s32 %v3901, %v3742
        %v4000 = vadd.s32 %v3901, %v3743
        %v4001 = vadd.s32 %v3901, %v3744
        %v4002 = vadd.s32 %v3901, %v3745
        %v4003 = vadd.s32 %v3901, %v3746
        %v4004 = vadd.s32 %v3901, %v3747
        %v4005 = vadd.s32 %v3901, %v3748
        %v4006 = vadd.s32 %v3901, %v3749
        %v4007 = vadd.s32 %v3901, %v3750
        %v4008 = vadd.s32 %v3901, %v3751
        %v4009 = vadd.s32 %v3901, %v3752
        %v4010 = vadd.s32 %v3901, %v3753
        %v4011 = vadd.s32 %v3901, %v3754
        %v4012 = vadd.s32 %v3901, %v3755
        %v4013 = vadd.s32 %v3901, %v3756
        %v4014 = vadd.s32 %v3901, %v3757
        %v4015 = vadd.s32 %v3901, %v3758
        %v4016 = vadd.s32 %v3901, %v3759
        %v4017 = vadd.s32 %v3901, %v3760
        %v4018 = vadd.s32 %v3901, %v3761
        %v4019 = vadd.s32 %v3901, %v3762
        %v4020 = vadd.s32 %v3901, %v3763
        %v4021 = vadd.s32 %v3901, %v3764
        %v4022 = vadd.s32 %v3901, %v3765
        %v4023 = vadd.s32 %v3901, %v3766
        %v4024 = vadd.s32 %v3901, %v3767
        %v4025 = vadd.s32 %v3901, %v3768
        %v4026 = vadd.s32 %v3901, %v3769
        %v4027 = vadd.s32 %v3901, %v3770
        %v4028 = vadd.s32 %v3901, %v3771
        %v4029 = vadd.s32 %v3901, %v3772
        %v4030 = vadd.s32 %v3901, %v3773
        %v4031 = vadd.s32 %v3901, %v3774
        %v4032 = vadd.s32 %v3901, %v3775
        %v4033 = vadd.s32 %v3901, %v3776
        %v4034 = vadd.s32 %v3901, %v3777
        %v4035 = vadd.s32 %v3901, %v3778
        %v4036 = vadd.s32 %v3901, %v3779
        %v4037 = vadd.s32 %v3901, %v3780
        %v4038 = vadd.s32 %v3901, %v3781
        %v4039 = vadd.s32 %v3901, %v3782
        %v4040 = vadd.s32 %v3901, %v3783
        %v4041 = vadd.s32 %v3901, %v3784
        %v4042 = vadd.s32 %v3901, %v3785
        %v4043 = vadd.s32 %v3901, %v3786
        %v4044 = vadd.s32 %v3901, %v3787
        %v4045 = vadd.s32 %v3901, %v3788
        %v4046 = vadd.s32 %v3901, %v3789
        %v4047 = vadd.s32 %v3901, %v3790
        %v4048 = vadd.s32 %v3901, %v3791
        %v4049 = vadd.s32 %v3901, %v3792
        %v4050 = vadd.s32 %v3901, %v3793
        %v4051 = vadd.s32 %v3901, %v3794
        %v4052 = vadd.s32 %v3901, %v3795
        %v4053 = vadd.s32 %v3901, %v3796
        %v4054 = vadd.s32 %v3901, %v3797
        %v4055 = vadd.s32 %v3901, %v3798
        %v4056 = vadd.s32 %v3901, %v3799
        %v4057 = vadd.s32 %v3901, %v3800
        %v4058 = vadd.s32 %v3901, %v3801
        %v4059 = vadd.s32 %v3901, %v3802
        %v4060 = vadd.s32 %v3901, %v3803
        %v4061 = vadd.s32 %v3901, %v3804
        %v4062 = vadd.s32 %v3901, %v3805
        %v4063 = vadd.s32 %v3901, %v3806
        %v4064 = vadd.s32 %v3901, %v3807
        %v4065 = vadd.s32 %v3901, %v3808
        %v4066 = vadd.s32 %v3901, %v3809
        %v4067 = vadd.s32 %v3901, %v3810
        %v4068 = vadd.s32 %v3901, %v3811
        %v4069 = vadd.s32 %v3901, %v3812
        %v4070 = vadd.s32 %v3901, %v3813
        %v4071 = vadd.s32 %v3901, %v3814
        %v4072 = vadd.s32 %v3901, %v3815
        %v4073 = vadd.s32 %v3901, %v3816
        %v4074 = vadd.s32 %v3901, %v3817
        %v4075 = vadd.s32 %v3901, %v3818
        %v4076 = vadd.s32 %v3901, %v3819
        %v4077 = vadd.s32 %v3901, %v3820
        %v4078 = vadd.s32 %v3901, %v3821
        %v4079 = vadd.s32 %v3901, %v3822
        %v4080 = vadd.s32 %v3901, %v3823
        %v4081 = vadd.s32 %v3901, %v3824
        %v4082 = vadd.s32 %v3901, %v3825
        %v4083 = vadd.s32 %v3901, %v3826
        %v4084 = vadd.s32 %v3901, %v3827
        %v4085 = vadd.s32 %v3901, %v3828
        %v4086 = vadd.s32 %v3901, %v3829
        %v4087 = vadd.s32 %v3901, %v3830
        %v4088 = vadd.s32 %v3901, %v3831
        %v4089 = vadd.s32 %v3901, %v3832
        %v4090 = vadd.s32 %v3901, %v3833
        %v4091 = vadd.s32 %v3901, %v3834
        %v4092 = vadd.s32 %v3901, %v3835
        %v4093 = vadd.s32 %v3901, %v3836
        %v4094 = vadd.s32 %v3901, %v3837
        %v4095 = vadd.s32 %v3901, %v3838
        %v4096 = vadd.s32 %v3901, %v3839
        %v4097 = vadd.s32 %v3901, %v3840
        %v4098 = vadd.s32 %v3901, %v3841
        %v4099 = vadd.s32 %v3901, %v3842
        %v4100 = vadd.s32 %v3901, %v3843
        %v4101 = vadd.s32 %v3901, %v3844
        %v4102 = vadd.s32 %v3901, %v3845
        %v4103 = vadd.s32 %v3901, %v3846
        %v4104 = vadd.s32 %v3901, %v3847
        %v4105 = vadd.s32 %v3901, %v3848
        %v4106 = vadd.s32 %v3901, %v3849
        %v4107 = vadd.s32 %v3901, %v3850
        %v4108 = vadd.s32 %v3901, %v3851
        %v4109 = vadd.s32 %v3901, %v3852
        %v4110 = vadd.s32 %v3901, %v3853
        %v4111 = vadd.s32 %v3901, %v3854
        %v4112 = vadd.s32 %v3901, %v3855
        %v4113 = vadd.s32 %v3901, %v3856
        %v4114 = vadd.s32 %v3901, %v3857
        %v4115 = vadd.s32 %v3901, %v3858
        %v4116 = vadd.s32 %v3901, %v3859
        %v4117 = vadd.s32 %v3901, %v3860
        %v4118 = vadd.s32 %v3901, %v3861
        %v4119 = vadd.s32 %v3901, %v3862
        %v4120 = vadd.s32 %v3901, %v3863
        %v4121 = vadd.s32 %v3901, %v3864
        %v4122 = vadd.s32 %v3901, %v3865
        %v4123 = vadd.s32 %v3901, %v3866
        %v4124 = vadd.s32 %v3901, %v3867
        %v4125 = vadd.s32 %v3901, %v3868
        %v4126 = vadd.s32 %v3901, %v3869
        %v4127 = vadd.s32 %v3901, %v3870
        %v4128 = vadd.s32 %v3901, %v3871
        %v4129 = vadd.s32 %v3901, %v3872
        %v4130 = vadd.s32 %v3901, %v3873
        %v4131 = vadd.s32 %v3901, %v3874
        %v4132 = vadd.s32 %v3901, %v3875
        %v4133 = vadd.s32 %v3901, %v3876
        %v4134 = vadd.s32 %v3901, %v3877
        %v4135 = vadd.s32 %v3901, %v3878
        %v4136 = vadd.s32 %v3901, %v3879
        %v4137 = vadd.s32 %v3901, %v3880
        %v4138 = vadd.s32 %v3901, %v3881
        %v4139 = vadd.s32 %v3901, %v3882
        %v4140 = vadd.s32 %v3901, %v3883
        %v4141 = vadd.s32 %v3901, %v3884
        %v4142 = vadd.s32 %v3901, %v3885
        %v4143 = vadd.s32 %v3901, %v3886
        %v4144 = vadd.s32 %v3901, %v3887
        %v4145 = vadd.s32 %v3901, %v3888
        %v4146 = vadd.s32 %v3901, %v3889
        %v4147 = vadd.s32 %v3901, %v3890
        %v4148 = vadd.s32 %v3901, %v3891
        %v4149 = vadd.s32 %v3901, %v3892
        %v4150 = vadd.s32 %v3901, %v3893
        %v4151 = vadd.s32 %v3901, %v3894
        %v4152 = vadd.s32 %v3901, %v3895
        %v4153 = vadd.s32 %v3901, %v3896
        %v4154 = vadd.s32 %v3901, %v3897
        %v4155 = vadd.s32 %v3901, %v3898
        %v4156 = vadd.s32 %v3901, %v3899
        %v4157 = vadd.s32 %v3901, %v3900
        %vm4158 = vcmp.lt.s32.totalorder %v3902, 2400
        %vm4159 = vcmp.lt.s32.totalorder %v3903, 2400
        %vm4160 = vcmp.lt.s32.totalorder %v3904, 2400
        %vm4161 = vcmp.lt.s32.totalorder %v3905, 2400
        %vm4162 = vcmp.lt.s32.totalorder %v3906, 2400
        %vm4163 = vcmp.lt.s32.totalorder %v3907, 2400
        %vm4164 = vcmp.lt.s32.totalorder %v3908, 2400
        %vm4165 = vcmp.lt.s32.totalorder %v3909, 2400
        %vm4166 = vcmp.lt.s32.totalorder %v3910, 2400
        %vm4167 = vcmp.lt.s32.totalorder %v3911, 2400
        %vm4168 = vcmp.lt.s32.totalorder %v3912, 2400
        %vm4169 = vcmp.lt.s32.totalorder %v3913, 2400
        %vm4170 = vcmp.lt.s32.totalorder %v3914, 2400
        %vm4171 = vcmp.lt.s32.totalorder %v3915, 2400
        %vm4172 = vcmp.lt.s32.totalorder %v3916, 2400
        %vm4173 = vcmp.lt.s32.totalorder %v3917, 2400
        %vm4174 = vcmp.lt.s32.totalorder %v3918, 2400
        %vm4175 = vcmp.lt.s32.totalorder %v3919, 2400
        %vm4176 = vcmp.lt.s32.totalorder %v3920, 2400
        %vm4177 = vcmp.lt.s32.totalorder %v3921, 2400
        %vm4178 = vcmp.lt.s32.totalorder %v3922, 2400
        %vm4179 = vcmp.lt.s32.totalorder %v3923, 2400
        %vm4180 = vcmp.lt.s32.totalorder %v3924, 2400
        %vm4181 = vcmp.lt.s32.totalorder %v3925, 2400
        %vm4182 = vcmp.lt.s32.totalorder %v3926, 2400
        %vm4183 = vcmp.lt.s32.totalorder %v3927, 2400
        %vm4184 = vcmp.lt.s32.totalorder %v3928, 2400
        %vm4185 = vcmp.lt.s32.totalorder %v3929, 2400
        %vm4186 = vcmp.lt.s32.totalorder %v3930, 2400
        %vm4187 = vcmp.lt.s32.totalorder %v3931, 2400
        %vm4188 = vcmp.lt.s32.totalorder %v3932, 2400
        %vm4189 = vcmp.lt.s32.totalorder %v3933, 2400
        %vm4190 = vcmp.lt.s32.totalorder %v3934, 2400
        %vm4191 = vcmp.lt.s32.totalorder %v3935, 2400
        %vm4192 = vcmp.lt.s32.totalorder %v3936, 2400
        %vm4193 = vcmp.lt.s32.totalorder %v3937, 2400
        %vm4194 = vcmp.lt.s32.totalorder %v3938, 2400
        %vm4195 = vcmp.lt.s32.totalorder %v3939, 2400
        %vm4196 = vcmp.lt.s32.totalorder %v3940, 2400
        %vm4197 = vcmp.lt.s32.totalorder %v3941, 2400
        %vm4198 = vcmp.lt.s32.totalorder %v3942, 2400
        %vm4199 = vcmp.lt.s32.totalorder %v3943, 2400
        %vm4200 = vcmp.lt.s32.totalorder %v3944, 2400
        %vm4201 = vcmp.lt.s32.totalorder %v3945, 2400
        %vm4202 = vcmp.lt.s32.totalorder %v3946, 2400
        %vm4203 = vcmp.lt.s32.totalorder %v3947, 2400
        %vm4204 = vcmp.lt.s32.totalorder %v3948, 2400
        %vm4205 = vcmp.lt.s32.totalorder %v3949, 2400
        %vm4206 = vcmp.lt.s32.totalorder %v3950, 2400
        %vm4207 = vcmp.lt.s32.totalorder %v3951, 2400
        %vm4208 = vcmp.lt.s32.totalorder %v3952, 2400
        %vm4209 = vcmp.lt.s32.totalorder %v3953, 2400
        %vm4210 = vcmp.lt.s32.totalorder %v3954, 2400
        %vm4211 = vcmp.lt.s32.totalorder %v3955, 2400
        %vm4212 = vcmp.lt.s32.totalorder %v3956, 2400
        %vm4213 = vcmp.lt.s32.totalorder %v3957, 2400
        %vm4214 = vcmp.lt.s32.totalorder %v3958, 2400
        %vm4215 = vcmp.lt.s32.totalorder %v3959, 2400
        %vm4216 = vcmp.lt.s32.totalorder %v3960, 2400
        %vm4217 = vcmp.lt.s32.totalorder %v3961, 2400
        %vm4218 = vcmp.lt.s32.totalorder %v3962, 2400
        %vm4219 = vcmp.lt.s32.totalorder %v3963, 2400
        %vm4220 = vcmp.lt.s32.totalorder %v3964, 2400
        %vm4221 = vcmp.lt.s32.totalorder %v3965, 2400
        %vm4222 = vcmp.lt.s32.totalorder %v3966, 2400
        %vm4223 = vcmp.lt.s32.totalorder %v3967, 2400
        %vm4224 = vcmp.lt.s32.totalorder %v3968, 2400
        %vm4225 = vcmp.lt.s32.totalorder %v3969, 2400
        %vm4226 = vcmp.lt.s32.totalorder %v3970, 2400
        %vm4227 = vcmp.lt.s32.totalorder %v3971, 2400
        %vm4228 = vcmp.lt.s32.totalorder %v3972, 2400
        %vm4229 = vcmp.lt.s32.totalorder %v3973, 2400
        %vm4230 = vcmp.lt.s32.totalorder %v3974, 2400
        %vm4231 = vcmp.lt.s32.totalorder %v3975, 2400
        %vm4232 = vcmp.lt.s32.totalorder %v3976, 2400
        %vm4233 = vcmp.lt.s32.totalorder %v3977, 2400
        %vm4234 = vcmp.lt.s32.totalorder %v3978, 2400
        %vm4235 = vcmp.lt.s32.totalorder %v3979, 2400
        %vm4236 = vcmp.lt.s32.totalorder %v3980, 2400
        %vm4237 = vcmp.lt.s32.totalorder %v3981, 2400
        %vm4238 = vcmp.lt.s32.totalorder %v3982, 2400
        %vm4239 = vcmp.lt.s32.totalorder %v3983, 2400
        %vm4240 = vcmp.lt.s32.totalorder %v3984, 2400
        %vm4241 = vcmp.lt.s32.totalorder %v3985, 2400
        %vm4242 = vcmp.lt.s32.totalorder %v3986, 2400
        %vm4243 = vcmp.lt.s32.totalorder %v3987, 2400
        %vm4244 = vcmp.lt.s32.totalorder %v3988, 2400
        %vm4245 = vcmp.lt.s32.totalorder %v3989, 2400
        %vm4246 = vcmp.lt.s32.totalorder %v3990, 2400
        %vm4247 = vcmp.lt.s32.totalorder %v3991, 2400
        %vm4248 = vcmp.lt.s32.totalorder %v3992, 2400
        %vm4249 = vcmp.lt.s32.totalorder %v3993, 2400
        %vm4250 = vcmp.lt.s32.totalorder %v3994, 2400
        %vm4251 = vcmp.lt.s32.totalorder %v3995, 2400
        %vm4252 = vcmp.lt.s32.totalorder %v3996, 2400
        %vm4253 = vcmp.lt.s32.totalorder %v3997, 2400
        %vm4254 = vcmp.lt.s32.totalorder %v3998, 2400
        %vm4255 = vcmp.lt.s32.totalorder %v3999, 2400
        %vm4256 = vcmp.lt.s32.totalorder %v4000, 2400
        %vm4257 = vcmp.lt.s32.totalorder %v4001, 2400
        %vm4258 = vcmp.lt.s32.totalorder %v4002, 2400
        %vm4259 = vcmp.lt.s32.totalorder %v4003, 2400
        %vm4260 = vcmp.lt.s32.totalorder %v4004, 2400
        %vm4261 = vcmp.lt.s32.totalorder %v4005, 2400
        %vm4262 = vcmp.lt.s32.totalorder %v4006, 2400
        %vm4263 = vcmp.lt.s32.totalorder %v4007, 2400
        %vm4264 = vcmp.lt.s32.totalorder %v4008, 2400
        %vm4265 = vcmp.lt.s32.totalorder %v4009, 2400
        %vm4266 = vcmp.lt.s32.totalorder %v4010, 2400
        %vm4267 = vcmp.lt.s32.totalorder %v4011, 2400
        %vm4268 = vcmp.lt.s32.totalorder %v4012, 2400
        %vm4269 = vcmp.lt.s32.totalorder %v4013, 2400
        %vm4270 = vcmp.lt.s32.totalorder %v4014, 2400
        %vm4271 = vcmp.lt.s32.totalorder %v4015, 2400
        %vm4272 = vcmp.lt.s32.totalorder %v4016, 2400
        %vm4273 = vcmp.lt.s32.totalorder %v4017, 2400
        %vm4274 = vcmp.lt.s32.totalorder %v4018, 2400
        %vm4275 = vcmp.lt.s32.totalorder %v4019, 2400
        %vm4276 = vcmp.lt.s32.totalorder %v4020, 2400
        %vm4277 = vcmp.lt.s32.totalorder %v4021, 2400
        %vm4278 = vcmp.lt.s32.totalorder %v4022, 2400
        %vm4279 = vcmp.lt.s32.totalorder %v4023, 2400
        %vm4280 = vcmp.lt.s32.totalorder %v4024, 2400
        %vm4281 = vcmp.lt.s32.totalorder %v4025, 2400
        %vm4282 = vcmp.lt.s32.totalorder %v4026, 2400
        %vm4283 = vcmp.lt.s32.totalorder %v4027, 2400
        %vm4284 = vcmp.lt.s32.totalorder %v4028, 2400
        %vm4285 = vcmp.lt.s32.totalorder %v4029, 2400
        %vm4286 = vcmp.lt.s32.totalorder %v4030, 2400
        %vm4287 = vcmp.lt.s32.totalorder %v4031, 2400
        %vm4288 = vcmp.lt.s32.totalorder %v4032, 2400
        %vm4289 = vcmp.lt.s32.totalorder %v4033, 2400
        %vm4290 = vcmp.lt.s32.totalorder %v4034, 2400
        %vm4291 = vcmp.lt.s32.totalorder %v4035, 2400
        %vm4292 = vcmp.lt.s32.totalorder %v4036, 2400
        %vm4293 = vcmp.lt.s32.totalorder %v4037, 2400
        %vm4294 = vcmp.lt.s32.totalorder %v4038, 2400
        %vm4295 = vcmp.lt.s32.totalorder %v4039, 2400
        %vm4296 = vcmp.lt.s32.totalorder %v4040, 2400
        %vm4297 = vcmp.lt.s32.totalorder %v4041, 2400
        %vm4298 = vcmp.lt.s32.totalorder %v4042, 2400
        %vm4299 = vcmp.lt.s32.totalorder %v4043, 2400
        %vm4300 = vcmp.lt.s32.totalorder %v4044, 2400
        %vm4301 = vcmp.lt.s32.totalorder %v4045, 2400
        %vm4302 = vcmp.lt.s32.totalorder %v4046, 2400
        %vm4303 = vcmp.lt.s32.totalorder %v4047, 2400
        %vm4304 = vcmp.lt.s32.totalorder %v4048, 2400
        %vm4305 = vcmp.lt.s32.totalorder %v4049, 2400
        %vm4306 = vcmp.lt.s32.totalorder %v4050, 2400
        %vm4307 = vcmp.lt.s32.totalorder %v4051, 2400
        %vm4308 = vcmp.lt.s32.totalorder %v4052, 2400
        %vm4309 = vcmp.lt.s32.totalorder %v4053, 2400
        %vm4310 = vcmp.lt.s32.totalorder %v4054, 2400
        %vm4311 = vcmp.lt.s32.totalorder %v4055, 2400
        %vm4312 = vcmp.lt.s32.totalorder %v4056, 2400
        %vm4313 = vcmp.lt.s32.totalorder %v4057, 2400
        %vm4314 = vcmp.lt.s32.totalorder %v4058, 2400
        %vm4315 = vcmp.lt.s32.totalorder %v4059, 2400
        %vm4316 = vcmp.lt.s32.totalorder %v4060, 2400
        %vm4317 = vcmp.lt.s32.totalorder %v4061, 2400
        %vm4318 = vcmp.lt.s32.totalorder %v4062, 2400
        %vm4319 = vcmp.lt.s32.totalorder %v4063, 2400
        %vm4320 = vcmp.lt.s32.totalorder %v4064, 2400
        %vm4321 = vcmp.lt.s32.totalorder %v4065, 2400
        %vm4322 = vcmp.lt.s32.totalorder %v4066, 2400
        %vm4323 = vcmp.lt.s32.totalorder %v4067, 2400
        %vm4324 = vcmp.lt.s32.totalorder %v4068, 2400
        %vm4325 = vcmp.lt.s32.totalorder %v4069, 2400
        %vm4326 = vcmp.lt.s32.totalorder %v4070, 2400
        %vm4327 = vcmp.lt.s32.totalorder %v4071, 2400
        %vm4328 = vcmp.lt.s32.totalorder %v4072, 2400
        %vm4329 = vcmp.lt.s32.totalorder %v4073, 2400
        %vm4330 = vcmp.lt.s32.totalorder %v4074, 2400
        %vm4331 = vcmp.lt.s32.totalorder %v4075, 2400
        %vm4332 = vcmp.lt.s32.totalorder %v4076, 2400
        %vm4333 = vcmp.lt.s32.totalorder %v4077, 2400
        %vm4334 = vcmp.lt.s32.totalorder %v4078, 2400
        %vm4335 = vcmp.lt.s32.totalorder %v4079, 2400
        %vm4336 = vcmp.lt.s32.totalorder %v4080, 2400
        %vm4337 = vcmp.lt.s32.totalorder %v4081, 2400
        %vm4338 = vcmp.lt.s32.totalorder %v4082, 2400
        %vm4339 = vcmp.lt.s32.totalorder %v4083, 2400
        %vm4340 = vcmp.lt.s32.totalorder %v4084, 2400
        %vm4341 = vcmp.lt.s32.totalorder %v4085, 2400
        %vm4342 = vcmp.lt.s32.totalorder %v4086, 2400
        %vm4343 = vcmp.lt.s32.totalorder %v4087, 2400
        %vm4344 = vcmp.lt.s32.totalorder %v4088, 2400
        %vm4345 = vcmp.lt.s32.totalorder %v4089, 2400
        %vm4346 = vcmp.lt.s32.totalorder %v4090, 2400
        %vm4347 = vcmp.lt.s32.totalorder %v4091, 2400
        %vm4348 = vcmp.lt.s32.totalorder %v4092, 2400
        %vm4349 = vcmp.lt.s32.totalorder %v4093, 2400
        %vm4350 = vcmp.lt.s32.totalorder %v4094, 2400
        %vm4351 = vcmp.lt.s32.totalorder %v4095, 2400
        %vm4352 = vcmp.lt.s32.totalorder %v4096, 2400
        %vm4353 = vcmp.lt.s32.totalorder %v4097, 2400
        %vm4354 = vcmp.lt.s32.totalorder %v4098, 2400
        %vm4355 = vcmp.lt.s32.totalorder %v4099, 2400
        %vm4356 = vcmp.lt.s32.totalorder %v4100, 2400
        %vm4357 = vcmp.lt.s32.totalorder %v4101, 2400
        %vm4358 = vcmp.lt.s32.totalorder %v4102, 2400
        %vm4359 = vcmp.lt.s32.totalorder %v4103, 2400
        %vm4360 = vcmp.lt.s32.totalorder %v4104, 2400
        %vm4361 = vcmp.lt.s32.totalorder %v4105, 2400
        %vm4362 = vcmp.lt.s32.totalorder %v4106, 2400
        %vm4363 = vcmp.lt.s32.totalorder %v4107, 2400
        %vm4364 = vcmp.lt.s32.totalorder %v4108, 2400
        %vm4365 = vcmp.lt.s32.totalorder %v4109, 2400
        %vm4366 = vcmp.lt.s32.totalorder %v4110, 2400
        %vm4367 = vcmp.lt.s32.totalorder %v4111, 2400
        %vm4368 = vcmp.lt.s32.totalorder %v4112, 2400
        %vm4369 = vcmp.lt.s32.totalorder %v4113, 2400
        %vm4370 = vcmp.lt.s32.totalorder %v4114, 2400
        %vm4371 = vcmp.lt.s32.totalorder %v4115, 2400
        %vm4372 = vcmp.lt.s32.totalorder %v4116, 2400
        %vm4373 = vcmp.lt.s32.totalorder %v4117, 2400
        %vm4374 = vcmp.lt.s32.totalorder %v4118, 2400
        %vm4375 = vcmp.lt.s32.totalorder %v4119, 2400
        %vm4376 = vcmp.lt.s32.totalorder %v4120, 2400
        %vm4377 = vcmp.lt.s32.totalorder %v4121, 2400
        %vm4378 = vcmp.lt.s32.totalorder %v4122, 2400
        %vm4379 = vcmp.lt.s32.totalorder %v4123, 2400
        %vm4380 = vcmp.lt.s32.totalorder %v4124, 2400
        %vm4381 = vcmp.lt.s32.totalorder %v4125, 2400
        %vm4382 = vcmp.lt.s32.totalorder %v4126, 2400
        %vm4383 = vcmp.lt.s32.totalorder %v4127, 2400
        %vm4384 = vcmp.lt.s32.totalorder %v4128, 2400
        %vm4385 = vcmp.lt.s32.totalorder %v4129, 2400
        %vm4386 = vcmp.lt.s32.totalorder %v4130, 2400
        %vm4387 = vcmp.lt.s32.totalorder %v4131, 2400
        %vm4388 = vcmp.lt.s32.totalorder %v4132, 2400
        %vm4389 = vcmp.lt.s32.totalorder %v4133, 2400
        %vm4390 = vcmp.lt.s32.totalorder %v4134, 2400
        %vm4391 = vcmp.lt.s32.totalorder %v4135, 2400
        %vm4392 = vcmp.lt.s32.totalorder %v4136, 2400
        %vm4393 = vcmp.lt.s32.totalorder %v4137, 2400
        %vm4394 = vcmp.lt.s32.totalorder %v4138, 2400
        %vm4395 = vcmp.lt.s32.totalorder %v4139, 2400
        %vm4396 = vcmp.lt.s32.totalorder %v4140, 2400
        %vm4397 = vcmp.lt.s32.totalorder %v4141, 2400
        %vm4398 = vcmp.lt.s32.totalorder %v4142, 2400
        %vm4399 = vcmp.lt.s32.totalorder %v4143, 2400
        %vm4400 = vcmp.lt.s32.totalorder %v4144, 2400
        %vm4401 = vcmp.lt.s32.totalorder %v4145, 2400
        %vm4402 = vcmp.lt.s32.totalorder %v4146, 2400
        %vm4403 = vcmp.lt.s32.totalorder %v4147, 2400
        %vm4404 = vcmp.lt.s32.totalorder %v4148, 2400
        %vm4405 = vcmp.lt.s32.totalorder %v4149, 2400
        %vm4406 = vcmp.lt.s32.totalorder %v4150, 2400
        %vm4407 = vcmp.lt.s32.totalorder %v4151, 2400
        %vm4408 = vcmp.lt.s32.totalorder %v4152, 2400
        %vm4409 = vcmp.lt.s32.totalorder %v4153, 2400
        %vm4410 = vcmp.lt.s32.totalorder %v4154, 2400
        %vm4411 = vcmp.lt.s32.totalorder %v4155, 2400
        %vm4412 = vcmp.lt.s32.totalorder %v4156, 2400
        %vm4413 = vcmp.lt.s32.totalorder %v4157, 2400
        %v4414 = vsel %vm4158, 1, 0
        %v4415 = vsel %vm4159, 1, 0
        %v4416 = vsel %vm4160, 1, 0
        %v4417 = vsel %vm4161, 1, 0
        %v4418 = vsel %vm4162, 1, 0
        %v4419 = vsel %vm4163, 1, 0
        %v4420 = vsel %vm4164, 1, 0
        %v4421 = vsel %vm4165, 1, 0
        %v4422 = vsel %vm4166, 1, 0
        %v4423 = vsel %vm4167, 1, 0
        %v4424 = vsel %vm4168, 1, 0
        %v4425 = vsel %vm4169, 1, 0
        %v4426 = vsel %vm4170, 1, 0
        %v4427 = vsel %vm4171, 1, 0
        %v4428 = vsel %vm4172, 1, 0
        %v4429 = vsel %vm4173, 1, 0
        %v4430 = vsel %vm4174, 1, 0
        %v4431 = vsel %vm4175, 1, 0
        %v4432 = vsel %vm4176, 1, 0
        %v4433 = vsel %vm4177, 1, 0
        %v4434 = vsel %vm4178, 1, 0
        %v4435 = vsel %vm4179, 1, 0
        %v4436 = vsel %vm4180, 1, 0
        %v4437 = vsel %vm4181, 1, 0
        %v4438 = vsel %vm4182, 1, 0
        %v4439 = vsel %vm4183, 1, 0
        %v4440 = vsel %vm4184, 1, 0
        %v4441 = vsel %vm4185, 1, 0
        %v4442 = vsel %vm4186, 1, 0
        %v4443 = vsel %vm4187, 1, 0
        %v4444 = vsel %vm4188, 1, 0
        %v4445 = vsel %vm4189, 1, 0
        %v4446 = vsel %vm4190, 1, 0
        %v4447 = vsel %vm4191, 1, 0
        %v4448 = vsel %vm4192, 1, 0
        %v4449 = vsel %vm4193, 1, 0
        %v4450 = vsel %vm4194, 1, 0
        %v4451 = vsel %vm4195, 1, 0
        %v4452 = vsel %vm4196, 1, 0
        %v4453 = vsel %vm4197, 1, 0
        %v4454 = vsel %vm4198, 1, 0
        %v4455 = vsel %vm4199, 1, 0
        %v4456 = vsel %vm4200, 1, 0
        %v4457 = vsel %vm4201, 1, 0
        %v4458 = vsel %vm4202, 1, 0
        %v4459 = vsel %vm4203, 1, 0
        %v4460 = vsel %vm4204, 1, 0
        %v4461 = vsel %vm4205, 1, 0
        %v4462 = vsel %vm4206, 1, 0
        %v4463 = vsel %vm4207, 1, 0
        %v4464 = vsel %vm4208, 1, 0
        %v4465 = vsel %vm4209, 1, 0
        %v4466 = vsel %vm4210, 1, 0
        %v4467 = vsel %vm4211, 1, 0
        %v4468 = vsel %vm4212, 1, 0
        %v4469 = vsel %vm4213, 1, 0
        %v4470 = vsel %vm4214, 1, 0
        %v4471 = vsel %vm4215, 1, 0
        %v4472 = vsel %vm4216, 1, 0
        %v4473 = vsel %vm4217, 1, 0
        %v4474 = vsel %vm4218, 1, 0
        %v4475 = vsel %vm4219, 1, 0
        %v4476 = vsel %vm4220, 1, 0
        %v4477 = vsel %vm4221, 1, 0
        %v4478 = vsel %vm4222, 1, 0
        %v4479 = vsel %vm4223, 1, 0
        %v4480 = vsel %vm4224, 1, 0
        %v4481 = vsel %vm4225, 1, 0
        %v4482 = vsel %vm4226, 1, 0
        %v4483 = vsel %vm4227, 1, 0
        %v4484 = vsel %vm4228, 1, 0
        %v4485 = vsel %vm4229, 1, 0
        %v4486 = vsel %vm4230, 1, 0
        %v4487 = vsel %vm4231, 1, 0
        %v4488 = vsel %vm4232, 1, 0
        %v4489 = vsel %vm4233, 1, 0
        %v4490 = vsel %vm4234, 1, 0
        %v4491 = vsel %vm4235, 1, 0
        %v4492 = vsel %vm4236, 1, 0
        %v4493 = vsel %vm4237, 1, 0
        %v4494 = vsel %vm4238, 1, 0
        %v4495 = vsel %vm4239, 1, 0
        %v4496 = vsel %vm4240, 1, 0
        %v4497 = vsel %vm4241, 1, 0
        %v4498 = vsel %vm4242, 1, 0
        %v4499 = vsel %vm4243, 1, 0
        %v4500 = vsel %vm4244, 1, 0
        %v4501 = vsel %vm4245, 1, 0
        %v4502 = vsel %vm4246, 1, 0
        %v4503 = vsel %vm4247, 1, 0
        %v4504 = vsel %vm4248, 1, 0
        %v4505 = vsel %vm4249, 1, 0
        %v4506 = vsel %vm4250, 1, 0
        %v4507 = vsel %vm4251, 1, 0
        %v4508 = vsel %vm4252, 1, 0
        %v4509 = vsel %vm4253, 1, 0
        %v4510 = vsel %vm4254, 1, 0
        %v4511 = vsel %vm4255, 1, 0
        %v4512 = vsel %vm4256, 1, 0
        %v4513 = vsel %vm4257, 1, 0
        %v4514 = vsel %vm4258, 1, 0
        %v4515 = vsel %vm4259, 1, 0
        %v4516 = vsel %vm4260, 1, 0
        %v4517 = vsel %vm4261, 1, 0
        %v4518 = vsel %vm4262, 1, 0
        %v4519 = vsel %vm4263, 1, 0
        %v4520 = vsel %vm4264, 1, 0
        %v4521 = vsel %vm4265, 1, 0
        %v4522 = vsel %vm4266, 1, 0
        %v4523 = vsel %vm4267, 1, 0
        %v4524 = vsel %vm4268, 1, 0
        %v4525 = vsel %vm4269, 1, 0
        %v4526 = vsel %vm4270, 1, 0
        %v4527 = vsel %vm4271, 1, 0
        %v4528 = vsel %vm4272, 1, 0
        %v4529 = vsel %vm4273, 1, 0
        %v4530 = vsel %vm4274, 1, 0
        %v4531 = vsel %vm4275, 1, 0
        %v4532 = vsel %vm4276, 1, 0
        %v4533 = vsel %vm4277, 1, 0
        %v4534 = vsel %vm4278, 1, 0
        %v4535 = vsel %vm4279, 1, 0
        %v4536 = vsel %vm4280, 1, 0
        %v4537 = vsel %vm4281, 1, 0
        %v4538 = vsel %vm4282, 1, 0
        %v4539 = vsel %vm4283, 1, 0
        %v4540 = vsel %vm4284, 1, 0
        %v4541 = vsel %vm4285, 1, 0
        %v4542 = vsel %vm4286, 1, 0
        %v4543 = vsel %vm4287, 1, 0
        %v4544 = vsel %vm4288, 1, 0
        %v4545 = vsel %vm4289, 1, 0
        %v4546 = vsel %vm4290, 1, 0
        %v4547 = vsel %vm4291, 1, 0
        %v4548 = vsel %vm4292, 1, 0
        %v4549 = vsel %vm4293, 1, 0
        %v4550 = vsel %vm4294, 1, 0
        %v4551 = vsel %vm4295, 1, 0
        %v4552 = vsel %vm4296, 1, 0
        %v4553 = vsel %vm4297, 1, 0
        %v4554 = vsel %vm4298, 1, 0
        %v4555 = vsel %vm4299, 1, 0
        %v4556 = vsel %vm4300, 1, 0
        %v4557 = vsel %vm4301, 1, 0
        %v4558 = vsel %vm4302, 1, 0
        %v4559 = vsel %vm4303, 1, 0
        %v4560 = vsel %vm4304, 1, 0
        %v4561 = vsel %vm4305, 1, 0
        %v4562 = vsel %vm4306, 1, 0
        %v4563 = vsel %vm4307, 1, 0
        %v4564 = vsel %vm4308, 1, 0
        %v4565 = vsel %vm4309, 1, 0
        %v4566 = vsel %vm4310, 1, 0
        %v4567 = vsel %vm4311, 1, 0
        %v4568 = vsel %vm4312, 1, 0
        %v4569 = vsel %vm4313, 1, 0
        %v4570 = vsel %vm4314, 1, 0
        %v4571 = vsel %vm4315, 1, 0
        %v4572 = vsel %vm4316, 1, 0
        %v4573 = vsel %vm4317, 1, 0
        %v4574 = vsel %vm4318, 1, 0
        %v4575 = vsel %vm4319, 1, 0
        %v4576 = vsel %vm4320, 1, 0
        %v4577 = vsel %vm4321, 1, 0
        %v4578 = vsel %vm4322, 1, 0
        %v4579 = vsel %vm4323, 1, 0
        %v4580 = vsel %vm4324, 1, 0
        %v4581 = vsel %vm4325, 1, 0
        %v4582 = vsel %vm4326, 1, 0
        %v4583 = vsel %vm4327, 1, 0
        %v4584 = vsel %vm4328, 1, 0
        %v4585 = vsel %vm4329, 1, 0
        %v4586 = vsel %vm4330, 1, 0
        %v4587 = vsel %vm4331, 1, 0
        %v4588 = vsel %vm4332, 1, 0
        %v4589 = vsel %vm4333, 1, 0
        %v4590 = vsel %vm4334, 1, 0
        %v4591 = vsel %vm4335, 1, 0
        %v4592 = vsel %vm4336, 1, 0
        %v4593 = vsel %vm4337, 1, 0
        %v4594 = vsel %vm4338, 1, 0
        %v4595 = vsel %vm4339, 1, 0
        %v4596 = vsel %vm4340, 1, 0
        %v4597 = vsel %vm4341, 1, 0
        %v4598 = vsel %vm4342, 1, 0
        %v4599 = vsel %vm4343, 1, 0
        %v4600 = vsel %vm4344, 1, 0
        %v4601 = vsel %vm4345, 1, 0
        %v4602 = vsel %vm4346, 1, 0
        %v4603 = vsel %vm4347, 1, 0
        %v4604 = vsel %vm4348, 1, 0
        %v4605 = vsel %vm4349, 1, 0
        %v4606 = vsel %vm4350, 1, 0
        %v4607 = vsel %vm4351, 1, 0
        %v4608 = vsel %vm4352, 1, 0
        %v4609 = vsel %vm4353, 1, 0
        %v4610 = vsel %vm4354, 1, 0
        %v4611 = vsel %vm4355, 1, 0
        %v4612 = vsel %vm4356, 1, 0
        %v4613 = vsel %vm4357, 1, 0
        %v4614 = vsel %vm4358, 1, 0
        %v4615 = vsel %vm4359, 1, 0
        %v4616 = vsel %vm4360, 1, 0
        %v4617 = vsel %vm4361, 1, 0
        %v4618 = vsel %vm4362, 1, 0
        %v4619 = vsel %vm4363, 1, 0
        %v4620 = vsel %vm4364, 1, 0
        %v4621 = vsel %vm4365, 1, 0
        %v4622 = vsel %vm4366, 1, 0
        %v4623 = vsel %vm4367, 1, 0
        %v4624 = vsel %vm4368, 1, 0
        %v4625 = vsel %vm4369, 1, 0
        %v4626 = vsel %vm4370, 1, 0
        %v4627 = vsel %vm4371, 1, 0
        %v4628 = vsel %vm4372, 1, 0
        %v4629 = vsel %vm4373, 1, 0
        %v4630 = vsel %vm4374, 1, 0
        %v4631 = vsel %vm4375, 1, 0
        %v4632 = vsel %vm4376, 1, 0
        %v4633 = vsel %vm4377, 1, 0
        %v4634 = vsel %vm4378, 1, 0
        %v4635 = vsel %vm4379, 1, 0
        %v4636 = vsel %vm4380, 1, 0
        %v4637 = vsel %vm4381, 1, 0
        %v4638 = vsel %vm4382, 1, 0
        %v4639 = vsel %vm4383, 1, 0
        %v4640 = vsel %vm4384, 1, 0
        %v4641 = vsel %vm4385, 1, 0
        %v4642 = vsel %vm4386, 1, 0
        %v4643 = vsel %vm4387, 1, 0
        %v4644 = vsel %vm4388, 1, 0
        %v4645 = vsel %vm4389, 1, 0
        %v4646 = vsel %vm4390, 1, 0
        %v4647 = vsel %vm4391, 1, 0
        %v4648 = vsel %vm4392, 1, 0
        %v4649 = vsel %vm4393, 1, 0
        %v4650 = vsel %vm4394, 1, 0
        %v4651 = vsel %vm4395, 1, 0
        %v4652 = vsel %vm4396, 1, 0
        %v4653 = vsel %vm4397, 1, 0
        %v4654 = vsel %vm4398, 1, 0
        %v4655 = vsel %vm4399, 1, 0
        %v4656 = vsel %vm4400, 1, 0
        %v4657 = vsel %vm4401, 1, 0
        %v4658 = vsel %vm4402, 1, 0
        %v4659 = vsel %vm4403, 1, 0
        %v4660 = vsel %vm4404, 1, 0
        %v4661 = vsel %vm4405, 1, 0
        %v4662 = vsel %vm4406, 1, 0
        %v4663 = vsel %vm4407, 1, 0
        %v4664 = vsel %vm4408, 1, 0
        %v4665 = vsel %vm4409, 1, 0
        %v4666 = vsel %vm4410, 1, 0
        %v4667 = vsel %vm4411, 1, 0
        %v4668 = vsel %vm4412, 1, 0
        %v4669 = vsel %vm4413, 1, 0
        %vm4670 = vcmp.eq.s32.totalorder %v4414, 1
        %vm4671 = vcmp.eq.s32.totalorder %v4415, 1
        %vm4672 = vcmp.eq.s32.totalorder %v4416, 1
        %vm4673 = vcmp.eq.s32.totalorder %v4417, 1
        %vm4674 = vcmp.eq.s32.totalorder %v4418, 1
        %vm4675 = vcmp.eq.s32.totalorder %v4419, 1
        %vm4676 = vcmp.eq.s32.totalorder %v4420, 1
        %vm4677 = vcmp.eq.s32.totalorder %v4421, 1
        %vm4678 = vcmp.eq.s32.totalorder %v4422, 1
        %vm4679 = vcmp.eq.s32.totalorder %v4423, 1
        %vm4680 = vcmp.eq.s32.totalorder %v4424, 1
        %vm4681 = vcmp.eq.s32.totalorder %v4425, 1
        %vm4682 = vcmp.eq.s32.totalorder %v4426, 1
        %vm4683 = vcmp.eq.s32.totalorder %v4427, 1
        %vm4684 = vcmp.eq.s32.totalorder %v4428, 1
        %vm4685 = vcmp.eq.s32.totalorder %v4429, 1
        %vm4686 = vcmp.eq.s32.totalorder %v4430, 1
        %vm4687 = vcmp.eq.s32.totalorder %v4431, 1
        %vm4688 = vcmp.eq.s32.totalorder %v4432, 1
        %vm4689 = vcmp.eq.s32.totalorder %v4433, 1
        %vm4690 = vcmp.eq.s32.totalorder %v4434, 1
        %vm4691 = vcmp.eq.s32.totalorder %v4435, 1
        %vm4692 = vcmp.eq.s32.totalorder %v4436, 1
        %vm4693 = vcmp.eq.s32.totalorder %v4437, 1
        %vm4694 = vcmp.eq.s32.totalorder %v4438, 1
        %vm4695 = vcmp.eq.s32.totalorder %v4439, 1
        %vm4696 = vcmp.eq.s32.totalorder %v4440, 1
        %vm4697 = vcmp.eq.s32.totalorder %v4441, 1
        %vm4698 = vcmp.eq.s32.totalorder %v4442, 1
        %vm4699 = vcmp.eq.s32.totalorder %v4443, 1
        %vm4700 = vcmp.eq.s32.totalorder %v4444, 1
        %vm4701 = vcmp.eq.s32.totalorder %v4445, 1
        %vm4702 = vcmp.eq.s32.totalorder %v4446, 1
        %vm4703 = vcmp.eq.s32.totalorder %v4447, 1
        %vm4704 = vcmp.eq.s32.totalorder %v4448, 1
        %vm4705 = vcmp.eq.s32.totalorder %v4449, 1
        %vm4706 = vcmp.eq.s32.totalorder %v4450, 1
        %vm4707 = vcmp.eq.s32.totalorder %v4451, 1
        %vm4708 = vcmp.eq.s32.totalorder %v4452, 1
        %vm4709 = vcmp.eq.s32.totalorder %v4453, 1
        %vm4710 = vcmp.eq.s32.totalorder %v4454, 1
        %vm4711 = vcmp.eq.s32.totalorder %v4455, 1
        %vm4712 = vcmp.eq.s32.totalorder %v4456, 1
        %vm4713 = vcmp.eq.s32.totalorder %v4457, 1
        %vm4714 = vcmp.eq.s32.totalorder %v4458, 1
        %vm4715 = vcmp.eq.s32.totalorder %v4459, 1
        %vm4716 = vcmp.eq.s32.totalorder %v4460, 1
        %vm4717 = vcmp.eq.s32.totalorder %v4461, 1
        %vm4718 = vcmp.eq.s32.totalorder %v4462, 1
        %vm4719 = vcmp.eq.s32.totalorder %v4463, 1
        %vm4720 = vcmp.eq.s32.totalorder %v4464, 1
        %vm4721 = vcmp.eq.s32.totalorder %v4465, 1
        %vm4722 = vcmp.eq.s32.totalorder %v4466, 1
        %vm4723 = vcmp.eq.s32.totalorder %v4467, 1
        %vm4724 = vcmp.eq.s32.totalorder %v4468, 1
        %vm4725 = vcmp.eq.s32.totalorder %v4469, 1
        %vm4726 = vcmp.eq.s32.totalorder %v4470, 1
        %vm4727 = vcmp.eq.s32.totalorder %v4471, 1
        %vm4728 = vcmp.eq.s32.totalorder %v4472, 1
        %vm4729 = vcmp.eq.s32.totalorder %v4473, 1
        %vm4730 = vcmp.eq.s32.totalorder %v4474, 1
        %vm4731 = vcmp.eq.s32.totalorder %v4475, 1
        %vm4732 = vcmp.eq.s32.totalorder %v4476, 1
        %vm4733 = vcmp.eq.s32.totalorder %v4477, 1
        %vm4734 = vcmp.eq.s32.totalorder %v4478, 1
        %vm4735 = vcmp.eq.s32.totalorder %v4479, 1
        %vm4736 = vcmp.eq.s32.totalorder %v4480, 1
        %vm4737 = vcmp.eq.s32.totalorder %v4481, 1
        %vm4738 = vcmp.eq.s32.totalorder %v4482, 1
        %vm4739 = vcmp.eq.s32.totalorder %v4483, 1
        %vm4740 = vcmp.eq.s32.totalorder %v4484, 1
        %vm4741 = vcmp.eq.s32.totalorder %v4485, 1
        %vm4742 = vcmp.eq.s32.totalorder %v4486, 1
        %vm4743 = vcmp.eq.s32.totalorder %v4487, 1
        %vm4744 = vcmp.eq.s32.totalorder %v4488, 1
        %vm4745 = vcmp.eq.s32.totalorder %v4489, 1
        %vm4746 = vcmp.eq.s32.totalorder %v4490, 1
        %vm4747 = vcmp.eq.s32.totalorder %v4491, 1
        %vm4748 = vcmp.eq.s32.totalorder %v4492, 1
        %vm4749 = vcmp.eq.s32.totalorder %v4493, 1
        %vm4750 = vcmp.eq.s32.totalorder %v4494, 1
        %vm4751 = vcmp.eq.s32.totalorder %v4495, 1
        %vm4752 = vcmp.eq.s32.totalorder %v4496, 1
        %vm4753 = vcmp.eq.s32.totalorder %v4497, 1
        %vm4754 = vcmp.eq.s32.totalorder %v4498, 1
        %vm4755 = vcmp.eq.s32.totalorder %v4499, 1
        %vm4756 = vcmp.eq.s32.totalorder %v4500, 1
        %vm4757 = vcmp.eq.s32.totalorder %v4501, 1
        %vm4758 = vcmp.eq.s32.totalorder %v4502, 1
        %vm4759 = vcmp.eq.s32.totalorder %v4503, 1
        %vm4760 = vcmp.eq.s32.totalorder %v4504, 1
        %vm4761 = vcmp.eq.s32.totalorder %v4505, 1
        %vm4762 = vcmp.eq.s32.totalorder %v4506, 1
        %vm4763 = vcmp.eq.s32.totalorder %v4507, 1
        %vm4764 = vcmp.eq.s32.totalorder %v4508, 1
        %vm4765 = vcmp.eq.s32.totalorder %v4509, 1
        %vm4766 = vcmp.eq.s32.totalorder %v4510, 1
        %vm4767 = vcmp.eq.s32.totalorder %v4511, 1
        %vm4768 = vcmp.eq.s32.totalorder %v4512, 1
        %vm4769 = vcmp.eq.s32.totalorder %v4513, 1
        %vm4770 = vcmp.eq.s32.totalorder %v4514, 1
        %vm4771 = vcmp.eq.s32.totalorder %v4515, 1
        %vm4772 = vcmp.eq.s32.totalorder %v4516, 1
        %vm4773 = vcmp.eq.s32.totalorder %v4517, 1
        %vm4774 = vcmp.eq.s32.totalorder %v4518, 1
        %vm4775 = vcmp.eq.s32.totalorder %v4519, 1
        %vm4776 = vcmp.eq.s32.totalorder %v4520, 1
        %vm4777 = vcmp.eq.s32.totalorder %v4521, 1
        %vm4778 = vcmp.eq.s32.totalorder %v4522, 1
        %vm4779 = vcmp.eq.s32.totalorder %v4523, 1
        %vm4780 = vcmp.eq.s32.totalorder %v4524, 1
        %vm4781 = vcmp.eq.s32.totalorder %v4525, 1
        %vm4782 = vcmp.eq.s32.totalorder %v4526, 1
        %vm4783 = vcmp.eq.s32.totalorder %v4527, 1
        %vm4784 = vcmp.eq.s32.totalorder %v4528, 1
        %vm4785 = vcmp.eq.s32.totalorder %v4529, 1
        %vm4786 = vcmp.eq.s32.totalorder %v4530, 1
        %vm4787 = vcmp.eq.s32.totalorder %v4531, 1
        %vm4788 = vcmp.eq.s32.totalorder %v4532, 1
        %vm4789 = vcmp.eq.s32.totalorder %v4533, 1
        %vm4790 = vcmp.eq.s32.totalorder %v4534, 1
        %vm4791 = vcmp.eq.s32.totalorder %v4535, 1
        %vm4792 = vcmp.eq.s32.totalorder %v4536, 1
        %vm4793 = vcmp.eq.s32.totalorder %v4537, 1
        %vm4794 = vcmp.eq.s32.totalorder %v4538, 1
        %vm4795 = vcmp.eq.s32.totalorder %v4539, 1
        %vm4796 = vcmp.eq.s32.totalorder %v4540, 1
        %vm4797 = vcmp.eq.s32.totalorder %v4541, 1
        %vm4798 = vcmp.eq.s32.totalorder %v4542, 1
        %vm4799 = vcmp.eq.s32.totalorder %v4543, 1
        %vm4800 = vcmp.eq.s32.totalorder %v4544, 1
        %vm4801 = vcmp.eq.s32.totalorder %v4545, 1
        %vm4802 = vcmp.eq.s32.totalorder %v4546, 1
        %vm4803 = vcmp.eq.s32.totalorder %v4547, 1
        %vm4804 = vcmp.eq.s32.totalorder %v4548, 1
        %vm4805 = vcmp.eq.s32.totalorder %v4549, 1
        %vm4806 = vcmp.eq.s32.totalorder %v4550, 1
        %vm4807 = vcmp.eq.s32.totalorder %v4551, 1
        %vm4808 = vcmp.eq.s32.totalorder %v4552, 1
        %vm4809 = vcmp.eq.s32.totalorder %v4553, 1
        %vm4810 = vcmp.eq.s32.totalorder %v4554, 1
        %vm4811 = vcmp.eq.s32.totalorder %v4555, 1
        %vm4812 = vcmp.eq.s32.totalorder %v4556, 1
        %vm4813 = vcmp.eq.s32.totalorder %v4557, 1
        %vm4814 = vcmp.eq.s32.totalorder %v4558, 1
        %vm4815 = vcmp.eq.s32.totalorder %v4559, 1
        %vm4816 = vcmp.eq.s32.totalorder %v4560, 1
        %vm4817 = vcmp.eq.s32.totalorder %v4561, 1
        %vm4818 = vcmp.eq.s32.totalorder %v4562, 1
        %vm4819 = vcmp.eq.s32.totalorder %v4563, 1
        %vm4820 = vcmp.eq.s32.totalorder %v4564, 1
        %vm4821 = vcmp.eq.s32.totalorder %v4565, 1
        %vm4822 = vcmp.eq.s32.totalorder %v4566, 1
        %vm4823 = vcmp.eq.s32.totalorder %v4567, 1
        %vm4824 = vcmp.eq.s32.totalorder %v4568, 1
        %vm4825 = vcmp.eq.s32.totalorder %v4569, 1
        %vm4826 = vcmp.eq.s32.totalorder %v4570, 1
        %vm4827 = vcmp.eq.s32.totalorder %v4571, 1
        %vm4828 = vcmp.eq.s32.totalorder %v4572, 1
        %vm4829 = vcmp.eq.s32.totalorder %v4573, 1
        %vm4830 = vcmp.eq.s32.totalorder %v4574, 1
        %vm4831 = vcmp.eq.s32.totalorder %v4575, 1
        %vm4832 = vcmp.eq.s32.totalorder %v4576, 1
        %vm4833 = vcmp.eq.s32.totalorder %v4577, 1
        %vm4834 = vcmp.eq.s32.totalorder %v4578, 1
        %vm4835 = vcmp.eq.s32.totalorder %v4579, 1
        %vm4836 = vcmp.eq.s32.totalorder %v4580, 1
        %vm4837 = vcmp.eq.s32.totalorder %v4581, 1
        %vm4838 = vcmp.eq.s32.totalorder %v4582, 1
        %vm4839 = vcmp.eq.s32.totalorder %v4583, 1
        %vm4840 = vcmp.eq.s32.totalorder %v4584, 1
        %vm4841 = vcmp.eq.s32.totalorder %v4585, 1
        %vm4842 = vcmp.eq.s32.totalorder %v4586, 1
        %vm4843 = vcmp.eq.s32.totalorder %v4587, 1
        %vm4844 = vcmp.eq.s32.totalorder %v4588, 1
        %vm4845 = vcmp.eq.s32.totalorder %v4589, 1
        %vm4846 = vcmp.eq.s32.totalorder %v4590, 1
        %vm4847 = vcmp.eq.s32.totalorder %v4591, 1
        %vm4848 = vcmp.eq.s32.totalorder %v4592, 1
        %vm4849 = vcmp.eq.s32.totalorder %v4593, 1
        %vm4850 = vcmp.eq.s32.totalorder %v4594, 1
        %vm4851 = vcmp.eq.s32.totalorder %v4595, 1
        %vm4852 = vcmp.eq.s32.totalorder %v4596, 1
        %vm4853 = vcmp.eq.s32.totalorder %v4597, 1
        %vm4854 = vcmp.eq.s32.totalorder %v4598, 1
        %vm4855 = vcmp.eq.s32.totalorder %v4599, 1
        %vm4856 = vcmp.eq.s32.totalorder %v4600, 1
        %vm4857 = vcmp.eq.s32.totalorder %v4601, 1
        %vm4858 = vcmp.eq.s32.totalorder %v4602, 1
        %vm4859 = vcmp.eq.s32.totalorder %v4603, 1
        %vm4860 = vcmp.eq.s32.totalorder %v4604, 1
        %vm4861 = vcmp.eq.s32.totalorder %v4605, 1
        %vm4862 = vcmp.eq.s32.totalorder %v4606, 1
        %vm4863 = vcmp.eq.s32.totalorder %v4607, 1
        %vm4864 = vcmp.eq.s32.totalorder %v4608, 1
        %vm4865 = vcmp.eq.s32.totalorder %v4609, 1
        %vm4866 = vcmp.eq.s32.totalorder %v4610, 1
        %vm4867 = vcmp.eq.s32.totalorder %v4611, 1
        %vm4868 = vcmp.eq.s32.totalorder %v4612, 1
        %vm4869 = vcmp.eq.s32.totalorder %v4613, 1
        %vm4870 = vcmp.eq.s32.totalorder %v4614, 1
        %vm4871 = vcmp.eq.s32.totalorder %v4615, 1
        %vm4872 = vcmp.eq.s32.totalorder %v4616, 1
        %vm4873 = vcmp.eq.s32.totalorder %v4617, 1
        %vm4874 = vcmp.eq.s32.totalorder %v4618, 1
        %vm4875 = vcmp.eq.s32.totalorder %v4619, 1
        %vm4876 = vcmp.eq.s32.totalorder %v4620, 1
        %vm4877 = vcmp.eq.s32.totalorder %v4621, 1
        %vm4878 = vcmp.eq.s32.totalorder %v4622, 1
        %vm4879 = vcmp.eq.s32.totalorder %v4623, 1
        %vm4880 = vcmp.eq.s32.totalorder %v4624, 1
        %vm4881 = vcmp.eq.s32.totalorder %v4625, 1
        %vm4882 = vcmp.eq.s32.totalorder %v4626, 1
        %vm4883 = vcmp.eq.s32.totalorder %v4627, 1
        %vm4884 = vcmp.eq.s32.totalorder %v4628, 1
        %vm4885 = vcmp.eq.s32.totalorder %v4629, 1
        %vm4886 = vcmp.eq.s32.totalorder %v4630, 1
        %vm4887 = vcmp.eq.s32.totalorder %v4631, 1
        %vm4888 = vcmp.eq.s32.totalorder %v4632, 1
        %vm4889 = vcmp.eq.s32.totalorder %v4633, 1
        %vm4890 = vcmp.eq.s32.totalorder %v4634, 1
        %vm4891 = vcmp.eq.s32.totalorder %v4635, 1
        %vm4892 = vcmp.eq.s32.totalorder %v4636, 1
        %vm4893 = vcmp.eq.s32.totalorder %v4637, 1
        %vm4894 = vcmp.eq.s32.totalorder %v4638, 1
        %vm4895 = vcmp.eq.s32.totalorder %v4639, 1
        %vm4896 = vcmp.eq.s32.totalorder %v4640, 1
        %vm4897 = vcmp.eq.s32.totalorder %v4641, 1
        %vm4898 = vcmp.eq.s32.totalorder %v4642, 1
        %vm4899 = vcmp.eq.s32.totalorder %v4643, 1
        %vm4900 = vcmp.eq.s32.totalorder %v4644, 1
        %vm4901 = vcmp.eq.s32.totalorder %v4645, 1
        %vm4902 = vcmp.eq.s32.totalorder %v4646, 1
        %vm4903 = vcmp.eq.s32.totalorder %v4647, 1
        %vm4904 = vcmp.eq.s32.totalorder %v4648, 1
        %vm4905 = vcmp.eq.s32.totalorder %v4649, 1
        %vm4906 = vcmp.eq.s32.totalorder %v4650, 1
        %vm4907 = vcmp.eq.s32.totalorder %v4651, 1
        %vm4908 = vcmp.eq.s32.totalorder %v4652, 1
        %vm4909 = vcmp.eq.s32.totalorder %v4653, 1
        %vm4910 = vcmp.eq.s32.totalorder %v4654, 1
        %vm4911 = vcmp.eq.s32.totalorder %v4655, 1
        %vm4912 = vcmp.eq.s32.totalorder %v4656, 1
        %vm4913 = vcmp.eq.s32.totalorder %v4657, 1
        %vm4914 = vcmp.eq.s32.totalorder %v4658, 1
        %vm4915 = vcmp.eq.s32.totalorder %v4659, 1
        %vm4916 = vcmp.eq.s32.totalorder %v4660, 1
        %vm4917 = vcmp.eq.s32.totalorder %v4661, 1
        %vm4918 = vcmp.eq.s32.totalorder %v4662, 1
        %vm4919 = vcmp.eq.s32.totalorder %v4663, 1
        %vm4920 = vcmp.eq.s32.totalorder %v4664, 1
        %vm4921 = vcmp.eq.s32.totalorder %v4665, 1
        %vm4922 = vcmp.eq.s32.totalorder %v4666, 1
        %vm4923 = vcmp.eq.s32.totalorder %v4667, 1
        %vm4924 = vcmp.eq.s32.totalorder %v4668, 1
        %vm4925 = vcmp.eq.s32.totalorder %v4669, 1
        %v4926 = vsel %vm4670, %v3385, 0.0
        %v4927 = vsel %vm4671, %v3386, 0.0
        %v4928 = vsel %vm4672, %v3387, 0.0
        %v4929 = vsel %vm4673, %v3388, 0.0
        %v4930 = vsel %vm4674, %v3389, 0.0
        %v4931 = vsel %vm4675, %v3390, 0.0
        %v4932 = vsel %vm4676, %v3391, 0.0
        %v4933 = vsel %vm4677, %v3392, 0.0
        %v4934 = vsel %vm4678, %v3393, 0.0
        %v4935 = vsel %vm4679, %v3394, 0.0
        %v4936 = vsel %vm4680, %v3395, 0.0
        %v4937 = vsel %vm4681, %v3396, 0.0
        %v4938 = vsel %vm4682, %v3397, 0.0
        %v4939 = vsel %vm4683, %v3398, 0.0
        %v4940 = vsel %vm4684, %v3399, 0.0
        %v4941 = vsel %vm4685, %v3400, 0.0
        %v4942 = vsel %vm4686, %v3401, 0.0
        %v4943 = vsel %vm4687, %v3402, 0.0
        %v4944 = vsel %vm4688, %v3403, 0.0
        %v4945 = vsel %vm4689, %v3404, 0.0
        %v4946 = vsel %vm4690, %v3405, 0.0
        %v4947 = vsel %vm4691, %v3406, 0.0
        %v4948 = vsel %vm4692, %v3407, 0.0
        %v4949 = vsel %vm4693, %v3408, 0.0
        %v4950 = vsel %vm4694, %v3409, 0.0
        %v4951 = vsel %vm4695, %v3410, 0.0
        %v4952 = vsel %vm4696, %v3411, 0.0
        %v4953 = vsel %vm4697, %v3412, 0.0
        %v4954 = vsel %vm4698, %v3413, 0.0
        %v4955 = vsel %vm4699, %v3414, 0.0
        %v4956 = vsel %vm4700, %v3415, 0.0
        %v4957 = vsel %vm4701, %v3416, 0.0
        %v4958 = vsel %vm4702, %v3417, 0.0
        %v4959 = vsel %vm4703, %v3418, 0.0
        %v4960 = vsel %vm4704, %v3419, 0.0
        %v4961 = vsel %vm4705, %v3420, 0.0
        %v4962 = vsel %vm4706, %v3421, 0.0
        %v4963 = vsel %vm4707, %v3422, 0.0
        %v4964 = vsel %vm4708, %v3423, 0.0
        %v4965 = vsel %vm4709, %v3424, 0.0
        %v4966 = vsel %vm4710, %v3425, 0.0
        %v4967 = vsel %vm4711, %v3426, 0.0
        %v4968 = vsel %vm4712, %v3427, 0.0
        %v4969 = vsel %vm4713, %v3428, 0.0
        %v4970 = vsel %vm4714, %v3429, 0.0
        %v4971 = vsel %vm4715, %v3430, 0.0
        %v4972 = vsel %vm4716, %v3431, 0.0
        %v4973 = vsel %vm4717, %v3432, 0.0
        %v4974 = vsel %vm4718, %v3433, 0.0
        %v4975 = vsel %vm4719, %v3434, 0.0
        %v4976 = vsel %vm4720, %v3435, 0.0
        %v4977 = vsel %vm4721, %v3436, 0.0
        %v4978 = vsel %vm4722, %v3437, 0.0
        %v4979 = vsel %vm4723, %v3438, 0.0
        %v4980 = vsel %vm4724, %v3439, 0.0
        %v4981 = vsel %vm4725, %v3440, 0.0
        %v4982 = vsel %vm4726, %v3441, 0.0
        %v4983 = vsel %vm4727, %v3442, 0.0
        %v4984 = vsel %vm4728, %v3443, 0.0
        %v4985 = vsel %vm4729, %v3444, 0.0
        %v4986 = vsel %vm4730, %v3445, 0.0
        %v4987 = vsel %vm4731, %v3446, 0.0
        %v4988 = vsel %vm4732, %v3447, 0.0
        %v4989 = vsel %vm4733, %v3448, 0.0
        %v4990 = vsel %vm4734, %v3449, 0.0
        %v4991 = vsel %vm4735, %v3450, 0.0
        %v4992 = vsel %vm4736, %v3451, 0.0
        %v4993 = vsel %vm4737, %v3452, 0.0
        %v4994 = vsel %vm4738, %v3453, 0.0
        %v4995 = vsel %vm4739, %v3454, 0.0
        %v4996 = vsel %vm4740, %v3455, 0.0
        %v4997 = vsel %vm4741, %v3456, 0.0
        %v4998 = vsel %vm4742, %v3457, 0.0
        %v4999 = vsel %vm4743, %v3458, 0.0
        %v5000 = vsel %vm4744, %v3459, 0.0
        %v5001 = vsel %vm4745, %v3460, 0.0
        %v5002 = vsel %vm4746, %v3461, 0.0
        %v5003 = vsel %vm4747, %v3462, 0.0
        %v5004 = vsel %vm4748, %v3463, 0.0
        %v5005 = vsel %vm4749, %v3464, 0.0
        %v5006 = vsel %vm4750, %v3465, 0.0
        %v5007 = vsel %vm4751, %v3466, 0.0
        %v5008 = vsel %vm4752, %v3467, 0.0
        %v5009 = vsel %vm4753, %v3468, 0.0
        %v5010 = vsel %vm4754, %v3469, 0.0
        %v5011 = vsel %vm4755, %v3470, 0.0
        %v5012 = vsel %vm4756, %v3471, 0.0
        %v5013 = vsel %vm4757, %v3472, 0.0
        %v5014 = vsel %vm4758, %v3473, 0.0
        %v5015 = vsel %vm4759, %v3474, 0.0
        %v5016 = vsel %vm4760, %v3475, 0.0
        %v5017 = vsel %vm4761, %v3476, 0.0
        %v5018 = vsel %vm4762, %v3477, 0.0
        %v5019 = vsel %vm4763, %v3478, 0.0
        %v5020 = vsel %vm4764, %v3479, 0.0
        %v5021 = vsel %vm4765, %v3480, 0.0
        %v5022 = vsel %vm4766, %v3481, 0.0
        %v5023 = vsel %vm4767, %v3482, 0.0
        %v5024 = vsel %vm4768, %v3483, 0.0
        %v5025 = vsel %vm4769, %v3484, 0.0
        %v5026 = vsel %vm4770, %v3485, 0.0
        %v5027 = vsel %vm4771, %v3486, 0.0
        %v5028 = vsel %vm4772, %v3487, 0.0
        %v5029 = vsel %vm4773, %v3488, 0.0
        %v5030 = vsel %vm4774, %v3489, 0.0
        %v5031 = vsel %vm4775, %v3490, 0.0
        %v5032 = vsel %vm4776, %v3491, 0.0
        %v5033 = vsel %vm4777, %v3492, 0.0
        %v5034 = vsel %vm4778, %v3493, 0.0
        %v5035 = vsel %vm4779, %v3494, 0.0
        %v5036 = vsel %vm4780, %v3495, 0.0
        %v5037 = vsel %vm4781, %v3496, 0.0
        %v5038 = vsel %vm4782, %v3497, 0.0
        %v5039 = vsel %vm4783, %v3498, 0.0
        %v5040 = vsel %vm4784, %v3499, 0.0
        %v5041 = vsel %vm4785, %v3500, 0.0
        %v5042 = vsel %vm4786, %v3501, 0.0
        %v5043 = vsel %vm4787, %v3502, 0.0
        %v5044 = vsel %vm4788, %v3503, 0.0
        %v5045 = vsel %vm4789, %v3504, 0.0
        %v5046 = vsel %vm4790, %v3505, 0.0
        %v5047 = vsel %vm4791, %v3506, 0.0
        %v5048 = vsel %vm4792, %v3507, 0.0
        %v5049 = vsel %vm4793, %v3508, 0.0
        %v5050 = vsel %vm4794, %v3509, 0.0
        %v5051 = vsel %vm4795, %v3510, 0.0
        %v5052 = vsel %vm4796, %v3511, 0.0
        %v5053 = vsel %vm4797, %v3512, 0.0
        %v5054 = vsel %vm4798, %v3513, 0.0
        %v5055 = vsel %vm4799, %v3514, 0.0
        %v5056 = vsel %vm4800, %v3515, 0.0
        %v5057 = vsel %vm4801, %v3516, 0.0
        %v5058 = vsel %vm4802, %v3517, 0.0
        %v5059 = vsel %vm4803, %v3518, 0.0
        %v5060 = vsel %vm4804, %v3519, 0.0
        %v5061 = vsel %vm4805, %v3520, 0.0
        %v5062 = vsel %vm4806, %v3521, 0.0
        %v5063 = vsel %vm4807, %v3522, 0.0
        %v5064 = vsel %vm4808, %v3523, 0.0
        %v5065 = vsel %vm4809, %v3524, 0.0
        %v5066 = vsel %vm4810, %v3525, 0.0
        %v5067 = vsel %vm4811, %v3526, 0.0
        %v5068 = vsel %vm4812, %v3527, 0.0
        %v5069 = vsel %vm4813, %v3528, 0.0
        %v5070 = vsel %vm4814, %v3529, 0.0
        %v5071 = vsel %vm4815, %v3530, 0.0
        %v5072 = vsel %vm4816, %v3531, 0.0
        %v5073 = vsel %vm4817, %v3532, 0.0
        %v5074 = vsel %vm4818, %v3533, 0.0
        %v5075 = vsel %vm4819, %v3534, 0.0
        %v5076 = vsel %vm4820, %v3535, 0.0
        %v5077 = vsel %vm4821, %v3536, 0.0
        %v5078 = vsel %vm4822, %v3537, 0.0
        %v5079 = vsel %vm4823, %v3538, 0.0
        %v5080 = vsel %vm4824, %v3539, 0.0
        %v5081 = vsel %vm4825, %v3540, 0.0
        %v5082 = vsel %vm4826, %v3541, 0.0
        %v5083 = vsel %vm4827, %v3542, 0.0
        %v5084 = vsel %vm4828, %v3543, 0.0
        %v5085 = vsel %vm4829, %v3544, 0.0
        %v5086 = vsel %vm4830, %v3545, 0.0
        %v5087 = vsel %vm4831, %v3546, 0.0
        %v5088 = vsel %vm4832, %v3547, 0.0
        %v5089 = vsel %vm4833, %v3548, 0.0
        %v5090 = vsel %vm4834, %v3549, 0.0
        %v5091 = vsel %vm4835, %v3550, 0.0
        %v5092 = vsel %vm4836, %v3551, 0.0
        %v5093 = vsel %vm4837, %v3552, 0.0
        %v5094 = vsel %vm4838, %v3553, 0.0
        %v5095 = vsel %vm4839, %v3554, 0.0
        %v5096 = vsel %vm4840, %v3555, 0.0
        %v5097 = vsel %vm4841, %v3556, 0.0
        %v5098 = vsel %vm4842, %v3557, 0.0
        %v5099 = vsel %vm4843, %v3558, 0.0
        %v5100 = vsel %vm4844, %v3559, 0.0
        %v5101 = vsel %vm4845, %v3560, 0.0
        %v5102 = vsel %vm4846, %v3561, 0.0
        %v5103 = vsel %vm4847, %v3562, 0.0
        %v5104 = vsel %vm4848, %v3563, 0.0
        %v5105 = vsel %vm4849, %v3564, 0.0
        %v5106 = vsel %vm4850, %v3565, 0.0
        %v5107 = vsel %vm4851, %v3566, 0.0
        %v5108 = vsel %vm4852, %v3567, 0.0
        %v5109 = vsel %vm4853, %v3568, 0.0
        %v5110 = vsel %vm4854, %v3569, 0.0
        %v5111 = vsel %vm4855, %v3570, 0.0
        %v5112 = vsel %vm4856, %v3571, 0.0
        %v5113 = vsel %vm4857, %v3572, 0.0
        %v5114 = vsel %vm4858, %v3573, 0.0
        %v5115 = vsel %vm4859, %v3574, 0.0
        %v5116 = vsel %vm4860, %v3575, 0.0
        %v5117 = vsel %vm4861, %v3576, 0.0
        %v5118 = vsel %vm4862, %v3577, 0.0
        %v5119 = vsel %vm4863, %v3578, 0.0
        %v5120 = vsel %vm4864, %v3579, 0.0
        %v5121 = vsel %vm4865, %v3580, 0.0
        %v5122 = vsel %vm4866, %v3581, 0.0
        %v5123 = vsel %vm4867, %v3582, 0.0
        %v5124 = vsel %vm4868, %v3583, 0.0
        %v5125 = vsel %vm4869, %v3584, 0.0
        %v5126 = vsel %vm4870, %v3585, 0.0
        %v5127 = vsel %vm4871, %v3586, 0.0
        %v5128 = vsel %vm4872, %v3587, 0.0
        %v5129 = vsel %vm4873, %v3588, 0.0
        %v5130 = vsel %vm4874, %v3589, 0.0
        %v5131 = vsel %vm4875, %v3590, 0.0
        %v5132 = vsel %vm4876, %v3591, 0.0
        %v5133 = vsel %vm4877, %v3592, 0.0
        %v5134 = vsel %vm4878, %v3593, 0.0
        %v5135 = vsel %vm4879, %v3594, 0.0
        %v5136 = vsel %vm4880, %v3595, 0.0
        %v5137 = vsel %vm4881, %v3596, 0.0
        %v5138 = vsel %vm4882, %v3597, 0.0
        %v5139 = vsel %vm4883, %v3598, 0.0
        %v5140 = vsel %vm4884, %v3599, 0.0
        %v5141 = vsel %vm4885, %v3600, 0.0
        %v5142 = vsel %vm4886, %v3601, 0.0
        %v5143 = vsel %vm4887, %v3602, 0.0
        %v5144 = vsel %vm4888, %v3603, 0.0
        %v5145 = vsel %vm4889, %v3604, 0.0
        %v5146 = vsel %vm4890, %v3605, 0.0
        %v5147 = vsel %vm4891, %v3606, 0.0
        %v5148 = vsel %vm4892, %v3607, 0.0
        %v5149 = vsel %vm4893, %v3608, 0.0
        %v5150 = vsel %vm4894, %v3609, 0.0
        %v5151 = vsel %vm4895, %v3610, 0.0
        %v5152 = vsel %vm4896, %v3611, 0.0
        %v5153 = vsel %vm4897, %v3612, 0.0
        %v5154 = vsel %vm4898, %v3613, 0.0
        %v5155 = vsel %vm4899, %v3614, 0.0
        %v5156 = vsel %vm4900, %v3615, 0.0
        %v5157 = vsel %vm4901, %v3616, 0.0
        %v5158 = vsel %vm4902, %v3617, 0.0
        %v5159 = vsel %vm4903, %v3618, 0.0
        %v5160 = vsel %vm4904, %v3619, 0.0
        %v5161 = vsel %vm4905, %v3620, 0.0
        %v5162 = vsel %vm4906, %v3621, 0.0
        %v5163 = vsel %vm4907, %v3622, 0.0
        %v5164 = vsel %vm4908, %v3623, 0.0
        %v5165 = vsel %vm4909, %v3624, 0.0
        %v5166 = vsel %vm4910, %v3625, 0.0
        %v5167 = vsel %vm4911, %v3626, 0.0
        %v5168 = vsel %vm4912, %v3627, 0.0
        %v5169 = vsel %vm4913, %v3628, 0.0
        %v5170 = vsel %vm4914, %v3629, 0.0
        %v5171 = vsel %vm4915, %v3630, 0.0
        %v5172 = vsel %vm4916, %v3631, 0.0
        %v5173 = vsel %vm4917, %v3632, 0.0
        %v5174 = vsel %vm4918, %v3633, 0.0
        %v5175 = vsel %vm4919, %v3634, 0.0
        %v5176 = vsel %vm4920, %v3635, 0.0
        %v5177 = vsel %vm4921, %v3636, 0.0
        %v5178 = vsel %vm4922, %v3637, 0.0
        %v5179 = vsel %vm4923, %v3638, 0.0
        %v5180 = vsel %vm4924, %v3639, 0.0
        %v5181 = vsel %vm4925, %v3640, 0.0
        %v5182 = vsel %vm4670, %v569, 0.0
        %v5183 = vsel %vm4671, %v570, 0.0
        %v5184 = vsel %vm4672, %v571, 0.0
        %v5185 = vsel %vm4673, %v572, 0.0
        %v5186 = vsel %vm4674, %v573, 0.0
        %v5187 = vsel %vm4675, %v574, 0.0
        %v5188 = vsel %vm4676, %v575, 0.0
        %v5189 = vsel %vm4677, %v576, 0.0
        %v5190 = vsel %vm4678, %v577, 0.0
        %v5191 = vsel %vm4679, %v578, 0.0
        %v5192 = vsel %vm4680, %v579, 0.0
        %v5193 = vsel %vm4681, %v580, 0.0
        %v5194 = vsel %vm4682, %v581, 0.0
        %v5195 = vsel %vm4683, %v582, 0.0
        %v5196 = vsel %vm4684, %v583, 0.0
        %v5197 = vsel %vm4685, %v584, 0.0
        %v5198 = vsel %vm4686, %v585, 0.0
        %v5199 = vsel %vm4687, %v586, 0.0
        %v5200 = vsel %vm4688, %v587, 0.0
        %v5201 = vsel %vm4689, %v588, 0.0
        %v5202 = vsel %vm4690, %v589, 0.0
        %v5203 = vsel %vm4691, %v590, 0.0
        %v5204 = vsel %vm4692, %v591, 0.0
        %v5205 = vsel %vm4693, %v592, 0.0
        %v5206 = vsel %vm4694, %v593, 0.0
        %v5207 = vsel %vm4695, %v594, 0.0
        %v5208 = vsel %vm4696, %v595, 0.0
        %v5209 = vsel %vm4697, %v596, 0.0
        %v5210 = vsel %vm4698, %v597, 0.0
        %v5211 = vsel %vm4699, %v598, 0.0
        %v5212 = vsel %vm4700, %v599, 0.0
        %v5213 = vsel %vm4701, %v600, 0.0
        %v5214 = vsel %vm4702, %v601, 0.0
        %v5215 = vsel %vm4703, %v602, 0.0
        %v5216 = vsel %vm4704, %v603, 0.0
        %v5217 = vsel %vm4705, %v604, 0.0
        %v5218 = vsel %vm4706, %v605, 0.0
        %v5219 = vsel %vm4707, %v606, 0.0
        %v5220 = vsel %vm4708, %v607, 0.0
        %v5221 = vsel %vm4709, %v608, 0.0
        %v5222 = vsel %vm4710, %v609, 0.0
        %v5223 = vsel %vm4711, %v610, 0.0
        %v5224 = vsel %vm4712, %v611, 0.0
        %v5225 = vsel %vm4713, %v612, 0.0
        %v5226 = vsel %vm4714, %v613, 0.0
        %v5227 = vsel %vm4715, %v614, 0.0
        %v5228 = vsel %vm4716, %v615, 0.0
        %v5229 = vsel %vm4717, %v616, 0.0
        %v5230 = vsel %vm4718, %v617, 0.0
        %v5231 = vsel %vm4719, %v618, 0.0
        %v5232 = vsel %vm4720, %v619, 0.0
        %v5233 = vsel %vm4721, %v620, 0.0
        %v5234 = vsel %vm4722, %v621, 0.0
        %v5235 = vsel %vm4723, %v622, 0.0
        %v5236 = vsel %vm4724, %v623, 0.0
        %v5237 = vsel %vm4725, %v624, 0.0
        %v5238 = vsel %vm4726, %v625, 0.0
        %v5239 = vsel %vm4727, %v626, 0.0
        %v5240 = vsel %vm4728, %v627, 0.0
        %v5241 = vsel %vm4729, %v628, 0.0
        %v5242 = vsel %vm4730, %v629, 0.0
        %v5243 = vsel %vm4731, %v630, 0.0
        %v5244 = vsel %vm4732, %v631, 0.0
        %v5245 = vsel %vm4733, %v632, 0.0
        %v5246 = vsel %vm4734, %v633, 0.0
        %v5247 = vsel %vm4735, %v634, 0.0
        %v5248 = vsel %vm4736, %v635, 0.0
        %v5249 = vsel %vm4737, %v636, 0.0
        %v5250 = vsel %vm4738, %v637, 0.0
        %v5251 = vsel %vm4739, %v638, 0.0
        %v5252 = vsel %vm4740, %v639, 0.0
        %v5253 = vsel %vm4741, %v640, 0.0
        %v5254 = vsel %vm4742, %v641, 0.0
        %v5255 = vsel %vm4743, %v642, 0.0
        %v5256 = vsel %vm4744, %v643, 0.0
        %v5257 = vsel %vm4745, %v644, 0.0
        %v5258 = vsel %vm4746, %v645, 0.0
        %v5259 = vsel %vm4747, %v646, 0.0
        %v5260 = vsel %vm4748, %v647, 0.0
        %v5261 = vsel %vm4749, %v648, 0.0
        %v5262 = vsel %vm4750, %v649, 0.0
        %v5263 = vsel %vm4751, %v650, 0.0
        %v5264 = vsel %vm4752, %v651, 0.0
        %v5265 = vsel %vm4753, %v652, 0.0
        %v5266 = vsel %vm4754, %v653, 0.0
        %v5267 = vsel %vm4755, %v654, 0.0
        %v5268 = vsel %vm4756, %v655, 0.0
        %v5269 = vsel %vm4757, %v656, 0.0
        %v5270 = vsel %vm4758, %v657, 0.0
        %v5271 = vsel %vm4759, %v658, 0.0
        %v5272 = vsel %vm4760, %v659, 0.0
        %v5273 = vsel %vm4761, %v660, 0.0
        %v5274 = vsel %vm4762, %v661, 0.0
        %v5275 = vsel %vm4763, %v662, 0.0
        %v5276 = vsel %vm4764, %v663, 0.0
        %v5277 = vsel %vm4765, %v664, 0.0
        %v5278 = vsel %vm4766, %v665, 0.0
        %v5279 = vsel %vm4767, %v666, 0.0
        %v5280 = vsel %vm4768, %v667, 0.0
        %v5281 = vsel %vm4769, %v668, 0.0
        %v5282 = vsel %vm4770, %v669, 0.0
        %v5283 = vsel %vm4771, %v670, 0.0
        %v5284 = vsel %vm4772, %v671, 0.0
        %v5285 = vsel %vm4773, %v672, 0.0
        %v5286 = vsel %vm4774, %v673, 0.0
        %v5287 = vsel %vm4775, %v674, 0.0
        %v5288 = vsel %vm4776, %v675, 0.0
        %v5289 = vsel %vm4777, %v676, 0.0
        %v5290 = vsel %vm4778, %v677, 0.0
        %v5291 = vsel %vm4779, %v678, 0.0
        %v5292 = vsel %vm4780, %v679, 0.0
        %v5293 = vsel %vm4781, %v680, 0.0
        %v5294 = vsel %vm4782, %v681, 0.0
        %v5295 = vsel %vm4783, %v682, 0.0
        %v5296 = vsel %vm4784, %v683, 0.0
        %v5297 = vsel %vm4785, %v684, 0.0
        %v5298 = vsel %vm4786, %v685, 0.0
        %v5299 = vsel %vm4787, %v686, 0.0
        %v5300 = vsel %vm4788, %v687, 0.0
        %v5301 = vsel %vm4789, %v688, 0.0
        %v5302 = vsel %vm4790, %v689, 0.0
        %v5303 = vsel %vm4791, %v690, 0.0
        %v5304 = vsel %vm4792, %v691, 0.0
        %v5305 = vsel %vm4793, %v692, 0.0
        %v5306 = vsel %vm4794, %v693, 0.0
        %v5307 = vsel %vm4795, %v694, 0.0
        %v5308 = vsel %vm4796, %v695, 0.0
        %v5309 = vsel %vm4797, %v696, 0.0
        %v5310 = vsel %vm4798, %v697, 0.0
        %v5311 = vsel %vm4799, %v698, 0.0
        %v5312 = vsel %vm4800, %v699, 0.0
        %v5313 = vsel %vm4801, %v700, 0.0
        %v5314 = vsel %vm4802, %v701, 0.0
        %v5315 = vsel %vm4803, %v702, 0.0
        %v5316 = vsel %vm4804, %v703, 0.0
        %v5317 = vsel %vm4805, %v704, 0.0
        %v5318 = vsel %vm4806, %v705, 0.0
        %v5319 = vsel %vm4807, %v706, 0.0
        %v5320 = vsel %vm4808, %v707, 0.0
        %v5321 = vsel %vm4809, %v708, 0.0
        %v5322 = vsel %vm4810, %v709, 0.0
        %v5323 = vsel %vm4811, %v710, 0.0
        %v5324 = vsel %vm4812, %v711, 0.0
        %v5325 = vsel %vm4813, %v712, 0.0
        %v5326 = vsel %vm4814, %v713, 0.0
        %v5327 = vsel %vm4815, %v714, 0.0
        %v5328 = vsel %vm4816, %v715, 0.0
        %v5329 = vsel %vm4817, %v716, 0.0
        %v5330 = vsel %vm4818, %v717, 0.0
        %v5331 = vsel %vm4819, %v718, 0.0
        %v5332 = vsel %vm4820, %v719, 0.0
        %v5333 = vsel %vm4821, %v720, 0.0
        %v5334 = vsel %vm4822, %v721, 0.0
        %v5335 = vsel %vm4823, %v722, 0.0
        %v5336 = vsel %vm4824, %v723, 0.0
        %v5337 = vsel %vm4825, %v724, 0.0
        %v5338 = vsel %vm4826, %v725, 0.0
        %v5339 = vsel %vm4827, %v726, 0.0
        %v5340 = vsel %vm4828, %v727, 0.0
        %v5341 = vsel %vm4829, %v728, 0.0
        %v5342 = vsel %vm4830, %v729, 0.0
        %v5343 = vsel %vm4831, %v730, 0.0
        %v5344 = vsel %vm4832, %v731, 0.0
        %v5345 = vsel %vm4833, %v732, 0.0
        %v5346 = vsel %vm4834, %v733, 0.0
        %v5347 = vsel %vm4835, %v734, 0.0
        %v5348 = vsel %vm4836, %v735, 0.0
        %v5349 = vsel %vm4837, %v736, 0.0
        %v5350 = vsel %vm4838, %v737, 0.0
        %v5351 = vsel %vm4839, %v738, 0.0
        %v5352 = vsel %vm4840, %v739, 0.0
        %v5353 = vsel %vm4841, %v740, 0.0
        %v5354 = vsel %vm4842, %v741, 0.0
        %v5355 = vsel %vm4843, %v742, 0.0
        %v5356 = vsel %vm4844, %v743, 0.0
        %v5357 = vsel %vm4845, %v744, 0.0
        %v5358 = vsel %vm4846, %v745, 0.0
        %v5359 = vsel %vm4847, %v746, 0.0
        %v5360 = vsel %vm4848, %v747, 0.0
        %v5361 = vsel %vm4849, %v748, 0.0
        %v5362 = vsel %vm4850, %v749, 0.0
        %v5363 = vsel %vm4851, %v750, 0.0
        %v5364 = vsel %vm4852, %v751, 0.0
        %v5365 = vsel %vm4853, %v752, 0.0
        %v5366 = vsel %vm4854, %v753, 0.0
        %v5367 = vsel %vm4855, %v754, 0.0
        %v5368 = vsel %vm4856, %v755, 0.0
        %v5369 = vsel %vm4857, %v756, 0.0
        %v5370 = vsel %vm4858, %v757, 0.0
        %v5371 = vsel %vm4859, %v758, 0.0
        %v5372 = vsel %vm4860, %v759, 0.0
        %v5373 = vsel %vm4861, %v760, 0.0
        %v5374 = vsel %vm4862, %v761, 0.0
        %v5375 = vsel %vm4863, %v762, 0.0
        %v5376 = vsel %vm4864, %v763, 0.0
        %v5377 = vsel %vm4865, %v764, 0.0
        %v5378 = vsel %vm4866, %v765, 0.0
        %v5379 = vsel %vm4867, %v766, 0.0
        %v5380 = vsel %vm4868, %v767, 0.0
        %v5381 = vsel %vm4869, %v768, 0.0
        %v5382 = vsel %vm4870, %v769, 0.0
        %v5383 = vsel %vm4871, %v770, 0.0
        %v5384 = vsel %vm4872, %v771, 0.0
        %v5385 = vsel %vm4873, %v772, 0.0
        %v5386 = vsel %vm4874, %v773, 0.0
        %v5387 = vsel %vm4875, %v774, 0.0
        %v5388 = vsel %vm4876, %v775, 0.0
        %v5389 = vsel %vm4877, %v776, 0.0
        %v5390 = vsel %vm4878, %v777, 0.0
        %v5391 = vsel %vm4879, %v778, 0.0
        %v5392 = vsel %vm4880, %v779, 0.0
        %v5393 = vsel %vm4881, %v780, 0.0
        %v5394 = vsel %vm4882, %v781, 0.0
        %v5395 = vsel %vm4883, %v782, 0.0
        %v5396 = vsel %vm4884, %v783, 0.0
        %v5397 = vsel %vm4885, %v784, 0.0
        %v5398 = vsel %vm4886, %v785, 0.0
        %v5399 = vsel %vm4887, %v786, 0.0
        %v5400 = vsel %vm4888, %v787, 0.0
        %v5401 = vsel %vm4889, %v788, 0.0
        %v5402 = vsel %vm4890, %v789, 0.0
        %v5403 = vsel %vm4891, %v790, 0.0
        %v5404 = vsel %vm4892, %v791, 0.0
        %v5405 = vsel %vm4893, %v792, 0.0
        %v5406 = vsel %vm4894, %v793, 0.0
        %v5407 = vsel %vm4895, %v794, 0.0
        %v5408 = vsel %vm4896, %v795, 0.0
        %v5409 = vsel %vm4897, %v796, 0.0
        %v5410 = vsel %vm4898, %v797, 0.0
        %v5411 = vsel %vm4899, %v798, 0.0
        %v5412 = vsel %vm4900, %v799, 0.0
        %v5413 = vsel %vm4901, %v800, 0.0
        %v5414 = vsel %vm4902, %v801, 0.0
        %v5415 = vsel %vm4903, %v802, 0.0
        %v5416 = vsel %vm4904, %v803, 0.0
        %v5417 = vsel %vm4905, %v804, 0.0
        %v5418 = vsel %vm4906, %v805, 0.0
        %v5419 = vsel %vm4907, %v806, 0.0
        %v5420 = vsel %vm4908, %v807, 0.0
        %v5421 = vsel %vm4909, %v808, 0.0
        %v5422 = vsel %vm4910, %v809, 0.0
        %v5423 = vsel %vm4911, %v810, 0.0
        %v5424 = vsel %vm4912, %v811, 0.0
        %v5425 = vsel %vm4913, %v812, 0.0
        %v5426 = vsel %vm4914, %v813, 0.0
        %v5427 = vsel %vm4915, %v814, 0.0
        %v5428 = vsel %vm4916, %v815, 0.0
        %v5429 = vsel %vm4917, %v816, 0.0
        %v5430 = vsel %vm4918, %v817, 0.0
        %v5431 = vsel %vm4919, %v818, 0.0
        %v5432 = vsel %vm4920, %v819, 0.0
        %v5433 = vsel %vm4921, %v820, 0.0
        %v5434 = vsel %vm4922, %v821, 0.0
        %v5435 = vsel %vm4923, %v822, 0.0
        %v5436 = vsel %vm4924, %v823, 0.0
        %v5437 = vsel %vm4925, %v824, 0.0
        %v5438 = vld [vmem:[#allocation2] sm:$0x1]
        %v5439 = vmul.f32 %v4926, %v5182
        %v5440 = vmul.f32 %v4927, %v5183
        %v5441 = vmul.f32 %v4928, %v5184
        %v5442 = vmul.f32 %v4929, %v5185
        %v5443 = vmul.f32 %v4930, %v5186
        %v5444 = vmul.f32 %v4931, %v5187
        %v5445 = vmul.f32 %v4932, %v5188
        %v5446 = vmul.f32 %v4933, %v5189
        %v5447 = vmul.f32 %v4934, %v5190
        %v5448 = vmul.f32 %v4935, %v5191
        %v5449 = vmul.f32 %v4936, %v5192
        %v5450 = vmul.f32 %v4937, %v5193
        %v5451 = vmul.f32 %v4938, %v5194
        %v5452 = vmul.f32 %v4939, %v5195
        %v5453 = vmul.f32 %v4940, %v5196
        %v5454 = vmul.f32 %v4941, %v5197
        %v5455 = vmul.f32 %v4942, %v5198
        %v5456 = vmul.f32 %v4943, %v5199
        %v5457 = vmul.f32 %v4944, %v5200
        %v5458 = vmul.f32 %v4945, %v5201
        %v5459 = vmul.f32 %v4946, %v5202
        %v5460 = vmul.f32 %v4947, %v5203
        %v5461 = vmul.f32 %v4948, %v5204
        %v5462 = vmul.f32 %v4949, %v5205
        %v5463 = vmul.f32 %v4950, %v5206
        %v5464 = vmul.f32 %v4951, %v5207
        %v5465 = vmul.f32 %v4952, %v5208
        %v5466 = vmul.f32 %v4953, %v5209
        %v5467 = vmul.f32 %v4954, %v5210
        %v5468 = vmul.f32 %v4955, %v5211
        %v5469 = vmul.f32 %v4956, %v5212
        %v5470 = vmul.f32 %v4957, %v5213
        %v5471 = vmul.f32 %v4958, %v5214
        %v5472 = vmul.f32 %v4959, %v5215
        %v5473 = vmul.f32 %v4960, %v5216
        %v5474 = vmul.f32 %v4961, %v5217
        %v5475 = vmul.f32 %v4962, %v5218
        %v5476 = vmul.f32 %v4963, %v5219
        %v5477 = vmul.f32 %v4964, %v5220
        %v5478 = vmul.f32 %v4965, %v5221
        %v5479 = vmul.f32 %v4966, %v5222
        %v5480 = vmul.f32 %v4967, %v5223
        %v5481 = vmul.f32 %v4968, %v5224
        %v5482 = vmul.f32 %v4969, %v5225
        %v5483 = vmul.f32 %v4970, %v5226
        %v5484 = vmul.f32 %v4971, %v5227
        %v5485 = vmul.f32 %v4972, %v5228
        %v5486 = vmul.f32 %v4973, %v5229
        %v5487 = vmul.f32 %v4974, %v5230
        %v5488 = vmul.f32 %v4975, %v5231
        %v5489 = vmul.f32 %v4976, %v5232
        %v5490 = vmul.f32 %v4977, %v5233
        %v5491 = vmul.f32 %v4978, %v5234
        %v5492 = vmul.f32 %v4979, %v5235
        %v5493 = vmul.f32 %v4980, %v5236
        %v5494 = vmul.f32 %v4981, %v5237
        %v5495 = vmul.f32 %v4982, %v5238
        %v5496 = vmul.f32 %v4983, %v5239
        %v5497 = vmul.f32 %v4984, %v5240
        %v5498 = vmul.f32 %v4985, %v5241
        %v5499 = vmul.f32 %v4986, %v5242
        %v5500 = vmul.f32 %v4987, %v5243
        %v5501 = vmul.f32 %v4988, %v5244
        %v5502 = vmul.f32 %v4989, %v5245
        %v5503 = vmul.f32 %v4990, %v5246
        %v5504 = vmul.f32 %v4991, %v5247
        %v5505 = vmul.f32 %v4992, %v5248
        %v5506 = vmul.f32 %v4993, %v5249
        %v5507 = vmul.f32 %v4994, %v5250
        %v5508 = vmul.f32 %v4995, %v5251
        %v5509 = vmul.f32 %v4996, %v5252
        %v5510 = vmul.f32 %v4997, %v5253
        %v5511 = vmul.f32 %v4998, %v5254
        %v5512 = vmul.f32 %v4999, %v5255
        %v5513 = vmul.f32 %v5000, %v5256
        %v5514 = vmul.f32 %v5001, %v5257
        %v5515 = vmul.f32 %v5002, %v5258
        %v5516 = vmul.f32 %v5003, %v5259
        %v5517 = vmul.f32 %v5004, %v5260
        %v5518 = vmul.f32 %v5005, %v5261
        %v5519 = vmul.f32 %v5006, %v5262
        %v5520 = vmul.f32 %v5007, %v5263
        %v5521 = vmul.f32 %v5008, %v5264
        %v5522 = vmul.f32 %v5009, %v5265
        %v5523 = vmul.f32 %v5010, %v5266
        %v5524 = vmul.f32 %v5011, %v5267
        %v5525 = vmul.f32 %v5012, %v5268
        %v5526 = vmul.f32 %v5013, %v5269
        %v5527 = vmul.f32 %v5014, %v5270
        %v5528 = vmul.f32 %v5015, %v5271
        %v5529 = vmul.f32 %v5016, %v5272
        %v5530 = vmul.f32 %v5017, %v5273
        %v5531 = vmul.f32 %v5018, %v5274
        %v5532 = vmul.f32 %v5019, %v5275
        %v5533 = vmul.f32 %v5020, %v5276
        %v5534 = vmul.f32 %v5021, %v5277
        %v5535 = vmul.f32 %v5022, %v5278
        %v5536 = vmul.f32 %v5023, %v5279
        %v5537 = vmul.f32 %v5024, %v5280
        %v5538 = vmul.f32 %v5025, %v5281
        %v5539 = vmul.f32 %v5026, %v5282
        %v5540 = vmul.f32 %v5027, %v5283
        %v5541 = vmul.f32 %v5028, %v5284
        %v5542 = vmul.f32 %v5029, %v5285
        %v5543 = vmul.f32 %v5030, %v5286
        %v5544 = vmul.f32 %v5031, %v5287
        %v5545 = vmul.f32 %v5032, %v5288
        %v5546 = vmul.f32 %v5033, %v5289
        %v5547 = vmul.f32 %v5034, %v5290
        %v5548 = vmul.f32 %v5035, %v5291
        %v5549 = vmul.f32 %v5036, %v5292
        %v5550 = vmul.f32 %v5037, %v5293
        %v5551 = vmul.f32 %v5038, %v5294
        %v5552 = vmul.f32 %v5039, %v5295
        %v5553 = vmul.f32 %v5040, %v5296
        %v5554 = vmul.f32 %v5041, %v5297
        %v5555 = vmul.f32 %v5042, %v5298
        %v5556 = vmul.f32 %v5043, %v5299
        %v5557 = vmul.f32 %v5044, %v5300
        %v5558 = vmul.f32 %v5045, %v5301
        %v5559 = vmul.f32 %v5046, %v5302
        %v5560 = vmul.f32 %v5047, %v5303
        %v5561 = vmul.f32 %v5048, %v5304
        %v5562 = vmul.f32 %v5049, %v5305
        %v5563 = vmul.f32 %v5050, %v5306
        %v5564 = vmul.f32 %v5051, %v5307
        %v5565 = vmul.f32 %v5052, %v5308
        %v5566 = vmul.f32 %v5053, %v5309
        %v5567 = vmul.f32 %v5054, %v5310
        %v5568 = vmul.f32 %v5055, %v5311
        %v5569 = vmul.f32 %v5056, %v5312
        %v5570 = vmul.f32 %v5057, %v5313
        %v5571 = vmul.f32 %v5058, %v5314
        %v5572 = vmul.f32 %v5059, %v5315
        %v5573 = vmul.f32 %v5060, %v5316
        %v5574 = vmul.f32 %v5061, %v5317
        %v5575 = vmul.f32 %v5062, %v5318
        %v5576 = vmul.f32 %v5063, %v5319
        %v5577 = vmul.f32 %v5064, %v5320
        %v5578 = vmul.f32 %v5065, %v5321
        %v5579 = vmul.f32 %v5066, %v5322
        %v5580 = vmul.f32 %v5067, %v5323
        %v5581 = vmul.f32 %v5068, %v5324
        %v5582 = vmul.f32 %v5069, %v5325
        %v5583 = vmul.f32 %v5070, %v5326
        %v5584 = vmul.f32 %v5071, %v5327
        %v5585 = vmul.f32 %v5072, %v5328
        %v5586 = vmul.f32 %v5073, %v5329
        %v5587 = vmul.f32 %v5074, %v5330
        %v5588 = vmul.f32 %v5075, %v5331
        %v5589 = vmul.f32 %v5076, %v5332
        %v5590 = vmul.f32 %v5077, %v5333
        %v5591 = vmul.f32 %v5078, %v5334
        %v5592 = vmul.f32 %v5079, %v5335
        %v5593 = vmul.f32 %v5080, %v5336
        %v5594 = vmul.f32 %v5081, %v5337
        %v5595 = vmul.f32 %v5082, %v5338
        %v5596 = vmul.f32 %v5083, %v5339
        %v5597 = vmul.f32 %v5084, %v5340
        %v5598 = vmul.f32 %v5085, %v5341
        %v5599 = vmul.f32 %v5086, %v5342
        %v5600 = vmul.f32 %v5087, %v5343
        %v5601 = vmul.f32 %v5088, %v5344
        %v5602 = vmul.f32 %v5089, %v5345
        %v5603 = vmul.f32 %v5090, %v5346
        %v5604 = vmul.f32 %v5091, %v5347
        %v5605 = vmul.f32 %v5092, %v5348
        %v5606 = vmul.f32 %v5093, %v5349
        %v5607 = vmul.f32 %v5094, %v5350
        %v5608 = vmul.f32 %v5095, %v5351
        %v5609 = vmul.f32 %v5096, %v5352
        %v5610 = vmul.f32 %v5097, %v5353
        %v5611 = vmul.f32 %v5098, %v5354
        %v5612 = vmul.f32 %v5099, %v5355
        %v5613 = vmul.f32 %v5100, %v5356
        %v5614 = vmul.f32 %v5101, %v5357
        %v5615 = vmul.f32 %v5102, %v5358
        %v5616 = vmul.f32 %v5103, %v5359
        %v5617 = vmul.f32 %v5104, %v5360
        %v5618 = vmul.f32 %v5105, %v5361
        %v5619 = vmul.f32 %v5106, %v5362
        %v5620 = vmul.f32 %v5107, %v5363
        %v5621 = vmul.f32 %v5108, %v5364
        %v5622 = vmul.f32 %v5109, %v5365
        %v5623 = vmul.f32 %v5110, %v5366
        %v5624 = vmul.f32 %v5111, %v5367
        %v5625 = vmul.f32 %v5112, %v5368
        %v5626 = vmul.f32 %v5113, %v5369
        %v5627 = vmul.f32 %v5114, %v5370
        %v5628 = vmul.f32 %v5115, %v5371
        %v5629 = vmul.f32 %v5116, %v5372
        %v5630 = vmul.f32 %v5117, %v5373
        %v5631 = vmul.f32 %v5118, %v5374
        %v5632 = vmul.f32 %v5119, %v5375
        %v5633 = vmul.f32 %v5120, %v5376
        %v5634 = vmul.f32 %v5121, %v5377
        %v5635 = vmul.f32 %v5122, %v5378
        %v5636 = vmul.f32 %v5123, %v5379
        %v5637 = vmul.f32 %v5124, %v5380
        %v5638 = vmul.f32 %v5125, %v5381
        %v5639 = vmul.f32 %v5126, %v5382
        %v5640 = vmul.f32 %v5127, %v5383
        %v5641 = vmul.f32 %v5128, %v5384
        %v5642 = vmul.f32 %v5129, %v5385
        %v5643 = vmul.f32 %v5130, %v5386
        %v5644 = vmul.f32 %v5131, %v5387
        %v5645 = vmul.f32 %v5132, %v5388
        %v5646 = vmul.f32 %v5133, %v5389
        %v5647 = vmul.f32 %v5134, %v5390
        %v5648 = vmul.f32 %v5135, %v5391
        %v5649 = vmul.f32 %v5136, %v5392
        %v5650 = vmul.f32 %v5137, %v5393
        %v5651 = vmul.f32 %v5138, %v5394
        %v5652 = vmul.f32 %v5139, %v5395
        %v5653 = vmul.f32 %v5140, %v5396
        %v5654 = vmul.f32 %v5141, %v5397
        %v5655 = vmul.f32 %v5142, %v5398
        %v5656 = vmul.f32 %v5143, %v5399
        %v5657 = vmul.f32 %v5144, %v5400
        %v5658 = vmul.f32 %v5145, %v5401
        %v5659 = vmul.f32 %v5146, %v5402
        %v5660 = vmul.f32 %v5147, %v5403
        %v5661 = vmul.f32 %v5148, %v5404
        %v5662 = vmul.f32 %v5149, %v5405
        %v5663 = vmul.f32 %v5150, %v5406
        %v5664 = vmul.f32 %v5151, %v5407
        %v5665 = vmul.f32 %v5152, %v5408
        %v5666 = vmul.f32 %v5153, %v5409
        %v5667 = vmul.f32 %v5154, %v5410
        %v5668 = vmul.f32 %v5155, %v5411
        %v5669 = vmul.f32 %v5156, %v5412
        %v5670 = vmul.f32 %v5157, %v5413
        %v5671 = vmul.f32 %v5158, %v5414
        %v5672 = vmul.f32 %v5159, %v5415
        %v5673 = vmul.f32 %v5160, %v5416
        %v5674 = vmul.f32 %v5161, %v5417
        %v5675 = vmul.f32 %v5162, %v5418
        %v5676 = vmul.f32 %v5163, %v5419
        %v5677 = vmul.f32 %v5164, %v5420
        %v5678 = vmul.f32 %v5165, %v5421
        %v5679 = vmul.f32 %v5166, %v5422
        %v5680 = vmul.f32 %v5167, %v5423
        %v5681 = vmul.f32 %v5168, %v5424
        %v5682 = vmul.f32 %v5169, %v5425
        %v5683 = vmul.f32 %v5170, %v5426
        %v5684 = vmul.f32 %v5171, %v5427
        %v5685 = vmul.f32 %v5172, %v5428
        %v5686 = vmul.f32 %v5173, %v5429
        %v5687 = vmul.f32 %v5174, %v5430
        %v5688 = vmul.f32 %v5175, %v5431
        %v5689 = vmul.f32 %v5176, %v5432
        %v5690 = vmul.f32 %v5177, %v5433
        %v5691 = vmul.f32 %v5178, %v5434
        %v5692 = vmul.f32 %v5179, %v5435
        %v5693 = vmul.f32 %v5180, %v5436
        %v5694 = vmul.f32 %v5181, %v5437
        %v5695 = vadd.f32 %v5439, %v5440
        %v5696 = vadd.f32 %v5695, %v5441
        %v5697 = vadd.f32 %v5696, %v5442
        %v5698 = vadd.f32 %v5697, %v5443
        %v5699 = vadd.f32 %v5698, %v5444
        %v5700 = vadd.f32 %v5699, %v5445
        %v5701 = vadd.f32 %v5700, %v5446
        %v5702 = vadd.f32 %v5701, %v5447
        %v5703 = vadd.f32 %v5702, %v5448
        %v5704 = vadd.f32 %v5703, %v5449
        %v5705 = vadd.f32 %v5704, %v5450
        %v5706 = vadd.f32 %v5705, %v5451
        %v5707 = vadd.f32 %v5706, %v5452
        %v5708 = vadd.f32 %v5707, %v5453
        %v5709 = vadd.f32 %v5708, %v5454
        %v5710 = vadd.f32 %v5709, %v5455
        %v5711 = vadd.f32 %v5710, %v5456
        %v5712 = vadd.f32 %v5711, %v5457
        %v5713 = vadd.f32 %v5712, %v5458
        %v5714 = vadd.f32 %v5713, %v5459
        %v5715 = vadd.f32 %v5714, %v5460
        %v5716 = vadd.f32 %v5715, %v5461
        %v5717 = vadd.f32 %v5716, %v5462
        %v5718 = vadd.f32 %v5717, %v5463
        %v5719 = vadd.f32 %v5718, %v5464
        %v5720 = vadd.f32 %v5719, %v5465
        %v5721 = vadd.f32 %v5720, %v5466
        %v5722 = vadd.f32 %v5721, %v5467
        %v5723 = vadd.f32 %v5722, %v5468
        %v5724 = vadd.f32 %v5723, %v5469
        %v5725 = vadd.f32 %v5724, %v5470
        %v5726 = vadd.f32 %v5725, %v5471
        %v5727 = vadd.f32 %v5726, %v5472
        %v5728 = vadd.f32 %v5727, %v5473
        %v5729 = vadd.f32 %v5728, %v5474
        %v5730 = vadd.f32 %v5729, %v5475
        %v5731 = vadd.f32 %v5730, %v5476
        %v5732 = vadd.f32 %v5731, %v5477
        %v5733 = vadd.f32 %v5732, %v5478
        %v5734 = vadd.f32 %v5733, %v5479
        %v5735 = vadd.f32 %v5734, %v5480
        %v5736 = vadd.f32 %v5735, %v5481
        %v5737 = vadd.f32 %v5736, %v5482
        %v5738 = vadd.f32 %v5737, %v5483
        %v5739 = vadd.f32 %v5738, %v5484
        %v5740 = vadd.f32 %v5739, %v5485
        %v5741 = vadd.f32 %v5740, %v5486
        %v5742 = vadd.f32 %v5741, %v5487
        %v5743 = vadd.f32 %v5742, %v5488
        %v5744 = vadd.f32 %v5743, %v5489
        %v5745 = vadd.f32 %v5744, %v5490
        %v5746 = vadd.f32 %v5745, %v5491
        %v5747 = vadd.f32 %v5746, %v5492
        %v5748 = vadd.f32 %v5747, %v5493
        %v5749 = vadd.f32 %v5748, %v5494
        %v5750 = vadd.f32 %v5749, %v5495
        %v5751 = vadd.f32 %v5750, %v5496
        %v5752 = vadd.f32 %v5751, %v5497
        %v5753 = vadd.f32 %v5752, %v5498
        %v5754 = vadd.f32 %v5753, %v5499
        %v5755 = vadd.f32 %v5754, %v5500
        %v5756 = vadd.f32 %v5755, %v5501
        %v5757 = vadd.f32 %v5756, %v5502
        %v5758 = vadd.f32 %v5757, %v5503
        %v5759 = vadd.f32 %v5758, %v5504
        %v5760 = vadd.f32 %v5759, %v5505
        %v5761 = vadd.f32 %v5760, %v5506
        %v5762 = vadd.f32 %v5761, %v5507
        %v5763 = vadd.f32 %v5762, %v5508
        %v5764 = vadd.f32 %v5763, %v5509
        %v5765 = vadd.f32 %v5764, %v5510
        %v5766 = vadd.f32 %v5765, %v5511
        %v5767 = vadd.f32 %v5766, %v5512
        %v5768 = vadd.f32 %v5767, %v5513
        %v5769 = vadd.f32 %v5768, %v5514
        %v5770 = vadd.f32 %v5769, %v5515
        %v5771 = vadd.f32 %v5770, %v5516
        %v5772 = vadd.f32 %v5771, %v5517
        %v5773 = vadd.f32 %v5772, %v5518
        %v5774 = vadd.f32 %v5773, %v5519
        %v5775 = vadd.f32 %v5774, %v5520
        %v5776 = vadd.f32 %v5775, %v5521
        %v5777 = vadd.f32 %v5776, %v5522
        %v5778 = vadd.f32 %v5777, %v5523
        %v5779 = vadd.f32 %v5778, %v5524
        %v5780 = vadd.f32 %v5779, %v5525
        %v5781 = vadd.f32 %v5780, %v5526
        %v5782 = vadd.f32 %v5781, %v5527
        %v5783 = vadd.f32 %v5782, %v5528
        %v5784 = vadd.f32 %v5783, %v5529
        %v5785 = vadd.f32 %v5784, %v5530
        %v5786 = vadd.f32 %v5785, %v5531
        %v5787 = vadd.f32 %v5786, %v5532
        %v5788 = vadd.f32 %v5787, %v5533
        %v5789 = vadd.f32 %v5788, %v5534
        %v5790 = vadd.f32 %v5789, %v5535
        %v5791 = vadd.f32 %v5790, %v5536
        %v5792 = vadd.f32 %v5791, %v5537
        %v5793 = vadd.f32 %v5792, %v5538
        %v5794 = vadd.f32 %v5793, %v5539
        %v5795 = vadd.f32 %v5794, %v5540
        %v5796 = vadd.f32 %v5795, %v5541
        %v5797 = vadd.f32 %v5796, %v5542
        %v5798 = vadd.f32 %v5797, %v5543
        %v5799 = vadd.f32 %v5798, %v5544
        %v5800 = vadd.f32 %v5799, %v5545
        %v5801 = vadd.f32 %v5800, %v5546
        %v5802 = vadd.f32 %v5801, %v5547
        %v5803 = vadd.f32 %v5802, %v5548
        %v5804 = vadd.f32 %v5803, %v5549
        %v5805 = vadd.f32 %v5804, %v5550
        %v5806 = vadd.f32 %v5805, %v5551
        %v5807 = vadd.f32 %v5806, %v5552
        %v5808 = vadd.f32 %v5807, %v5553
        %v5809 = vadd.f32 %v5808, %v5554
        %v5810 = vadd.f32 %v5809, %v5555
        %v5811 = vadd.f32 %v5810, %v5556
        %v5812 = vadd.f32 %v5811, %v5557
        %v5813 = vadd.f32 %v5812, %v5558
        %v5814 = vadd.f32 %v5813, %v5559
        %v5815 = vadd.f32 %v5814, %v5560
        %v5816 = vadd.f32 %v5815, %v5561
        %v5817 = vadd.f32 %v5816, %v5562
        %v5818 = vadd.f32 %v5817, %v5563
        %v5819 = vadd.f32 %v5818, %v5564
        %v5820 = vadd.f32 %v5819, %v5565
        %v5821 = vadd.f32 %v5820, %v5566
        %v5822 = vadd.f32 %v5821, %v5567
        %v5823 = vadd.f32 %v5822, %v5568
        %v5824 = vadd.f32 %v5823, %v5569
        %v5825 = vadd.f32 %v5824, %v5570
        %v5826 = vadd.f32 %v5825, %v5571
        %v5827 = vadd.f32 %v5826, %v5572
        %v5828 = vadd.f32 %v5827, %v5573
        %v5829 = vadd.f32 %v5828, %v5574
        %v5830 = vadd.f32 %v5829, %v5575
        %v5831 = vadd.f32 %v5830, %v5576
        %v5832 = vadd.f32 %v5831, %v5577
        %v5833 = vadd.f32 %v5832, %v5578
        %v5834 = vadd.f32 %v5833, %v5579
        %v5835 = vadd.f32 %v5834, %v5580
        %v5836 = vadd.f32 %v5835, %v5581
        %v5837 = vadd.f32 %v5836, %v5582
        %v5838 = vadd.f32 %v5837, %v5583
        %v5839 = vadd.f32 %v5838, %v5584
        %v5840 = vadd.f32 %v5839, %v5585
        %v5841 = vadd.f32 %v5840, %v5586
        %v5842 = vadd.f32 %v5841, %v5587
        %v5843 = vadd.f32 %v5842, %v5588
        %v5844 = vadd.f32 %v5843, %v5589
        %v5845 = vadd.f32 %v5844, %v5590
        %v5846 = vadd.f32 %v5845, %v5591
        %v5847 = vadd.f32 %v5846, %v5592
        %v5848 = vadd.f32 %v5847, %v5593
        %v5849 = vadd.f32 %v5848, %v5594
        %v5850 = vadd.f32 %v5849, %v5595
        %v5851 = vadd.f32 %v5850, %v5596
        %v5852 = vadd.f32 %v5851, %v5597
        %v5853 = vadd.f32 %v5852, %v5598
        %v5854 = vadd.f32 %v5853, %v5599
        %v5855 = vadd.f32 %v5854, %v5600
        %v5856 = vadd.f32 %v5855, %v5601
        %v5857 = vadd.f32 %v5856, %v5602
        %v5858 = vadd.f32 %v5857, %v5603
        %v5859 = vadd.f32 %v5858, %v5604
        %v5860 = vadd.f32 %v5859, %v5605
        %v5861 = vadd.f32 %v5860, %v5606
        %v5862 = vadd.f32 %v5861, %v5607
        %v5863 = vadd.f32 %v5862, %v5608
        %v5864 = vadd.f32 %v5863, %v5609
        %v5865 = vadd.f32 %v5864, %v5610
        %v5866 = vadd.f32 %v5865, %v5611
        %v5867 = vadd.f32 %v5866, %v5612
        %v5868 = vadd.f32 %v5867, %v5613
        %v5869 = vadd.f32 %v5868, %v5614
        %v5870 = vadd.f32 %v5869, %v5615
        %v5871 = vadd.f32 %v5870, %v5616
        %v5872 = vadd.f32 %v5871, %v5617
        %v5873 = vadd.f32 %v5872, %v5618
        %v5874 = vadd.f32 %v5873, %v5619
        %v5875 = vadd.f32 %v5874, %v5620
        %v5876 = vadd.f32 %v5875, %v5621
        %v5877 = vadd.f32 %v5876, %v5622
        %v5878 = vadd.f32 %v5877, %v5623
        %v5879 = vadd.f32 %v5878, %v5624
        %v5880 = vadd.f32 %v5879, %v5625
        %v5881 = vadd.f32 %v5880, %v5626
        %v5882 = vadd.f32 %v5881, %v5627
        %v5883 = vadd.f32 %v5882, %v5628
        %v5884 = vadd.f32 %v5883, %v5629
        %v5885 = vadd.f32 %v5884, %v5630
        %v5886 = vadd.f32 %v5885, %v5631
        %v5887 = vadd.f32 %v5886, %v5632
        %v5888 = vadd.f32 %v5887, %v5633
        %v5889 = vadd.f32 %v5888, %v5634
        %v5890 = vadd.f32 %v5889, %v5635
        %v5891 = vadd.f32 %v5890, %v5636
        %v5892 = vadd.f32 %v5891, %v5637
        %v5893 = vadd.f32 %v5892, %v5638
        %v5894 = vadd.f32 %v5893, %v5639
        %v5895 = vadd.f32 %v5894, %v5640
        %v5896 = vadd.f32 %v5895, %v5641
        %v5897 = vadd.f32 %v5896, %v5642
        %v5898 = vadd.f32 %v5897, %v5643
        %v5899 = vadd.f32 %v5898, %v5644
        %v5900 = vadd.f32 %v5899, %v5645
        %v5901 = vadd.f32 %v5900, %v5646
        %v5902 = vadd.f32 %v5901, %v5647
        %v5903 = vadd.f32 %v5902, %v5648
        %v5904 = vadd.f32 %v5903, %v5649
        %v5905 = vadd.f32 %v5904, %v5650
        %v5906 = vadd.f32 %v5905, %v5651
        %v5907 = vadd.f32 %v5906, %v5652
        %v5908 = vadd.f32 %v5907, %v5653
        %v5909 = vadd.f32 %v5908, %v5654
        %v5910 = vadd.f32 %v5909, %v5655
        %v5911 = vadd.f32 %v5910, %v5656
        %v5912 = vadd.f32 %v5911, %v5657
        %v5913 = vadd.f32 %v5912, %v5658
        %v5914 = vadd.f32 %v5913, %v5659
        %v5915 = vadd.f32 %v5914, %v5660
        %v5916 = vadd.f32 %v5915, %v5661
        %v5917 = vadd.f32 %v5916, %v5662
        %v5918 = vadd.f32 %v5917, %v5663
        %v5919 = vadd.f32 %v5918, %v5664
        %v5920 = vadd.f32 %v5919, %v5665
        %v5921 = vadd.f32 %v5920, %v5666
        %v5922 = vadd.f32 %v5921, %v5667
        %v5923 = vadd.f32 %v5922, %v5668
        %v5924 = vadd.f32 %v5923, %v5669
        %v5925 = vadd.f32 %v5924, %v5670
        %v5926 = vadd.f32 %v5925, %v5671
        %v5927 = vadd.f32 %v5926, %v5672
        %v5928 = vadd.f32 %v5927, %v5673
        %v5929 = vadd.f32 %v5928, %v5674
        %v5930 = vadd.f32 %v5929, %v5675
        %v5931 = vadd.f32 %v5930, %v5676
        %v5932 = vadd.f32 %v5931, %v5677
        %v5933 = vadd.f32 %v5932, %v5678
        %v5934 = vadd.f32 %v5933, %v5679
        %v5935 = vadd.f32 %v5934, %v5680
        %v5936 = vadd.f32 %v5935, %v5681
        %v5937 = vadd.f32 %v5936, %v5682
        %v5938 = vadd.f32 %v5937, %v5683
        %v5939 = vadd.f32 %v5938, %v5684
        %v5940 = vadd.f32 %v5939, %v5685
        %v5941 = vadd.f32 %v5940, %v5686
        %v5942 = vadd.f32 %v5941, %v5687
        %v5943 = vadd.f32 %v5942, %v5688
        %v5944 = vadd.f32 %v5943, %v5689
        %v5945 = vadd.f32 %v5944, %v5690
        %v5946 = vadd.f32 %v5945, %v5691
        %v5947 = vadd.f32 %v5946, %v5692
        %v5948 = vadd.f32 %v5947, %v5693
        %v5949 = vadd.f32 %v5948, %v5694
        %v5950 = vrot.slane %v5949, 4
        %v5951 = vadd.f32 %v5949, %v5950
        %v5952 = vrot.slane %v5951, 2
        %v5953 = vadd.f32 %v5951, %v5952
        %v5954 = vrot.slane %v5953, 1
        %v5955 = vadd.f32 %v5953, %v5954
        %v5956 = vadd.f32 %v5438, %v5955
        %5957 = vst [vmem:[#allocation2] sm:$0x1] %v5956
        %v5958 = vld [vmem:[#allocation3] sm:$0x1]
        %v5959 = vadd.f32 %v4926, %v5182
        %v5960 = vadd.f32 %v4927, %v5183
        %v5961 = vadd.f32 %v4928, %v5184
        %v5962 = vadd.f32 %v4929, %v5185
        %v5963 = vadd.f32 %v4930, %v5186
        %v5964 = vadd.f32 %v4931, %v5187
        %v5965 = vadd.f32 %v4932, %v5188
        %v5966 = vadd.f32 %v4933, %v5189
        %v5967 = vadd.f32 %v4934, %v5190
        %v5968 = vadd.f32 %v4935, %v5191
        %v5969 = vadd.f32 %v4936, %v5192
        %v5970 = vadd.f32 %v4937, %v5193
        %v5971 = vadd.f32 %v4938, %v5194
        %v5972 = vadd.f32 %v4939, %v5195
        %v5973 = vadd.f32 %v4940, %v5196
        %v5974 = vadd.f32 %v4941, %v5197
        %v5975 = vadd.f32 %v4942, %v5198
        %v5976 = vadd.f32 %v4943, %v5199
        %v5977 = vadd.f32 %v4944, %v5200
        %v5978 = vadd.f32 %v4945, %v5201
        %v5979 = vadd.f32 %v4946, %v5202
        %v5980 = vadd.f32 %v4947, %v5203
        %v5981 = vadd.f32 %v4948, %v5204
        %v5982 = vadd.f32 %v4949, %v5205
        %v5983 = vadd.f32 %v4950, %v5206
        %v5984 = vadd.f32 %v4951, %v5207
        %v5985 = vadd.f32 %v4952, %v5208
        %v5986 = vadd.f32 %v4953, %v5209
        %v5987 = vadd.f32 %v4954, %v5210
        %v5988 = vadd.f32 %v4955, %v5211
        %v5989 = vadd.f32 %v4956, %v5212
        %v5990 = vadd.f32 %v4957, %v5213
        %v5991 = vadd.f32 %v4958, %v5214
        %v5992 = vadd.f32 %v4959, %v5215
        %v5993 = vadd.f32 %v4960, %v5216
        %v5994 = vadd.f32 %v4961, %v5217
        %v5995 = vadd.f32 %v4962, %v5218
        %v5996 = vadd.f32 %v4963, %v5219
        %v5997 = vadd.f32 %v4964, %v5220
        %v5998 = vadd.f32 %v4965, %v5221
        %v5999 = vadd.f32 %v4966, %v5222
        %v6000 = vadd.f32 %v4967, %v5223
        %v6001 = vadd.f32 %v4968, %v5224
        %v6002 = vadd.f32 %v4969, %v5225
        %v6003 = vadd.f32 %v4970, %v5226
        %v6004 = vadd.f32 %v4971, %v5227
        %v6005 = vadd.f32 %v4972, %v5228
        %v6006 = vadd.f32 %v4973, %v5229
        %v6007 = vadd.f32 %v4974, %v5230
        %v6008 = vadd.f32 %v4975, %v5231
        %v6009 = vadd.f32 %v4976, %v5232
        %v6010 = vadd.f32 %v4977, %v5233
        %v6011 = vadd.f32 %v4978, %v5234
        %v6012 = vadd.f32 %v4979, %v5235
        %v6013 = vadd.f32 %v4980, %v5236
        %v6014 = vadd.f32 %v4981, %v5237
        %v6015 = vadd.f32 %v4982, %v5238
        %v6016 = vadd.f32 %v4983, %v5239
        %v6017 = vadd.f32 %v4984, %v5240
        %v6018 = vadd.f32 %v4985, %v5241
        %v6019 = vadd.f32 %v4986, %v5242
        %v6020 = vadd.f32 %v4987, %v5243
        %v6021 = vadd.f32 %v4988, %v5244
        %v6022 = vadd.f32 %v4989, %v5245
        %v6023 = vadd.f32 %v4990, %v5246
        %v6024 = vadd.f32 %v4991, %v5247
        %v6025 = vadd.f32 %v4992, %v5248
        %v6026 = vadd.f32 %v4993, %v5249
        %v6027 = vadd.f32 %v4994, %v5250
        %v6028 = vadd.f32 %v4995, %v5251
        %v6029 = vadd.f32 %v4996, %v5252
        %v6030 = vadd.f32 %v4997, %v5253
        %v6031 = vadd.f32 %v4998, %v5254
        %v6032 = vadd.f32 %v4999, %v5255
        %v6033 = vadd.f32 %v5000, %v5256
        %v6034 = vadd.f32 %v5001, %v5257
        %v6035 = vadd.f32 %v5002, %v5258
        %v6036 = vadd.f32 %v5003, %v5259
        %v6037 = vadd.f32 %v5004, %v5260
        %v6038 = vadd.f32 %v5005, %v5261
        %v6039 = vadd.f32 %v5006, %v5262
        %v6040 = vadd.f32 %v5007, %v5263
        %v6041 = vadd.f32 %v5008, %v5264
        %v6042 = vadd.f32 %v5009, %v5265
        %v6043 = vadd.f32 %v5010, %v5266
        %v6044 = vadd.f32 %v5011, %v5267
        %v6045 = vadd.f32 %v5012, %v5268
        %v6046 = vadd.f32 %v5013, %v5269
        %v6047 = vadd.f32 %v5014, %v5270
        %v6048 = vadd.f32 %v5015, %v5271
        %v6049 = vadd.f32 %v5016, %v5272
        %v6050 = vadd.f32 %v5017, %v5273
        %v6051 = vadd.f32 %v5018, %v5274
        %v6052 = vadd.f32 %v5019, %v5275
        %v6053 = vadd.f32 %v5020, %v5276
        %v6054 = vadd.f32 %v5021, %v5277
        %v6055 = vadd.f32 %v5022, %v5278
        %v6056 = vadd.f32 %v5023, %v5279
        %v6057 = vadd.f32 %v5024, %v5280
        %v6058 = vadd.f32 %v5025, %v5281
        %v6059 = vadd.f32 %v5026, %v5282
        %v6060 = vadd.f32 %v5027, %v5283
        %v6061 = vadd.f32 %v5028, %v5284
        %v6062 = vadd.f32 %v5029, %v5285
        %v6063 = vadd.f32 %v5030, %v5286
        %v6064 = vadd.f32 %v5031, %v5287
        %v6065 = vadd.f32 %v5032, %v5288
        %v6066 = vadd.f32 %v5033, %v5289
        %v6067 = vadd.f32 %v5034, %v5290
        %v6068 = vadd.f32 %v5035, %v5291
        %v6069 = vadd.f32 %v5036, %v5292
        %v6070 = vadd.f32 %v5037, %v5293
        %v6071 = vadd.f32 %v5038, %v5294
        %v6072 = vadd.f32 %v5039, %v5295
        %v6073 = vadd.f32 %v5040, %v5296
        %v6074 = vadd.f32 %v5041, %v5297
        %v6075 = vadd.f32 %v5042, %v5298
        %v6076 = vadd.f32 %v5043, %v5299
        %v6077 = vadd.f32 %v5044, %v5300
        %v6078 = vadd.f32 %v5045, %v5301
        %v6079 = vadd.f32 %v5046, %v5302
        %v6080 = vadd.f32 %v5047, %v5303
        %v6081 = vadd.f32 %v5048, %v5304
        %v6082 = vadd.f32 %v5049, %v5305
        %v6083 = vadd.f32 %v5050, %v5306
        %v6084 = vadd.f32 %v5051, %v5307
        %v6085 = vadd.f32 %v5052, %v5308
        %v6086 = vadd.f32 %v5053, %v5309
        %v6087 = vadd.f32 %v5054, %v5310
        %v6088 = vadd.f32 %v5055, %v5311
        %v6089 = vadd.f32 %v5056, %v5312
        %v6090 = vadd.f32 %v5057, %v5313
        %v6091 = vadd.f32 %v5058, %v5314
        %v6092 = vadd.f32 %v5059, %v5315
        %v6093 = vadd.f32 %v5060, %v5316
        %v6094 = vadd.f32 %v5061, %v5317
        %v6095 = vadd.f32 %v5062, %v5318
        %v6096 = vadd.f32 %v5063, %v5319
        %v6097 = vadd.f32 %v5064, %v5320
        %v6098 = vadd.f32 %v5065, %v5321
        %v6099 = vadd.f32 %v5066, %v5322
        %v6100 = vadd.f32 %v5067, %v5323
        %v6101 = vadd.f32 %v5068, %v5324
        %v6102 = vadd.f32 %v5069, %v5325
        %v6103 = vadd.f32 %v5070, %v5326
        %v6104 = vadd.f32 %v5071, %v5327
        %v6105 = vadd.f32 %v5072, %v5328
        %v6106 = vadd.f32 %v5073, %v5329
        %v6107 = vadd.f32 %v5074, %v5330
        %v6108 = vadd.f32 %v5075, %v5331
        %v6109 = vadd.f32 %v5076, %v5332
        %v6110 = vadd.f32 %v5077, %v5333
        %v6111 = vadd.f32 %v5078, %v5334
        %v6112 = vadd.f32 %v5079, %v5335
        %v6113 = vadd.f32 %v5080, %v5336
        %v6114 = vadd.f32 %v5081, %v5337
        %v6115 = vadd.f32 %v5082, %v5338
        %v6116 = vadd.f32 %v5083, %v5339
        %v6117 = vadd.f32 %v5084, %v5340
        %v6118 = vadd.f32 %v5085, %v5341
        %v6119 = vadd.f32 %v5086, %v5342
        %v6120 = vadd.f32 %v5087, %v5343
        %v6121 = vadd.f32 %v5088, %v5344
        %v6122 = vadd.f32 %v5089, %v5345
        %v6123 = vadd.f32 %v5090, %v5346
        %v6124 = vadd.f32 %v5091, %v5347
        %v6125 = vadd.f32 %v5092, %v5348
        %v6126 = vadd.f32 %v5093, %v5349
        %v6127 = vadd.f32 %v5094, %v5350
        %v6128 = vadd.f32 %v5095, %v5351
        %v6129 = vadd.f32 %v5096, %v5352
        %v6130 = vadd.f32 %v5097, %v5353
        %v6131 = vadd.f32 %v5098, %v5354
        %v6132 = vadd.f32 %v5099, %v5355
        %v6133 = vadd.f32 %v5100, %v5356
        %v6134 = vadd.f32 %v5101, %v5357
        %v6135 = vadd.f32 %v5102, %v5358
        %v6136 = vadd.f32 %v5103, %v5359
        %v6137 = vadd.f32 %v5104, %v5360
        %v6138 = vadd.f32 %v5105, %v5361
        %v6139 = vadd.f32 %v5106, %v5362
        %v6140 = vadd.f32 %v5107, %v5363
        %v6141 = vadd.f32 %v5108, %v5364
        %v6142 = vadd.f32 %v5109, %v5365
        %v6143 = vadd.f32 %v5110, %v5366
        %v6144 = vadd.f32 %v5111, %v5367
        %v6145 = vadd.f32 %v5112, %v5368
        %v6146 = vadd.f32 %v5113, %v5369
        %v6147 = vadd.f32 %v5114, %v5370
        %v6148 = vadd.f32 %v5115, %v5371
        %v6149 = vadd.f32 %v5116, %v5372
        %v6150 = vadd.f32 %v5117, %v5373
        %v6151 = vadd.f32 %v5118, %v5374
        %v6152 = vadd.f32 %v5119, %v5375
        %v6153 = vadd.f32 %v5120, %v5376
        %v6154 = vadd.f32 %v5121, %v5377
        %v6155 = vadd.f32 %v5122, %v5378
        %v6156 = vadd.f32 %v5123, %v5379
        %v6157 = vadd.f32 %v5124, %v5380
        %v6158 = vadd.f32 %v5125, %v5381
        %v6159 = vadd.f32 %v5126, %v5382
        %v6160 = vadd.f32 %v5127, %v5383
        %v6161 = vadd.f32 %v5128, %v5384
        %v6162 = vadd.f32 %v5129, %v5385
        %v6163 = vadd.f32 %v5130, %v5386
        %v6164 = vadd.f32 %v5131, %v5387
        %v6165 = vadd.f32 %v5132, %v5388
        %v6166 = vadd.f32 %v5133, %v5389
        %v6167 = vadd.f32 %v5134, %v5390
        %v6168 = vadd.f32 %v5135, %v5391
        %v6169 = vadd.f32 %v5136, %v5392
        %v6170 = vadd.f32 %v5137, %v5393
        %v6171 = vadd.f32 %v5138, %v5394
        %v6172 = vadd.f32 %v5139, %v5395
        %v6173 = vadd.f32 %v5140, %v5396
        %v6174 = vadd.f32 %v5141, %v5397
        %v6175 = vadd.f32 %v5142, %v5398
        %v6176 = vadd.f32 %v5143, %v5399
        %v6177 = vadd.f32 %v5144, %v5400
        %v6178 = vadd.f32 %v5145, %v5401
        %v6179 = vadd.f32 %v5146, %v5402
        %v6180 = vadd.f32 %v5147, %v5403
        %v6181 = vadd.f32 %v5148, %v5404
        %v6182 = vadd.f32 %v5149, %v5405
        %v6183 = vadd.f32 %v5150, %v5406
        %v6184 = vadd.f32 %v5151, %v5407
        %v6185 = vadd.f32 %v5152, %v5408
        %v6186 = vadd.f32 %v5153, %v5409
        %v6187 = vadd.f32 %v5154, %v5410
        %v6188 = vadd.f32 %v5155, %v5411
        %v6189 = vadd.f32 %v5156, %v5412
        %v6190 = vadd.f32 %v5157, %v5413
        %v6191 = vadd.f32 %v5158, %v5414
        %v6192 = vadd.f32 %v5159, %v5415
        %v6193 = vadd.f32 %v5160, %v5416
        %v6194 = vadd.f32 %v5161, %v5417
        %v6195 = vadd.f32 %v5162, %v5418
        %v6196 = vadd.f32 %v5163, %v5419
        %v6197 = vadd.f32 %v5164, %v5420
        %v6198 = vadd.f32 %v5165, %v5421
        %v6199 = vadd.f32 %v5166, %v5422
        %v6200 = vadd.f32 %v5167, %v5423
        %v6201 = vadd.f32 %v5168, %v5424
        %v6202 = vadd.f32 %v5169, %v5425
        %v6203 = vadd.f32 %v5170, %v5426
        %v6204 = vadd.f32 %v5171, %v5427
        %v6205 = vadd.f32 %v5172, %v5428
        %v6206 = vadd.f32 %v5173, %v5429
        %v6207 = vadd.f32 %v5174, %v5430
        %v6208 = vadd.f32 %v5175, %v5431
        %v6209 = vadd.f32 %v5176, %v5432
        %v6210 = vadd.f32 %v5177, %v5433
        %v6211 = vadd.f32 %v5178, %v5434
        %v6212 = vadd.f32 %v5179, %v5435
        %v6213 = vadd.f32 %v5180, %v5436
        %v6214 = vadd.f32 %v5181, %v5437
        %v6215 = vadd.f32 %v5959, %v5960
        %v6216 = vadd.f32 %v6215, %v5961
        %v6217 = vadd.f32 %v6216, %v5962
        %v6218 = vadd.f32 %v6217, %v5963
        %v6219 = vadd.f32 %v6218, %v5964
        %v6220 = vadd.f32 %v6219, %v5965
        %v6221 = vadd.f32 %v6220, %v5966
        %v6222 = vadd.f32 %v6221, %v5967
        %v6223 = vadd.f32 %v6222, %v5968
        %v6224 = vadd.f32 %v6223, %v5969
        %v6225 = vadd.f32 %v6224, %v5970
        %v6226 = vadd.f32 %v6225, %v5971
        %v6227 = vadd.f32 %v6226, %v5972
        %v6228 = vadd.f32 %v6227, %v5973
        %v6229 = vadd.f32 %v6228, %v5974
        %v6230 = vadd.f32 %v6229, %v5975
        %v6231 = vadd.f32 %v6230, %v5976
        %v6232 = vadd.f32 %v6231, %v5977
        %v6233 = vadd.f32 %v6232, %v5978
        %v6234 = vadd.f32 %v6233, %v5979
        %v6235 = vadd.f32 %v6234, %v5980
        %v6236 = vadd.f32 %v6235, %v5981
        %v6237 = vadd.f32 %v6236, %v5982
        %v6238 = vadd.f32 %v6237, %v5983
        %v6239 = vadd.f32 %v6238, %v5984
        %v6240 = vadd.f32 %v6239, %v5985
        %v6241 = vadd.f32 %v6240, %v5986
        %v6242 = vadd.f32 %v6241, %v5987
        %v6243 = vadd.f32 %v6242, %v5988
        %v6244 = vadd.f32 %v6243, %v5989
        %v6245 = vadd.f32 %v6244, %v5990
        %v6246 = vadd.f32 %v6245, %v5991
        %v6247 = vadd.f32 %v6246, %v5992
        %v6248 = vadd.f32 %v6247, %v5993
        %v6249 = vadd.f32 %v6248, %v5994
        %v6250 = vadd.f32 %v6249, %v5995
        %v6251 = vadd.f32 %v6250, %v5996
        %v6252 = vadd.f32 %v6251, %v5997
        %v6253 = vadd.f32 %v6252, %v5998
        %v6254 = vadd.f32 %v6253, %v5999
        %v6255 = vadd.f32 %v6254, %v6000
        %v6256 = vadd.f32 %v6255, %v6001
        %v6257 = vadd.f32 %v6256, %v6002
        %v6258 = vadd.f32 %v6257, %v6003
        %v6259 = vadd.f32 %v6258, %v6004
        %v6260 = vadd.f32 %v6259, %v6005
        %v6261 = vadd.f32 %v6260, %v6006
        %v6262 = vadd.f32 %v6261, %v6007
        %v6263 = vadd.f32 %v6262, %v6008
        %v6264 = vadd.f32 %v6263, %v6009
        %v6265 = vadd.f32 %v6264, %v6010
        %v6266 = vadd.f32 %v6265, %v6011
        %v6267 = vadd.f32 %v6266, %v6012
        %v6268 = vadd.f32 %v6267, %v6013
        %v6269 = vadd.f32 %v6268, %v6014
        %v6270 = vadd.f32 %v6269, %v6015
        %v6271 = vadd.f32 %v6270, %v6016
        %v6272 = vadd.f32 %v6271, %v6017
        %v6273 = vadd.f32 %v6272, %v6018
        %v6274 = vadd.f32 %v6273, %v6019
        %v6275 = vadd.f32 %v6274, %v6020
        %v6276 = vadd.f32 %v6275, %v6021
        %v6277 = vadd.f32 %v6276, %v6022
        %v6278 = vadd.f32 %v6277, %v6023
        %v6279 = vadd.f32 %v6278, %v6024
        %v6280 = vadd.f32 %v6279, %v6025
        %v6281 = vadd.f32 %v6280, %v6026
        %v6282 = vadd.f32 %v6281, %v6027
        %v6283 = vadd.f32 %v6282, %v6028
        %v6284 = vadd.f32 %v6283, %v6029
        %v6285 = vadd.f32 %v6284, %v6030
        %v6286 = vadd.f32 %v6285, %v6031
        %v6287 = vadd.f32 %v6286, %v6032
        %v6288 = vadd.f32 %v6287, %v6033
        %v6289 = vadd.f32 %v6288, %v6034
        %v6290 = vadd.f32 %v6289, %v6035
        %v6291 = vadd.f32 %v6290, %v6036
        %v6292 = vadd.f32 %v6291, %v6037
        %v6293 = vadd.f32 %v6292, %v6038
        %v6294 = vadd.f32 %v6293, %v6039
        %v6295 = vadd.f32 %v6294, %v6040
        %v6296 = vadd.f32 %v6295, %v6041
        %v6297 = vadd.f32 %v6296, %v6042
        %v6298 = vadd.f32 %v6297, %v6043
        %v6299 = vadd.f32 %v6298, %v6044
        %v6300 = vadd.f32 %v6299, %v6045
        %v6301 = vadd.f32 %v6300, %v6046
        %v6302 = vadd.f32 %v6301, %v6047
        %v6303 = vadd.f32 %v6302, %v6048
        %v6304 = vadd.f32 %v6303, %v6049
        %v6305 = vadd.f32 %v6304, %v6050
        %v6306 = vadd.f32 %v6305, %v6051
        %v6307 = vadd.f32 %v6306, %v6052
        %v6308 = vadd.f32 %v6307, %v6053
        %v6309 = vadd.f32 %v6308, %v6054
        %v6310 = vadd.f32 %v6309, %v6055
        %v6311 = vadd.f32 %v6310, %v6056
        %v6312 = vadd.f32 %v6311, %v6057
        %v6313 = vadd.f32 %v6312, %v6058
        %v6314 = vadd.f32 %v6313, %v6059
        %v6315 = vadd.f32 %v6314, %v6060
        %v6316 = vadd.f32 %v6315, %v6061
        %v6317 = vadd.f32 %v6316, %v6062
        %v6318 = vadd.f32 %v6317, %v6063
        %v6319 = vadd.f32 %v6318, %v6064
        %v6320 = vadd.f32 %v6319, %v6065
        %v6321 = vadd.f32 %v6320, %v6066
        %v6322 = vadd.f32 %v6321, %v6067
        %v6323 = vadd.f32 %v6322, %v6068
        %v6324 = vadd.f32 %v6323, %v6069
        %v6325 = vadd.f32 %v6324, %v6070
        %v6326 = vadd.f32 %v6325, %v6071
        %v6327 = vadd.f32 %v6326, %v6072
        %v6328 = vadd.f32 %v6327, %v6073
        %v6329 = vadd.f32 %v6328, %v6074
        %v6330 = vadd.f32 %v6329, %v6075
        %v6331 = vadd.f32 %v6330, %v6076
        %v6332 = vadd.f32 %v6331, %v6077
        %v6333 = vadd.f32 %v6332, %v6078
        %v6334 = vadd.f32 %v6333, %v6079
        %v6335 = vadd.f32 %v6334, %v6080
        %v6336 = vadd.f32 %v6335, %v6081
        %v6337 = vadd.f32 %v6336, %v6082
        %v6338 = vadd.f32 %v6337, %v6083
        %v6339 = vadd.f32 %v6338, %v6084
        %v6340 = vadd.f32 %v6339, %v6085
        %v6341 = vadd.f32 %v6340, %v6086
        %v6342 = vadd.f32 %v6341, %v6087
        %v6343 = vadd.f32 %v6342, %v6088
        %v6344 = vadd.f32 %v6343, %v6089
        %v6345 = vadd.f32 %v6344, %v6090
        %v6346 = vadd.f32 %v6345, %v6091
        %v6347 = vadd.f32 %v6346, %v6092
        %v6348 = vadd.f32 %v6347, %v6093
        %v6349 = vadd.f32 %v6348, %v6094
        %v6350 = vadd.f32 %v6349, %v6095
        %v6351 = vadd.f32 %v6350, %v6096
        %v6352 = vadd.f32 %v6351, %v6097
        %v6353 = vadd.f32 %v6352, %v6098
        %v6354 = vadd.f32 %v6353, %v6099
        %v6355 = vadd.f32 %v6354, %v6100
        %v6356 = vadd.f32 %v6355, %v6101
        %v6357 = vadd.f32 %v6356, %v6102
        %v6358 = vadd.f32 %v6357, %v6103
        %v6359 = vadd.f32 %v6358, %v6104
        %v6360 = vadd.f32 %v6359, %v6105
        %v6361 = vadd.f32 %v6360, %v6106
        %v6362 = vadd.f32 %v6361, %v6107
        %v6363 = vadd.f32 %v6362, %v6108
        %v6364 = vadd.f32 %v6363, %v6109
        %v6365 = vadd.f32 %v6364, %v6110
        %v6366 = vadd.f32 %v6365, %v6111
        %v6367 = vadd.f32 %v6366, %v6112
        %v6368 = vadd.f32 %v6367, %v6113
        %v6369 = vadd.f32 %v6368, %v6114
        %v6370 = vadd.f32 %v6369, %v6115
        %v6371 = vadd.f32 %v6370, %v6116
        %v6372 = vadd.f32 %v6371, %v6117
        %v6373 = vadd.f32 %v6372, %v6118
        %v6374 = vadd.f32 %v6373, %v6119
        %v6375 = vadd.f32 %v6374, %v6120
        %v6376 = vadd.f32 %v6375, %v6121
        %v6377 = vadd.f32 %v6376, %v6122
        %v6378 = vadd.f32 %v6377, %v6123
        %v6379 = vadd.f32 %v6378, %v6124
        %v6380 = vadd.f32 %v6379, %v6125
        %v6381 = vadd.f32 %v6380, %v6126
        %v6382 = vadd.f32 %v6381, %v6127
        %v6383 = vadd.f32 %v6382, %v6128
        %v6384 = vadd.f32 %v6383, %v6129
        %v6385 = vadd.f32 %v6384, %v6130
        %v6386 = vadd.f32 %v6385, %v6131
        %v6387 = vadd.f32 %v6386, %v6132
        %v6388 = vadd.f32 %v6387, %v6133
        %v6389 = vadd.f32 %v6388, %v6134
        %v6390 = vadd.f32 %v6389, %v6135
        %v6391 = vadd.f32 %v6390, %v6136
        %v6392 = vadd.f32 %v6391, %v6137
        %v6393 = vadd.f32 %v6392, %v6138
        %v6394 = vadd.f32 %v6393, %v6139
        %v6395 = vadd.f32 %v6394, %v6140
        %v6396 = vadd.f32 %v6395, %v6141
        %v6397 = vadd.f32 %v6396, %v6142
        %v6398 = vadd.f32 %v6397, %v6143
        %v6399 = vadd.f32 %v6398, %v6144
        %v6400 = vadd.f32 %v6399, %v6145
        %v6401 = vadd.f32 %v6400, %v6146
        %v6402 = vadd.f32 %v6401, %v6147
        %v6403 = vadd.f32 %v6402, %v6148
        %v6404 = vadd.f32 %v6403, %v6149
        %v6405 = vadd.f32 %v6404, %v6150
        %v6406 = vadd.f32 %v6405, %v6151
        %v6407 = vadd.f32 %v6406, %v6152
        %v6408 = vadd.f32 %v6407, %v6153
        %v6409 = vadd.f32 %v6408, %v6154
        %v6410 = vadd.f32 %v6409, %v6155
        %v6411 = vadd.f32 %v6410, %v6156
        %v6412 = vadd.f32 %v6411, %v6157
        %v6413 = vadd.f32 %v6412, %v6158
        %v6414 = vadd.f32 %v6413, %v6159
        %v6415 = vadd.f32 %v6414, %v6160
        %v6416 = vadd.f32 %v6415, %v6161
        %v6417 = vadd.f32 %v6416, %v6162
        %v6418 = vadd.f32 %v6417, %v6163
        %v6419 = vadd.f32 %v6418, %v6164
        %v6420 = vadd.f32 %v6419, %v6165
        %v6421 = vadd.f32 %v6420, %v6166
        %v6422 = vadd.f32 %v6421, %v6167
        %v6423 = vadd.f32 %v6422, %v6168
        %v6424 = vadd.f32 %v6423, %v6169
        %v6425 = vadd.f32 %v6424, %v6170
        %v6426 = vadd.f32 %v6425, %v6171
        %v6427 = vadd.f32 %v6426, %v6172
        %v6428 = vadd.f32 %v6427, %v6173
        %v6429 = vadd.f32 %v6428, %v6174
        %v6430 = vadd.f32 %v6429, %v6175
        %v6431 = vadd.f32 %v6430, %v6176
        %v6432 = vadd.f32 %v6431, %v6177
        %v6433 = vadd.f32 %v6432, %v6178
        %v6434 = vadd.f32 %v6433, %v6179
        %v6435 = vadd.f32 %v6434, %v6180
        %v6436 = vadd.f32 %v6435, %v6181
        %v6437 = vadd.f32 %v6436, %v6182
        %v6438 = vadd.f32 %v6437, %v6183
        %v6439 = vadd.f32 %v6438, %v6184
        %v6440 = vadd.f32 %v6439, %v6185
        %v6441 = vadd.f32 %v6440, %v6186
        %v6442 = vadd.f32 %v6441, %v6187
        %v6443 = vadd.f32 %v6442, %v6188
        %v6444 = vadd.f32 %v6443, %v6189
        %v6445 = vadd.f32 %v6444, %v6190
        %v6446 = vadd.f32 %v6445, %v6191
        %v6447 = vadd.f32 %v6446, %v6192
        %v6448 = vadd.f32 %v6447, %v6193
        %v6449 = vadd.f32 %v6448, %v6194
        %v6450 = vadd.f32 %v6449, %v6195
        %v6451 = vadd.f32 %v6450, %v6196
        %v6452 = vadd.f32 %v6451, %v6197
        %v6453 = vadd.f32 %v6452, %v6198
        %v6454 = vadd.f32 %v6453, %v6199
        %v6455 = vadd.f32 %v6454, %v6200
        %v6456 = vadd.f32 %v6455, %v6201
        %v6457 = vadd.f32 %v6456, %v6202
        %v6458 = vadd.f32 %v6457, %v6203
        %v6459 = vadd.f32 %v6458, %v6204
        %v6460 = vadd.f32 %v6459, %v6205
        %v6461 = vadd.f32 %v6460, %v6206
        %v6462 = vadd.f32 %v6461, %v6207
        %v6463 = vadd.f32 %v6462, %v6208
        %v6464 = vadd.f32 %v6463, %v6209
        %v6465 = vadd.f32 %v6464, %v6210
        %v6466 = vadd.f32 %v6465, %v6211
        %v6467 = vadd.f32 %v6466, %v6212
        %v6468 = vadd.f32 %v6467, %v6213
        %v6469 = vadd.f32 %v6468, %v6214
        %v6470 = vrot.slane %v6469, 4
        %v6471 = vadd.f32 %v6469, %v6470
        %v6472 = vrot.slane %v6471, 2
        %v6473 = vadd.f32 %v6471, %v6472
        %v6474 = vrot.slane %v6473, 1
        %v6475 = vadd.f32 %v6473, %v6474
        %v6476 = vadd.f32 %v5958, %v6475
        %6477 = vst [vmem:[#allocation3] sm:$0x1] %v6476
        %v6478 = vmul.f32 %v569, %v1337
        %v6479 = vmul.f32 %v570, %v1338
        %v6480 = vmul.f32 %v571, %v1339
        %v6481 = vmul.f32 %v572, %v1340
        %v6482 = vmul.f32 %v573, %v1341
        %v6483 = vmul.f32 %v574, %v1342
        %v6484 = vmul.f32 %v575, %v1343
        %v6485 = vmul.f32 %v576, %v1344
        %v6486 = vmul.f32 %v577, %v1345
        %v6487 = vmul.f32 %v578, %v1346
        %v6488 = vmul.f32 %v579, %v1347
        %v6489 = vmul.f32 %v580, %v1348
        %v6490 = vmul.f32 %v581, %v1349
        %v6491 = vmul.f32 %v582, %v1350
        %v6492 = vmul.f32 %v583, %v1351
        %v6493 = vmul.f32 %v584, %v1352
        %v6494 = vmul.f32 %v585, %v1353
        %v6495 = vmul.f32 %v586, %v1354
        %v6496 = vmul.f32 %v587, %v1355
        %v6497 = vmul.f32 %v588, %v1356
        %v6498 = vmul.f32 %v589, %v1357
        %v6499 = vmul.f32 %v590, %v1358
        %v6500 = vmul.f32 %v591, %v1359
        %v6501 = vmul.f32 %v592, %v1360
        %v6502 = vmul.f32 %v593, %v1361
        %v6503 = vmul.f32 %v594, %v1362
        %v6504 = vmul.f32 %v595, %v1363
        %v6505 = vmul.f32 %v596, %v1364
        %v6506 = vmul.f32 %v597, %v1365
        %v6507 = vmul.f32 %v598, %v1366
        %v6508 = vmul.f32 %v599, %v1367
        %v6509 = vmul.f32 %v600, %v1368
        %v6510 = vmul.f32 %v601, %v1369
        %v6511 = vmul.f32 %v602, %v1370
        %v6512 = vmul.f32 %v603, %v1371
        %v6513 = vmul.f32 %v604, %v1372
        %v6514 = vmul.f32 %v605, %v1373
        %v6515 = vmul.f32 %v606, %v1374
        %v6516 = vmul.f32 %v607, %v1375
        %v6517 = vmul.f32 %v608, %v1376
        %v6518 = vmul.f32 %v609, %v1377
        %v6519 = vmul.f32 %v610, %v1378
        %v6520 = vmul.f32 %v611, %v1379
        %v6521 = vmul.f32 %v612, %v1380
        %v6522 = vmul.f32 %v613, %v1381
        %v6523 = vmul.f32 %v614, %v1382
        %v6524 = vmul.f32 %v615, %v1383
        %v6525 = vmul.f32 %v616, %v1384
        %v6526 = vmul.f32 %v617, %v1385
        %v6527 = vmul.f32 %v618, %v1386
        %v6528 = vmul.f32 %v619, %v1387
        %v6529 = vmul.f32 %v620, %v1388
        %v6530 = vmul.f32 %v621, %v1389
        %v6531 = vmul.f32 %v622, %v1390
        %v6532 = vmul.f32 %v623, %v1391
        %v6533 = vmul.f32 %v624, %v1392
        %v6534 = vmul.f32 %v625, %v1393
        %v6535 = vmul.f32 %v626, %v1394
        %v6536 = vmul.f32 %v627, %v1395
        %v6537 = vmul.f32 %v628, %v1396
        %v6538 = vmul.f32 %v629, %v1397
        %v6539 = vmul.f32 %v630, %v1398
        %v6540 = vmul.f32 %v631, %v1399
        %v6541 = vmul.f32 %v632, %v1400
        %v6542 = vmul.f32 %v633, %v1401
        %v6543 = vmul.f32 %v634, %v1402
        %v6544 = vmul.f32 %v635, %v1403
        %v6545 = vmul.f32 %v636, %v1404
        %v6546 = vmul.f32 %v637, %v1405
        %v6547 = vmul.f32 %v638, %v1406
        %v6548 = vmul.f32 %v639, %v1407
        %v6549 = vmul.f32 %v640, %v1408
        %v6550 = vmul.f32 %v641, %v1409
        %v6551 = vmul.f32 %v642, %v1410
        %v6552 = vmul.f32 %v643, %v1411
        %v6553 = vmul.f32 %v644, %v1412
        %v6554 = vmul.f32 %v645, %v1413
        %v6555 = vmul.f32 %v646, %v1414
        %v6556 = vmul.f32 %v647, %v1415
        %v6557 = vmul.f32 %v648, %v1416
        %v6558 = vmul.f32 %v649, %v1417
        %v6559 = vmul.f32 %v650, %v1418
        %v6560 = vmul.f32 %v651, %v1419
        %v6561 = vmul.f32 %v652, %v1420
        %v6562 = vmul.f32 %v653, %v1421
        %v6563 = vmul.f32 %v654, %v1422
        %v6564 = vmul.f32 %v655, %v1423
        %v6565 = vmul.f32 %v656, %v1424
        %v6566 = vmul.f32 %v657, %v1425
        %v6567 = vmul.f32 %v658, %v1426
        %v6568 = vmul.f32 %v659, %v1427
        %v6569 = vmul.f32 %v660, %v1428
        %v6570 = vmul.f32 %v661, %v1429
        %v6571 = vmul.f32 %v662, %v1430
        %v6572 = vmul.f32 %v663, %v1431
        %v6573 = vmul.f32 %v664, %v1432
        %v6574 = vmul.f32 %v665, %v1433
        %v6575 = vmul.f32 %v666, %v1434
        %v6576 = vmul.f32 %v667, %v1435
        %v6577 = vmul.f32 %v668, %v1436
        %v6578 = vmul.f32 %v669, %v1437
        %v6579 = vmul.f32 %v670, %v1438
        %v6580 = vmul.f32 %v671, %v1439
        %v6581 = vmul.f32 %v672, %v1440
        %v6582 = vmul.f32 %v673, %v1441
        %v6583 = vmul.f32 %v674, %v1442
        %v6584 = vmul.f32 %v675, %v1443
        %v6585 = vmul.f32 %v676, %v1444
        %v6586 = vmul.f32 %v677, %v1445
        %v6587 = vmul.f32 %v678, %v1446
        %v6588 = vmul.f32 %v679, %v1447
        %v6589 = vmul.f32 %v680, %v1448
        %v6590 = vmul.f32 %v681, %v1449
        %v6591 = vmul.f32 %v682, %v1450
        %v6592 = vmul.f32 %v683, %v1451
        %v6593 = vmul.f32 %v684, %v1452
        %v6594 = vmul.f32 %v685, %v1453
        %v6595 = vmul.f32 %v686, %v1454
        %v6596 = vmul.f32 %v687, %v1455
        %v6597 = vmul.f32 %v688, %v1456
        %v6598 = vmul.f32 %v689, %v1457
        %v6599 = vmul.f32 %v690, %v1458
        %v6600 = vmul.f32 %v691, %v1459
        %v6601 = vmul.f32 %v692, %v1460
        %v6602 = vmul.f32 %v693, %v1461
        %v6603 = vmul.f32 %v694, %v1462
        %v6604 = vmul.f32 %v695, %v1463
        %v6605 = vmul.f32 %v696, %v1464
        %v6606 = vmul.f32 %v697, %v1465
        %v6607 = vmul.f32 %v698, %v1466
        %v6608 = vmul.f32 %v699, %v1467
        %v6609 = vmul.f32 %v700, %v1468
        %v6610 = vmul.f32 %v701, %v1469
        %v6611 = vmul.f32 %v702, %v1470
        %v6612 = vmul.f32 %v703, %v1471
        %v6613 = vmul.f32 %v704, %v1472
        %v6614 = vmul.f32 %v705, %v1473
        %v6615 = vmul.f32 %v706, %v1474
        %v6616 = vmul.f32 %v707, %v1475
        %v6617 = vmul.f32 %v708, %v1476
        %v6618 = vmul.f32 %v709, %v1477
        %v6619 = vmul.f32 %v710, %v1478
        %v6620 = vmul.f32 %v711, %v1479
        %v6621 = vmul.f32 %v712, %v1480
        %v6622 = vmul.f32 %v713, %v1481
        %v6623 = vmul.f32 %v714, %v1482
        %v6624 = vmul.f32 %v715, %v1483
        %v6625 = vmul.f32 %v716, %v1484
        %v6626 = vmul.f32 %v717, %v1485
        %v6627 = vmul.f32 %v718, %v1486
        %v6628 = vmul.f32 %v719, %v1487
        %v6629 = vmul.f32 %v720, %v1488
        %v6630 = vmul.f32 %v721, %v1489
        %v6631 = vmul.f32 %v722, %v1490
        %v6632 = vmul.f32 %v723, %v1491
        %v6633 = vmul.f32 %v724, %v1492
        %v6634 = vmul.f32 %v725, %v1493
        %v6635 = vmul.f32 %v726, %v1494
        %v6636 = vmul.f32 %v727, %v1495
        %v6637 = vmul.f32 %v728, %v1496
        %v6638 = vmul.f32 %v729, %v1497
        %v6639 = vmul.f32 %v730, %v1498
        %v6640 = vmul.f32 %v731, %v1499
        %v6641 = vmul.f32 %v732, %v1500
        %v6642 = vmul.f32 %v733, %v1501
        %v6643 = vmul.f32 %v734, %v1502
        %v6644 = vmul.f32 %v735, %v1503
        %v6645 = vmul.f32 %v736, %v1504
        %v6646 = vmul.f32 %v737, %v1505
        %v6647 = vmul.f32 %v738, %v1506
        %v6648 = vmul.f32 %v739, %v1507
        %v6649 = vmul.f32 %v740, %v1508
        %v6650 = vmul.f32 %v741, %v1509
        %v6651 = vmul.f32 %v742, %v1510
        %v6652 = vmul.f32 %v743, %v1511
        %v6653 = vmul.f32 %v744, %v1512
        %v6654 = vmul.f32 %v745, %v1513
        %v6655 = vmul.f32 %v746, %v1514
        %v6656 = vmul.f32 %v747, %v1515
        %v6657 = vmul.f32 %v748, %v1516
        %v6658 = vmul.f32 %v749, %v1517
        %v6659 = vmul.f32 %v750, %v1518
        %v6660 = vmul.f32 %v751, %v1519
        %v6661 = vmul.f32 %v752, %v1520
        %v6662 = vmul.f32 %v753, %v1521
        %v6663 = vmul.f32 %v754, %v1522
        %v6664 = vmul.f32 %v755, %v1523
        %v6665 = vmul.f32 %v756, %v1524
        %v6666 = vmul.f32 %v757, %v1525
        %v6667 = vmul.f32 %v758, %v1526
        %v6668 = vmul.f32 %v759, %v1527
        %v6669 = vmul.f32 %v760, %v1528
        %v6670 = vmul.f32 %v761, %v1529
        %v6671 = vmul.f32 %v762, %v1530
        %v6672 = vmul.f32 %v763, %v1531
        %v6673 = vmul.f32 %v764, %v1532
        %v6674 = vmul.f32 %v765, %v1533
        %v6675 = vmul.f32 %v766, %v1534
        %v6676 = vmul.f32 %v767, %v1535
        %v6677 = vmul.f32 %v768, %v1536
        %v6678 = vmul.f32 %v769, %v1537
        %v6679 = vmul.f32 %v770, %v1538
        %v6680 = vmul.f32 %v771, %v1539
        %v6681 = vmul.f32 %v772, %v1540
        %v6682 = vmul.f32 %v773, %v1541
        %v6683 = vmul.f32 %v774, %v1542
        %v6684 = vmul.f32 %v775, %v1543
        %v6685 = vmul.f32 %v776, %v1544
        %v6686 = vmul.f32 %v777, %v1545
        %v6687 = vmul.f32 %v778, %v1546
        %v6688 = vmul.f32 %v779, %v1547
        %v6689 = vmul.f32 %v780, %v1548
        %v6690 = vmul.f32 %v781, %v1549
        %v6691 = vmul.f32 %v782, %v1550
        %v6692 = vmul.f32 %v783, %v1551
        %v6693 = vmul.f32 %v784, %v1552
        %v6694 = vmul.f32 %v785, %v1553
        %v6695 = vmul.f32 %v786, %v1554
        %v6696 = vmul.f32 %v787, %v1555
        %v6697 = vmul.f32 %v788, %v1556
        %v6698 = vmul.f32 %v789, %v1557
        %v6699 = vmul.f32 %v790, %v1558
        %v6700 = vmul.f32 %v791, %v1559
        %v6701 = vmul.f32 %v792, %v1560
        %v6702 = vmul.f32 %v793, %v1561
        %v6703 = vmul.f32 %v794, %v1562
        %v6704 = vmul.f32 %v795, %v1563
        %v6705 = vmul.f32 %v796, %v1564
        %v6706 = vmul.f32 %v797, %v1565
        %v6707 = vmul.f32 %v798, %v1566
        %v6708 = vmul.f32 %v799, %v1567
        %v6709 = vmul.f32 %v800, %v1568
        %v6710 = vmul.f32 %v801, %v1569
        %v6711 = vmul.f32 %v802, %v1570
        %v6712 = vmul.f32 %v803, %v1571
        %v6713 = vmul.f32 %v804, %v1572
        %v6714 = vmul.f32 %v805, %v1573
        %v6715 = vmul.f32 %v806, %v1574
        %v6716 = vmul.f32 %v807, %v1575
        %v6717 = vmul.f32 %v808, %v1576
        %v6718 = vmul.f32 %v809, %v1577
        %v6719 = vmul.f32 %v810, %v1578
        %v6720 = vmul.f32 %v811, %v1579
        %v6721 = vmul.f32 %v812, %v1580
        %v6722 = vmul.f32 %v813, %v1581
        %v6723 = vmul.f32 %v814, %v1582
        %v6724 = vmul.f32 %v815, %v1583
        %v6725 = vmul.f32 %v816, %v1584
        %v6726 = vmul.f32 %v817, %v1585
        %v6727 = vmul.f32 %v818, %v1586
        %v6728 = vmul.f32 %v819, %v1587
        %v6729 = vmul.f32 %v820, %v1588
        %v6730 = vmul.f32 %v821, %v1589
        %v6731 = vmul.f32 %v822, %v1590
        %v6732 = vmul.f32 %v823, %v1591
        %v6733 = vmul.f32 %v824, %v1592
        %6734 = vadd.xlane.f32.xlu0 %v6478
        %v6735 = vpop.xlane.xlu0 %6734
        %6736 = vadd.xlane.f32.xlu0 %v6479
        %v6737 = vpop.xlane.xlu0 %6736
        %6738 = vadd.xlane.f32.xlu0 %v6480
        %v6739 = vpop.xlane.xlu0 %6738
        %6740 = vadd.xlane.f32.xlu0 %v6481
        %v6741 = vpop.xlane.xlu0 %6740
        %6742 = vadd.xlane.f32.xlu0 %v6482
        %v6743 = vpop.xlane.xlu0 %6742
        %6744 = vadd.xlane.f32.xlu0 %v6483
        %v6745 = vpop.xlane.xlu0 %6744
        %6746 = vadd.xlane.f32.xlu0 %v6484
        %v6747 = vpop.xlane.xlu0 %6746
        %6748 = vadd.xlane.f32.xlu0 %v6485
        %v6749 = vpop.xlane.xlu0 %6748
        %6750 = vadd.xlane.f32.xlu0 %v6486
        %v6751 = vpop.xlane.xlu0 %6750
        %6752 = vadd.xlane.f32.xlu0 %v6487
        %v6753 = vpop.xlane.xlu0 %6752
        %6754 = vadd.xlane.f32.xlu0 %v6488
        %v6755 = vpop.xlane.xlu0 %6754
        %6756 = vadd.xlane.f32.xlu0 %v6489
        %v6757 = vpop.xlane.xlu0 %6756
        %6758 = vadd.xlane.f32.xlu0 %v6490
        %v6759 = vpop.xlane.xlu0 %6758
        %6760 = vadd.xlane.f32.xlu0 %v6491
        %v6761 = vpop.xlane.xlu0 %6760
        %6762 = vadd.xlane.f32.xlu0 %v6492
        %v6763 = vpop.xlane.xlu0 %6762
        %6764 = vadd.xlane.f32.xlu0 %v6493
        %v6765 = vpop.xlane.xlu0 %6764
        %6766 = vadd.xlane.f32.xlu0 %v6494
        %v6767 = vpop.xlane.xlu0 %6766
        %6768 = vadd.xlane.f32.xlu0 %v6495
        %v6769 = vpop.xlane.xlu0 %6768
        %6770 = vadd.xlane.f32.xlu0 %v6496
        %v6771 = vpop.xlane.xlu0 %6770
        %6772 = vadd.xlane.f32.xlu0 %v6497
        %v6773 = vpop.xlane.xlu0 %6772
        %6774 = vadd.xlane.f32.xlu0 %v6498
        %v6775 = vpop.xlane.xlu0 %6774
        %6776 = vadd.xlane.f32.xlu0 %v6499
        %v6777 = vpop.xlane.xlu0 %6776
        %6778 = vadd.xlane.f32.xlu0 %v6500
        %v6779 = vpop.xlane.xlu0 %6778
        %6780 = vadd.xlane.f32.xlu0 %v6501
        %v6781 = vpop.xlane.xlu0 %6780
        %6782 = vadd.xlane.f32.xlu0 %v6502
        %v6783 = vpop.xlane.xlu0 %6782
        %6784 = vadd.xlane.f32.xlu0 %v6503
        %v6785 = vpop.xlane.xlu0 %6784
        %6786 = vadd.xlane.f32.xlu0 %v6504
        %v6787 = vpop.xlane.xlu0 %6786
        %6788 = vadd.xlane.f32.xlu0 %v6505
        %v6789 = vpop.xlane.xlu0 %6788
        %6790 = vadd.xlane.f32.xlu0 %v6506
        %v6791 = vpop.xlane.xlu0 %6790
        %6792 = vadd.xlane.f32.xlu0 %v6507
        %v6793 = vpop.xlane.xlu0 %6792
        %6794 = vadd.xlane.f32.xlu0 %v6508
        %v6795 = vpop.xlane.xlu0 %6794
        %6796 = vadd.xlane.f32.xlu0 %v6509
        %v6797 = vpop.xlane.xlu0 %6796
        %6798 = vadd.xlane.f32.xlu0 %v6510
        %v6799 = vpop.xlane.xlu0 %6798
        %6800 = vadd.xlane.f32.xlu0 %v6511
        %v6801 = vpop.xlane.xlu0 %6800
        %6802 = vadd.xlane.f32.xlu0 %v6512
        %v6803 = vpop.xlane.xlu0 %6802
        %6804 = vadd.xlane.f32.xlu0 %v6513
        %v6805 = vpop.xlane.xlu0 %6804
        %6806 = vadd.xlane.f32.xlu0 %v6514
        %v6807 = vpop.xlane.xlu0 %6806
        %6808 = vadd.xlane.f32.xlu0 %v6515
        %v6809 = vpop.xlane.xlu0 %6808
        %6810 = vadd.xlane.f32.xlu0 %v6516
        %v6811 = vpop.xlane.xlu0 %6810
        %6812 = vadd.xlane.f32.xlu0 %v6517
        %v6813 = vpop.xlane.xlu0 %6812
        %6814 = vadd.xlane.f32.xlu0 %v6518
        %v6815 = vpop.xlane.xlu0 %6814
        %6816 = vadd.xlane.f32.xlu0 %v6519
        %v6817 = vpop.xlane.xlu0 %6816
        %6818 = vadd.xlane.f32.xlu0 %v6520
        %v6819 = vpop.xlane.xlu0 %6818
        %6820 = vadd.xlane.f32.xlu0 %v6521
        %v6821 = vpop.xlane.xlu0 %6820
        %6822 = vadd.xlane.f32.xlu0 %v6522
        %v6823 = vpop.xlane.xlu0 %6822
        %6824 = vadd.xlane.f32.xlu0 %v6523
        %v6825 = vpop.xlane.xlu0 %6824
        %6826 = vadd.xlane.f32.xlu0 %v6524
        %v6827 = vpop.xlane.xlu0 %6826
        %6828 = vadd.xlane.f32.xlu0 %v6525
        %v6829 = vpop.xlane.xlu0 %6828
        %6830 = vadd.xlane.f32.xlu0 %v6526
        %v6831 = vpop.xlane.xlu0 %6830
        %6832 = vadd.xlane.f32.xlu0 %v6527
        %v6833 = vpop.xlane.xlu0 %6832
        %6834 = vadd.xlane.f32.xlu0 %v6528
        %v6835 = vpop.xlane.xlu0 %6834
        %6836 = vadd.xlane.f32.xlu0 %v6529
        %v6837 = vpop.xlane.xlu0 %6836
        %6838 = vadd.xlane.f32.xlu0 %v6530
        %v6839 = vpop.xlane.xlu0 %6838
        %6840 = vadd.xlane.f32.xlu0 %v6531
        %v6841 = vpop.xlane.xlu0 %6840
        %6842 = vadd.xlane.f32.xlu0 %v6532
        %v6843 = vpop.xlane.xlu0 %6842
        %6844 = vadd.xlane.f32.xlu0 %v6533
        %v6845 = vpop.xlane.xlu0 %6844
        %6846 = vadd.xlane.f32.xlu0 %v6534
        %v6847 = vpop.xlane.xlu0 %6846
        %6848 = vadd.xlane.f32.xlu0 %v6535
        %v6849 = vpop.xlane.xlu0 %6848
        %6850 = vadd.xlane.f32.xlu0 %v6536
        %v6851 = vpop.xlane.xlu0 %6850
        %6852 = vadd.xlane.f32.xlu0 %v6537
        %v6853 = vpop.xlane.xlu0 %6852
        %6854 = vadd.xlane.f32.xlu0 %v6538
        %v6855 = vpop.xlane.xlu0 %6854
        %6856 = vadd.xlane.f32.xlu0 %v6539
        %v6857 = vpop.xlane.xlu0 %6856
        %6858 = vadd.xlane.f32.xlu0 %v6540
        %v6859 = vpop.xlane.xlu0 %6858
        %6860 = vadd.xlane.f32.xlu0 %v6541
        %v6861 = vpop.xlane.xlu0 %6860
        %6862 = vadd.xlane.f32.xlu0 %v6542
        %v6863 = vpop.xlane.xlu0 %6862
        %6864 = vadd.xlane.f32.xlu0 %v6543
        %v6865 = vpop.xlane.xlu0 %6864
        %6866 = vadd.xlane.f32.xlu0 %v6544
        %v6867 = vpop.xlane.xlu0 %6866
        %6868 = vadd.xlane.f32.xlu0 %v6545
        %v6869 = vpop.xlane.xlu0 %6868
        %6870 = vadd.xlane.f32.xlu0 %v6546
        %v6871 = vpop.xlane.xlu0 %6870
        %6872 = vadd.xlane.f32.xlu0 %v6547
        %v6873 = vpop.xlane.xlu0 %6872
        %6874 = vadd.xlane.f32.xlu0 %v6548
        %v6875 = vpop.xlane.xlu0 %6874
        %6876 = vadd.xlane.f32.xlu0 %v6549
        %v6877 = vpop.xlane.xlu0 %6876
        %6878 = vadd.xlane.f32.xlu0 %v6550
        %v6879 = vpop.xlane.xlu0 %6878
        %6880 = vadd.xlane.f32.xlu0 %v6551
        %v6881 = vpop.xlane.xlu0 %6880
        %6882 = vadd.xlane.f32.xlu0 %v6552
        %v6883 = vpop.xlane.xlu0 %6882
        %6884 = vadd.xlane.f32.xlu0 %v6553
        %v6885 = vpop.xlane.xlu0 %6884
        %6886 = vadd.xlane.f32.xlu0 %v6554
        %v6887 = vpop.xlane.xlu0 %6886
        %6888 = vadd.xlane.f32.xlu0 %v6555
        %v6889 = vpop.xlane.xlu0 %6888
        %6890 = vadd.xlane.f32.xlu0 %v6556
        %v6891 = vpop.xlane.xlu0 %6890
        %6892 = vadd.xlane.f32.xlu0 %v6557
        %v6893 = vpop.xlane.xlu0 %6892
        %6894 = vadd.xlane.f32.xlu0 %v6558
        %v6895 = vpop.xlane.xlu0 %6894
        %6896 = vadd.xlane.f32.xlu0 %v6559
        %v6897 = vpop.xlane.xlu0 %6896
        %6898 = vadd.xlane.f32.xlu0 %v6560
        %v6899 = vpop.xlane.xlu0 %6898
        %6900 = vadd.xlane.f32.xlu0 %v6561
        %v6901 = vpop.xlane.xlu0 %6900
        %6902 = vadd.xlane.f32.xlu0 %v6562
        %v6903 = vpop.xlane.xlu0 %6902
        %6904 = vadd.xlane.f32.xlu0 %v6563
        %v6905 = vpop.xlane.xlu0 %6904
        %6906 = vadd.xlane.f32.xlu0 %v6564
        %v6907 = vpop.xlane.xlu0 %6906
        %6908 = vadd.xlane.f32.xlu0 %v6565
        %v6909 = vpop.xlane.xlu0 %6908
        %6910 = vadd.xlane.f32.xlu0 %v6566
        %v6911 = vpop.xlane.xlu0 %6910
        %6912 = vadd.xlane.f32.xlu0 %v6567
        %v6913 = vpop.xlane.xlu0 %6912
        %6914 = vadd.xlane.f32.xlu0 %v6568
        %v6915 = vpop.xlane.xlu0 %6914
        %6916 = vadd.xlane.f32.xlu0 %v6569
        %v6917 = vpop.xlane.xlu0 %6916
        %6918 = vadd.xlane.f32.xlu0 %v6570
        %v6919 = vpop.xlane.xlu0 %6918
        %6920 = vadd.xlane.f32.xlu0 %v6571
        %v6921 = vpop.xlane.xlu0 %6920
        %6922 = vadd.xlane.f32.xlu0 %v6572
        %v6923 = vpop.xlane.xlu0 %6922
        %6924 = vadd.xlane.f32.xlu0 %v6573
        %v6925 = vpop.xlane.xlu0 %6924
        %6926 = vadd.xlane.f32.xlu0 %v6574
        %v6927 = vpop.xlane.xlu0 %6926
        %6928 = vadd.xlane.f32.xlu0 %v6575
        %v6929 = vpop.xlane.xlu0 %6928
        %6930 = vadd.xlane.f32.xlu0 %v6576
        %v6931 = vpop.xlane.xlu0 %6930
        %6932 = vadd.xlane.f32.xlu0 %v6577
        %v6933 = vpop.xlane.xlu0 %6932
        %6934 = vadd.xlane.f32.xlu0 %v6578
        %v6935 = vpop.xlane.xlu0 %6934
        %6936 = vadd.xlane.f32.xlu0 %v6579
        %v6937 = vpop.xlane.xlu0 %6936
        %6938 = vadd.xlane.f32.xlu0 %v6580
        %v6939 = vpop.xlane.xlu0 %6938
        %6940 = vadd.xlane.f32.xlu0 %v6581
        %v6941 = vpop.xlane.xlu0 %6940
        %6942 = vadd.xlane.f32.xlu0 %v6582
        %v6943 = vpop.xlane.xlu0 %6942
        %6944 = vadd.xlane.f32.xlu0 %v6583
        %v6945 = vpop.xlane.xlu0 %6944
        %6946 = vadd.xlane.f32.xlu0 %v6584
        %v6947 = vpop.xlane.xlu0 %6946
        %6948 = vadd.xlane.f32.xlu0 %v6585
        %v6949 = vpop.xlane.xlu0 %6948
        %6950 = vadd.xlane.f32.xlu0 %v6586
        %v6951 = vpop.xlane.xlu0 %6950
        %6952 = vadd.xlane.f32.xlu0 %v6587
        %v6953 = vpop.xlane.xlu0 %6952
        %6954 = vadd.xlane.f32.xlu0 %v6588
        %v6955 = vpop.xlane.xlu0 %6954
        %6956 = vadd.xlane.f32.xlu0 %v6589
        %v6957 = vpop.xlane.xlu0 %6956
        %6958 = vadd.xlane.f32.xlu0 %v6590
        %v6959 = vpop.xlane.xlu0 %6958
        %6960 = vadd.xlane.f32.xlu0 %v6591
        %v6961 = vpop.xlane.xlu0 %6960
        %6962 = vadd.xlane.f32.xlu0 %v6592
        %v6963 = vpop.xlane.xlu0 %6962
        %6964 = vadd.xlane.f32.xlu0 %v6593
        %v6965 = vpop.xlane.xlu0 %6964
        %6966 = vadd.xlane.f32.xlu0 %v6594
        %v6967 = vpop.xlane.xlu0 %6966
        %6968 = vadd.xlane.f32.xlu0 %v6595
        %v6969 = vpop.xlane.xlu0 %6968
        %6970 = vadd.xlane.f32.xlu0 %v6596
        %v6971 = vpop.xlane.xlu0 %6970
        %6972 = vadd.xlane.f32.xlu0 %v6597
        %v6973 = vpop.xlane.xlu0 %6972
        %6974 = vadd.xlane.f32.xlu0 %v6598
        %v6975 = vpop.xlane.xlu0 %6974
        %6976 = vadd.xlane.f32.xlu0 %v6599
        %v6977 = vpop.xlane.xlu0 %6976
        %6978 = vadd.xlane.f32.xlu0 %v6600
        %v6979 = vpop.xlane.xlu0 %6978
        %6980 = vadd.xlane.f32.xlu0 %v6601
        %v6981 = vpop.xlane.xlu0 %6980
        %6982 = vadd.xlane.f32.xlu0 %v6602
        %v6983 = vpop.xlane.xlu0 %6982
        %6984 = vadd.xlane.f32.xlu0 %v6603
        %v6985 = vpop.xlane.xlu0 %6984
        %6986 = vadd.xlane.f32.xlu0 %v6604
        %v6987 = vpop.xlane.xlu0 %6986
        %6988 = vadd.xlane.f32.xlu0 %v6605
        %v6989 = vpop.xlane.xlu0 %6988
        %6990 = vadd.xlane.f32.xlu0 %v6606
        %v6991 = vpop.xlane.xlu0 %6990
        %6992 = vadd.xlane.f32.xlu0 %v6607
        %v6993 = vpop.xlane.xlu0 %6992
        %6994 = vadd.xlane.f32.xlu0 %v6608
        %v6995 = vpop.xlane.xlu0 %6994
        %6996 = vadd.xlane.f32.xlu0 %v6609
        %v6997 = vpop.xlane.xlu0 %6996
        %6998 = vadd.xlane.f32.xlu0 %v6610
        %v6999 = vpop.xlane.xlu0 %6998
        %7000 = vadd.xlane.f32.xlu0 %v6611
        %v7001 = vpop.xlane.xlu0 %7000
        %7002 = vadd.xlane.f32.xlu0 %v6612
        %v7003 = vpop.xlane.xlu0 %7002
        %7004 = vadd.xlane.f32.xlu0 %v6613
        %v7005 = vpop.xlane.xlu0 %7004
        %7006 = vadd.xlane.f32.xlu0 %v6614
        %v7007 = vpop.xlane.xlu0 %7006
        %7008 = vadd.xlane.f32.xlu0 %v6615
        %v7009 = vpop.xlane.xlu0 %7008
        %7010 = vadd.xlane.f32.xlu0 %v6616
        %v7011 = vpop.xlane.xlu0 %7010
        %7012 = vadd.xlane.f32.xlu0 %v6617
        %v7013 = vpop.xlane.xlu0 %7012
        %7014 = vadd.xlane.f32.xlu0 %v6618
        %v7015 = vpop.xlane.xlu0 %7014
        %7016 = vadd.xlane.f32.xlu0 %v6619
        %v7017 = vpop.xlane.xlu0 %7016
        %7018 = vadd.xlane.f32.xlu0 %v6620
        %v7019 = vpop.xlane.xlu0 %7018
        %7020 = vadd.xlane.f32.xlu0 %v6621
        %v7021 = vpop.xlane.xlu0 %7020
        %7022 = vadd.xlane.f32.xlu0 %v6622
        %v7023 = vpop.xlane.xlu0 %7022
        %7024 = vadd.xlane.f32.xlu0 %v6623
        %v7025 = vpop.xlane.xlu0 %7024
        %7026 = vadd.xlane.f32.xlu0 %v6624
        %v7027 = vpop.xlane.xlu0 %7026
        %7028 = vadd.xlane.f32.xlu0 %v6625
        %v7029 = vpop.xlane.xlu0 %7028
        %7030 = vadd.xlane.f32.xlu0 %v6626
        %v7031 = vpop.xlane.xlu0 %7030
        %7032 = vadd.xlane.f32.xlu0 %v6627
        %v7033 = vpop.xlane.xlu0 %7032
        %7034 = vadd.xlane.f32.xlu0 %v6628
        %v7035 = vpop.xlane.xlu0 %7034
        %7036 = vadd.xlane.f32.xlu0 %v6629
        %v7037 = vpop.xlane.xlu0 %7036
        %7038 = vadd.xlane.f32.xlu0 %v6630
        %v7039 = vpop.xlane.xlu0 %7038
        %7040 = vadd.xlane.f32.xlu0 %v6631
        %v7041 = vpop.xlane.xlu0 %7040
        %7042 = vadd.xlane.f32.xlu0 %v6632
        %v7043 = vpop.xlane.xlu0 %7042
        %7044 = vadd.xlane.f32.xlu0 %v6633
        %v7045 = vpop.xlane.xlu0 %7044
        %7046 = vadd.xlane.f32.xlu0 %v6634
        %v7047 = vpop.xlane.xlu0 %7046
        %7048 = vadd.xlane.f32.xlu0 %v6635
        %v7049 = vpop.xlane.xlu0 %7048
        %7050 = vadd.xlane.f32.xlu0 %v6636
        %v7051 = vpop.xlane.xlu0 %7050
        %7052 = vadd.xlane.f32.xlu0 %v6637
        %v7053 = vpop.xlane.xlu0 %7052
        %7054 = vadd.xlane.f32.xlu0 %v6638
        %v7055 = vpop.xlane.xlu0 %7054
        %7056 = vadd.xlane.f32.xlu0 %v6639
        %v7057 = vpop.xlane.xlu0 %7056
        %7058 = vadd.xlane.f32.xlu0 %v6640
        %v7059 = vpop.xlane.xlu0 %7058
        %7060 = vadd.xlane.f32.xlu0 %v6641
        %v7061 = vpop.xlane.xlu0 %7060
        %7062 = vadd.xlane.f32.xlu0 %v6642
        %v7063 = vpop.xlane.xlu0 %7062
        %7064 = vadd.xlane.f32.xlu0 %v6643
        %v7065 = vpop.xlane.xlu0 %7064
        %7066 = vadd.xlane.f32.xlu0 %v6644
        %v7067 = vpop.xlane.xlu0 %7066
        %7068 = vadd.xlane.f32.xlu0 %v6645
        %v7069 = vpop.xlane.xlu0 %7068
        %7070 = vadd.xlane.f32.xlu0 %v6646
        %v7071 = vpop.xlane.xlu0 %7070
        %7072 = vadd.xlane.f32.xlu0 %v6647
        %v7073 = vpop.xlane.xlu0 %7072
        %7074 = vadd.xlane.f32.xlu0 %v6648
        %v7075 = vpop.xlane.xlu0 %7074
        %7076 = vadd.xlane.f32.xlu0 %v6649
        %v7077 = vpop.xlane.xlu0 %7076
        %7078 = vadd.xlane.f32.xlu0 %v6650
        %v7079 = vpop.xlane.xlu0 %7078
        %7080 = vadd.xlane.f32.xlu0 %v6651
        %v7081 = vpop.xlane.xlu0 %7080
        %7082 = vadd.xlane.f32.xlu0 %v6652
        %v7083 = vpop.xlane.xlu0 %7082
        %7084 = vadd.xlane.f32.xlu0 %v6653
        %v7085 = vpop.xlane.xlu0 %7084
        %7086 = vadd.xlane.f32.xlu0 %v6654
        %v7087 = vpop.xlane.xlu0 %7086
        %7088 = vadd.xlane.f32.xlu0 %v6655
        %v7089 = vpop.xlane.xlu0 %7088
        %7090 = vadd.xlane.f32.xlu0 %v6656
        %v7091 = vpop.xlane.xlu0 %7090
        %7092 = vadd.xlane.f32.xlu0 %v6657
        %v7093 = vpop.xlane.xlu0 %7092
        %7094 = vadd.xlane.f32.xlu0 %v6658
        %v7095 = vpop.xlane.xlu0 %7094
        %7096 = vadd.xlane.f32.xlu0 %v6659
        %v7097 = vpop.xlane.xlu0 %7096
        %7098 = vadd.xlane.f32.xlu0 %v6660
        %v7099 = vpop.xlane.xlu0 %7098
        %7100 = vadd.xlane.f32.xlu0 %v6661
        %v7101 = vpop.xlane.xlu0 %7100
        %7102 = vadd.xlane.f32.xlu0 %v6662
        %v7103 = vpop.xlane.xlu0 %7102
        %7104 = vadd.xlane.f32.xlu0 %v6663
        %v7105 = vpop.xlane.xlu0 %7104
        %7106 = vadd.xlane.f32.xlu0 %v6664
        %v7107 = vpop.xlane.xlu0 %7106
        %7108 = vadd.xlane.f32.xlu0 %v6665
        %v7109 = vpop.xlane.xlu0 %7108
        %7110 = vadd.xlane.f32.xlu0 %v6666
        %v7111 = vpop.xlane.xlu0 %7110
        %7112 = vadd.xlane.f32.xlu0 %v6667
        %v7113 = vpop.xlane.xlu0 %7112
        %7114 = vadd.xlane.f32.xlu0 %v6668
        %v7115 = vpop.xlane.xlu0 %7114
        %7116 = vadd.xlane.f32.xlu0 %v6669
        %v7117 = vpop.xlane.xlu0 %7116
        %7118 = vadd.xlane.f32.xlu0 %v6670
        %v7119 = vpop.xlane.xlu0 %7118
        %7120 = vadd.xlane.f32.xlu0 %v6671
        %v7121 = vpop.xlane.xlu0 %7120
        %7122 = vadd.xlane.f32.xlu0 %v6672
        %v7123 = vpop.xlane.xlu0 %7122
        %7124 = vadd.xlane.f32.xlu0 %v6673
        %v7125 = vpop.xlane.xlu0 %7124
        %7126 = vadd.xlane.f32.xlu0 %v6674
        %v7127 = vpop.xlane.xlu0 %7126
        %7128 = vadd.xlane.f32.xlu0 %v6675
        %v7129 = vpop.xlane.xlu0 %7128
        %7130 = vadd.xlane.f32.xlu0 %v6676
        %v7131 = vpop.xlane.xlu0 %7130
        %7132 = vadd.xlane.f32.xlu0 %v6677
        %v7133 = vpop.xlane.xlu0 %7132
        %7134 = vadd.xlane.f32.xlu0 %v6678
        %v7135 = vpop.xlane.xlu0 %7134
        %7136 = vadd.xlane.f32.xlu0 %v6679
        %v7137 = vpop.xlane.xlu0 %7136
        %7138 = vadd.xlane.f32.xlu0 %v6680
        %v7139 = vpop.xlane.xlu0 %7138
        %7140 = vadd.xlane.f32.xlu0 %v6681
        %v7141 = vpop.xlane.xlu0 %7140
        %7142 = vadd.xlane.f32.xlu0 %v6682
        %v7143 = vpop.xlane.xlu0 %7142
        %7144 = vadd.xlane.f32.xlu0 %v6683
        %v7145 = vpop.xlane.xlu0 %7144
        %7146 = vadd.xlane.f32.xlu0 %v6684
        %v7147 = vpop.xlane.xlu0 %7146
        %7148 = vadd.xlane.f32.xlu0 %v6685
        %v7149 = vpop.xlane.xlu0 %7148
        %7150 = vadd.xlane.f32.xlu0 %v6686
        %v7151 = vpop.xlane.xlu0 %7150
        %7152 = vadd.xlane.f32.xlu0 %v6687
        %v7153 = vpop.xlane.xlu0 %7152
        %7154 = vadd.xlane.f32.xlu0 %v6688
        %v7155 = vpop.xlane.xlu0 %7154
        %7156 = vadd.xlane.f32.xlu0 %v6689
        %v7157 = vpop.xlane.xlu0 %7156
        %7158 = vadd.xlane.f32.xlu0 %v6690
        %v7159 = vpop.xlane.xlu0 %7158
        %7160 = vadd.xlane.f32.xlu0 %v6691
        %v7161 = vpop.xlane.xlu0 %7160
        %7162 = vadd.xlane.f32.xlu0 %v6692
        %v7163 = vpop.xlane.xlu0 %7162
        %7164 = vadd.xlane.f32.xlu0 %v6693
        %v7165 = vpop.xlane.xlu0 %7164
        %7166 = vadd.xlane.f32.xlu0 %v6694
        %v7167 = vpop.xlane.xlu0 %7166
        %7168 = vadd.xlane.f32.xlu0 %v6695
        %v7169 = vpop.xlane.xlu0 %7168
        %7170 = vadd.xlane.f32.xlu0 %v6696
        %v7171 = vpop.xlane.xlu0 %7170
        %7172 = vadd.xlane.f32.xlu0 %v6697
        %v7173 = vpop.xlane.xlu0 %7172
        %7174 = vadd.xlane.f32.xlu0 %v6698
        %v7175 = vpop.xlane.xlu0 %7174
        %7176 = vadd.xlane.f32.xlu0 %v6699
        %v7177 = vpop.xlane.xlu0 %7176
        %7178 = vadd.xlane.f32.xlu0 %v6700
        %v7179 = vpop.xlane.xlu0 %7178
        %7180 = vadd.xlane.f32.xlu0 %v6701
        %v7181 = vpop.xlane.xlu0 %7180
        %7182 = vadd.xlane.f32.xlu0 %v6702
        %v7183 = vpop.xlane.xlu0 %7182
        %7184 = vadd.xlane.f32.xlu0 %v6703
        %v7185 = vpop.xlane.xlu0 %7184
        %7186 = vadd.xlane.f32.xlu0 %v6704
        %v7187 = vpop.xlane.xlu0 %7186
        %7188 = vadd.xlane.f32.xlu0 %v6705
        %v7189 = vpop.xlane.xlu0 %7188
        %7190 = vadd.xlane.f32.xlu0 %v6706
        %v7191 = vpop.xlane.xlu0 %7190
        %7192 = vadd.xlane.f32.xlu0 %v6707
        %v7193 = vpop.xlane.xlu0 %7192
        %7194 = vadd.xlane.f32.xlu0 %v6708
        %v7195 = vpop.xlane.xlu0 %7194
        %7196 = vadd.xlane.f32.xlu0 %v6709
        %v7197 = vpop.xlane.xlu0 %7196
        %7198 = vadd.xlane.f32.xlu0 %v6710
        %v7199 = vpop.xlane.xlu0 %7198
        %7200 = vadd.xlane.f32.xlu0 %v6711
        %v7201 = vpop.xlane.xlu0 %7200
        %7202 = vadd.xlane.f32.xlu0 %v6712
        %v7203 = vpop.xlane.xlu0 %7202
        %7204 = vadd.xlane.f32.xlu0 %v6713
        %v7205 = vpop.xlane.xlu0 %7204
        %7206 = vadd.xlane.f32.xlu0 %v6714
        %v7207 = vpop.xlane.xlu0 %7206
        %7208 = vadd.xlane.f32.xlu0 %v6715
        %v7209 = vpop.xlane.xlu0 %7208
        %7210 = vadd.xlane.f32.xlu0 %v6716
        %v7211 = vpop.xlane.xlu0 %7210
        %7212 = vadd.xlane.f32.xlu0 %v6717
        %v7213 = vpop.xlane.xlu0 %7212
        %7214 = vadd.xlane.f32.xlu0 %v6718
        %v7215 = vpop.xlane.xlu0 %7214
        %7216 = vadd.xlane.f32.xlu0 %v6719
        %v7217 = vpop.xlane.xlu0 %7216
        %7218 = vadd.xlane.f32.xlu0 %v6720
        %v7219 = vpop.xlane.xlu0 %7218
        %7220 = vadd.xlane.f32.xlu0 %v6721
        %v7221 = vpop.xlane.xlu0 %7220
        %7222 = vadd.xlane.f32.xlu0 %v6722
        %v7223 = vpop.xlane.xlu0 %7222
        %7224 = vadd.xlane.f32.xlu0 %v6723
        %v7225 = vpop.xlane.xlu0 %7224
        %7226 = vadd.xlane.f32.xlu0 %v6724
        %v7227 = vpop.xlane.xlu0 %7226
        %7228 = vadd.xlane.f32.xlu0 %v6725
        %v7229 = vpop.xlane.xlu0 %7228
        %7230 = vadd.xlane.f32.xlu0 %v6726
        %v7231 = vpop.xlane.xlu0 %7230
        %7232 = vadd.xlane.f32.xlu0 %v6727
        %v7233 = vpop.xlane.xlu0 %7232
        %7234 = vadd.xlane.f32.xlu0 %v6728
        %v7235 = vpop.xlane.xlu0 %7234
        %7236 = vadd.xlane.f32.xlu0 %v6729
        %v7237 = vpop.xlane.xlu0 %7236
        %7238 = vadd.xlane.f32.xlu0 %v6730
        %v7239 = vpop.xlane.xlu0 %7238
        %7240 = vadd.xlane.f32.xlu0 %v6731
        %v7241 = vpop.xlane.xlu0 %7240
        %7242 = vadd.xlane.f32.xlu0 %v6732
        %v7243 = vpop.xlane.xlu0 %7242
        %7244 = vadd.xlane.f32.xlu0 %v6733
        %v7245 = vpop.xlane.xlu0 %7244
        %v7246 = vsub.f32 %v2618, %v6735
        %v7247 = vsub.f32 %v2620, %v6737
        %v7248 = vsub.f32 %v2622, %v6739
        %v7249 = vsub.f32 %v2624, %v6741
        %v7250 = vsub.f32 %v2626, %v6743
        %v7251 = vsub.f32 %v2628, %v6745
        %v7252 = vsub.f32 %v2630, %v6747
        %v7253 = vsub.f32 %v2632, %v6749
        %v7254 = vsub.f32 %v2634, %v6751
        %v7255 = vsub.f32 %v2636, %v6753
        %v7256 = vsub.f32 %v2638, %v6755
        %v7257 = vsub.f32 %v2640, %v6757
        %v7258 = vsub.f32 %v2642, %v6759
        %v7259 = vsub.f32 %v2644, %v6761
        %v7260 = vsub.f32 %v2646, %v6763
        %v7261 = vsub.f32 %v2648, %v6765
        %v7262 = vsub.f32 %v2650, %v6767
        %v7263 = vsub.f32 %v2652, %v6769
        %v7264 = vsub.f32 %v2654, %v6771
        %v7265 = vsub.f32 %v2656, %v6773
        %v7266 = vsub.f32 %v2658, %v6775
        %v7267 = vsub.f32 %v2660, %v6777
        %v7268 = vsub.f32 %v2662, %v6779
        %v7269 = vsub.f32 %v2664, %v6781
        %v7270 = vsub.f32 %v2666, %v6783
        %v7271 = vsub.f32 %v2668, %v6785
        %v7272 = vsub.f32 %v2670, %v6787
        %v7273 = vsub.f32 %v2672, %v6789
        %v7274 = vsub.f32 %v2674, %v6791
        %v7275 = vsub.f32 %v2676, %v6793
        %v7276 = vsub.f32 %v2678, %v6795
        %v7277 = vsub.f32 %v2680, %v6797
        %v7278 = vsub.f32 %v2682, %v6799
        %v7279 = vsub.f32 %v2684, %v6801
        %v7280 = vsub.f32 %v2686, %v6803
        %v7281 = vsub.f32 %v2688, %v6805
        %v7282 = vsub.f32 %v2690, %v6807
        %v7283 = vsub.f32 %v2692, %v6809
        %v7284 = vsub.f32 %v2694, %v6811
        %v7285 = vsub.f32 %v2696, %v6813
        %v7286 = vsub.f32 %v2698, %v6815
        %v7287 = vsub.f32 %v2700, %v6817
        %v7288 = vsub.f32 %v2702, %v6819
        %v7289 = vsub.f32 %v2704, %v6821
        %v7290 = vsub.f32 %v2706, %v6823
        %v7291 = vsub.f32 %v2708, %v6825
        %v7292 = vsub.f32 %v2710, %v6827
        %v7293 = vsub.f32 %v2712, %v6829
        %v7294 = vsub.f32 %v2714, %v6831
        %v7295 = vsub.f32 %v2716, %v6833
        %v7296 = vsub.f32 %v2718, %v6835
        %v7297 = vsub.f32 %v2720, %v6837
        %v7298 = vsub.f32 %v2722, %v6839
        %v7299 = vsub.f32 %v2724, %v6841
        %v7300 = vsub.f32 %v2726, %v6843
        %v7301 = vsub.f32 %v2728, %v6845
        %v7302 = vsub.f32 %v2730, %v6847
        %v7303 = vsub.f32 %v2732, %v6849
        %v7304 = vsub.f32 %v2734, %v6851
        %v7305 = vsub.f32 %v2736, %v6853
        %v7306 = vsub.f32 %v2738, %v6855
        %v7307 = vsub.f32 %v2740, %v6857
        %v7308 = vsub.f32 %v2742, %v6859
        %v7309 = vsub.f32 %v2744, %v6861
        %v7310 = vsub.f32 %v2746, %v6863
        %v7311 = vsub.f32 %v2748, %v6865
        %v7312 = vsub.f32 %v2750, %v6867
        %v7313 = vsub.f32 %v2752, %v6869
        %v7314 = vsub.f32 %v2754, %v6871
        %v7315 = vsub.f32 %v2756, %v6873
        %v7316 = vsub.f32 %v2758, %v6875
        %v7317 = vsub.f32 %v2760, %v6877
        %v7318 = vsub.f32 %v2762, %v6879
        %v7319 = vsub.f32 %v2764, %v6881
        %v7320 = vsub.f32 %v2766, %v6883
        %v7321 = vsub.f32 %v2768, %v6885
        %v7322 = vsub.f32 %v2770, %v6887
        %v7323 = vsub.f32 %v2772, %v6889
        %v7324 = vsub.f32 %v2774, %v6891
        %v7325 = vsub.f32 %v2776, %v6893
        %v7326 = vsub.f32 %v2778, %v6895
        %v7327 = vsub.f32 %v2780, %v6897
        %v7328 = vsub.f32 %v2782, %v6899
        %v7329 = vsub.f32 %v2784, %v6901
        %v7330 = vsub.f32 %v2786, %v6903
        %v7331 = vsub.f32 %v2788, %v6905
        %v7332 = vsub.f32 %v2790, %v6907
        %v7333 = vsub.f32 %v2792, %v6909
        %v7334 = vsub.f32 %v2794, %v6911
        %v7335 = vsub.f32 %v2796, %v6913
        %v7336 = vsub.f32 %v2798, %v6915
        %v7337 = vsub.f32 %v2800, %v6917
        %v7338 = vsub.f32 %v2802, %v6919
        %v7339 = vsub.f32 %v2804, %v6921
        %v7340 = vsub.f32 %v2806, %v6923
        %v7341 = vsub.f32 %v2808, %v6925
        %v7342 = vsub.f32 %v2810, %v6927
        %v7343 = vsub.f32 %v2812, %v6929
        %v7344 = vsub.f32 %v2814, %v6931
        %v7345 = vsub.f32 %v2816, %v6933
        %v7346 = vsub.f32 %v2818, %v6935
        %v7347 = vsub.f32 %v2820, %v6937
        %v7348 = vsub.f32 %v2822, %v6939
        %v7349 = vsub.f32 %v2824, %v6941
        %v7350 = vsub.f32 %v2826, %v6943
        %v7351 = vsub.f32 %v2828, %v6945
        %v7352 = vsub.f32 %v2830, %v6947
        %v7353 = vsub.f32 %v2832, %v6949
        %v7354 = vsub.f32 %v2834, %v6951
        %v7355 = vsub.f32 %v2836, %v6953
        %v7356 = vsub.f32 %v2838, %v6955
        %v7357 = vsub.f32 %v2840, %v6957
        %v7358 = vsub.f32 %v2842, %v6959
        %v7359 = vsub.f32 %v2844, %v6961
        %v7360 = vsub.f32 %v2846, %v6963
        %v7361 = vsub.f32 %v2848, %v6965
        %v7362 = vsub.f32 %v2850, %v6967
        %v7363 = vsub.f32 %v2852, %v6969
        %v7364 = vsub.f32 %v2854, %v6971
        %v7365 = vsub.f32 %v2856, %v6973
        %v7366 = vsub.f32 %v2858, %v6975
        %v7367 = vsub.f32 %v2860, %v6977
        %v7368 = vsub.f32 %v2862, %v6979
        %v7369 = vsub.f32 %v2864, %v6981
        %v7370 = vsub.f32 %v2866, %v6983
        %v7371 = vsub.f32 %v2868, %v6985
        %v7372 = vsub.f32 %v2870, %v6987
        %v7373 = vsub.f32 %v2872, %v6989
        %v7374 = vsub.f32 %v2874, %v6991
        %v7375 = vsub.f32 %v2876, %v6993
        %v7376 = vsub.f32 %v2878, %v6995
        %v7377 = vsub.f32 %v2880, %v6997
        %v7378 = vsub.f32 %v2882, %v6999
        %v7379 = vsub.f32 %v2884, %v7001
        %v7380 = vsub.f32 %v2886, %v7003
        %v7381 = vsub.f32 %v2888, %v7005
        %v7382 = vsub.f32 %v2890, %v7007
        %v7383 = vsub.f32 %v2892, %v7009
        %v7384 = vsub.f32 %v2894, %v7011
        %v7385 = vsub.f32 %v2896, %v7013
        %v7386 = vsub.f32 %v2898, %v7015
        %v7387 = vsub.f32 %v2900, %v7017
        %v7388 = vsub.f32 %v2902, %v7019
        %v7389 = vsub.f32 %v2904, %v7021
        %v7390 = vsub.f32 %v2906, %v7023
        %v7391 = vsub.f32 %v2908, %v7025
        %v7392 = vsub.f32 %v2910, %v7027
        %v7393 = vsub.f32 %v2912, %v7029
        %v7394 = vsub.f32 %v2914, %v7031
        %v7395 = vsub.f32 %v2916, %v7033
        %v7396 = vsub.f32 %v2918, %v7035
        %v7397 = vsub.f32 %v2920, %v7037
        %v7398 = vsub.f32 %v2922, %v7039
        %v7399 = vsub.f32 %v2924, %v7041
        %v7400 = vsub.f32 %v2926, %v7043
        %v7401 = vsub.f32 %v2928, %v7045
        %v7402 = vsub.f32 %v2930, %v7047
        %v7403 = vsub.f32 %v2932, %v7049
        %v7404 = vsub.f32 %v2934, %v7051
        %v7405 = vsub.f32 %v2936, %v7053
        %v7406 = vsub.f32 %v2938, %v7055
        %v7407 = vsub.f32 %v2940, %v7057
        %v7408 = vsub.f32 %v2942, %v7059
        %v7409 = vsub.f32 %v2944, %v7061
        %v7410 = vsub.f32 %v2946, %v7063
        %v7411 = vsub.f32 %v2948, %v7065
        %v7412 = vsub.f32 %v2950, %v7067
        %v7413 = vsub.f32 %v2952, %v7069
        %v7414 = vsub.f32 %v2954, %v7071
        %v7415 = vsub.f32 %v2956, %v7073
        %v7416 = vsub.f32 %v2958, %v7075
        %v7417 = vsub.f32 %v2960, %v7077
        %v7418 = vsub.f32 %v2962, %v7079
        %v7419 = vsub.f32 %v2964, %v7081
        %v7420 = vsub.f32 %v2966, %v7083
        %v7421 = vsub.f32 %v2968, %v7085
        %v7422 = vsub.f32 %v2970, %v7087
        %v7423 = vsub.f32 %v2972, %v7089
        %v7424 = vsub.f32 %v2974, %v7091
        %v7425 = vsub.f32 %v2976, %v7093
        %v7426 = vsub.f32 %v2978, %v7095
        %v7427 = vsub.f32 %v2980, %v7097
        %v7428 = vsub.f32 %v2982, %v7099
        %v7429 = vsub.f32 %v2984, %v7101
        %v7430 = vsub.f32 %v2986, %v7103
        %v7431 = vsub.f32 %v2988, %v7105
        %v7432 = vsub.f32 %v2990, %v7107
        %v7433 = vsub.f32 %v2992, %v7109
        %v7434 = vsub.f32 %v2994, %v7111
        %v7435 = vsub.f32 %v2996, %v7113
        %v7436 = vsub.f32 %v2998, %v7115
        %v7437 = vsub.f32 %v3000, %v7117
        %v7438 = vsub.f32 %v3002, %v7119
        %v7439 = vsub.f32 %v3004, %v7121
        %v7440 = vsub.f32 %v3006, %v7123
        %v7441 = vsub.f32 %v3008, %v7125
        %v7442 = vsub.f32 %v3010, %v7127
        %v7443 = vsub.f32 %v3012, %v7129
        %v7444 = vsub.f32 %v3014, %v7131
        %v7445 = vsub.f32 %v3016, %v7133
        %v7446 = vsub.f32 %v3018, %v7135
        %v7447 = vsub.f32 %v3020, %v7137
        %v7448 = vsub.f32 %v3022, %v7139
        %v7449 = vsub.f32 %v3024, %v7141
        %v7450 = vsub.f32 %v3026, %v7143
        %v7451 = vsub.f32 %v3028, %v7145
        %v7452 = vsub.f32 %v3030, %v7147
        %v7453 = vsub.f32 %v3032, %v7149
        %v7454 = vsub.f32 %v3034, %v7151
        %v7455 = vsub.f32 %v3036, %v7153
        %v7456 = vsub.f32 %v3038, %v7155
        %v7457 = vsub.f32 %v3040, %v7157
        %v7458 = vsub.f32 %v3042, %v7159
        %v7459 = vsub.f32 %v3044, %v7161
        %v7460 = vsub.f32 %v3046, %v7163
        %v7461 = vsub.f32 %v3048, %v7165
        %v7462 = vsub.f32 %v3050, %v7167
        %v7463 = vsub.f32 %v3052, %v7169
        %v7464 = vsub.f32 %v3054, %v7171
        %v7465 = vsub.f32 %v3056, %v7173
        %v7466 = vsub.f32 %v3058, %v7175
        %v7467 = vsub.f32 %v3060, %v7177
        %v7468 = vsub.f32 %v3062, %v7179
        %v7469 = vsub.f32 %v3064, %v7181
        %v7470 = vsub.f32 %v3066, %v7183
        %v7471 = vsub.f32 %v3068, %v7185
        %v7472 = vsub.f32 %v3070, %v7187
        %v7473 = vsub.f32 %v3072, %v7189
        %v7474 = vsub.f32 %v3074, %v7191
        %v7475 = vsub.f32 %v3076, %v7193
        %v7476 = vsub.f32 %v3078, %v7195
        %v7477 = vsub.f32 %v3080, %v7197
        %v7478 = vsub.f32 %v3082, %v7199
        %v7479 = vsub.f32 %v3084, %v7201
        %v7480 = vsub.f32 %v3086, %v7203
        %v7481 = vsub.f32 %v3088, %v7205
        %v7482 = vsub.f32 %v3090, %v7207
        %v7483 = vsub.f32 %v3092, %v7209
        %v7484 = vsub.f32 %v3094, %v7211
        %v7485 = vsub.f32 %v3096, %v7213
        %v7486 = vsub.f32 %v3098, %v7215
        %v7487 = vsub.f32 %v3100, %v7217
        %v7488 = vsub.f32 %v3102, %v7219
        %v7489 = vsub.f32 %v3104, %v7221
        %v7490 = vsub.f32 %v3106, %v7223
        %v7491 = vsub.f32 %v3108, %v7225
        %v7492 = vsub.f32 %v3110, %v7227
        %v7493 = vsub.f32 %v3112, %v7229
        %v7494 = vsub.f32 %v3114, %v7231
        %v7495 = vsub.f32 %v3116, %v7233
        %v7496 = vsub.f32 %v3118, %v7235
        %v7497 = vsub.f32 %v3120, %v7237
        %v7498 = vsub.f32 %v3122, %v7239
        %v7499 = vsub.f32 %v3124, %v7241
        %v7500 = vsub.f32 %v3126, %v7243
        %v7501 = vsub.f32 %v3128, %v7245
        %v7502 = vsub.f32 0.0, %v7246
        %v7503 = vsub.f32 0.0, %v7247
        %v7504 = vsub.f32 0.0, %v7248
        %v7505 = vsub.f32 0.0, %v7249
        %v7506 = vsub.f32 0.0, %v7250
        %v7507 = vsub.f32 0.0, %v7251
        %v7508 = vsub.f32 0.0, %v7252
        %v7509 = vsub.f32 0.0, %v7253
        %v7510 = vsub.f32 0.0, %v7254
        %v7511 = vsub.f32 0.0, %v7255
        %v7512 = vsub.f32 0.0, %v7256
        %v7513 = vsub.f32 0.0, %v7257
        %v7514 = vsub.f32 0.0, %v7258
        %v7515 = vsub.f32 0.0, %v7259
        %v7516 = vsub.f32 0.0, %v7260
        %v7517 = vsub.f32 0.0, %v7261
        %v7518 = vsub.f32 0.0, %v7262
        %v7519 = vsub.f32 0.0, %v7263
        %v7520 = vsub.f32 0.0, %v7264
        %v7521 = vsub.f32 0.0, %v7265
        %v7522 = vsub.f32 0.0, %v7266
        %v7523 = vsub.f32 0.0, %v7267
        %v7524 = vsub.f32 0.0, %v7268
        %v7525 = vsub.f32 0.0, %v7269
        %v7526 = vsub.f32 0.0, %v7270
        %v7527 = vsub.f32 0.0, %v7271
        %v7528 = vsub.f32 0.0, %v7272
        %v7529 = vsub.f32 0.0, %v7273
        %v7530 = vsub.f32 0.0, %v7274
        %v7531 = vsub.f32 0.0, %v7275
        %v7532 = vsub.f32 0.0, %v7276
        %v7533 = vsub.f32 0.0, %v7277
        %v7534 = vsub.f32 0.0, %v7278
        %v7535 = vsub.f32 0.0, %v7279
        %v7536 = vsub.f32 0.0, %v7280
        %v7537 = vsub.f32 0.0, %v7281
        %v7538 = vsub.f32 0.0, %v7282
        %v7539 = vsub.f32 0.0, %v7283
        %v7540 = vsub.f32 0.0, %v7284
        %v7541 = vsub.f32 0.0, %v7285
        %v7542 = vsub.f32 0.0, %v7286
        %v7543 = vsub.f32 0.0, %v7287
        %v7544 = vsub.f32 0.0, %v7288
        %v7545 = vsub.f32 0.0, %v7289
        %v7546 = vsub.f32 0.0, %v7290
        %v7547 = vsub.f32 0.0, %v7291
        %v7548 = vsub.f32 0.0, %v7292
        %v7549 = vsub.f32 0.0, %v7293
        %v7550 = vsub.f32 0.0, %v7294
        %v7551 = vsub.f32 0.0, %v7295
        %v7552 = vsub.f32 0.0, %v7296
        %v7553 = vsub.f32 0.0, %v7297
        %v7554 = vsub.f32 0.0, %v7298
        %v7555 = vsub.f32 0.0, %v7299
        %v7556 = vsub.f32 0.0, %v7300
        %v7557 = vsub.f32 0.0, %v7301
        %v7558 = vsub.f32 0.0, %v7302
        %v7559 = vsub.f32 0.0, %v7303
        %v7560 = vsub.f32 0.0, %v7304
        %v7561 = vsub.f32 0.0, %v7305
        %v7562 = vsub.f32 0.0, %v7306
        %v7563 = vsub.f32 0.0, %v7307
        %v7564 = vsub.f32 0.0, %v7308
        %v7565 = vsub.f32 0.0, %v7309
        %v7566 = vsub.f32 0.0, %v7310
        %v7567 = vsub.f32 0.0, %v7311
        %v7568 = vsub.f32 0.0, %v7312
        %v7569 = vsub.f32 0.0, %v7313
        %v7570 = vsub.f32 0.0, %v7314
        %v7571 = vsub.f32 0.0, %v7315
        %v7572 = vsub.f32 0.0, %v7316
        %v7573 = vsub.f32 0.0, %v7317
        %v7574 = vsub.f32 0.0, %v7318
        %v7575 = vsub.f32 0.0, %v7319
        %v7576 = vsub.f32 0.0, %v7320
        %v7577 = vsub.f32 0.0, %v7321
        %v7578 = vsub.f32 0.0, %v7322
        %v7579 = vsub.f32 0.0, %v7323
        %v7580 = vsub.f32 0.0, %v7324
        %v7581 = vsub.f32 0.0, %v7325
        %v7582 = vsub.f32 0.0, %v7326
        %v7583 = vsub.f32 0.0, %v7327
        %v7584 = vsub.f32 0.0, %v7328
        %v7585 = vsub.f32 0.0, %v7329
        %v7586 = vsub.f32 0.0, %v7330
        %v7587 = vsub.f32 0.0, %v7331
        %v7588 = vsub.f32 0.0, %v7332
        %v7589 = vsub.f32 0.0, %v7333
        %v7590 = vsub.f32 0.0, %v7334
        %v7591 = vsub.f32 0.0, %v7335
        %v7592 = vsub.f32 0.0, %v7336
        %v7593 = vsub.f32 0.0, %v7337
        %v7594 = vsub.f32 0.0, %v7338
        %v7595 = vsub.f32 0.0, %v7339
        %v7596 = vsub.f32 0.0, %v7340
        %v7597 = vsub.f32 0.0, %v7341
        %v7598 = vsub.f32 0.0, %v7342
        %v7599 = vsub.f32 0.0, %v7343
        %v7600 = vsub.f32 0.0, %v7344
        %v7601 = vsub.f32 0.0, %v7345
        %v7602 = vsub.f32 0.0, %v7346
        %v7603 = vsub.f32 0.0, %v7347
        %v7604 = vsub.f32 0.0, %v7348
        %v7605 = vsub.f32 0.0, %v7349
        %v7606 = vsub.f32 0.0, %v7350
        %v7607 = vsub.f32 0.0, %v7351
        %v7608 = vsub.f32 0.0, %v7352
        %v7609 = vsub.f32 0.0, %v7353
        %v7610 = vsub.f32 0.0, %v7354
        %v7611 = vsub.f32 0.0, %v7355
        %v7612 = vsub.f32 0.0, %v7356
        %v7613 = vsub.f32 0.0, %v7357
        %v7614 = vsub.f32 0.0, %v7358
        %v7615 = vsub.f32 0.0, %v7359
        %v7616 = vsub.f32 0.0, %v7360
        %v7617 = vsub.f32 0.0, %v7361
        %v7618 = vsub.f32 0.0, %v7362
        %v7619 = vsub.f32 0.0, %v7363
        %v7620 = vsub.f32 0.0, %v7364
        %v7621 = vsub.f32 0.0, %v7365
        %v7622 = vsub.f32 0.0, %v7366
        %v7623 = vsub.f32 0.0, %v7367
        %v7624 = vsub.f32 0.0, %v7368
        %v7625 = vsub.f32 0.0, %v7369
        %v7626 = vsub.f32 0.0, %v7370
        %v7627 = vsub.f32 0.0, %v7371
        %v7628 = vsub.f32 0.0, %v7372
        %v7629 = vsub.f32 0.0, %v7373
        %v7630 = vsub.f32 0.0, %v7374
        %v7631 = vsub.f32 0.0, %v7375
        %v7632 = vsub.f32 0.0, %v7376
        %v7633 = vsub.f32 0.0, %v7377
        %v7634 = vsub.f32 0.0, %v7378
        %v7635 = vsub.f32 0.0, %v7379
        %v7636 = vsub.f32 0.0, %v7380
        %v7637 = vsub.f32 0.0, %v7381
        %v7638 = vsub.f32 0.0, %v7382
        %v7639 = vsub.f32 0.0, %v7383
        %v7640 = vsub.f32 0.0, %v7384
        %v7641 = vsub.f32 0.0, %v7385
        %v7642 = vsub.f32 0.0, %v7386
        %v7643 = vsub.f32 0.0, %v7387
        %v7644 = vsub.f32 0.0, %v7388
        %v7645 = vsub.f32 0.0, %v7389
        %v7646 = vsub.f32 0.0, %v7390
        %v7647 = vsub.f32 0.0, %v7391
        %v7648 = vsub.f32 0.0, %v7392
        %v7649 = vsub.f32 0.0, %v7393
        %v7650 = vsub.f32 0.0, %v7394
        %v7651 = vsub.f32 0.0, %v7395
        %v7652 = vsub.f32 0.0, %v7396
        %v7653 = vsub.f32 0.0, %v7397
        %v7654 = vsub.f32 0.0, %v7398
        %v7655 = vsub.f32 0.0, %v7399
        %v7656 = vsub.f32 0.0, %v7400
        %v7657 = vsub.f32 0.0, %v7401
        %v7658 = vsub.f32 0.0, %v7402
        %v7659 = vsub.f32 0.0, %v7403
        %v7660 = vsub.f32 0.0, %v7404
        %v7661 = vsub.f32 0.0, %v7405
        %v7662 = vsub.f32 0.0, %v7406
        %v7663 = vsub.f32 0.0, %v7407
        %v7664 = vsub.f32 0.0, %v7408
        %v7665 = vsub.f32 0.0, %v7409
        %v7666 = vsub.f32 0.0, %v7410
        %v7667 = vsub.f32 0.0, %v7411
        %v7668 = vsub.f32 0.0, %v7412
        %v7669 = vsub.f32 0.0, %v7413
        %v7670 = vsub.f32 0.0, %v7414
        %v7671 = vsub.f32 0.0, %v7415
        %v7672 = vsub.f32 0.0, %v7416
        %v7673 = vsub.f32 0.0, %v7417
        %v7674 = vsub.f32 0.0, %v7418
        %v7675 = vsub.f32 0.0, %v7419
        %v7676 = vsub.f32 0.0, %v7420
        %v7677 = vsub.f32 0.0, %v7421
        %v7678 = vsub.f32 0.0, %v7422
        %v7679 = vsub.f32 0.0, %v7423
        %v7680 = vsub.f32 0.0, %v7424
        %v7681 = vsub.f32 0.0, %v7425
        %v7682 = vsub.f32 0.0, %v7426
        %v7683 = vsub.f32 0.0, %v7427
        %v7684 = vsub.f32 0.0, %v7428
        %v7685 = vsub.f32 0.0, %v7429
        %v7686 = vsub.f32 0.0, %v7430
        %v7687 = vsub.f32 0.0, %v7431
        %v7688 = vsub.f32 0.0, %v7432
        %v7689 = vsub.f32 0.0, %v7433
        %v7690 = vsub.f32 0.0, %v7434
        %v7691 = vsub.f32 0.0, %v7435
        %v7692 = vsub.f32 0.0, %v7436
        %v7693 = vsub.f32 0.0, %v7437
        %v7694 = vsub.f32 0.0, %v7438
        %v7695 = vsub.f32 0.0, %v7439
        %v7696 = vsub.f32 0.0, %v7440
        %v7697 = vsub.f32 0.0, %v7441
        %v7698 = vsub.f32 0.0, %v7442
        %v7699 = vsub.f32 0.0, %v7443
        %v7700 = vsub.f32 0.0, %v7444
        %v7701 = vsub.f32 0.0, %v7445
        %v7702 = vsub.f32 0.0, %v7446
        %v7703 = vsub.f32 0.0, %v7447
        %v7704 = vsub.f32 0.0, %v7448
        %v7705 = vsub.f32 0.0, %v7449
        %v7706 = vsub.f32 0.0, %v7450
        %v7707 = vsub.f32 0.0, %v7451
        %v7708 = vsub.f32 0.0, %v7452
        %v7709 = vsub.f32 0.0, %v7453
        %v7710 = vsub.f32 0.0, %v7454
        %v7711 = vsub.f32 0.0, %v7455
        %v7712 = vsub.f32 0.0, %v7456
        %v7713 = vsub.f32 0.0, %v7457
        %v7714 = vsub.f32 0.0, %v7458
        %v7715 = vsub.f32 0.0, %v7459
        %v7716 = vsub.f32 0.0, %v7460
        %v7717 = vsub.f32 0.0, %v7461
        %v7718 = vsub.f32 0.0, %v7462
        %v7719 = vsub.f32 0.0, %v7463
        %v7720 = vsub.f32 0.0, %v7464
        %v7721 = vsub.f32 0.0, %v7465
        %v7722 = vsub.f32 0.0, %v7466
        %v7723 = vsub.f32 0.0, %v7467
        %v7724 = vsub.f32 0.0, %v7468
        %v7725 = vsub.f32 0.0, %v7469
        %v7726 = vsub.f32 0.0, %v7470
        %v7727 = vsub.f32 0.0, %v7471
        %v7728 = vsub.f32 0.0, %v7472
        %v7729 = vsub.f32 0.0, %v7473
        %v7730 = vsub.f32 0.0, %v7474
        %v7731 = vsub.f32 0.0, %v7475
        %v7732 = vsub.f32 0.0, %v7476
        %v7733 = vsub.f32 0.0, %v7477
        %v7734 = vsub.f32 0.0, %v7478
        %v7735 = vsub.f32 0.0, %v7479
        %v7736 = vsub.f32 0.0, %v7480
        %v7737 = vsub.f32 0.0, %v7481
        %v7738 = vsub.f32 0.0, %v7482
        %v7739 = vsub.f32 0.0, %v7483
        %v7740 = vsub.f32 0.0, %v7484
        %v7741 = vsub.f32 0.0, %v7485
        %v7742 = vsub.f32 0.0, %v7486
        %v7743 = vsub.f32 0.0, %v7487
        %v7744 = vsub.f32 0.0, %v7488
        %v7745 = vsub.f32 0.0, %v7489
        %v7746 = vsub.f32 0.0, %v7490
        %v7747 = vsub.f32 0.0, %v7491
        %v7748 = vsub.f32 0.0, %v7492
        %v7749 = vsub.f32 0.0, %v7493
        %v7750 = vsub.f32 0.0, %v7494
        %v7751 = vsub.f32 0.0, %v7495
        %v7752 = vsub.f32 0.0, %v7496
        %v7753 = vsub.f32 0.0, %v7497
        %v7754 = vsub.f32 0.0, %v7498
        %v7755 = vsub.f32 0.0, %v7499
        %v7756 = vsub.f32 0.0, %v7500
        %v7757 = vsub.f32 0.0, %v7501
        %v7758 = vmul.f32 %v7502, 1.442695
        %v7759 = vpow.pop %v7758
        %v7760 = vmul.f32 %v7503, 1.442695
        %v7761 = vpow.pop %v7760
        %v7762 = vmul.f32 %v7504, 1.442695
        %v7763 = vpow.pop %v7762
        %v7764 = vmul.f32 %v7505, 1.442695
        %v7765 = vpow.pop %v7764
        %v7766 = vmul.f32 %v7506, 1.442695
        %v7767 = vpow.pop %v7766
        %v7768 = vmul.f32 %v7507, 1.442695
        %v7769 = vpow.pop %v7768
        %v7770 = vmul.f32 %v7508, 1.442695
        %v7771 = vpow.pop %v7770
        %v7772 = vmul.f32 %v7509, 1.442695
        %v7773 = vpow.pop %v7772
        %v7774 = vmul.f32 %v7510, 1.442695
        %v7775 = vpow.pop %v7774
        %v7776 = vmul.f32 %v7511, 1.442695
        %v7777 = vpow.pop %v7776
        %v7778 = vmul.f32 %v7512, 1.442695
        %v7779 = vpow.pop %v7778
        %v7780 = vmul.f32 %v7513, 1.442695
        %v7781 = vpow.pop %v7780
        %v7782 = vmul.f32 %v7514, 1.442695
        %v7783 = vpow.pop %v7782
        %v7784 = vmul.f32 %v7515, 1.442695
        %v7785 = vpow.pop %v7784
        %v7786 = vmul.f32 %v7516, 1.442695
        %v7787 = vpow.pop %v7786
        %v7788 = vmul.f32 %v7517, 1.442695
        %v7789 = vpow.pop %v7788
        %v7790 = vmul.f32 %v7518, 1.442695
        %v7791 = vpow.pop %v7790
        %v7792 = vmul.f32 %v7519, 1.442695
        %v7793 = vpow.pop %v7792
        %v7794 = vmul.f32 %v7520, 1.442695
        %v7795 = vpow.pop %v7794
        %v7796 = vmul.f32 %v7521, 1.442695
        %v7797 = vpow.pop %v7796
        %v7798 = vmul.f32 %v7522, 1.442695
        %v7799 = vpow.pop %v7798
        %v7800 = vmul.f32 %v7523, 1.442695
        %v7801 = vpow.pop %v7800
        %v7802 = vmul.f32 %v7524, 1.442695
        %v7803 = vpow.pop %v7802
        %v7804 = vmul.f32 %v7525, 1.442695
        %v7805 = vpow.pop %v7804
        %v7806 = vmul.f32 %v7526, 1.442695
        %v7807 = vpow.pop %v7806
        %v7808 = vmul.f32 %v7527, 1.442695
        %v7809 = vpow.pop %v7808
        %v7810 = vmul.f32 %v7528, 1.442695
        %v7811 = vpow.pop %v7810
        %v7812 = vmul.f32 %v7529, 1.442695
        %v7813 = vpow.pop %v7812
        %v7814 = vmul.f32 %v7530, 1.442695
        %v7815 = vpow.pop %v7814
        %v7816 = vmul.f32 %v7531, 1.442695
        %v7817 = vpow.pop %v7816
        %v7818 = vmul.f32 %v7532, 1.442695
        %v7819 = vpow.pop %v7818
        %v7820 = vmul.f32 %v7533, 1.442695
        %v7821 = vpow.pop %v7820
        %v7822 = vmul.f32 %v7534, 1.442695
        %v7823 = vpow.pop %v7822
        %v7824 = vmul.f32 %v7535, 1.442695
        %v7825 = vpow.pop %v7824
        %v7826 = vmul.f32 %v7536, 1.442695
        %v7827 = vpow.pop %v7826
        %v7828 = vmul.f32 %v7537, 1.442695
        %v7829 = vpow.pop %v7828
        %v7830 = vmul.f32 %v7538, 1.442695
        %v7831 = vpow.pop %v7830
        %v7832 = vmul.f32 %v7539, 1.442695
        %v7833 = vpow.pop %v7832
        %v7834 = vmul.f32 %v7540, 1.442695
        %v7835 = vpow.pop %v7834
        %v7836 = vmul.f32 %v7541, 1.442695
        %v7837 = vpow.pop %v7836
        %v7838 = vmul.f32 %v7542, 1.442695
        %v7839 = vpow.pop %v7838
        %v7840 = vmul.f32 %v7543, 1.442695
        %v7841 = vpow.pop %v7840
        %v7842 = vmul.f32 %v7544, 1.442695
        %v7843 = vpow.pop %v7842
        %v7844 = vmul.f32 %v7545, 1.442695
        %v7845 = vpow.pop %v7844
        %v7846 = vmul.f32 %v7546, 1.442695
        %v7847 = vpow.pop %v7846
        %v7848 = vmul.f32 %v7547, 1.442695
        %v7849 = vpow.pop %v7848
        %v7850 = vmul.f32 %v7548, 1.442695
        %v7851 = vpow.pop %v7850
        %v7852 = vmul.f32 %v7549, 1.442695
        %v7853 = vpow.pop %v7852
        %v7854 = vmul.f32 %v7550, 1.442695
        %v7855 = vpow.pop %v7854
        %v7856 = vmul.f32 %v7551, 1.442695
        %v7857 = vpow.pop %v7856
        %v7858 = vmul.f32 %v7552, 1.442695
        %v7859 = vpow.pop %v7858
        %v7860 = vmul.f32 %v7553, 1.442695
        %v7861 = vpow.pop %v7860
        %v7862 = vmul.f32 %v7554, 1.442695
        %v7863 = vpow.pop %v7862
        %v7864 = vmul.f32 %v7555, 1.442695
        %v7865 = vpow.pop %v7864
        %v7866 = vmul.f32 %v7556, 1.442695
        %v7867 = vpow.pop %v7866
        %v7868 = vmul.f32 %v7557, 1.442695
        %v7869 = vpow.pop %v7868
        %v7870 = vmul.f32 %v7558, 1.442695
        %v7871 = vpow.pop %v7870
        %v7872 = vmul.f32 %v7559, 1.442695
        %v7873 = vpow.pop %v7872
        %v7874 = vmul.f32 %v7560, 1.442695
        %v7875 = vpow.pop %v7874
        %v7876 = vmul.f32 %v7561, 1.442695
        %v7877 = vpow.pop %v7876
        %v7878 = vmul.f32 %v7562, 1.442695
        %v7879 = vpow.pop %v7878
        %v7880 = vmul.f32 %v7563, 1.442695
        %v7881 = vpow.pop %v7880
        %v7882 = vmul.f32 %v7564, 1.442695
        %v7883 = vpow.pop %v7882
        %v7884 = vmul.f32 %v7565, 1.442695
        %v7885 = vpow.pop %v7884
        %v7886 = vmul.f32 %v7566, 1.442695
        %v7887 = vpow.pop %v7886
        %v7888 = vmul.f32 %v7567, 1.442695
        %v7889 = vpow.pop %v7888
        %v7890 = vmul.f32 %v7568, 1.442695
        %v7891 = vpow.pop %v7890
        %v7892 = vmul.f32 %v7569, 1.442695
        %v7893 = vpow.pop %v7892
        %v7894 = vmul.f32 %v7570, 1.442695
        %v7895 = vpow.pop %v7894
        %v7896 = vmul.f32 %v7571, 1.442695
        %v7897 = vpow.pop %v7896
        %v7898 = vmul.f32 %v7572, 1.442695
        %v7899 = vpow.pop %v7898
        %v7900 = vmul.f32 %v7573, 1.442695
        %v7901 = vpow.pop %v7900
        %v7902 = vmul.f32 %v7574, 1.442695
        %v7903 = vpow.pop %v7902
        %v7904 = vmul.f32 %v7575, 1.442695
        %v7905 = vpow.pop %v7904
        %v7906 = vmul.f32 %v7576, 1.442695
        %v7907 = vpow.pop %v7906
        %v7908 = vmul.f32 %v7577, 1.442695
        %v7909 = vpow.pop %v7908
        %v7910 = vmul.f32 %v7578, 1.442695
        %v7911 = vpow.pop %v7910
        %v7912 = vmul.f32 %v7579, 1.442695
        %v7913 = vpow.pop %v7912
        %v7914 = vmul.f32 %v7580, 1.442695
        %v7915 = vpow.pop %v7914
        %v7916 = vmul.f32 %v7581, 1.442695
        %v7917 = vpow.pop %v7916
        %v7918 = vmul.f32 %v7582, 1.442695
        %v7919 = vpow.pop %v7918
        %v7920 = vmul.f32 %v7583, 1.442695
        %v7921 = vpow.pop %v7920
        %v7922 = vmul.f32 %v7584, 1.442695
        %v7923 = vpow.pop %v7922
        %v7924 = vmul.f32 %v7585, 1.442695
        %v7925 = vpow.pop %v7924
        %v7926 = vmul.f32 %v7586, 1.442695
        %v7927 = vpow.pop %v7926
        %v7928 = vmul.f32 %v7587, 1.442695
        %v7929 = vpow.pop %v7928
        %v7930 = vmul.f32 %v7588, 1.442695
        %v7931 = vpow.pop %v7930
        %v7932 = vmul.f32 %v7589, 1.442695
        %v7933 = vpow.pop %v7932
        %v7934 = vmul.f32 %v7590, 1.442695
        %v7935 = vpow.pop %v7934
        %v7936 = vmul.f32 %v7591, 1.442695
        %v7937 = vpow.pop %v7936
        %v7938 = vmul.f32 %v7592, 1.442695
        %v7939 = vpow.pop %v7938
        %v7940 = vmul.f32 %v7593, 1.442695
        %v7941 = vpow.pop %v7940
        %v7942 = vmul.f32 %v7594, 1.442695
        %v7943 = vpow.pop %v7942
        %v7944 = vmul.f32 %v7595, 1.442695
        %v7945 = vpow.pop %v7944
        %v7946 = vmul.f32 %v7596, 1.442695
        %v7947 = vpow.pop %v7946
        %v7948 = vmul.f32 %v7597, 1.442695
        %v7949 = vpow.pop %v7948
        %v7950 = vmul.f32 %v7598, 1.442695
        %v7951 = vpow.pop %v7950
        %v7952 = vmul.f32 %v7599, 1.442695
        %v7953 = vpow.pop %v7952
        %v7954 = vmul.f32 %v7600, 1.442695
        %v7955 = vpow.pop %v7954
        %v7956 = vmul.f32 %v7601, 1.442695
        %v7957 = vpow.pop %v7956
        %v7958 = vmul.f32 %v7602, 1.442695
        %v7959 = vpow.pop %v7958
        %v7960 = vmul.f32 %v7603, 1.442695
        %v7961 = vpow.pop %v7960
        %v7962 = vmul.f32 %v7604, 1.442695
        %v7963 = vpow.pop %v7962
        %v7964 = vmul.f32 %v7605, 1.442695
        %v7965 = vpow.pop %v7964
        %v7966 = vmul.f32 %v7606, 1.442695
        %v7967 = vpow.pop %v7966
        %v7968 = vmul.f32 %v7607, 1.442695
        %v7969 = vpow.pop %v7968
        %v7970 = vmul.f32 %v7608, 1.442695
        %v7971 = vpow.pop %v7970
        %v7972 = vmul.f32 %v7609, 1.442695
        %v7973 = vpow.pop %v7972
        %v7974 = vmul.f32 %v7610, 1.442695
        %v7975 = vpow.pop %v7974
        %v7976 = vmul.f32 %v7611, 1.442695
        %v7977 = vpow.pop %v7976
        %v7978 = vmul.f32 %v7612, 1.442695
        %v7979 = vpow.pop %v7978
        %v7980 = vmul.f32 %v7613, 1.442695
        %v7981 = vpow.pop %v7980
        %v7982 = vmul.f32 %v7614, 1.442695
        %v7983 = vpow.pop %v7982
        %v7984 = vmul.f32 %v7615, 1.442695
        %v7985 = vpow.pop %v7984
        %v7986 = vmul.f32 %v7616, 1.442695
        %v7987 = vpow.pop %v7986
        %v7988 = vmul.f32 %v7617, 1.442695
        %v7989 = vpow.pop %v7988
        %v7990 = vmul.f32 %v7618, 1.442695
        %v7991 = vpow.pop %v7990
        %v7992 = vmul.f32 %v7619, 1.442695
        %v7993 = vpow.pop %v7992
        %v7994 = vmul.f32 %v7620, 1.442695
        %v7995 = vpow.pop %v7994
        %v7996 = vmul.f32 %v7621, 1.442695
        %v7997 = vpow.pop %v7996
        %v7998 = vmul.f32 %v7622, 1.442695
        %v7999 = vpow.pop %v7998
        %v8000 = vmul.f32 %v7623, 1.442695
        %v8001 = vpow.pop %v8000
        %v8002 = vmul.f32 %v7624, 1.442695
        %v8003 = vpow.pop %v8002
        %v8004 = vmul.f32 %v7625, 1.442695
        %v8005 = vpow.pop %v8004
        %v8006 = vmul.f32 %v7626, 1.442695
        %v8007 = vpow.pop %v8006
        %v8008 = vmul.f32 %v7627, 1.442695
        %v8009 = vpow.pop %v8008
        %v8010 = vmul.f32 %v7628, 1.442695
        %v8011 = vpow.pop %v8010
        %v8012 = vmul.f32 %v7629, 1.442695
        %v8013 = vpow.pop %v8012
        %v8014 = vmul.f32 %v7630, 1.442695
        %v8015 = vpow.pop %v8014
        %v8016 = vmul.f32 %v7631, 1.442695
        %v8017 = vpow.pop %v8016
        %v8018 = vmul.f32 %v7632, 1.442695
        %v8019 = vpow.pop %v8018
        %v8020 = vmul.f32 %v7633, 1.442695
        %v8021 = vpow.pop %v8020
        %v8022 = vmul.f32 %v7634, 1.442695
        %v8023 = vpow.pop %v8022
        %v8024 = vmul.f32 %v7635, 1.442695
        %v8025 = vpow.pop %v8024
        %v8026 = vmul.f32 %v7636, 1.442695
        %v8027 = vpow.pop %v8026
        %v8028 = vmul.f32 %v7637, 1.442695
        %v8029 = vpow.pop %v8028
        %v8030 = vmul.f32 %v7638, 1.442695
        %v8031 = vpow.pop %v8030
        %v8032 = vmul.f32 %v7639, 1.442695
        %v8033 = vpow.pop %v8032
        %v8034 = vmul.f32 %v7640, 1.442695
        %v8035 = vpow.pop %v8034
        %v8036 = vmul.f32 %v7641, 1.442695
        %v8037 = vpow.pop %v8036
        %v8038 = vmul.f32 %v7642, 1.442695
        %v8039 = vpow.pop %v8038
        %v8040 = vmul.f32 %v7643, 1.442695
        %v8041 = vpow.pop %v8040
        %v8042 = vmul.f32 %v7644, 1.442695
        %v8043 = vpow.pop %v8042
        %v8044 = vmul.f32 %v7645, 1.442695
        %v8045 = vpow.pop %v8044
        %v8046 = vmul.f32 %v7646, 1.442695
        %v8047 = vpow.pop %v8046
        %v8048 = vmul.f32 %v7647, 1.442695
        %v8049 = vpow.pop %v8048
        %v8050 = vmul.f32 %v7648, 1.442695
        %v8051 = vpow.pop %v8050
        %v8052 = vmul.f32 %v7649, 1.442695
        %v8053 = vpow.pop %v8052
        %v8054 = vmul.f32 %v7650, 1.442695
        %v8055 = vpow.pop %v8054
        %v8056 = vmul.f32 %v7651, 1.442695
        %v8057 = vpow.pop %v8056
        %v8058 = vmul.f32 %v7652, 1.442695
        %v8059 = vpow.pop %v8058
        %v8060 = vmul.f32 %v7653, 1.442695
        %v8061 = vpow.pop %v8060
        %v8062 = vmul.f32 %v7654, 1.442695
        %v8063 = vpow.pop %v8062
        %v8064 = vmul.f32 %v7655, 1.442695
        %v8065 = vpow.pop %v8064
        %v8066 = vmul.f32 %v7656, 1.442695
        %v8067 = vpow.pop %v8066
        %v8068 = vmul.f32 %v7657, 1.442695
        %v8069 = vpow.pop %v8068
        %v8070 = vmul.f32 %v7658, 1.442695
        %v8071 = vpow.pop %v8070
        %v8072 = vmul.f32 %v7659, 1.442695
        %v8073 = vpow.pop %v8072
        %v8074 = vmul.f32 %v7660, 1.442695
        %v8075 = vpow.pop %v8074
        %v8076 = vmul.f32 %v7661, 1.442695
        %v8077 = vpow.pop %v8076
        %v8078 = vmul.f32 %v7662, 1.442695
        %v8079 = vpow.pop %v8078
        %v8080 = vmul.f32 %v7663, 1.442695
        %v8081 = vpow.pop %v8080
        %v8082 = vmul.f32 %v7664, 1.442695
        %v8083 = vpow.pop %v8082
        %v8084 = vmul.f32 %v7665, 1.442695
        %v8085 = vpow.pop %v8084
        %v8086 = vmul.f32 %v7666, 1.442695
        %v8087 = vpow.pop %v8086
        %v8088 = vmul.f32 %v7667, 1.442695
        %v8089 = vpow.pop %v8088
        %v8090 = vmul.f32 %v7668, 1.442695
        %v8091 = vpow.pop %v8090
        %v8092 = vmul.f32 %v7669, 1.442695
        %v8093 = vpow.pop %v8092
        %v8094 = vmul.f32 %v7670, 1.442695
        %v8095 = vpow.pop %v8094
        %v8096 = vmul.f32 %v7671, 1.442695
        %v8097 = vpow.pop %v8096
        %v8098 = vmul.f32 %v7672, 1.442695
        %v8099 = vpow.pop %v8098
        %v8100 = vmul.f32 %v7673, 1.442695
        %v8101 = vpow.pop %v8100
        %v8102 = vmul.f32 %v7674, 1.442695
        %v8103 = vpow.pop %v8102
        %v8104 = vmul.f32 %v7675, 1.442695
        %v8105 = vpow.pop %v8104
        %v8106 = vmul.f32 %v7676, 1.442695
        %v8107 = vpow.pop %v8106
        %v8108 = vmul.f32 %v7677, 1.442695
        %v8109 = vpow.pop %v8108
        %v8110 = vmul.f32 %v7678, 1.442695
        %v8111 = vpow.pop %v8110
        %v8112 = vmul.f32 %v7679, 1.442695
        %v8113 = vpow.pop %v8112
        %v8114 = vmul.f32 %v7680, 1.442695
        %v8115 = vpow.pop %v8114
        %v8116 = vmul.f32 %v7681, 1.442695
        %v8117 = vpow.pop %v8116
        %v8118 = vmul.f32 %v7682, 1.442695
        %v8119 = vpow.pop %v8118
        %v8120 = vmul.f32 %v7683, 1.442695
        %v8121 = vpow.pop %v8120
        %v8122 = vmul.f32 %v7684, 1.442695
        %v8123 = vpow.pop %v8122
        %v8124 = vmul.f32 %v7685, 1.442695
        %v8125 = vpow.pop %v8124
        %v8126 = vmul.f32 %v7686, 1.442695
        %v8127 = vpow.pop %v8126
        %v8128 = vmul.f32 %v7687, 1.442695
        %v8129 = vpow.pop %v8128
        %v8130 = vmul.f32 %v7688, 1.442695
        %v8131 = vpow.pop %v8130
        %v8132 = vmul.f32 %v7689, 1.442695
        %v8133 = vpow.pop %v8132
        %v8134 = vmul.f32 %v7690, 1.442695
        %v8135 = vpow.pop %v8134
        %v8136 = vmul.f32 %v7691, 1.442695
        %v8137 = vpow.pop %v8136
        %v8138 = vmul.f32 %v7692, 1.442695
        %v8139 = vpow.pop %v8138
        %v8140 = vmul.f32 %v7693, 1.442695
        %v8141 = vpow.pop %v8140
        %v8142 = vmul.f32 %v7694, 1.442695
        %v8143 = vpow.pop %v8142
        %v8144 = vmul.f32 %v7695, 1.442695
        %v8145 = vpow.pop %v8144
        %v8146 = vmul.f32 %v7696, 1.442695
        %v8147 = vpow.pop %v8146
        %v8148 = vmul.f32 %v7697, 1.442695
        %v8149 = vpow.pop %v8148
        %v8150 = vmul.f32 %v7698, 1.442695
        %v8151 = vpow.pop %v8150
        %v8152 = vmul.f32 %v7699, 1.442695
        %v8153 = vpow.pop %v8152
        %v8154 = vmul.f32 %v7700, 1.442695
        %v8155 = vpow.pop %v8154
        %v8156 = vmul.f32 %v7701, 1.442695
        %v8157 = vpow.pop %v8156
        %v8158 = vmul.f32 %v7702, 1.442695
        %v8159 = vpow.pop %v8158
        %v8160 = vmul.f32 %v7703, 1.442695
        %v8161 = vpow.pop %v8160
        %v8162 = vmul.f32 %v7704, 1.442695
        %v8163 = vpow.pop %v8162
        %v8164 = vmul.f32 %v7705, 1.442695
        %v8165 = vpow.pop %v8164
        %v8166 = vmul.f32 %v7706, 1.442695
        %v8167 = vpow.pop %v8166
        %v8168 = vmul.f32 %v7707, 1.442695
        %v8169 = vpow.pop %v8168
        %v8170 = vmul.f32 %v7708, 1.442695
        %v8171 = vpow.pop %v8170
        %v8172 = vmul.f32 %v7709, 1.442695
        %v8173 = vpow.pop %v8172
        %v8174 = vmul.f32 %v7710, 1.442695
        %v8175 = vpow.pop %v8174
        %v8176 = vmul.f32 %v7711, 1.442695
        %v8177 = vpow.pop %v8176
        %v8178 = vmul.f32 %v7712, 1.442695
        %v8179 = vpow.pop %v8178
        %v8180 = vmul.f32 %v7713, 1.442695
        %v8181 = vpow.pop %v8180
        %v8182 = vmul.f32 %v7714, 1.442695
        %v8183 = vpow.pop %v8182
        %v8184 = vmul.f32 %v7715, 1.442695
        %v8185 = vpow.pop %v8184
        %v8186 = vmul.f32 %v7716, 1.442695
        %v8187 = vpow.pop %v8186
        %v8188 = vmul.f32 %v7717, 1.442695
        %v8189 = vpow.pop %v8188
        %v8190 = vmul.f32 %v7718, 1.442695
        %v8191 = vpow.pop %v8190
        %v8192 = vmul.f32 %v7719, 1.442695
        %v8193 = vpow.pop %v8192
        %v8194 = vmul.f32 %v7720, 1.442695
        %v8195 = vpow.pop %v8194
        %v8196 = vmul.f32 %v7721, 1.442695
        %v8197 = vpow.pop %v8196
        %v8198 = vmul.f32 %v7722, 1.442695
        %v8199 = vpow.pop %v8198
        %v8200 = vmul.f32 %v7723, 1.442695
        %v8201 = vpow.pop %v8200
        %v8202 = vmul.f32 %v7724, 1.442695
        %v8203 = vpow.pop %v8202
        %v8204 = vmul.f32 %v7725, 1.442695
        %v8205 = vpow.pop %v8204
        %v8206 = vmul.f32 %v7726, 1.442695
        %v8207 = vpow.pop %v8206
        %v8208 = vmul.f32 %v7727, 1.442695
        %v8209 = vpow.pop %v8208
        %v8210 = vmul.f32 %v7728, 1.442695
        %v8211 = vpow.pop %v8210
        %v8212 = vmul.f32 %v7729, 1.442695
        %v8213 = vpow.pop %v8212
        %v8214 = vmul.f32 %v7730, 1.442695
        %v8215 = vpow.pop %v8214
        %v8216 = vmul.f32 %v7731, 1.442695
        %v8217 = vpow.pop %v8216
        %v8218 = vmul.f32 %v7732, 1.442695
        %v8219 = vpow.pop %v8218
        %v8220 = vmul.f32 %v7733, 1.442695
        %v8221 = vpow.pop %v8220
        %v8222 = vmul.f32 %v7734, 1.442695
        %v8223 = vpow.pop %v8222
        %v8224 = vmul.f32 %v7735, 1.442695
        %v8225 = vpow.pop %v8224
        %v8226 = vmul.f32 %v7736, 1.442695
        %v8227 = vpow.pop %v8226
        %v8228 = vmul.f32 %v7737, 1.442695
        %v8229 = vpow.pop %v8228
        %v8230 = vmul.f32 %v7738, 1.442695
        %v8231 = vpow.pop %v8230
        %v8232 = vmul.f32 %v7739, 1.442695
        %v8233 = vpow.pop %v8232
        %v8234 = vmul.f32 %v7740, 1.442695
        %v8235 = vpow.pop %v8234
        %v8236 = vmul.f32 %v7741, 1.442695
        %v8237 = vpow.pop %v8236
        %v8238 = vmul.f32 %v7742, 1.442695
        %v8239 = vpow.pop %v8238
        %v8240 = vmul.f32 %v7743, 1.442695
        %v8241 = vpow.pop %v8240
        %v8242 = vmul.f32 %v7744, 1.442695
        %v8243 = vpow.pop %v8242
        %v8244 = vmul.f32 %v7745, 1.442695
        %v8245 = vpow.pop %v8244
        %v8246 = vmul.f32 %v7746, 1.442695
        %v8247 = vpow.pop %v8246
        %v8248 = vmul.f32 %v7747, 1.442695
        %v8249 = vpow.pop %v8248
        %v8250 = vmul.f32 %v7748, 1.442695
        %v8251 = vpow.pop %v8250
        %v8252 = vmul.f32 %v7749, 1.442695
        %v8253 = vpow.pop %v8252
        %v8254 = vmul.f32 %v7750, 1.442695
        %v8255 = vpow.pop %v8254
        %v8256 = vmul.f32 %v7751, 1.442695
        %v8257 = vpow.pop %v8256
        %v8258 = vmul.f32 %v7752, 1.442695
        %v8259 = vpow.pop %v8258
        %v8260 = vmul.f32 %v7753, 1.442695
        %v8261 = vpow.pop %v8260
        %v8262 = vmul.f32 %v7754, 1.442695
        %v8263 = vpow.pop %v8262
        %v8264 = vmul.f32 %v7755, 1.442695
        %v8265 = vpow.pop %v8264
        %v8266 = vmul.f32 %v7756, 1.442695
        %v8267 = vpow.pop %v8266
        %v8268 = vmul.f32 %v7757, 1.442695
        %v8269 = vpow.pop %v8268
        %v8270 = vsub.f32 1.0, %v7759
        %v8271 = vsub.f32 1.0, %v7761
        %v8272 = vsub.f32 1.0, %v7763
        %v8273 = vsub.f32 1.0, %v7765
        %v8274 = vsub.f32 1.0, %v7767
        %v8275 = vsub.f32 1.0, %v7769
        %v8276 = vsub.f32 1.0, %v7771
        %v8277 = vsub.f32 1.0, %v7773
        %v8278 = vsub.f32 1.0, %v7775
        %v8279 = vsub.f32 1.0, %v7777
        %v8280 = vsub.f32 1.0, %v7779
        %v8281 = vsub.f32 1.0, %v7781
        %v8282 = vsub.f32 1.0, %v7783
        %v8283 = vsub.f32 1.0, %v7785
        %v8284 = vsub.f32 1.0, %v7787
        %v8285 = vsub.f32 1.0, %v7789
        %v8286 = vsub.f32 1.0, %v7791
        %v8287 = vsub.f32 1.0, %v7793
        %v8288 = vsub.f32 1.0, %v7795
        %v8289 = vsub.f32 1.0, %v7797
        %v8290 = vsub.f32 1.0, %v7799
        %v8291 = vsub.f32 1.0, %v7801
        %v8292 = vsub.f32 1.0, %v7803
        %v8293 = vsub.f32 1.0, %v7805
        %v8294 = vsub.f32 1.0, %v7807
        %v8295 = vsub.f32 1.0, %v7809
        %v8296 = vsub.f32 1.0, %v7811
        %v8297 = vsub.f32 1.0, %v7813
        %v8298 = vsub.f32 1.0, %v7815
        %v8299 = vsub.f32 1.0, %v7817
        %v8300 = vsub.f32 1.0, %v7819
        %v8301 = vsub.f32 1.0, %v7821
        %v8302 = vsub.f32 1.0, %v7823
        %v8303 = vsub.f32 1.0, %v7825
        %v8304 = vsub.f32 1.0, %v7827
        %v8305 = vsub.f32 1.0, %v7829
        %v8306 = vsub.f32 1.0, %v7831
        %v8307 = vsub.f32 1.0, %v7833
        %v8308 = vsub.f32 1.0, %v7835
        %v8309 = vsub.f32 1.0, %v7837
        %v8310 = vsub.f32 1.0, %v7839
        %v8311 = vsub.f32 1.0, %v7841
        %v8312 = vsub.f32 1.0, %v7843
        %v8313 = vsub.f32 1.0, %v7845
        %v8314 = vsub.f32 1.0, %v7847
        %v8315 = vsub.f32 1.0, %v7849
        %v8316 = vsub.f32 1.0, %v7851
        %v8317 = vsub.f32 1.0, %v7853
        %v8318 = vsub.f32 1.0, %v7855
        %v8319 = vsub.f32 1.0, %v7857
        %v8320 = vsub.f32 1.0, %v7859
        %v8321 = vsub.f32 1.0, %v7861
        %v8322 = vsub.f32 1.0, %v7863
        %v8323 = vsub.f32 1.0, %v7865
        %v8324 = vsub.f32 1.0, %v7867
        %v8325 = vsub.f32 1.0, %v7869
        %v8326 = vsub.f32 1.0, %v7871
        %v8327 = vsub.f32 1.0, %v7873
        %v8328 = vsub.f32 1.0, %v7875
        %v8329 = vsub.f32 1.0, %v7877
        %v8330 = vsub.f32 1.0, %v7879
        %v8331 = vsub.f32 1.0, %v7881
        %v8332 = vsub.f32 1.0, %v7883
        %v8333 = vsub.f32 1.0, %v7885
        %v8334 = vsub.f32 1.0, %v7887
        %v8335 = vsub.f32 1.0, %v7889
        %v8336 = vsub.f32 1.0, %v7891
        %v8337 = vsub.f32 1.0, %v7893
        %v8338 = vsub.f32 1.0, %v7895
        %v8339 = vsub.f32 1.0, %v7897
        %v8340 = vsub.f32 1.0, %v7899
        %v8341 = vsub.f32 1.0, %v7901
        %v8342 = vsub.f32 1.0, %v7903
        %v8343 = vsub.f32 1.0, %v7905
        %v8344 = vsub.f32 1.0, %v7907
        %v8345 = vsub.f32 1.0, %v7909
        %v8346 = vsub.f32 1.0, %v7911
        %v8347 = vsub.f32 1.0, %v7913
        %v8348 = vsub.f32 1.0, %v7915
        %v8349 = vsub.f32 1.0, %v7917
        %v8350 = vsub.f32 1.0, %v7919
        %v8351 = vsub.f32 1.0, %v7921
        %v8352 = vsub.f32 1.0, %v7923
        %v8353 = vsub.f32 1.0, %v7925
        %v8354 = vsub.f32 1.0, %v7927
        %v8355 = vsub.f32 1.0, %v7929
        %v8356 = vsub.f32 1.0, %v7931
        %v8357 = vsub.f32 1.0, %v7933
        %v8358 = vsub.f32 1.0, %v7935
        %v8359 = vsub.f32 1.0, %v7937
        %v8360 = vsub.f32 1.0, %v7939
        %v8361 = vsub.f32 1.0, %v7941
        %v8362 = vsub.f32 1.0, %v7943
        %v8363 = vsub.f32 1.0, %v7945
        %v8364 = vsub.f32 1.0, %v7947
        %v8365 = vsub.f32 1.0, %v7949
        %v8366 = vsub.f32 1.0, %v7951
        %v8367 = vsub.f32 1.0, %v7953
        %v8368 = vsub.f32 1.0, %v7955
        %v8369 = vsub.f32 1.0, %v7957
        %v8370 = vsub.f32 1.0, %v7959
        %v8371 = vsub.f32 1.0, %v7961
        %v8372 = vsub.f32 1.0, %v7963
        %v8373 = vsub.f32 1.0, %v7965
        %v8374 = vsub.f32 1.0, %v7967
        %v8375 = vsub.f32 1.0, %v7969
        %v8376 = vsub.f32 1.0, %v7971
        %v8377 = vsub.f32 1.0, %v7973
        %v8378 = vsub.f32 1.0, %v7975
        %v8379 = vsub.f32 1.0, %v7977
        %v8380 = vsub.f32 1.0, %v7979
        %v8381 = vsub.f32 1.0, %v7981
        %v8382 = vsub.f32 1.0, %v7983
        %v8383 = vsub.f32 1.0, %v7985
        %v8384 = vsub.f32 1.0, %v7987
        %v8385 = vsub.f32 1.0, %v7989
        %v8386 = vsub.f32 1.0, %v7991
        %v8387 = vsub.f32 1.0, %v7993
        %v8388 = vsub.f32 1.0, %v7995
        %v8389 = vsub.f32 1.0, %v7997
        %v8390 = vsub.f32 1.0, %v7999
        %v8391 = vsub.f32 1.0, %v8001
        %v8392 = vsub.f32 1.0, %v8003
        %v8393 = vsub.f32 1.0, %v8005
        %v8394 = vsub.f32 1.0, %v8007
        %v8395 = vsub.f32 1.0, %v8009
        %v8396 = vsub.f32 1.0, %v8011
        %v8397 = vsub.f32 1.0, %v8013
        %v8398 = vsub.f32 1.0, %v8015
        %v8399 = vsub.f32 1.0, %v8017
        %v8400 = vsub.f32 1.0, %v8019
        %v8401 = vsub.f32 1.0, %v8021
        %v8402 = vsub.f32 1.0, %v8023
        %v8403 = vsub.f32 1.0, %v8025
        %v8404 = vsub.f32 1.0, %v8027
        %v8405 = vsub.f32 1.0, %v8029
        %v8406 = vsub.f32 1.0, %v8031
        %v8407 = vsub.f32 1.0, %v8033
        %v8408 = vsub.f32 1.0, %v8035
        %v8409 = vsub.f32 1.0, %v8037
        %v8410 = vsub.f32 1.0, %v8039
        %v8411 = vsub.f32 1.0, %v8041
        %v8412 = vsub.f32 1.0, %v8043
        %v8413 = vsub.f32 1.0, %v8045
        %v8414 = vsub.f32 1.0, %v8047
        %v8415 = vsub.f32 1.0, %v8049
        %v8416 = vsub.f32 1.0, %v8051
        %v8417 = vsub.f32 1.0, %v8053
        %v8418 = vsub.f32 1.0, %v8055
        %v8419 = vsub.f32 1.0, %v8057
        %v8420 = vsub.f32 1.0, %v8059
        %v8421 = vsub.f32 1.0, %v8061
        %v8422 = vsub.f32 1.0, %v8063
        %v8423 = vsub.f32 1.0, %v8065
        %v8424 = vsub.f32 1.0, %v8067
        %v8425 = vsub.f32 1.0, %v8069
        %v8426 = vsub.f32 1.0, %v8071
        %v8427 = vsub.f32 1.0, %v8073
        %v8428 = vsub.f32 1.0, %v8075
        %v8429 = vsub.f32 1.0, %v8077
        %v8430 = vsub.f32 1.0, %v8079
        %v8431 = vsub.f32 1.0, %v8081
        %v8432 = vsub.f32 1.0, %v8083
        %v8433 = vsub.f32 1.0, %v8085
        %v8434 = vsub.f32 1.0, %v8087
        %v8435 = vsub.f32 1.0, %v8089
        %v8436 = vsub.f32 1.0, %v8091
        %v8437 = vsub.f32 1.0, %v8093
        %v8438 = vsub.f32 1.0, %v8095
        %v8439 = vsub.f32 1.0, %v8097
        %v8440 = vsub.f32 1.0, %v8099
        %v8441 = vsub.f32 1.0, %v8101
        %v8442 = vsub.f32 1.0, %v8103
        %v8443 = vsub.f32 1.0, %v8105
        %v8444 = vsub.f32 1.0, %v8107
        %v8445 = vsub.f32 1.0, %v8109
        %v8446 = vsub.f32 1.0, %v8111
        %v8447 = vsub.f32 1.0, %v8113
        %v8448 = vsub.f32 1.0, %v8115
        %v8449 = vsub.f32 1.0, %v8117
        %v8450 = vsub.f32 1.0, %v8119
        %v8451 = vsub.f32 1.0, %v8121
        %v8452 = vsub.f32 1.0, %v8123
        %v8453 = vsub.f32 1.0, %v8125
        %v8454 = vsub.f32 1.0, %v8127
        %v8455 = vsub.f32 1.0, %v8129
        %v8456 = vsub.f32 1.0, %v8131
        %v8457 = vsub.f32 1.0, %v8133
        %v8458 = vsub.f32 1.0, %v8135
        %v8459 = vsub.f32 1.0, %v8137
        %v8460 = vsub.f32 1.0, %v8139
        %v8461 = vsub.f32 1.0, %v8141
        %v8462 = vsub.f32 1.0, %v8143
        %v8463 = vsub.f32 1.0, %v8145
        %v8464 = vsub.f32 1.0, %v8147
        %v8465 = vsub.f32 1.0, %v8149
        %v8466 = vsub.f32 1.0, %v8151
        %v8467 = vsub.f32 1.0, %v8153
        %v8468 = vsub.f32 1.0, %v8155
        %v8469 = vsub.f32 1.0, %v8157
        %v8470 = vsub.f32 1.0, %v8159
        %v8471 = vsub.f32 1.0, %v8161
        %v8472 = vsub.f32 1.0, %v8163
        %v8473 = vsub.f32 1.0, %v8165
        %v8474 = vsub.f32 1.0, %v8167
        %v8475 = vsub.f32 1.0, %v8169
        %v8476 = vsub.f32 1.0, %v8171
        %v8477 = vsub.f32 1.0, %v8173
        %v8478 = vsub.f32 1.0, %v8175
        %v8479 = vsub.f32 1.0, %v8177
        %v8480 = vsub.f32 1.0, %v8179
        %v8481 = vsub.f32 1.0, %v8181
        %v8482 = vsub.f32 1.0, %v8183
        %v8483 = vsub.f32 1.0, %v8185
        %v8484 = vsub.f32 1.0, %v8187
        %v8485 = vsub.f32 1.0, %v8189
        %v8486 = vsub.f32 1.0, %v8191
        %v8487 = vsub.f32 1.0, %v8193
        %v8488 = vsub.f32 1.0, %v8195
        %v8489 = vsub.f32 1.0, %v8197
        %v8490 = vsub.f32 1.0, %v8199
        %v8491 = vsub.f32 1.0, %v8201
        %v8492 = vsub.f32 1.0, %v8203
        %v8493 = vsub.f32 1.0, %v8205
        %v8494 = vsub.f32 1.0, %v8207
        %v8495 = vsub.f32 1.0, %v8209
        %v8496 = vsub.f32 1.0, %v8211
        %v8497 = vsub.f32 1.0, %v8213
        %v8498 = vsub.f32 1.0, %v8215
        %v8499 = vsub.f32 1.0, %v8217
        %v8500 = vsub.f32 1.0, %v8219
        %v8501 = vsub.f32 1.0, %v8221
        %v8502 = vsub.f32 1.0, %v8223
        %v8503 = vsub.f32 1.0, %v8225
        %v8504 = vsub.f32 1.0, %v8227
        %v8505 = vsub.f32 1.0, %v8229
        %v8506 = vsub.f32 1.0, %v8231
        %v8507 = vsub.f32 1.0, %v8233
        %v8508 = vsub.f32 1.0, %v8235
        %v8509 = vsub.f32 1.0, %v8237
        %v8510 = vsub.f32 1.0, %v8239
        %v8511 = vsub.f32 1.0, %v8241
        %v8512 = vsub.f32 1.0, %v8243
        %v8513 = vsub.f32 1.0, %v8245
        %v8514 = vsub.f32 1.0, %v8247
        %v8515 = vsub.f32 1.0, %v8249
        %v8516 = vsub.f32 1.0, %v8251
        %v8517 = vsub.f32 1.0, %v8253
        %v8518 = vsub.f32 1.0, %v8255
        %v8519 = vsub.f32 1.0, %v8257
        %v8520 = vsub.f32 1.0, %v8259
        %v8521 = vsub.f32 1.0, %v8261
        %v8522 = vsub.f32 1.0, %v8263
        %v8523 = vsub.f32 1.0, %v8265
        %v8524 = vsub.f32 1.0, %v8267
        %v8525 = vsub.f32 1.0, %v8269
        %v8526 = vmul.f32 %v8270, %v8270
        %v8527 = vmul.f32 %v8271, %v8271
        %v8528 = vmul.f32 %v8272, %v8272
        %v8529 = vmul.f32 %v8273, %v8273
        %v8530 = vmul.f32 %v8274, %v8274
        %v8531 = vmul.f32 %v8275, %v8275
        %v8532 = vmul.f32 %v8276, %v8276
        %v8533 = vmul.f32 %v8277, %v8277
        %v8534 = vmul.f32 %v8278, %v8278
        %v8535 = vmul.f32 %v8279, %v8279
        %v8536 = vmul.f32 %v8280, %v8280
        %v8537 = vmul.f32 %v8281, %v8281
        %v8538 = vmul.f32 %v8282, %v8282
        %v8539 = vmul.f32 %v8283, %v8283
        %v8540 = vmul.f32 %v8284, %v8284
        %v8541 = vmul.f32 %v8285, %v8285
        %v8542 = vmul.f32 %v8286, %v8286
        %v8543 = vmul.f32 %v8287, %v8287
        %v8544 = vmul.f32 %v8288, %v8288
        %v8545 = vmul.f32 %v8289, %v8289
        %v8546 = vmul.f32 %v8290, %v8290
        %v8547 = vmul.f32 %v8291, %v8291
        %v8548 = vmul.f32 %v8292, %v8292
        %v8549 = vmul.f32 %v8293, %v8293
        %v8550 = vmul.f32 %v8294, %v8294
        %v8551 = vmul.f32 %v8295, %v8295
        %v8552 = vmul.f32 %v8296, %v8296
        %v8553 = vmul.f32 %v8297, %v8297
        %v8554 = vmul.f32 %v8298, %v8298
        %v8555 = vmul.f32 %v8299, %v8299
        %v8556 = vmul.f32 %v8300, %v8300
        %v8557 = vmul.f32 %v8301, %v8301
        %v8558 = vmul.f32 %v8302, %v8302
        %v8559 = vmul.f32 %v8303, %v8303
        %v8560 = vmul.f32 %v8304, %v8304
        %v8561 = vmul.f32 %v8305, %v8305
        %v8562 = vmul.f32 %v8306, %v8306
        %v8563 = vmul.f32 %v8307, %v8307
        %v8564 = vmul.f32 %v8308, %v8308
        %v8565 = vmul.f32 %v8309, %v8309
        %v8566 = vmul.f32 %v8310, %v8310
        %v8567 = vmul.f32 %v8311, %v8311
        %v8568 = vmul.f32 %v8312, %v8312
        %v8569 = vmul.f32 %v8313, %v8313
        %v8570 = vmul.f32 %v8314, %v8314
        %v8571 = vmul.f32 %v8315, %v8315
        %v8572 = vmul.f32 %v8316, %v8316
        %v8573 = vmul.f32 %v8317, %v8317
        %v8574 = vmul.f32 %v8318, %v8318
        %v8575 = vmul.f32 %v8319, %v8319
        %v8576 = vmul.f32 %v8320, %v8320
        %v8577 = vmul.f32 %v8321, %v8321
        %v8578 = vmul.f32 %v8322, %v8322
        %v8579 = vmul.f32 %v8323, %v8323
        %v8580 = vmul.f32 %v8324, %v8324
        %v8581 = vmul.f32 %v8325, %v8325
        %v8582 = vmul.f32 %v8326, %v8326
        %v8583 = vmul.f32 %v8327, %v8327
        %v8584 = vmul.f32 %v8328, %v8328
        %v8585 = vmul.f32 %v8329, %v8329
        %v8586 = vmul.f32 %v8330, %v8330
        %v8587 = vmul.f32 %v8331, %v8331
        %v8588 = vmul.f32 %v8332, %v8332
        %v8589 = vmul.f32 %v8333, %v8333
        %v8590 = vmul.f32 %v8334, %v8334
        %v8591 = vmul.f32 %v8335, %v8335
        %v8592 = vmul.f32 %v8336, %v8336
        %v8593 = vmul.f32 %v8337, %v8337
        %v8594 = vmul.f32 %v8338, %v8338
        %v8595 = vmul.f32 %v8339, %v8339
        %v8596 = vmul.f32 %v8340, %v8340
        %v8597 = vmul.f32 %v8341, %v8341
        %v8598 = vmul.f32 %v8342, %v8342
        %v8599 = vmul.f32 %v8343, %v8343
        %v8600 = vmul.f32 %v8344, %v8344
        %v8601 = vmul.f32 %v8345, %v8345
        %v8602 = vmul.f32 %v8346, %v8346
        %v8603 = vmul.f32 %v8347, %v8347
        %v8604 = vmul.f32 %v8348, %v8348
        %v8605 = vmul.f32 %v8349, %v8349
        %v8606 = vmul.f32 %v8350, %v8350
        %v8607 = vmul.f32 %v8351, %v8351
        %v8608 = vmul.f32 %v8352, %v8352
        %v8609 = vmul.f32 %v8353, %v8353
        %v8610 = vmul.f32 %v8354, %v8354
        %v8611 = vmul.f32 %v8355, %v8355
        %v8612 = vmul.f32 %v8356, %v8356
        %v8613 = vmul.f32 %v8357, %v8357
        %v8614 = vmul.f32 %v8358, %v8358
        %v8615 = vmul.f32 %v8359, %v8359
        %v8616 = vmul.f32 %v8360, %v8360
        %v8617 = vmul.f32 %v8361, %v8361
        %v8618 = vmul.f32 %v8362, %v8362
        %v8619 = vmul.f32 %v8363, %v8363
        %v8620 = vmul.f32 %v8364, %v8364
        %v8621 = vmul.f32 %v8365, %v8365
        %v8622 = vmul.f32 %v8366, %v8366
        %v8623 = vmul.f32 %v8367, %v8367
        %v8624 = vmul.f32 %v8368, %v8368
        %v8625 = vmul.f32 %v8369, %v8369
        %v8626 = vmul.f32 %v8370, %v8370
        %v8627 = vmul.f32 %v8371, %v8371
        %v8628 = vmul.f32 %v8372, %v8372
        %v8629 = vmul.f32 %v8373, %v8373
        %v8630 = vmul.f32 %v8374, %v8374
        %v8631 = vmul.f32 %v8375, %v8375
        %v8632 = vmul.f32 %v8376, %v8376
        %v8633 = vmul.f32 %v8377, %v8377
        %v8634 = vmul.f32 %v8378, %v8378
        %v8635 = vmul.f32 %v8379, %v8379
        %v8636 = vmul.f32 %v8380, %v8380
        %v8637 = vmul.f32 %v8381, %v8381
        %v8638 = vmul.f32 %v8382, %v8382
        %v8639 = vmul.f32 %v8383, %v8383
        %v8640 = vmul.f32 %v8384, %v8384
        %v8641 = vmul.f32 %v8385, %v8385
        %v8642 = vmul.f32 %v8386, %v8386
        %v8643 = vmul.f32 %v8387, %v8387
        %v8644 = vmul.f32 %v8388, %v8388
        %v8645 = vmul.f32 %v8389, %v8389
        %v8646 = vmul.f32 %v8390, %v8390
        %v8647 = vmul.f32 %v8391, %v8391
        %v8648 = vmul.f32 %v8392, %v8392
        %v8649 = vmul.f32 %v8393, %v8393
        %v8650 = vmul.f32 %v8394, %v8394
        %v8651 = vmul.f32 %v8395, %v8395
        %v8652 = vmul.f32 %v8396, %v8396
        %v8653 = vmul.f32 %v8397, %v8397
        %v8654 = vmul.f32 %v8398, %v8398
        %v8655 = vmul.f32 %v8399, %v8399
        %v8656 = vmul.f32 %v8400, %v8400
        %v8657 = vmul.f32 %v8401, %v8401
        %v8658 = vmul.f32 %v8402, %v8402
        %v8659 = vmul.f32 %v8403, %v8403
        %v8660 = vmul.f32 %v8404, %v8404
        %v8661 = vmul.f32 %v8405, %v8405
        %v8662 = vmul.f32 %v8406, %v8406
        %v8663 = vmul.f32 %v8407, %v8407
        %v8664 = vmul.f32 %v8408, %v8408
        %v8665 = vmul.f32 %v8409, %v8409
        %v8666 = vmul.f32 %v8410, %v8410
        %v8667 = vmul.f32 %v8411, %v8411
        %v8668 = vmul.f32 %v8412, %v8412
        %v8669 = vmul.f32 %v8413, %v8413
        %v8670 = vmul.f32 %v8414, %v8414
        %v8671 = vmul.f32 %v8415, %v8415
        %v8672 = vmul.f32 %v8416, %v8416
        %v8673 = vmul.f32 %v8417, %v8417
        %v8674 = vmul.f32 %v8418, %v8418
        %v8675 = vmul.f32 %v8419, %v8419
        %v8676 = vmul.f32 %v8420, %v8420
        %v8677 = vmul.f32 %v8421, %v8421
        %v8678 = vmul.f32 %v8422, %v8422
        %v8679 = vmul.f32 %v8423, %v8423
        %v8680 = vmul.f32 %v8424, %v8424
        %v8681 = vmul.f32 %v8425, %v8425
        %v8682 = vmul.f32 %v8426, %v8426
        %v8683 = vmul.f32 %v8427, %v8427
        %v8684 = vmul.f32 %v8428, %v8428
        %v8685 = vmul.f32 %v8429, %v8429
        %v8686 = vmul.f32 %v8430, %v8430
        %v8687 = vmul.f32 %v8431, %v8431
        %v8688 = vmul.f32 %v8432, %v8432
        %v8689 = vmul.f32 %v8433, %v8433
        %v8690 = vmul.f32 %v8434, %v8434
        %v8691 = vmul.f32 %v8435, %v8435
        %v8692 = vmul.f32 %v8436, %v8436
        %v8693 = vmul.f32 %v8437, %v8437
        %v8694 = vmul.f32 %v8438, %v8438
        %v8695 = vmul.f32 %v8439, %v8439
        %v8696 = vmul.f32 %v8440, %v8440
        %v8697 = vmul.f32 %v8441, %v8441
        %v8698 = vmul.f32 %v8442, %v8442
        %v8699 = vmul.f32 %v8443, %v8443
        %v8700 = vmul.f32 %v8444, %v8444
        %v8701 = vmul.f32 %v8445, %v8445
        %v8702 = vmul.f32 %v8446, %v8446
        %v8703 = vmul.f32 %v8447, %v8447
        %v8704 = vmul.f32 %v8448, %v8448
        %v8705 = vmul.f32 %v8449, %v8449
        %v8706 = vmul.f32 %v8450, %v8450
        %v8707 = vmul.f32 %v8451, %v8451
        %v8708 = vmul.f32 %v8452, %v8452
        %v8709 = vmul.f32 %v8453, %v8453
        %v8710 = vmul.f32 %v8454, %v8454
        %v8711 = vmul.f32 %v8455, %v8455
        %v8712 = vmul.f32 %v8456, %v8456
        %v8713 = vmul.f32 %v8457, %v8457
        %v8714 = vmul.f32 %v8458, %v8458
        %v8715 = vmul.f32 %v8459, %v8459
        %v8716 = vmul.f32 %v8460, %v8460
        %v8717 = vmul.f32 %v8461, %v8461
        %v8718 = vmul.f32 %v8462, %v8462
        %v8719 = vmul.f32 %v8463, %v8463
        %v8720 = vmul.f32 %v8464, %v8464
        %v8721 = vmul.f32 %v8465, %v8465
        %v8722 = vmul.f32 %v8466, %v8466
        %v8723 = vmul.f32 %v8467, %v8467
        %v8724 = vmul.f32 %v8468, %v8468
        %v8725 = vmul.f32 %v8469, %v8469
        %v8726 = vmul.f32 %v8470, %v8470
        %v8727 = vmul.f32 %v8471, %v8471
        %v8728 = vmul.f32 %v8472, %v8472
        %v8729 = vmul.f32 %v8473, %v8473
        %v8730 = vmul.f32 %v8474, %v8474
        %v8731 = vmul.f32 %v8475, %v8475
        %v8732 = vmul.f32 %v8476, %v8476
        %v8733 = vmul.f32 %v8477, %v8477
        %v8734 = vmul.f32 %v8478, %v8478
        %v8735 = vmul.f32 %v8479, %v8479
        %v8736 = vmul.f32 %v8480, %v8480
        %v8737 = vmul.f32 %v8481, %v8481
        %v8738 = vmul.f32 %v8482, %v8482
        %v8739 = vmul.f32 %v8483, %v8483
        %v8740 = vmul.f32 %v8484, %v8484
        %v8741 = vmul.f32 %v8485, %v8485
        %v8742 = vmul.f32 %v8486, %v8486
        %v8743 = vmul.f32 %v8487, %v8487
        %v8744 = vmul.f32 %v8488, %v8488
        %v8745 = vmul.f32 %v8489, %v8489
        %v8746 = vmul.f32 %v8490, %v8490
        %v8747 = vmul.f32 %v8491, %v8491
        %v8748 = vmul.f32 %v8492, %v8492
        %v8749 = vmul.f32 %v8493, %v8493
        %v8750 = vmul.f32 %v8494, %v8494
        %v8751 = vmul.f32 %v8495, %v8495
        %v8752 = vmul.f32 %v8496, %v8496
        %v8753 = vmul.f32 %v8497, %v8497
        %v8754 = vmul.f32 %v8498, %v8498
        %v8755 = vmul.f32 %v8499, %v8499
        %v8756 = vmul.f32 %v8500, %v8500
        %v8757 = vmul.f32 %v8501, %v8501
        %v8758 = vmul.f32 %v8502, %v8502
        %v8759 = vmul.f32 %v8503, %v8503
        %v8760 = vmul.f32 %v8504, %v8504
        %v8761 = vmul.f32 %v8505, %v8505
        %v8762 = vmul.f32 %v8506, %v8506
        %v8763 = vmul.f32 %v8507, %v8507
        %v8764 = vmul.f32 %v8508, %v8508
        %v8765 = vmul.f32 %v8509, %v8509
        %v8766 = vmul.f32 %v8510, %v8510
        %v8767 = vmul.f32 %v8511, %v8511
        %v8768 = vmul.f32 %v8512, %v8512
        %v8769 = vmul.f32 %v8513, %v8513
        %v8770 = vmul.f32 %v8514, %v8514
        %v8771 = vmul.f32 %v8515, %v8515
        %v8772 = vmul.f32 %v8516, %v8516
        %v8773 = vmul.f32 %v8517, %v8517
        %v8774 = vmul.f32 %v8518, %v8518
        %v8775 = vmul.f32 %v8519, %v8519
        %v8776 = vmul.f32 %v8520, %v8520
        %v8777 = vmul.f32 %v8521, %v8521
        %v8778 = vmul.f32 %v8522, %v8522
        %v8779 = vmul.f32 %v8523, %v8523
        %v8780 = vmul.f32 %v8524, %v8524
        %v8781 = vmul.f32 %v8525, %v8525
        %v8782 = vmul.f32 %v7246, %v8526
        %v8783 = vmul.f32 %v7247, %v8527
        %v8784 = vmul.f32 %v7248, %v8528
        %v8785 = vmul.f32 %v7249, %v8529
        %v8786 = vmul.f32 %v7250, %v8530
        %v8787 = vmul.f32 %v7251, %v8531
        %v8788 = vmul.f32 %v7252, %v8532
        %v8789 = vmul.f32 %v7253, %v8533
        %v8790 = vmul.f32 %v7254, %v8534
        %v8791 = vmul.f32 %v7255, %v8535
        %v8792 = vmul.f32 %v7256, %v8536
        %v8793 = vmul.f32 %v7257, %v8537
        %v8794 = vmul.f32 %v7258, %v8538
        %v8795 = vmul.f32 %v7259, %v8539
        %v8796 = vmul.f32 %v7260, %v8540
        %v8797 = vmul.f32 %v7261, %v8541
        %v8798 = vmul.f32 %v7262, %v8542
        %v8799 = vmul.f32 %v7263, %v8543
        %v8800 = vmul.f32 %v7264, %v8544
        %v8801 = vmul.f32 %v7265, %v8545
        %v8802 = vmul.f32 %v7266, %v8546
        %v8803 = vmul.f32 %v7267, %v8547
        %v8804 = vmul.f32 %v7268, %v8548
        %v8805 = vmul.f32 %v7269, %v8549
        %v8806 = vmul.f32 %v7270, %v8550
        %v8807 = vmul.f32 %v7271, %v8551
        %v8808 = vmul.f32 %v7272, %v8552
        %v8809 = vmul.f32 %v7273, %v8553
        %v8810 = vmul.f32 %v7274, %v8554
        %v8811 = vmul.f32 %v7275, %v8555
        %v8812 = vmul.f32 %v7276, %v8556
        %v8813 = vmul.f32 %v7277, %v8557
        %v8814 = vmul.f32 %v7278, %v8558
        %v8815 = vmul.f32 %v7279, %v8559
        %v8816 = vmul.f32 %v7280, %v8560
        %v8817 = vmul.f32 %v7281, %v8561
        %v8818 = vmul.f32 %v7282, %v8562
        %v8819 = vmul.f32 %v7283, %v8563
        %v8820 = vmul.f32 %v7284, %v8564
        %v8821 = vmul.f32 %v7285, %v8565
        %v8822 = vmul.f32 %v7286, %v8566
        %v8823 = vmul.f32 %v7287, %v8567
        %v8824 = vmul.f32 %v7288, %v8568
        %v8825 = vmul.f32 %v7289, %v8569
        %v8826 = vmul.f32 %v7290, %v8570
        %v8827 = vmul.f32 %v7291, %v8571
        %v8828 = vmul.f32 %v7292, %v8572
        %v8829 = vmul.f32 %v7293, %v8573
        %v8830 = vmul.f32 %v7294, %v8574
        %v8831 = vmul.f32 %v7295, %v8575
        %v8832 = vmul.f32 %v7296, %v8576
        %v8833 = vmul.f32 %v7297, %v8577
        %v8834 = vmul.f32 %v7298, %v8578
        %v8835 = vmul.f32 %v7299, %v8579
        %v8836 = vmul.f32 %v7300, %v8580
        %v8837 = vmul.f32 %v7301, %v8581
        %v8838 = vmul.f32 %v7302, %v8582
        %v8839 = vmul.f32 %v7303, %v8583
        %v8840 = vmul.f32 %v7304, %v8584
        %v8841 = vmul.f32 %v7305, %v8585
        %v8842 = vmul.f32 %v7306, %v8586
        %v8843 = vmul.f32 %v7307, %v8587
        %v8844 = vmul.f32 %v7308, %v8588
        %v8845 = vmul.f32 %v7309, %v8589
        %v8846 = vmul.f32 %v7310, %v8590
        %v8847 = vmul.f32 %v7311, %v8591
        %v8848 = vmul.f32 %v7312, %v8592
        %v8849 = vmul.f32 %v7313, %v8593
        %v8850 = vmul.f32 %v7314, %v8594
        %v8851 = vmul.f32 %v7315, %v8595
        %v8852 = vmul.f32 %v7316, %v8596
        %v8853 = vmul.f32 %v7317, %v8597
        %v8854 = vmul.f32 %v7318, %v8598
        %v8855 = vmul.f32 %v7319, %v8599
        %v8856 = vmul.f32 %v7320, %v8600
        %v8857 = vmul.f32 %v7321, %v8601
        %v8858 = vmul.f32 %v7322, %v8602
        %v8859 = vmul.f32 %v7323, %v8603
        %v8860 = vmul.f32 %v7324, %v8604
        %v8861 = vmul.f32 %v7325, %v8605
        %v8862 = vmul.f32 %v7326, %v8606
        %v8863 = vmul.f32 %v7327, %v8607
        %v8864 = vmul.f32 %v7328, %v8608
        %v8865 = vmul.f32 %v7329, %v8609
        %v8866 = vmul.f32 %v7330, %v8610
        %v8867 = vmul.f32 %v7331, %v8611
        %v8868 = vmul.f32 %v7332, %v8612
        %v8869 = vmul.f32 %v7333, %v8613
        %v8870 = vmul.f32 %v7334, %v8614
        %v8871 = vmul.f32 %v7335, %v8615
        %v8872 = vmul.f32 %v7336, %v8616
        %v8873 = vmul.f32 %v7337, %v8617
        %v8874 = vmul.f32 %v7338, %v8618
        %v8875 = vmul.f32 %v7339, %v8619
        %v8876 = vmul.f32 %v7340, %v8620
        %v8877 = vmul.f32 %v7341, %v8621
        %v8878 = vmul.f32 %v7342, %v8622
        %v8879 = vmul.f32 %v7343, %v8623
        %v8880 = vmul.f32 %v7344, %v8624
        %v8881 = vmul.f32 %v7345, %v8625
        %v8882 = vmul.f32 %v7346, %v8626
        %v8883 = vmul.f32 %v7347, %v8627
        %v8884 = vmul.f32 %v7348, %v8628
        %v8885 = vmul.f32 %v7349, %v8629
        %v8886 = vmul.f32 %v7350, %v8630
        %v8887 = vmul.f32 %v7351, %v8631
        %v8888 = vmul.f32 %v7352, %v8632
        %v8889 = vmul.f32 %v7353, %v8633
        %v8890 = vmul.f32 %v7354, %v8634
        %v8891 = vmul.f32 %v7355, %v8635
        %v8892 = vmul.f32 %v7356, %v8636
        %v8893 = vmul.f32 %v7357, %v8637
        %v8894 = vmul.f32 %v7358, %v8638
        %v8895 = vmul.f32 %v7359, %v8639
        %v8896 = vmul.f32 %v7360, %v8640
        %v8897 = vmul.f32 %v7361, %v8641
        %v8898 = vmul.f32 %v7362, %v8642
        %v8899 = vmul.f32 %v7363, %v8643
        %v8900 = vmul.f32 %v7364, %v8644
        %v8901 = vmul.f32 %v7365, %v8645
        %v8902 = vmul.f32 %v7366, %v8646
        %v8903 = vmul.f32 %v7367, %v8647
        %v8904 = vmul.f32 %v7368, %v8648
        %v8905 = vmul.f32 %v7369, %v8649
        %v8906 = vmul.f32 %v7370, %v8650
        %v8907 = vmul.f32 %v7371, %v8651
        %v8908 = vmul.f32 %v7372, %v8652
        %v8909 = vmul.f32 %v7373, %v8653
        %v8910 = vmul.f32 %v7374, %v8654
        %v8911 = vmul.f32 %v7375, %v8655
        %v8912 = vmul.f32 %v7376, %v8656
        %v8913 = vmul.f32 %v7377, %v8657
        %v8914 = vmul.f32 %v7378, %v8658
        %v8915 = vmul.f32 %v7379, %v8659
        %v8916 = vmul.f32 %v7380, %v8660
        %v8917 = vmul.f32 %v7381, %v8661
        %v8918 = vmul.f32 %v7382, %v8662
        %v8919 = vmul.f32 %v7383, %v8663
        %v8920 = vmul.f32 %v7384, %v8664
        %v8921 = vmul.f32 %v7385, %v8665
        %v8922 = vmul.f32 %v7386, %v8666
        %v8923 = vmul.f32 %v7387, %v8667
        %v8924 = vmul.f32 %v7388, %v8668
        %v8925 = vmul.f32 %v7389, %v8669
        %v8926 = vmul.f32 %v7390, %v8670
        %v8927 = vmul.f32 %v7391, %v8671
        %v8928 = vmul.f32 %v7392, %v8672
        %v8929 = vmul.f32 %v7393, %v8673
        %v8930 = vmul.f32 %v7394, %v8674
        %v8931 = vmul.f32 %v7395, %v8675
        %v8932 = vmul.f32 %v7396, %v8676
        %v8933 = vmul.f32 %v7397, %v8677
        %v8934 = vmul.f32 %v7398, %v8678
        %v8935 = vmul.f32 %v7399, %v8679
        %v8936 = vmul.f32 %v7400, %v8680
        %v8937 = vmul.f32 %v7401, %v8681
        %v8938 = vmul.f32 %v7402, %v8682
        %v8939 = vmul.f32 %v7403, %v8683
        %v8940 = vmul.f32 %v7404, %v8684
        %v8941 = vmul.f32 %v7405, %v8685
        %v8942 = vmul.f32 %v7406, %v8686
        %v8943 = vmul.f32 %v7407, %v8687
        %v8944 = vmul.f32 %v7408, %v8688
        %v8945 = vmul.f32 %v7409, %v8689
        %v8946 = vmul.f32 %v7410, %v8690
        %v8947 = vmul.f32 %v7411, %v8691
        %v8948 = vmul.f32 %v7412, %v8692
        %v8949 = vmul.f32 %v7413, %v8693
        %v8950 = vmul.f32 %v7414, %v8694
        %v8951 = vmul.f32 %v7415, %v8695
        %v8952 = vmul.f32 %v7416, %v8696
        %v8953 = vmul.f32 %v7417, %v8697
        %v8954 = vmul.f32 %v7418, %v8698
        %v8955 = vmul.f32 %v7419, %v8699
        %v8956 = vmul.f32 %v7420, %v8700
        %v8957 = vmul.f32 %v7421, %v8701
        %v8958 = vmul.f32 %v7422, %v8702
        %v8959 = vmul.f32 %v7423, %v8703
        %v8960 = vmul.f32 %v7424, %v8704
        %v8961 = vmul.f32 %v7425, %v8705
        %v8962 = vmul.f32 %v7426, %v8706
        %v8963 = vmul.f32 %v7427, %v8707
        %v8964 = vmul.f32 %v7428, %v8708
        %v8965 = vmul.f32 %v7429, %v8709
        %v8966 = vmul.f32 %v7430, %v8710
        %v8967 = vmul.f32 %v7431, %v8711
        %v8968 = vmul.f32 %v7432, %v8712
        %v8969 = vmul.f32 %v7433, %v8713
        %v8970 = vmul.f32 %v7434, %v8714
        %v8971 = vmul.f32 %v7435, %v8715
        %v8972 = vmul.f32 %v7436, %v8716
        %v8973 = vmul.f32 %v7437, %v8717
        %v8974 = vmul.f32 %v7438, %v8718
        %v8975 = vmul.f32 %v7439, %v8719
        %v8976 = vmul.f32 %v7440, %v8720
        %v8977 = vmul.f32 %v7441, %v8721
        %v8978 = vmul.f32 %v7442, %v8722
        %v8979 = vmul.f32 %v7443, %v8723
        %v8980 = vmul.f32 %v7444, %v8724
        %v8981 = vmul.f32 %v7445, %v8725
        %v8982 = vmul.f32 %v7446, %v8726
        %v8983 = vmul.f32 %v7447, %v8727
        %v8984 = vmul.f32 %v7448, %v8728
        %v8985 = vmul.f32 %v7449, %v8729
        %v8986 = vmul.f32 %v7450, %v8730
        %v8987 = vmul.f32 %v7451, %v8731
        %v8988 = vmul.f32 %v7452, %v8732
        %v8989 = vmul.f32 %v7453, %v8733
        %v8990 = vmul.f32 %v7454, %v8734
        %v8991 = vmul.f32 %v7455, %v8735
        %v8992 = vmul.f32 %v7456, %v8736
        %v8993 = vmul.f32 %v7457, %v8737
        %v8994 = vmul.f32 %v7458, %v8738
        %v8995 = vmul.f32 %v7459, %v8739
        %v8996 = vmul.f32 %v7460, %v8740
        %v8997 = vmul.f32 %v7461, %v8741
        %v8998 = vmul.f32 %v7462, %v8742
        %v8999 = vmul.f32 %v7463, %v8743
        %v9000 = vmul.f32 %v7464, %v8744
        %v9001 = vmul.f32 %v7465, %v8745
        %v9002 = vmul.f32 %v7466, %v8746
        %v9003 = vmul.f32 %v7467, %v8747
        %v9004 = vmul.f32 %v7468, %v8748
        %v9005 = vmul.f32 %v7469, %v8749
        %v9006 = vmul.f32 %v7470, %v8750
        %v9007 = vmul.f32 %v7471, %v8751
        %v9008 = vmul.f32 %v7472, %v8752
        %v9009 = vmul.f32 %v7473, %v8753
        %v9010 = vmul.f32 %v7474, %v8754
        %v9011 = vmul.f32 %v7475, %v8755
        %v9012 = vmul.f32 %v7476, %v8756
        %v9013 = vmul.f32 %v7477, %v8757
        %v9014 = vmul.f32 %v7478, %v8758
        %v9015 = vmul.f32 %v7479, %v8759
        %v9016 = vmul.f32 %v7480, %v8760
        %v9017 = vmul.f32 %v7481, %v8761
        %v9018 = vmul.f32 %v7482, %v8762
        %v9019 = vmul.f32 %v7483, %v8763
        %v9020 = vmul.f32 %v7484, %v8764
        %v9021 = vmul.f32 %v7485, %v8765
        %v9022 = vmul.f32 %v7486, %v8766
        %v9023 = vmul.f32 %v7487, %v8767
        %v9024 = vmul.f32 %v7488, %v8768
        %v9025 = vmul.f32 %v7489, %v8769
        %v9026 = vmul.f32 %v7490, %v8770
        %v9027 = vmul.f32 %v7491, %v8771
        %v9028 = vmul.f32 %v7492, %v8772
        %v9029 = vmul.f32 %v7493, %v8773
        %v9030 = vmul.f32 %v7494, %v8774
        %v9031 = vmul.f32 %v7495, %v8775
        %v9032 = vmul.f32 %v7496, %v8776
        %v9033 = vmul.f32 %v7497, %v8777
        %v9034 = vmul.f32 %v7498, %v8778
        %v9035 = vmul.f32 %v7499, %v8779
        %v9036 = vmul.f32 %v7500, %v8780
        %v9037 = vmul.f32 %v7501, %v8781
        %v9038 = vsel %vm4158, %v8782, 0.0
        %v9039 = vsel %vm4159, %v8783, 0.0
        %v9040 = vsel %vm4160, %v8784, 0.0
        %v9041 = vsel %vm4161, %v8785, 0.0
        %v9042 = vsel %vm4162, %v8786, 0.0
        %v9043 = vsel %vm4163, %v8787, 0.0
        %v9044 = vsel %vm4164, %v8788, 0.0
        %v9045 = vsel %vm4165, %v8789, 0.0
        %v9046 = vsel %vm4166, %v8790, 0.0
        %v9047 = vsel %vm4167, %v8791, 0.0
        %v9048 = vsel %vm4168, %v8792, 0.0
        %v9049 = vsel %vm4169, %v8793, 0.0
        %v9050 = vsel %vm4170, %v8794, 0.0
        %v9051 = vsel %vm4171, %v8795, 0.0
        %v9052 = vsel %vm4172, %v8796, 0.0
        %v9053 = vsel %vm4173, %v8797, 0.0
        %v9054 = vsel %vm4174, %v8798, 0.0
        %v9055 = vsel %vm4175, %v8799, 0.0
        %v9056 = vsel %vm4176, %v8800, 0.0
        %v9057 = vsel %vm4177, %v8801, 0.0
        %v9058 = vsel %vm4178, %v8802, 0.0
        %v9059 = vsel %vm4179, %v8803, 0.0
        %v9060 = vsel %vm4180, %v8804, 0.0
        %v9061 = vsel %vm4181, %v8805, 0.0
        %v9062 = vsel %vm4182, %v8806, 0.0
        %v9063 = vsel %vm4183, %v8807, 0.0
        %v9064 = vsel %vm4184, %v8808, 0.0
        %v9065 = vsel %vm4185, %v8809, 0.0
        %v9066 = vsel %vm4186, %v8810, 0.0
        %v9067 = vsel %vm4187, %v8811, 0.0
        %v9068 = vsel %vm4188, %v8812, 0.0
        %v9069 = vsel %vm4189, %v8813, 0.0
        %v9070 = vsel %vm4190, %v8814, 0.0
        %v9071 = vsel %vm4191, %v8815, 0.0
        %v9072 = vsel %vm4192, %v8816, 0.0
        %v9073 = vsel %vm4193, %v8817, 0.0
        %v9074 = vsel %vm4194, %v8818, 0.0
        %v9075 = vsel %vm4195, %v8819, 0.0
        %v9076 = vsel %vm4196, %v8820, 0.0
        %v9077 = vsel %vm4197, %v8821, 0.0
        %v9078 = vsel %vm4198, %v8822, 0.0
        %v9079 = vsel %vm4199, %v8823, 0.0
        %v9080 = vsel %vm4200, %v8824, 0.0
        %v9081 = vsel %vm4201, %v8825, 0.0
        %v9082 = vsel %vm4202, %v8826, 0.0
        %v9083 = vsel %vm4203, %v8827, 0.0
        %v9084 = vsel %vm4204, %v8828, 0.0
        %v9085 = vsel %vm4205, %v8829, 0.0
        %v9086 = vsel %vm4206, %v8830, 0.0
        %v9087 = vsel %vm4207, %v8831, 0.0
        %v9088 = vsel %vm4208, %v8832, 0.0
        %v9089 = vsel %vm4209, %v8833, 0.0
        %v9090 = vsel %vm4210, %v8834, 0.0
        %v9091 = vsel %vm4211, %v8835, 0.0
        %v9092 = vsel %vm4212, %v8836, 0.0
        %v9093 = vsel %vm4213, %v8837, 0.0
        %v9094 = vsel %vm4214, %v8838, 0.0
        %v9095 = vsel %vm4215, %v8839, 0.0
        %v9096 = vsel %vm4216, %v8840, 0.0
        %v9097 = vsel %vm4217, %v8841, 0.0
        %v9098 = vsel %vm4218, %v8842, 0.0
        %v9099 = vsel %vm4219, %v8843, 0.0
        %v9100 = vsel %vm4220, %v8844, 0.0
        %v9101 = vsel %vm4221, %v8845, 0.0
        %v9102 = vsel %vm4222, %v8846, 0.0
        %v9103 = vsel %vm4223, %v8847, 0.0
        %v9104 = vsel %vm4224, %v8848, 0.0
        %v9105 = vsel %vm4225, %v8849, 0.0
        %v9106 = vsel %vm4226, %v8850, 0.0
        %v9107 = vsel %vm4227, %v8851, 0.0
        %v9108 = vsel %vm4228, %v8852, 0.0
        %v9109 = vsel %vm4229, %v8853, 0.0
        %v9110 = vsel %vm4230, %v8854, 0.0
        %v9111 = vsel %vm4231, %v8855, 0.0
        %v9112 = vsel %vm4232, %v8856, 0.0
        %v9113 = vsel %vm4233, %v8857, 0.0
        %v9114 = vsel %vm4234, %v8858, 0.0
        %v9115 = vsel %vm4235, %v8859, 0.0
        %v9116 = vsel %vm4236, %v8860, 0.0
        %v9117 = vsel %vm4237, %v8861, 0.0
        %v9118 = vsel %vm4238, %v8862, 0.0
        %v9119 = vsel %vm4239, %v8863, 0.0
        %v9120 = vsel %vm4240, %v8864, 0.0
        %v9121 = vsel %vm4241, %v8865, 0.0
        %v9122 = vsel %vm4242, %v8866, 0.0
        %v9123 = vsel %vm4243, %v8867, 0.0
        %v9124 = vsel %vm4244, %v8868, 0.0
        %v9125 = vsel %vm4245, %v8869, 0.0
        %v9126 = vsel %vm4246, %v8870, 0.0
        %v9127 = vsel %vm4247, %v8871, 0.0
        %v9128 = vsel %vm4248, %v8872, 0.0
        %v9129 = vsel %vm4249, %v8873, 0.0
        %v9130 = vsel %vm4250, %v8874, 0.0
        %v9131 = vsel %vm4251, %v8875, 0.0
        %v9132 = vsel %vm4252, %v8876, 0.0
        %v9133 = vsel %vm4253, %v8877, 0.0
        %v9134 = vsel %vm4254, %v8878, 0.0
        %v9135 = vsel %vm4255, %v8879, 0.0
        %v9136 = vsel %vm4256, %v8880, 0.0
        %v9137 = vsel %vm4257, %v8881, 0.0
        %v9138 = vsel %vm4258, %v8882, 0.0
        %v9139 = vsel %vm4259, %v8883, 0.0
        %v9140 = vsel %vm4260, %v8884, 0.0
        %v9141 = vsel %vm4261, %v8885, 0.0
        %v9142 = vsel %vm4262, %v8886, 0.0
        %v9143 = vsel %vm4263, %v8887, 0.0
        %v9144 = vsel %vm4264, %v8888, 0.0
        %v9145 = vsel %vm4265, %v8889, 0.0
        %v9146 = vsel %vm4266, %v8890, 0.0
        %v9147 = vsel %vm4267, %v8891, 0.0
        %v9148 = vsel %vm4268, %v8892, 0.0
        %v9149 = vsel %vm4269, %v8893, 0.0
        %v9150 = vsel %vm4270, %v8894, 0.0
        %v9151 = vsel %vm4271, %v8895, 0.0
        %v9152 = vsel %vm4272, %v8896, 0.0
        %v9153 = vsel %vm4273, %v8897, 0.0
        %v9154 = vsel %vm4274, %v8898, 0.0
        %v9155 = vsel %vm4275, %v8899, 0.0
        %v9156 = vsel %vm4276, %v8900, 0.0
        %v9157 = vsel %vm4277, %v8901, 0.0
        %v9158 = vsel %vm4278, %v8902, 0.0
        %v9159 = vsel %vm4279, %v8903, 0.0
        %v9160 = vsel %vm4280, %v8904, 0.0
        %v9161 = vsel %vm4281, %v8905, 0.0
        %v9162 = vsel %vm4282, %v8906, 0.0
        %v9163 = vsel %vm4283, %v8907, 0.0
        %v9164 = vsel %vm4284, %v8908, 0.0
        %v9165 = vsel %vm4285, %v8909, 0.0
        %v9166 = vsel %vm4286, %v8910, 0.0
        %v9167 = vsel %vm4287, %v8911, 0.0
        %v9168 = vsel %vm4288, %v8912, 0.0
        %v9169 = vsel %vm4289, %v8913, 0.0
        %v9170 = vsel %vm4290, %v8914, 0.0
        %v9171 = vsel %vm4291, %v8915, 0.0
        %v9172 = vsel %vm4292, %v8916, 0.0
        %v9173 = vsel %vm4293, %v8917, 0.0
        %v9174 = vsel %vm4294, %v8918, 0.0
        %v9175 = vsel %vm4295, %v8919, 0.0
        %v9176 = vsel %vm4296, %v8920, 0.0
        %v9177 = vsel %vm4297, %v8921, 0.0
        %v9178 = vsel %vm4298, %v8922, 0.0
        %v9179 = vsel %vm4299, %v8923, 0.0
        %v9180 = vsel %vm4300, %v8924, 0.0
        %v9181 = vsel %vm4301, %v8925, 0.0
        %v9182 = vsel %vm4302, %v8926, 0.0
        %v9183 = vsel %vm4303, %v8927, 0.0
        %v9184 = vsel %vm4304, %v8928, 0.0
        %v9185 = vsel %vm4305, %v8929, 0.0
        %v9186 = vsel %vm4306, %v8930, 0.0
        %v9187 = vsel %vm4307, %v8931, 0.0
        %v9188 = vsel %vm4308, %v8932, 0.0
        %v9189 = vsel %vm4309, %v8933, 0.0
        %v9190 = vsel %vm4310, %v8934, 0.0
        %v9191 = vsel %vm4311, %v8935, 0.0
        %v9192 = vsel %vm4312, %v8936, 0.0
        %v9193 = vsel %vm4313, %v8937, 0.0
        %v9194 = vsel %vm4314, %v8938, 0.0
        %v9195 = vsel %vm4315, %v8939, 0.0
        %v9196 = vsel %vm4316, %v8940, 0.0
        %v9197 = vsel %vm4317, %v8941, 0.0
        %v9198 = vsel %vm4318, %v8942, 0.0
        %v9199 = vsel %vm4319, %v8943, 0.0
        %v9200 = vsel %vm4320, %v8944, 0.0
        %v9201 = vsel %vm4321, %v8945, 0.0
        %v9202 = vsel %vm4322, %v8946, 0.0
        %v9203 = vsel %vm4323, %v8947, 0.0
        %v9204 = vsel %vm4324, %v8948, 0.0
        %v9205 = vsel %vm4325, %v8949, 0.0
        %v9206 = vsel %vm4326, %v8950, 0.0
        %v9207 = vsel %vm4327, %v8951, 0.0
        %v9208 = vsel %vm4328, %v8952, 0.0
        %v9209 = vsel %vm4329, %v8953, 0.0
        %v9210 = vsel %vm4330, %v8954, 0.0
        %v9211 = vsel %vm4331, %v8955, 0.0
        %v9212 = vsel %vm4332, %v8956, 0.0
        %v9213 = vsel %vm4333, %v8957, 0.0
        %v9214 = vsel %vm4334, %v8958, 0.0
        %v9215 = vsel %vm4335, %v8959, 0.0
        %v9216 = vsel %vm4336, %v8960, 0.0
        %v9217 = vsel %vm4337, %v8961, 0.0
        %v9218 = vsel %vm4338, %v8962, 0.0
        %v9219 = vsel %vm4339, %v8963, 0.0
        %v9220 = vsel %vm4340, %v8964, 0.0
        %v9221 = vsel %vm4341, %v8965, 0.0
        %v9222 = vsel %vm4342, %v8966, 0.0
        %v9223 = vsel %vm4343, %v8967, 0.0
        %v9224 = vsel %vm4344, %v8968, 0.0
        %v9225 = vsel %vm4345, %v8969, 0.0
        %v9226 = vsel %vm4346, %v8970, 0.0
        %v9227 = vsel %vm4347, %v8971, 0.0
        %v9228 = vsel %vm4348, %v8972, 0.0
        %v9229 = vsel %vm4349, %v8973, 0.0
        %v9230 = vsel %vm4350, %v8974, 0.0
        %v9231 = vsel %vm4351, %v8975, 0.0
        %v9232 = vsel %vm4352, %v8976, 0.0
        %v9233 = vsel %vm4353, %v8977, 0.0
        %v9234 = vsel %vm4354, %v8978, 0.0
        %v9235 = vsel %vm4355, %v8979, 0.0
        %v9236 = vsel %vm4356, %v8980, 0.0
        %v9237 = vsel %vm4357, %v8981, 0.0
        %v9238 = vsel %vm4358, %v8982, 0.0
        %v9239 = vsel %vm4359, %v8983, 0.0
        %v9240 = vsel %vm4360, %v8984, 0.0
        %v9241 = vsel %vm4361, %v8985, 0.0
        %v9242 = vsel %vm4362, %v8986, 0.0
        %v9243 = vsel %vm4363, %v8987, 0.0
        %v9244 = vsel %vm4364, %v8988, 0.0
        %v9245 = vsel %vm4365, %v8989, 0.0
        %v9246 = vsel %vm4366, %v8990, 0.0
        %v9247 = vsel %vm4367, %v8991, 0.0
        %v9248 = vsel %vm4368, %v8992, 0.0
        %v9249 = vsel %vm4369, %v8993, 0.0
        %v9250 = vsel %vm4370, %v8994, 0.0
        %v9251 = vsel %vm4371, %v8995, 0.0
        %v9252 = vsel %vm4372, %v8996, 0.0
        %v9253 = vsel %vm4373, %v8997, 0.0
        %v9254 = vsel %vm4374, %v8998, 0.0
        %v9255 = vsel %vm4375, %v8999, 0.0
        %v9256 = vsel %vm4376, %v9000, 0.0
        %v9257 = vsel %vm4377, %v9001, 0.0
        %v9258 = vsel %vm4378, %v9002, 0.0
        %v9259 = vsel %vm4379, %v9003, 0.0
        %v9260 = vsel %vm4380, %v9004, 0.0
        %v9261 = vsel %vm4381, %v9005, 0.0
        %v9262 = vsel %vm4382, %v9006, 0.0
        %v9263 = vsel %vm4383, %v9007, 0.0
        %v9264 = vsel %vm4384, %v9008, 0.0
        %v9265 = vsel %vm4385, %v9009, 0.0
        %v9266 = vsel %vm4386, %v9010, 0.0
        %v9267 = vsel %vm4387, %v9011, 0.0
        %v9268 = vsel %vm4388, %v9012, 0.0
        %v9269 = vsel %vm4389, %v9013, 0.0
        %v9270 = vsel %vm4390, %v9014, 0.0
        %v9271 = vsel %vm4391, %v9015, 0.0
        %v9272 = vsel %vm4392, %v9016, 0.0
        %v9273 = vsel %vm4393, %v9017, 0.0
        %v9274 = vsel %vm4394, %v9018, 0.0
        %v9275 = vsel %vm4395, %v9019, 0.0
        %v9276 = vsel %vm4396, %v9020, 0.0
        %v9277 = vsel %vm4397, %v9021, 0.0
        %v9278 = vsel %vm4398, %v9022, 0.0
        %v9279 = vsel %vm4399, %v9023, 0.0
        %v9280 = vsel %vm4400, %v9024, 0.0
        %v9281 = vsel %vm4401, %v9025, 0.0
        %v9282 = vsel %vm4402, %v9026, 0.0
        %v9283 = vsel %vm4403, %v9027, 0.0
        %v9284 = vsel %vm4404, %v9028, 0.0
        %v9285 = vsel %vm4405, %v9029, 0.0
        %v9286 = vsel %vm4406, %v9030, 0.0
        %v9287 = vsel %vm4407, %v9031, 0.0
        %v9288 = vsel %vm4408, %v9032, 0.0
        %v9289 = vsel %vm4409, %v9033, 0.0
        %v9290 = vsel %vm4410, %v9034, 0.0
        %v9291 = vsel %vm4411, %v9035, 0.0
        %v9292 = vsel %vm4412, %v9036, 0.0
        %v9293 = vsel %vm4413, %v9037, 0.0
        %v9294 = vld [vmem:[#allocation4] sm:$0x1]
        %v9295 = vadd.f32 %v9038, %v9039
        %v9296 = vadd.f32 %v9295, %v9040
        %v9297 = vadd.f32 %v9296, %v9041
        %v9298 = vadd.f32 %v9297, %v9042
        %v9299 = vadd.f32 %v9298, %v9043
        %v9300 = vadd.f32 %v9299, %v9044
        %v9301 = vadd.f32 %v9300, %v9045
        %v9302 = vadd.f32 %v9301, %v9046
        %v9303 = vadd.f32 %v9302, %v9047
        %v9304 = vadd.f32 %v9303, %v9048
        %v9305 = vadd.f32 %v9304, %v9049
        %v9306 = vadd.f32 %v9305, %v9050
        %v9307 = vadd.f32 %v9306, %v9051
        %v9308 = vadd.f32 %v9307, %v9052
        %v9309 = vadd.f32 %v9308, %v9053
        %v9310 = vadd.f32 %v9309, %v9054
        %v9311 = vadd.f32 %v9310, %v9055
        %v9312 = vadd.f32 %v9311, %v9056
        %v9313 = vadd.f32 %v9312, %v9057
        %v9314 = vadd.f32 %v9313, %v9058
        %v9315 = vadd.f32 %v9314, %v9059
        %v9316 = vadd.f32 %v9315, %v9060
        %v9317 = vadd.f32 %v9316, %v9061
        %v9318 = vadd.f32 %v9317, %v9062
        %v9319 = vadd.f32 %v9318, %v9063
        %v9320 = vadd.f32 %v9319, %v9064
        %v9321 = vadd.f32 %v9320, %v9065
        %v9322 = vadd.f32 %v9321, %v9066
        %v9323 = vadd.f32 %v9322, %v9067
        %v9324 = vadd.f32 %v9323, %v9068
        %v9325 = vadd.f32 %v9324, %v9069
        %v9326 = vadd.f32 %v9325, %v9070
        %v9327 = vadd.f32 %v9326, %v9071
        %v9328 = vadd.f32 %v9327, %v9072
        %v9329 = vadd.f32 %v9328, %v9073
        %v9330 = vadd.f32 %v9329, %v9074
        %v9331 = vadd.f32 %v9330, %v9075
        %v9332 = vadd.f32 %v9331, %v9076
        %v9333 = vadd.f32 %v9332, %v9077
        %v9334 = vadd.f32 %v9333, %v9078
        %v9335 = vadd.f32 %v9334, %v9079
        %v9336 = vadd.f32 %v9335, %v9080
        %v9337 = vadd.f32 %v9336, %v9081
        %v9338 = vadd.f32 %v9337, %v9082
        %v9339 = vadd.f32 %v9338, %v9083
        %v9340 = vadd.f32 %v9339, %v9084
        %v9341 = vadd.f32 %v9340, %v9085
        %v9342 = vadd.f32 %v9341, %v9086
        %v9343 = vadd.f32 %v9342, %v9087
        %v9344 = vadd.f32 %v9343, %v9088
        %v9345 = vadd.f32 %v9344, %v9089
        %v9346 = vadd.f32 %v9345, %v9090
        %v9347 = vadd.f32 %v9346, %v9091
        %v9348 = vadd.f32 %v9347, %v9092
        %v9349 = vadd.f32 %v9348, %v9093
        %v9350 = vadd.f32 %v9349, %v9094
        %v9351 = vadd.f32 %v9350, %v9095
        %v9352 = vadd.f32 %v9351, %v9096
        %v9353 = vadd.f32 %v9352, %v9097
        %v9354 = vadd.f32 %v9353, %v9098
        %v9355 = vadd.f32 %v9354, %v9099
        %v9356 = vadd.f32 %v9355, %v9100
        %v9357 = vadd.f32 %v9356, %v9101
        %v9358 = vadd.f32 %v9357, %v9102
        %v9359 = vadd.f32 %v9358, %v9103
        %v9360 = vadd.f32 %v9359, %v9104
        %v9361 = vadd.f32 %v9360, %v9105
        %v9362 = vadd.f32 %v9361, %v9106
        %v9363 = vadd.f32 %v9362, %v9107
        %v9364 = vadd.f32 %v9363, %v9108
        %v9365 = vadd.f32 %v9364, %v9109
        %v9366 = vadd.f32 %v9365, %v9110
        %v9367 = vadd.f32 %v9366, %v9111
        %v9368 = vadd.f32 %v9367, %v9112
        %v9369 = vadd.f32 %v9368, %v9113
        %v9370 = vadd.f32 %v9369, %v9114
        %v9371 = vadd.f32 %v9370, %v9115
        %v9372 = vadd.f32 %v9371, %v9116
        %v9373 = vadd.f32 %v9372, %v9117
        %v9374 = vadd.f32 %v9373, %v9118
        %v9375 = vadd.f32 %v9374, %v9119
        %v9376 = vadd.f32 %v9375, %v9120
        %v9377 = vadd.f32 %v9376, %v9121
        %v9378 = vadd.f32 %v9377, %v9122
        %v9379 = vadd.f32 %v9378, %v9123
        %v9380 = vadd.f32 %v9379, %v9124
        %v9381 = vadd.f32 %v9380, %v9125
        %v9382 = vadd.f32 %v9381, %v9126
        %v9383 = vadd.f32 %v9382, %v9127
        %v9384 = vadd.f32 %v9383, %v9128
        %v9385 = vadd.f32 %v9384, %v9129
        %v9386 = vadd.f32 %v9385, %v9130
        %v9387 = vadd.f32 %v9386, %v9131
        %v9388 = vadd.f32 %v9387, %v9132
        %v9389 = vadd.f32 %v9388, %v9133
        %v9390 = vadd.f32 %v9389, %v9134
        %v9391 = vadd.f32 %v9390, %v9135
        %v9392 = vadd.f32 %v9391, %v9136
        %v9393 = vadd.f32 %v9392, %v9137
        %v9394 = vadd.f32 %v9393, %v9138
        %v9395 = vadd.f32 %v9394, %v9139
        %v9396 = vadd.f32 %v9395, %v9140
        %v9397 = vadd.f32 %v9396, %v9141
        %v9398 = vadd.f32 %v9397, %v9142
        %v9399 = vadd.f32 %v9398, %v9143
        %v9400 = vadd.f32 %v9399, %v9144
        %v9401 = vadd.f32 %v9400, %v9145
        %v9402 = vadd.f32 %v9401, %v9146
        %v9403 = vadd.f32 %v9402, %v9147
        %v9404 = vadd.f32 %v9403, %v9148
        %v9405 = vadd.f32 %v9404, %v9149
        %v9406 = vadd.f32 %v9405, %v9150
        %v9407 = vadd.f32 %v9406, %v9151
        %v9408 = vadd.f32 %v9407, %v9152
        %v9409 = vadd.f32 %v9408, %v9153
        %v9410 = vadd.f32 %v9409, %v9154
        %v9411 = vadd.f32 %v9410, %v9155
        %v9412 = vadd.f32 %v9411, %v9156
        %v9413 = vadd.f32 %v9412, %v9157
        %v9414 = vadd.f32 %v9413, %v9158
        %v9415 = vadd.f32 %v9414, %v9159
        %v9416 = vadd.f32 %v9415, %v9160
        %v9417 = vadd.f32 %v9416, %v9161
        %v9418 = vadd.f32 %v9417, %v9162
        %v9419 = vadd.f32 %v9418, %v9163
        %v9420 = vadd.f32 %v9419, %v9164
        %v9421 = vadd.f32 %v9420, %v9165
        %v9422 = vadd.f32 %v9421, %v9166
        %v9423 = vadd.f32 %v9422, %v9167
        %v9424 = vadd.f32 %v9423, %v9168
        %v9425 = vadd.f32 %v9424, %v9169
        %v9426 = vadd.f32 %v9425, %v9170
        %v9427 = vadd.f32 %v9426, %v9171
        %v9428 = vadd.f32 %v9427, %v9172
        %v9429 = vadd.f32 %v9428, %v9173
        %v9430 = vadd.f32 %v9429, %v9174
        %v9431 = vadd.f32 %v9430, %v9175
        %v9432 = vadd.f32 %v9431, %v9176
        %v9433 = vadd.f32 %v9432, %v9177
        %v9434 = vadd.f32 %v9433, %v9178
        %v9435 = vadd.f32 %v9434, %v9179
        %v9436 = vadd.f32 %v9435, %v9180
        %v9437 = vadd.f32 %v9436, %v9181
        %v9438 = vadd.f32 %v9437, %v9182
        %v9439 = vadd.f32 %v9438, %v9183
        %v9440 = vadd.f32 %v9439, %v9184
        %v9441 = vadd.f32 %v9440, %v9185
        %v9442 = vadd.f32 %v9441, %v9186
        %v9443 = vadd.f32 %v9442, %v9187
        %v9444 = vadd.f32 %v9443, %v9188
        %v9445 = vadd.f32 %v9444, %v9189
        %v9446 = vadd.f32 %v9445, %v9190
        %v9447 = vadd.f32 %v9446, %v9191
        %v9448 = vadd.f32 %v9447, %v9192
        %v9449 = vadd.f32 %v9448, %v9193
        %v9450 = vadd.f32 %v9449, %v9194
        %v9451 = vadd.f32 %v9450, %v9195
        %v9452 = vadd.f32 %v9451, %v9196
        %v9453 = vadd.f32 %v9452, %v9197
        %v9454 = vadd.f32 %v9453, %v9198
        %v9455 = vadd.f32 %v9454, %v9199
        %v9456 = vadd.f32 %v9455, %v9200
        %v9457 = vadd.f32 %v9456, %v9201
        %v9458 = vadd.f32 %v9457, %v9202
        %v9459 = vadd.f32 %v9458, %v9203
        %v9460 = vadd.f32 %v9459, %v9204
        %v9461 = vadd.f32 %v9460, %v9205
        %v9462 = vadd.f32 %v9461, %v9206
        %v9463 = vadd.f32 %v9462, %v9207
        %v9464 = vadd.f32 %v9463, %v9208
        %v9465 = vadd.f32 %v9464, %v9209
        %v9466 = vadd.f32 %v9465, %v9210
        %v9467 = vadd.f32 %v9466, %v9211
        %v9468 = vadd.f32 %v9467, %v9212
        %v9469 = vadd.f32 %v9468, %v9213
        %v9470 = vadd.f32 %v9469, %v9214
        %v9471 = vadd.f32 %v9470, %v9215
        %v9472 = vadd.f32 %v9471, %v9216
        %v9473 = vadd.f32 %v9472, %v9217
        %v9474 = vadd.f32 %v9473, %v9218
        %v9475 = vadd.f32 %v9474, %v9219
        %v9476 = vadd.f32 %v9475, %v9220
        %v9477 = vadd.f32 %v9476, %v9221
        %v9478 = vadd.f32 %v9477, %v9222
        %v9479 = vadd.f32 %v9478, %v9223
        %v9480 = vadd.f32 %v9479, %v9224
        %v9481 = vadd.f32 %v9480, %v9225
        %v9482 = vadd.f32 %v9481, %v9226
        %v9483 = vadd.f32 %v9482, %v9227
        %v9484 = vadd.f32 %v9483, %v9228
        %v9485 = vadd.f32 %v9484, %v9229
        %v9486 = vadd.f32 %v9485, %v9230
        %v9487 = vadd.f32 %v9486, %v9231
        %v9488 = vadd.f32 %v9487, %v9232
        %v9489 = vadd.f32 %v9488, %v9233
        %v9490 = vadd.f32 %v9489, %v9234
        %v9491 = vadd.f32 %v9490, %v9235
        %v9492 = vadd.f32 %v9491, %v9236
        %v9493 = vadd.f32 %v9492, %v9237
        %v9494 = vadd.f32 %v9493, %v9238
        %v9495 = vadd.f32 %v9494, %v9239
        %v9496 = vadd.f32 %v9495, %v9240
        %v9497 = vadd.f32 %v9496, %v9241
        %v9498 = vadd.f32 %v9497, %v9242
        %v9499 = vadd.f32 %v9498, %v9243
        %v9500 = vadd.f32 %v9499, %v9244
        %v9501 = vadd.f32 %v9500, %v9245
        %v9502 = vadd.f32 %v9501, %v9246
        %v9503 = vadd.f32 %v9502, %v9247
        %v9504 = vadd.f32 %v9503, %v9248
        %v9505 = vadd.f32 %v9504, %v9249
        %v9506 = vadd.f32 %v9505, %v9250
        %v9507 = vadd.f32 %v9506, %v9251
        %v9508 = vadd.f32 %v9507, %v9252
        %v9509 = vadd.f32 %v9508, %v9253
        %v9510 = vadd.f32 %v9509, %v9254
        %v9511 = vadd.f32 %v9510, %v9255
        %v9512 = vadd.f32 %v9511, %v9256
        %v9513 = vadd.f32 %v9512, %v9257
        %v9514 = vadd.f32 %v9513, %v9258
        %v9515 = vadd.f32 %v9514, %v9259
        %v9516 = vadd.f32 %v9515, %v9260
        %v9517 = vadd.f32 %v9516, %v9261
        %v9518 = vadd.f32 %v9517, %v9262
        %v9519 = vadd.f32 %v9518, %v9263
        %v9520 = vadd.f32 %v9519, %v9264
        %v9521 = vadd.f32 %v9520, %v9265
        %v9522 = vadd.f32 %v9521, %v9266
        %v9523 = vadd.f32 %v9522, %v9267
        %v9524 = vadd.f32 %v9523, %v9268
        %v9525 = vadd.f32 %v9524, %v9269
        %v9526 = vadd.f32 %v9525, %v9270
        %v9527 = vadd.f32 %v9526, %v9271
        %v9528 = vadd.f32 %v9527, %v9272
        %v9529 = vadd.f32 %v9528, %v9273
        %v9530 = vadd.f32 %v9529, %v9274
        %v9531 = vadd.f32 %v9530, %v9275
        %v9532 = vadd.f32 %v9531, %v9276
        %v9533 = vadd.f32 %v9532, %v9277
        %v9534 = vadd.f32 %v9533, %v9278
        %v9535 = vadd.f32 %v9534, %v9279
        %v9536 = vadd.f32 %v9535, %v9280
        %v9537 = vadd.f32 %v9536, %v9281
        %v9538 = vadd.f32 %v9537, %v9282
        %v9539 = vadd.f32 %v9538, %v9283
        %v9540 = vadd.f32 %v9539, %v9284
        %v9541 = vadd.f32 %v9540, %v9285
        %v9542 = vadd.f32 %v9541, %v9286
        %v9543 = vadd.f32 %v9542, %v9287
        %v9544 = vadd.f32 %v9543, %v9288
        %v9545 = vadd.f32 %v9544, %v9289
        %v9546 = vadd.f32 %v9545, %v9290
        %v9547 = vadd.f32 %v9546, %v9291
        %v9548 = vadd.f32 %v9547, %v9292
        %v9549 = vadd.f32 %v9548, %v9293
        %v9550 = vrot.slane %v9549, 4
        %v9551 = vadd.f32 %v9549, %v9550
        %v9552 = vrot.slane %v9551, 2
        %v9553 = vadd.f32 %v9551, %v9552
        %v9554 = vrot.slane %v9553, 1
        %v9555 = vadd.f32 %v9553, %v9554
        %v9556 = vadd.f32 %v9294, %v9555
        %vm9557 = vcmask 0
        %9558 = vst.msk [vmem:[#allocation4] sm:$0x1] %vm9557, %v9556
        %p9559 = scmp.eq.s32.totalorder %s29, 1
        // Predicated region
        $region41: #{tpu_custom_call.1} parent=27 // pred_check
          %p9560 = pneg %p9559
        $region42: #{tpu_custom_call.1} parent=27 // pred_check_branch
          %9562 = sbr.rel (%p9560) target = $region44
        $region43: #{tpu_custom_call.1} parent=27 // pred_region
          %v9563 = vld [vmem:[#allocation2] sm:$0x1]
          %9564 = vst [vmem:[#allocation10] sm:$0x1] %v9563
          %v9565 = vld [vmem:[#allocation3] sm:$0x1]
          %9566 = vst [vmem:[#allocation11] sm:$0x1] %v9565
          %v9567 = vld [vmem:[#allocation4] sm:$0x1]
          %9568 = vst.msk [vmem:[#allocation13] sm:$0x1] %vm9557, %v9567
        $region44: #{tpu_custom_call.1} parent=27 // pred_fallthru
          _
        // Predicated region
        $region45: #{tpu_custom_call.1} parent=27 // pred_check
          %p9569 = pneg %p114
        $region46: #{tpu_custom_call.1} parent=27 // pred_check_branch
          %9571 = sbr.rel (%p9569) target = $region48
        $region47: #{tpu_custom_call.1} parent=27 // pred_region
          %s9573 = ssub.s32 16, 16
          %9574 = vsyncadd [#allocation7], %s9573
          %s9575 = smul.addr %s28, 16
          %s9576 = scalar_lea.hbm %s2, %s9575
          %s9578 = sshll.u32 [#allocation10], 4
          %s9579 = int_to_ptr.vmem [resolvable:$true] %s9578
          %9581 = dma.vmem_to_hbm [thread:$0]  %s9579, 16, %s9576, [#allocation7]
        $region48: #{tpu_custom_call.1} parent=27 // pred_fallthru
          _
        // Predicated region
        $region49: #{tpu_custom_call.1} parent=27 // pred_check
          %p9582 = pneg %p140
        $region50: #{tpu_custom_call.1} parent=27 // pred_check_branch
          %9584 = sbr.rel (%p9582) target = $region52
        $region51: #{tpu_custom_call.1} parent=27 // pred_region
          %s9586 = ssub.s32 16, 16
          %9587 = vsyncadd [#allocation12], %s9586
          %s9588 = smul.addr %s28, 16
          %s9589 = scalar_lea.hbm %s3, %s9588
          %s9591 = sshll.u32 [#allocation11], 4
          %s9592 = int_to_ptr.vmem [resolvable:$true] %s9591
          %9594 = dma.vmem_to_hbm [thread:$0]  %s9592, 16, %s9589, [#allocation12]
        $region52: #{tpu_custom_call.1} parent=27 // pred_fallthru
          _
        // Predicated region
        $region53: #{tpu_custom_call.1} parent=27 // pred_check
          %p9595 = pneg %p166
        $region54: #{tpu_custom_call.1} parent=27 // pred_check_branch
          %9597 = sbr.rel (%p9595) target = $region56
        $region55: #{tpu_custom_call.1} parent=27 // pred_region
          %s9599 = ssub.s32 16, 16
          %9600 = vsyncadd [#allocation12], %s9599
          %s9601 = smul.addr %s28, 16
          %s9602 = scalar_lea.hbm %s4, %s9601
          %s9604 = sshll.u32 [#allocation13], 4
          %s9605 = int_to_ptr.vmem [resolvable:$true] %s9604
          %9607 = dma.vmem_to_hbm [thread:$0]  %s9605, 16, %s9602, [#allocation12]
        $region56: #{tpu_custom_call.1} parent=27 // pred_fallthru
          _
        // Predicated region
        $region57: #{tpu_custom_call.1} parent=27 // pred_check
          %p9608 = pneg %p114
        $region58: #{tpu_custom_call.1} parent=27 // pred_check_branch
          %9610 = sbr.rel (%p9608) target = $region60
        $region59: #{tpu_custom_call.1} parent=27 // pred_region
          %9611 = dma.done [#allocation7], 16
        $region60: #{tpu_custom_call.1} parent=27 // pred_fallthru
          _
        // Predicated region
        $region61: #{tpu_custom_call.1} parent=27 // pred_check
          %p9612 = pneg %p140
        $region62: #{tpu_custom_call.1} parent=27 // pred_check_branch
          %9614 = sbr.rel (%p9612) target = $region64
        $region63: #{tpu_custom_call.1} parent=27 // pred_region
          %9615 = dma.done [#allocation12], 16
        $region64: #{tpu_custom_call.1} parent=27 // pred_fallthru
          _
        // Predicated region
        $region65: #{tpu_custom_call.1} parent=27 // pred_check
          %p9616 = pneg %p166
        $region66: #{tpu_custom_call.1} parent=27 // pred_check_branch
          %9618 = sbr.rel (%p9616) target = $region68
        $region67: #{tpu_custom_call.1} parent=27 // pred_region
          %9619 = dma.done [#allocation12], 16
        $region68: #{tpu_custom_call.1} parent=27 // pred_fallthru
          _
      $region28: #{tpu_custom_call.1} parent=5 // pred_fallthru
        _
      %p9620 = scmp.le.s32.totalorder 2, %s19
      // Predicated region
      $region69: #{tpu_custom_call.1} parent=5 // pred_check
        %p9621 = pneg %p9620
      $region70: #{tpu_custom_call.1} parent=5 // pred_check_branch
        %9623 = sbr.rel (%p9621) target = $region72
      $region71: #{tpu_custom_call.1} parent=5 // pred_region
        %s9624 = ssub.s32 %s19, 2
      $region72: #{tpu_custom_call.1} parent=5 // pred_fallthru
        _
    $region6: #{tpu_custom_call.1} parent=1 // loop_footer
      %s23 = sadd.s32 1, %s19
    $region7: #{tpu_custom_call.1} parent=1 // loop_footer_branch
      %18 = sbr.rel target = $region3
    $region8: #{tpu_custom_call.1} parent=1 // loop_exit
      _
    %9625 = vsyncpa [#allocation6], 1
    %s9626 = scalar_lea.sflag [#allocation6], 1
    %9627 = vsyncpa %s9626, 1
    %9628 = vsyncpa [#allocation9], 1
    %s9629 = scalar_lea.sflag [#allocation9], 1
    %9630 = vsyncpa %s9629, 1
    %9631 = vsyncpa [#allocation7], 1
    %s9632 = scalar_lea.sflag [#allocation7], 1
    %9633 = vsyncpa %s9632, 1
    %9634 = vsyncpa [#allocation12], 1

</llo_original>
